<compile_context>
chip_gen: v7x
topology: tpu7x:2x2x1
jax: 0.10.0
libtpu: 0.0.40
codegen_flags: <defaults>
</compile_context>

<pallas_src>
import functools

import jax
import jax.numpy as jnp
from jax.experimental import pallas as pl
from jax.experimental.pallas import tpu as pltpu

N_VTX = 431          # HMD_former.N_vtx
D_VTX = 512          # HMD_former.D_vtx
C_FEAT = 2048        # backbone last-stage channels (cam_proj_D in_features)
S_FEAT = 49          # 7*7 spatial tokens (cam_proj_N in_features)
D_HID = 64           # cam_proj_D hidden size


def _gelu_tanh(x):
    # TODO(synk): timm's Mlp default is exact (erf) GELU; the tanh approximation
    # is used for robust Mosaic lowering (~1e-3 relative difference).
    c = jnp.sqrt(2.0 / jnp.pi).astype(x.dtype)
    return 0.5 * x * (1.0 + jnp.tanh(c * (x + 0.044715 * x * x * x)))


# ----------------------------------------------------------------------------
# Fused kernel: backbone projection + camera head + transformer/mesh stand-in.
# One grid step processes `n_bt` batch elements; all weights have constant
# block indices so they stay resident in VMEM across the grid.
# ----------------------------------------------------------------------------
def _fused_kernel(pooled_ref, wb_ref, bb_ref, wn_ref,
                  w1_ref, b1_ref, w2_ref, b2_ref,
                  q_ref, wt_ref, btr_ref, wv_ref, bv_ref,
                  cam_ref, vtx_ref, *, n_bt, n_cin):
    wb = wb_ref[...]             # (C_in, 2048) f32
    bb = bb_ref[...]             # (1, 2048)    f32
    wn = wn_ref[...]             # (49, 1)      f32   (cam_proj_N weight)
    w1 = w1_ref[...]             # (2048, 64)   bf16
    b1 = b1_ref[...]             # (1, 64)      f32   (includes folded bN)
    w2 = w2_ref[...]             # (64, 3)      f32
    b2 = b2_ref[...]             # (1, 3)       f32
    q = q_ref[...]               # (431, 49)    bf16
    wt = wt_ref[...]             # (2048, 512)  bf16
    btr = btr_ref[...]           # (1, 512)     f32
    wv = wv_ref[...]             # (512, 3)     bf16
    bv = bv_ref[...]             # (1, 3)       f32

    for b in range(n_bt):
        p = pooled_ref[b]        # (49, C_in) f32

        # ---- backbone 1x1-conv stand-in: C_in VPU FMAs (no K=4 MXU matmul) --
        # TODO(synk): real cfg.backbone is config-defined; deterministic
        # stand-in producing the same (49, 2048) token features.
        feat = bb + p[:, 0:1] * wb[0:1, :]                 # (49, 2048) f32
        for k in range(1, n_cin):
            feat = feat + p[:, k:k + 1] * wb[k:k + 1, :]
        feat_bf = feat.astype(jnp.bfloat16)

        # ---- camera head (exact: cam_proj_N -> transpose -> cam_proj_D) ----
        # Contract over the 49-token axis of the (49, 2048) layout: the output
        # is lane-dense (2048) and no HBM transpose is required.
        cf = jnp.sum(feat * wn, axis=0, keepdims=True)     # (1, 2048) f32
        h = jnp.dot(cf.astype(jnp.bfloat16), w1,
                    preferred_element_type=jnp.float32) + b1   # (1, 64)
        h = _gelu_tanh(h)
        cam = jnp.dot(h, w2, preferred_element_type=jnp.float32) + b2  # (1, 3)
        cam_ref[b] = cam

        # ---- transformer + mesh_up stand-in (reassociated matmul chain) ----
        # TODO(synk): cfg.transformer / cfg.duplex_mapping / cfg.mesh_up are
        # config-defined; stand-in produces the same (431, 3) vertex output.
        # (feat @ Wt) first -> (49,512), then Q @ that -> (431,512): ~8x fewer
        # FLOPs than Q@feat first, and the dominant contraction has K=2048.
        fwt = jnp.dot(feat_bf, wt,
                      preferred_element_type=jnp.float32)                # (49, 512)
        x = jnp.dot(q, fwt.astype(jnp.bfloat16),
                    preferred_element_type=jnp.float32) + btr            # (431, 512)
        v = jnp.dot(x.astype(jnp.bfloat16), wv,
                    preferred_element_type=jnp.float32) + bv             # (431, 3)
        vtx_ref[b] = v


def _fused_forward(pooled, params):
    """pooled: (B, 49, C_in) f32 -> (cam (B,3), vtx3d (B,431,3))."""
    B, S, C_in = pooled.shape
    assert S == S_FEAT

    # Batch-tile: small B -> BT=1 (2 programs at B=2 feeds both v7x cores);
    # large B -> up to 8 batches per grid step to amortize per-step overhead.
    BT = max(1, min(8, B // 2))
    Bp = -(-B // BT) * BT
    if Bp != B:
        pooled = jnp.pad(pooled, ((0, Bp - B), (0, 0), (0, 0)))

    f32, bf16 = jnp.float32, jnp.bfloat16
    wb = params["Wb"].astype(f32)                                # (C_in, 2048)
    bb = params["bb"].reshape(1, C_FEAT).astype(f32)
    wn = params["wN"].reshape(S_FEAT, 1).astype(f32)
    # Fold the scalar cam_proj_N bias bN into the Mlp fc1 bias:
    # (cf + bN) @ W1 + b1 == cf @ W1 + (b1 + bN * colsum(W1))  (exact).
    b1 = (params["b1"].reshape(1, D_HID)
          + params["bN"].reshape(1, 1) * params["w1"].sum(axis=0, keepdims=True)
          ).astype(f32)
    w1 = params["w1"].astype(bf16)
    w2 = params["w2"].astype(f32)
    b2 = params["b2"].reshape(1, 3).astype(f32)
    q = params["Q"].astype(bf16)
    wt = params["Wt"].astype(bf16)
    btr = params["bt"].reshape(1, D_VTX).astype(f32)
    wv = params["Wv"].astype(bf16)
    bv = params["bv"].reshape(1, 3).astype(f32)

    const2 = lambda i: (0, 0)
    kernel = functools.partial(_fused_kernel, n_bt=BT, n_cin=C_in)

    cam3, vtx = pl.pallas_call(
        kernel,
        out_shape=(jax.ShapeDtypeStruct((Bp, 1, 3), f32),
                   jax.ShapeDtypeStruct((Bp, N_VTX, 3), f32)),
        grid=(Bp // BT,),
        in_specs=[
            pl.BlockSpec((BT, S_FEAT, C_in), lambda i: (i, 0, 0)),   # pooled
            pl.BlockSpec((C_in, C_FEAT), const2),                    # Wb
            pl.BlockSpec((1, C_FEAT), const2),                       # bb
            pl.BlockSpec((S_FEAT, 1), const2),                       # wN
            pl.BlockSpec((C_FEAT, D_HID), const2),                   # w1 (bf16)
            pl.BlockSpec((1, D_HID), const2),                        # b1 (+bN)
            pl.BlockSpec((D_HID, 3), const2),                        # w2
            pl.BlockSpec((1, 3), const2),                            # b2
            pl.BlockSpec((N_VTX, S_FEAT), const2),                   # Q  (bf16)
            pl.BlockSpec((C_FEAT, D_VTX), const2),                   # Wt (bf16)
            pl.BlockSpec((1, D_VTX), const2),                        # bt
            pl.BlockSpec((D_VTX, 3), const2),                        # Wv (bf16)
            pl.BlockSpec((1, 3), const2),                            # bv
        ],
        out_specs=(
            pl.BlockSpec((BT, 1, 3), lambda i: (i, 0, 0)),
            pl.BlockSpec((BT, N_VTX, 3), lambda i: (i, 0, 0)),
        ),
        compiler_params=pltpu.CompilerParams(
            dimension_semantics=("parallel",)),
    )(pooled, wb, bb, wn, w1, b1, w2, b2, q, wt, btr, wv, bv)

    return cam3[:B, 0, :], vtx[:B]


# ----------------------------------------------------------------------------
# Full forward (mirrors HMD_former.forward, mode='test' -> num_layers=1)
# ----------------------------------------------------------------------------
def hmd_former_forward(img, params):
    B, C_in, H, W = img.shape
    assert H % 7 == 0 and W % 7 == 0
    ph, pw = H // 7, W // 7
    # TODO(synk): cfg.backbone is config-defined; stand-in = adaptive average
    # pool to 7x7 (plain JAX glue on a tiny tensor) + a 1x1-conv projection to
    # 2048 channels that runs inside the fused Pallas kernel.
    pooled = img.reshape(B, C_in, 7, ph, 7, pw).mean(axis=(3, 5))   # (B,C_in,7,7)
    pooled = pooled.reshape(B, C_in, S_FEAT).transpose(0, 2, 1)     # (B,49,C_in)

    cam, vtx3d = _fused_forward(pooled, params)
    return {"all_vtx3d": [vtx3d], "cam": cam}


def init_params(key):
    ks = jax.random.split(key, 10)
    n = functools.partial(jax.random.normal, dtype=jnp.float32)
    s = 0.02
    return {
        # backbone stand-in (1x1 conv C_in->2048)
        "Wb": s * n(ks[0], (4, C_FEAT)),
        "bb": s * n(ks[1], (C_FEAT,)),
        # cam_proj_N: nn.Linear(49, 1)
        "wN": s * n(ks[2], (S_FEAT,)),
        "bN": s * n(ks[3], (1,)),
        # cam_proj_D: Mlp(2048, 64, 3)
        "w1": s * n(ks[4], (C_FEAT, D_HID)),
        "b1": s * n(ks[5], (D_HID,)),
        "w2": s * n(ks[6], (D_HID, 3)),
        "b2": s * n(ks[7], (3,)),
        # transformer + mesh_up stand-in
        "Q": s * n(ks[8], (N_VTX, S_FEAT)),
        "Wt": s * n(ks[9], (C_FEAT, D_VTX)),
        "bt": jnp.zeros((D_VTX,), jnp.float32),
        "Wv": s * n(jax.random.fold_in(key, 123), (D_VTX, 3)),
        "bv": jnp.zeros((3,), jnp.float32),
    }


if __name__ == "__main__":
    key = jax.random.PRNGKey(0)
    k_img, k_par = jax.random.split(key)
    # small image, NCHW: B=2, C=4, 14x14 (pooled to 7x7 inside the backbone)
    img = jax.random.normal(k_img, (2, 4, 14, 14), dtype=jnp.float32)
    params = init_params(k_par)

    fwd = jax.jit(hmd_former_forward)
    out = fwd(img, params)
    jax.block_until_ready(out)

    assert out["cam"].shape == (2, 3)
    assert out["all_vtx3d"][0].shape == (2, N_VTX, 3)
    assert bool(jnp.all(jnp.isfinite(out["cam"])))
    assert bool(jnp.all(jnp.isfinite(out["all_vtx3d"][0])))
    print("KERNEL_OK")
</pallas_src>

<mosaic_0001>
module attributes {stable_mosaic.version = 11 : i64} {
  func.func @_fused_kernel(%arg0: i32, %arg1: memref<1x49x4xf32, #tpu.memory_space<vmem>>, %arg2: memref<4x2048xf32, #tpu.memory_space<vmem>>, %arg3: memref<1x2048xf32, #tpu.memory_space<vmem>>, %arg4: memref<49x1xf32, #tpu.memory_space<vmem>>, %arg5: memref<2048x64xbf16, #tpu.memory_space<vmem>>, %arg6: memref<1x64xf32, #tpu.memory_space<vmem>>, %arg7: memref<64x3xf32, #tpu.memory_space<vmem>>, %arg8: memref<1x3xf32, #tpu.memory_space<vmem>>, %arg9: memref<431x49xbf16, #tpu.memory_space<vmem>>, %arg10: memref<2048x512xbf16, #tpu.memory_space<vmem>>, %arg11: memref<1x512xf32, #tpu.memory_space<vmem>>, %arg12: memref<512x3xbf16, #tpu.memory_space<vmem>>, %arg13: memref<1x3xf32, #tpu.memory_space<vmem>>, %arg14: memref<1x1x3xf32, #tpu.memory_space<vmem>>, %arg15: memref<1x431x3xf32, #tpu.memory_space<vmem>>) attributes {dimension_semantics = [#tpu.dimension_semantics<parallel>], iteration_bounds = array<i64: 2>, scalar_prefetch = 0 : i64, scratch_operands = 0 : i64, tpu.core_type = #tpu.core_type<tc>, window_params = [{transform_indices = @transform_0, window_bounds = array<i64: 1, 49, 4>}, {pipeline_mode = #tpu.pipeline_mode<synchronous>, transform_indices = @transform_1, window_bounds = array<i64: 4, 2048>}, {pipeline_mode = #tpu.pipeline_mode<synchronous>, transform_indices = @transform_2, window_bounds = array<i64: 1, 2048>}, {pipeline_mode = #tpu.pipeline_mode<synchronous>, transform_indices = @transform_3, window_bounds = array<i64: 49, 1>}, {pipeline_mode = #tpu.pipeline_mode<synchronous>, transform_indices = @transform_4, window_bounds = array<i64: 2048, 64>}, {pipeline_mode = #tpu.pipeline_mode<synchronous>, transform_indices = @transform_5, window_bounds = array<i64: 1, 64>}, {pipeline_mode = #tpu.pipeline_mode<synchronous>, transform_indices = @transform_6, window_bounds = array<i64: 64, 3>}, {pipeline_mode = #tpu.pipeline_mode<synchronous>, transform_indices = @transform_7, window_bounds = array<i64: 1, 3>}, {pipeline_mode = #tpu.pipeline_mode<synchronous>, transform_indices = @transform_8, window_bounds = array<i64: 431, 49>}, {pipeline_mode = #tpu.pipeline_mode<synchronous>, transform_indices = @transform_9, window_bounds = array<i64: 2048, 512>}, {pipeline_mode = #tpu.pipeline_mode<synchronous>, transform_indices = @transform_10, window_bounds = array<i64: 1, 512>}, {pipeline_mode = #tpu.pipeline_mode<synchronous>, transform_indices = @transform_11, window_bounds = array<i64: 512, 3>}, {pipeline_mode = #tpu.pipeline_mode<synchronous>, transform_indices = @transform_12, window_bounds = array<i64: 1, 3>}, {transform_indices = @transform_13, window_bounds = array<i64: 1, 1, 3>}, {transform_indices = @transform_14, window_bounds = array<i64: 1, 431, 3>}]} {
    %c0 = arith.constant 0 : index
    %c0_0 = arith.constant 0 : index
    %0 = vector.load %arg2[%c0, %c0_0] : memref<4x2048xf32, #tpu.memory_space<vmem>>, vector<4x2048xf32>
    %c0_1 = arith.constant 0 : index
    %c0_2 = arith.constant 0 : index
    %1 = vector.load %arg3[%c0_1, %c0_2] : memref<1x2048xf32, #tpu.memory_space<vmem>>, vector<1x2048xf32>
    %c0_3 = arith.constant 0 : index
    %c0_4 = arith.constant 0 : index
    %2 = vector.load %arg4[%c0_3, %c0_4] : memref<49x1xf32, #tpu.memory_space<vmem>>, vector<49x1xf32>
    %c0_5 = arith.constant 0 : index
    %c0_6 = arith.constant 0 : index
    %3 = vector.load %arg5[%c0_5, %c0_6] : memref<2048x64xbf16, #tpu.memory_space<vmem>>, vector<2048x64xbf16>
    %c0_7 = arith.constant 0 : index
    %c0_8 = arith.constant 0 : index
    %4 = vector.load %arg6[%c0_7, %c0_8] : memref<1x64xf32, #tpu.memory_space<vmem>>, vector<1x64xf32>
    %c0_9 = arith.constant 0 : index
    %c0_10 = arith.constant 0 : index
    %5 = vector.load %arg7[%c0_9, %c0_10] : memref<64x3xf32, #tpu.memory_space<vmem>>, vector<64x3xf32>
    %c0_11 = arith.constant 0 : index
    %c0_12 = arith.constant 0 : index
    %6 = vector.load %arg8[%c0_11, %c0_12] : memref<1x3xf32, #tpu.memory_space<vmem>>, vector<1x3xf32>
    %c0_13 = arith.constant 0 : index
    %c0_14 = arith.constant 0 : index
    %7 = vector.load %arg9[%c0_13, %c0_14] : memref<431x49xbf16, #tpu.memory_space<vmem>>, vector<431x49xbf16>
    %c0_15 = arith.constant 0 : index
    %c0_16 = arith.constant 0 : index
    %8 = vector.load %arg10[%c0_15, %c0_16] : memref<2048x512xbf16, #tpu.memory_space<vmem>>, vector<2048x512xbf16>
    %c0_17 = arith.constant 0 : index
    %c0_18 = arith.constant 0 : index
    %9 = vector.load %arg11[%c0_17, %c0_18] : memref<1x512xf32, #tpu.memory_space<vmem>>, vector<1x512xf32>
    %c0_19 = arith.constant 0 : index
    %c0_20 = arith.constant 0 : index
    %10 = vector.load %arg12[%c0_19, %c0_20] : memref<512x3xbf16, #tpu.memory_space<vmem>>, vector<512x3xbf16>
    %c0_21 = arith.constant 0 : index
    %c0_22 = arith.constant 0 : index
    %11 = vector.load %arg13[%c0_21, %c0_22] : memref<1x3xf32, #tpu.memory_space<vmem>>, vector<1x3xf32>
    %c0_23 = arith.constant 0 : index
    %c0_24 = arith.constant 0 : index
    %c0_25 = arith.constant 0 : index
    %12 = vector.load %arg1[%c0_23, %c0_24, %c0_25] : memref<1x49x4xf32, #tpu.memory_space<vmem>>, vector<1x49x4xf32>
    %13 = vector.shape_cast %12 : vector<1x49x4xf32> to vector<49x4xf32>
    %14 = vector.extract_strided_slice %13 {offsets = [0, 0], sizes = [49, 1], strides = [1, 1]} : vector<49x4xf32> to vector<49x1xf32>
    %15 = vector.extract_strided_slice %0 {offsets = [0, 0], sizes = [1, 2048], strides = [1, 1]} : vector<4x2048xf32> to vector<1x2048xf32>
    %16 = vector.broadcast %14 : vector<49x1xf32> to vector<49x2048xf32>
    %17 = vector.broadcast %15 : vector<1x2048xf32> to vector<49x2048xf32>
    %18 = arith.mulf %16, %17 : vector<49x2048xf32>
    %19 = vector.broadcast %1 : vector<1x2048xf32> to vector<49x2048xf32>
    %20 = arith.addf %19, %18 : vector<49x2048xf32>
    %21 = vector.extract_strided_slice %13 {offsets = [0, 1], sizes = [49, 1], strides = [1, 1]} : vector<49x4xf32> to vector<49x1xf32>
    %22 = vector.extract_strided_slice %0 {offsets = [1, 0], sizes = [1, 2048], strides = [1, 1]} : vector<4x2048xf32> to vector<1x2048xf32>
    %23 = vector.broadcast %21 : vector<49x1xf32> to vector<49x2048xf32>
    %24 = vector.broadcast %22 : vector<1x2048xf32> to vector<49x2048xf32>
    %25 = arith.mulf %23, %24 : vector<49x2048xf32>
    %26 = arith.addf %20, %25 : vector<49x2048xf32>
    %27 = vector.extract_strided_slice %13 {offsets = [0, 2], sizes = [49, 1], strides = [1, 1]} : vector<49x4xf32> to vector<49x1xf32>
    %28 = vector.extract_strided_slice %0 {offsets = [2, 0], sizes = [1, 2048], strides = [1, 1]} : vector<4x2048xf32> to vector<1x2048xf32>
    %29 = vector.broadcast %27 : vector<49x1xf32> to vector<49x2048xf32>
    %30 = vector.broadcast %28 : vector<1x2048xf32> to vector<49x2048xf32>
    %31 = arith.mulf %29, %30 : vector<49x2048xf32>
    %32 = arith.addf %26, %31 : vector<49x2048xf32>
    %33 = vector.extract_strided_slice %13 {offsets = [0, 3], sizes = [49, 1], strides = [1, 1]} : vector<49x4xf32> to vector<49x1xf32>
    %34 = vector.extract_strided_slice %0 {offsets = [3, 0], sizes = [1, 2048], strides = [1, 1]} : vector<4x2048xf32> to vector<1x2048xf32>
    %35 = vector.broadcast %33 : vector<49x1xf32> to vector<49x2048xf32>
    %36 = vector.broadcast %34 : vector<1x2048xf32> to vector<49x2048xf32>
    %37 = arith.mulf %35, %36 : vector<49x2048xf32>
    %38 = arith.addf %32, %37 : vector<49x2048xf32>
    %39 = arith.truncf %38 : vector<49x2048xf32> to vector<49x2048xbf16>
    %40 = vector.broadcast %2 : vector<49x1xf32> to vector<49x2048xf32>
    %41 = arith.mulf %38, %40 : vector<49x2048xf32>
    %cst = arith.constant dense<0.000000e+00> : vector<2048xf32>
    %42 = vector.multi_reduction <add>, %41, %cst [0] : vector<49x2048xf32> to vector<2048xf32>
    %43 = vector.shape_cast %42 : vector<2048xf32> to vector<1x2048xf32>
    %44 = arith.truncf %43 : vector<1x2048xf32> to vector<1x2048xbf16>
    %cst_26 = arith.constant dense<0.000000e+00> : vector<1x64xf32>
    %45 = tpu.matmul %44, %3, %cst_26 {dimension_numbers = #tpu.dot_dimension_numbers<[1], [0], [0], [1], [0, 0, 1, 1], [], []>} : vector<1x2048xbf16>, vector<2048x64xbf16>, vector<1x64xf32> -> vector<1x64xf32>
    %46 = arith.addf %45, %4 : vector<1x64xf32>
    %cst_27 = arith.constant 0.636619746 : f32
    %47 = math.sqrt %cst_27 : f32
    %cst_28 = arith.constant 5.000000e-01 : f32
    %48 = vector.broadcast %cst_28 : f32 to vector<1x64xf32>
    %49 = arith.mulf %48, %46 : vector<1x64xf32>
    %cst_29 = arith.constant 4.471500e-02 : f32
    %50 = vector.broadcast %cst_29 : f32 to vector<1x64xf32>
    %51 = arith.mulf %50, %46 : vector<1x64xf32>
    %52 = arith.mulf %51, %46 : vector<1x64xf32>
    %53 = arith.mulf %52, %46 : vector<1x64xf32>
    %54 = arith.addf %46, %53 : vector<1x64xf32>
    %55 = vector.broadcast %47 : f32 to vector<1x64xf32>
    %56 = arith.mulf %55, %54 : vector<1x64xf32>
    %57 = math.tanh %56 : vector<1x64xf32>
    %cst_30 = arith.constant 1.000000e+00 : f32
    %58 = vector.broadcast %cst_30 : f32 to vector<1x64xf32>
    %59 = arith.addf %58, %57 : vector<1x64xf32>
    %60 = arith.mulf %49, %59 : vector<1x64xf32>
    %cst_31 = arith.constant dense<0.000000e+00> : vector<1x3xf32>
    %61 = tpu.matmul %60, %5, %cst_31 {dimension_numbers = #tpu.dot_dimension_numbers<[1], [0], [0], [1], [0, 0, 1, 1], [], []>} : vector<1x64xf32>, vector<64x3xf32>, vector<1x3xf32> -> vector<1x3xf32>
    %62 = arith.addf %61, %6 : vector<1x3xf32>
    %c0_32 = arith.constant 0 : index
    %c0_33 = arith.constant 0 : index
    %c0_34 = arith.constant 0 : index
    %63 = vector.load %arg14[%c0_32, %c0_33, %c0_34] : memref<1x1x3xf32, #tpu.memory_space<vmem>>, vector<1x1x3xf32>
    %64 = vector.shape_cast %63 : vector<1x1x3xf32> to vector<1x3xf32>
    %65 = vector.shape_cast %62 : vector<1x3xf32> to vector<1x1x3xf32>
    tpu.vector_store %arg14[%c0_32, %c0_33, %c0_34], %65 {strides = array<i32>} : memref<1x1x3xf32, #tpu.memory_space<vmem>>, vector<1x1x3xf32>,
    %cst_35 = arith.constant dense<0.000000e+00> : vector<49x512xf32>
    %66 = tpu.matmul %39, %8, %cst_35 {dimension_numbers = #tpu.dot_dimension_numbers<[1], [0], [0], [1], [0, 0, 1, 1], [], []>} : vector<49x2048xbf16>, vector<2048x512xbf16>, vector<49x512xf32> -> vector<49x512xf32>
    %67 = arith.truncf %66 : vector<49x512xf32> to vector<49x512xbf16>
    %cst_36 = arith.constant dense<0.000000e+00> : vector<431x512xf32>
    %68 = tpu.matmul %7, %67, %cst_36 {dimension_numbers = #tpu.dot_dimension_numbers<[1], [0], [0], [1], [0, 0, 1, 1], [], []>} : vector<431x49xbf16>, vector<49x512xbf16>, vector<431x512xf32> -> vector<431x512xf32>
    %69 = vector.broadcast %9 : vector<1x512xf32> to vector<431x512xf32>
    %70 = arith.addf %68, %69 : vector<431x512xf32>
    %71 = arith.truncf %70 : vector<431x512xf32> to vector<431x512xbf16>
    %cst_37 = arith.constant dense<0.000000e+00> : vector<431x3xf32>
    %72 = tpu.matmul %71, %10, %cst_37 {dimension_numbers = #tpu.dot_dimension_numbers<[1], [0], [0], [1], [0, 0, 1, 1], [], []>} : vector<431x512xbf16>, vector<512x3xbf16>, vector<431x3xf32> -> vector<431x3xf32>
    %73 = vector.broadcast %11 : vector<1x3xf32> to vector<431x3xf32>
    %74 = arith.addf %72, %73 : vector<431x3xf32>
    %c0_38 = arith.constant 0 : index
    %c0_39 = arith.constant 0 : index
    %c0_40 = arith.constant 0 : index
    %75 = vector.load %arg15[%c0_38, %c0_39, %c0_40] : memref<1x431x3xf32, #tpu.memory_space<vmem>>, vector<1x431x3xf32>
    %76 = vector.shape_cast %75 : vector<1x431x3xf32> to vector<431x3xf32>
    %77 = vector.shape_cast %74 : vector<431x3xf32> to vector<1x431x3xf32>
    tpu.vector_store %arg15[%c0_38, %c0_39, %c0_40], %77 {strides = array<i32>} : memref<1x431x3xf32, #tpu.memory_space<vmem>>, vector<1x431x3xf32>,
    return
  }
  func.func @transform_0(%arg0: i32) -> (i32, i32, i32) {
    %c0_i32 = arith.constant 0 : i32
    %c0_i32_0 = arith.constant 0 : i32
    %c0_i32_1 = arith.constant 0 : i32
    return %arg0, %c0_i32, %c0_i32_0 : i32, i32, i32
  }
  func.func @transform_1(%arg0: i32) -> (i32, i32) {
    %c0_i32 = arith.constant 0 : i32
    %c0_i32_0 = arith.constant 0 : i32
    %c0_i32_1 = arith.constant 0 : i32
    return %c0_i32, %c0_i32_0 : i32, i32
  }
  func.func @transform_2(%arg0: i32) -> (i32, i32) {
    %c0_i32 = arith.constant 0 : i32
    %c0_i32_0 = arith.constant 0 : i32
    %c0_i32_1 = arith.constant 0 : i32
    return %c0_i32, %c0_i32_0 : i32, i32
  }
  func.func @transform_3(%arg0: i32) -> (i32, i32) {
    %c0_i32 = arith.constant 0 : i32
    %c0_i32_0 = arith.constant 0 : i32
    %c0_i32_1 = arith.constant 0 : i32
    return %c0_i32, %c0_i32_0 : i32, i32
  }
  func.func @transform_4(%arg0: i32) -> (i32, i32) {
    %c0_i32 = arith.constant 0 : i32
    %c0_i32_0 = arith.constant 0 : i32
    %c0_i32_1 = arith.constant 0 : i32
    return %c0_i32, %c0_i32_0 : i32, i32
  }
  func.func @transform_5(%arg0: i32) -> (i32, i32) {
    %c0_i32 = arith.constant 0 : i32
    %c0_i32_0 = arith.constant 0 : i32
    %c0_i32_1 = arith.constant 0 : i32
    return %c0_i32, %c0_i32_0 : i32, i32
  }
  func.func @transform_6(%arg0: i32) -> (i32, i32) {
    %c0_i32 = arith.constant 0 : i32
    %c0_i32_0 = arith.constant 0 : i32
    %c0_i32_1 = arith.constant 0 : i32
    return %c0_i32, %c0_i32_0 : i32, i32
  }
  func.func @transform_7(%arg0: i32) -> (i32, i32) {
    %c0_i32 = arith.constant 0 : i32
    %c0_i32_0 = arith.constant 0 : i32
    %c0_i32_1 = arith.constant 0 : i32
    return %c0_i32, %c0_i32_0 : i32, i32
  }
  func.func @transform_8(%arg0: i32) -> (i32, i32) {
    %c0_i32 = arith.constant 0 : i32
    %c0_i32_0 = arith.constant 0 : i32
    %c0_i32_1 = arith.constant 0 : i32
    return %c0_i32, %c0_i32_0 : i32, i32
  }
  func.func @transform_9(%arg0: i32) -> (i32, i32) {
    %c0_i32 = arith.constant 0 : i32
    %c0_i32_0 = arith.constant 0 : i32
    %c0_i32_1 = arith.constant 0 : i32
    return %c0_i32, %c0_i32_0 : i32, i32
  }
  func.func @transform_10(%arg0: i32) -> (i32, i32) {
    %c0_i32 = arith.constant 0 : i32
    %c0_i32_0 = arith.constant 0 : i32
    %c0_i32_1 = arith.constant 0 : i32
    return %c0_i32, %c0_i32_0 : i32, i32
  }
  func.func @transform_11(%arg0: i32) -> (i32, i32) {
    %c0_i32 = arith.constant 0 : i32
    %c0_i32_0 = arith.constant 0 : i32
    %c0_i32_1 = arith.constant 0 : i32
    return %c0_i32, %c0_i32_0 : i32, i32
  }
  func.func @transform_12(%arg0: i32) -> (i32, i32) {
    %c0_i32 = arith.constant 0 : i32
    %c0_i32_0 = arith.constant 0 : i32
    %c0_i32_1 = arith.constant 0 : i32
    return %c0_i32, %c0_i32_0 : i32, i32
  }
  func.func @transform_13(%arg0: i32) -> (i32, i32, i32) {
    %c0_i32 = arith.constant 0 : i32
    %c0_i32_0 = arith.constant 0 : i32
    %c0_i32_1 = arith.constant 0 : i32
    return %arg0, %c0_i32, %c0_i32_0 : i32, i32, i32
  }
  func.func @transform_14(%arg0: i32) -> (i32, i32, i32) {
    %c0_i32 = arith.constant 0 : i32
    %c0_i32_0 = arith.constant 0 : i32
    %c0_i32_1 = arith.constant 0 : i32
    return %arg0, %c0_i32, %c0_i32_0 : i32, i32, i32
  }
}

</mosaic_0001>

<llo_original>
// kernel: hmd_former_forward.1
$region0: #{hmd_former_forward.1}
  #allocation0 [shape = 'u32[]', space=smem, size = 0x4, offset = 0x4, fixed_abs, tag = 'smem constant byte address 0x4 - core index']
  #allocation1 [shape = 'u32[144,128]{1,0:T(1,128)}', space=vmem, size = 0x12000, scoped, tag = 'internal scratch']
  %s0 = inlined_call_operand.vmem [shape: f32[2,49,4], index: 0, kind: input, shape index: {}]
  %s1 = inlined_call_operand.vmem [shape: f32[4,2048], index: 1, kind: input, shape index: {}]
  %s2 = inlined_call_operand.vmem [shape: f32[1,2048], index: 2, kind: input, shape index: {}]
  %s3 = inlined_call_operand.vmem [shape: f32[49,1], index: 3, kind: input, shape index: {}]
  %s4 = inlined_call_operand.vmem [shape: bf16[2048,64], index: 4, kind: input, shape index: {}]
  %s5 = inlined_call_operand.vmem [shape: f32[1,64], index: 5, kind: input, shape index: {}]
  %s6 = inlined_call_operand.vmem [shape: f32[64,3], index: 6, kind: input, shape index: {}]
  %s7 = inlined_call_operand.vmem [shape: f32[1,3], index: 7, kind: input, shape index: {}]
  %s8 = inlined_call_operand.vmem [shape: bf16[431,49], index: 8, kind: input, shape index: {}]
  %s9 = inlined_call_operand.vmem [shape: bf16[2048,512], index: 9, kind: input, shape index: {}]
  %s10 = inlined_call_operand.vmem [shape: f32[1,512], index: 10, kind: input, shape index: {}]
  %s11 = inlined_call_operand.vmem [shape: bf16[512,3], index: 11, kind: input, shape index: {}]
  %s12 = inlined_call_operand.vmem [shape: f32[1,3], index: 12, kind: input, shape index: {}]
  %s13 = inlined_call_operand.hbm [shape: f32[2,1,3], index: 13, kind: output, shape index: {0}]
  %s14 = inlined_call_operand.vmem [shape: f32[2,431,3], index: 14, kind: output, shape index: {1}]
  %15 = xla_tuple %s13, %s14
  %s16 = sld [smem:[#allocation0]]
  $region93: #{hmd_former_forward.1} parent=0
    _
  %s18 = ssub.s32 1, %s16
  %s19 = scalar_select 0, %s18, %s16
  $region1: #{hmd_former_forward.1} parent=0
    #allocation2 [shape = 'u8[1024]{0}', space=vmem, size = 0x400, scoped, tag = 'output window, operand 0']
    #allocation3 [shape = 's32[2]{0}', space=sflag, size = 0x8, scoped, tag = 'scoped memory for hmd_former_forward.1']
    %20 = vsyncpa [#allocation3], 0
    %s21 = scalar_lea.sflag [#allocation3], 1
    %22 = vsyncpa %s21, 0
    loop: start=0, step=1, limit=4
    $region2: #{hmd_former_forward.1} parent=1 // loop_pre_header
      _
    $region3: #{hmd_former_forward.1} parent=1 // loop_header
      %s24 = sphi 0, %s28
      %p25 = scmp.ge.s32.totalorder %s24, 4
      %s34 = sphi 0, %s36
      %s37 = sphi 0, %s34
      %s38 = sphi 0, %s37
      %s54 = sphi 0, %s38
      %s58 = sphi 0, %s58
      %s60 = sphi 0, %s58
      %s61 = sphi 0, %s60
      %s75 = sphi 0, %s61
      %s79 = sphi 0, %s79
      %s81 = sphi 0, %s79
      %s82 = sphi 0, %s81
      %s96 = sphi 0, %s82
      %s100 = sphi 0, %s100
      %s102 = sphi 0, %s100
      %s103 = sphi 0, %s102
      %s117 = sphi 0, %s103
      %s121 = sphi 0, %s121
      %s123 = sphi 0, %s121
      %s124 = sphi 0, %s123
      %s138 = sphi 0, %s124
      %s142 = sphi 0, %s142
      %s144 = sphi 0, %s142
      %s145 = sphi 0, %s144
      %s159 = sphi 0, %s145
      %s163 = sphi 0, %s163
      %s165 = sphi 0, %s163
      %s166 = sphi 0, %s165
      %s180 = sphi 0, %s166
      %s184 = sphi 0, %s184
      %s186 = sphi 0, %s184
      %s187 = sphi 0, %s186
      %s201 = sphi 0, %s187
      %s205 = sphi 0, %s205
      %s207 = sphi 0, %s205
      %s208 = sphi 0, %s207
      %s222 = sphi 0, %s208
      %s226 = sphi 0, %s226
      %s228 = sphi 0, %s226
      %s229 = sphi 0, %s228
      %s243 = sphi 0, %s229
      %s247 = sphi 0, %s247
      %s249 = sphi 0, %s247
      %s250 = sphi 0, %s249
      %s264 = sphi 0, %s250
      %s268 = sphi 0, %s268
      %s270 = sphi 0, %s268
      %s271 = sphi 0, %s270
      %s285 = sphi 0, %s271
      %s289 = sphi 0, %s289
      %s291 = sphi 0, %s289
      %s292 = sphi 0, %s291
      %s306 = sphi 0, %s292
      %s312 = sphi 0, %s314
      %s315 = sphi 0, %s312
      %s316 = sphi 0, %s315
      %s332 = sphi 0, %s316
      %s338 = sphi 0, %s340
      %s341 = sphi 0, %s338
      %s342 = sphi 0, %s341
      %s358 = sphi 0, %s342
    $region4: #{hmd_former_forward.1} parent=1 // loop_header_branch
      %27 = sbr.rel (%p25) target = $region8
    $region5: #{hmd_former_forward.1} parent=1 // loop_body
      %s29 = ssub.s32 %s24, 1
      %s30 = ssub.s32 %s24, 2
      %s31 = sadd.s32 %s24, 1
      %s32 = ssub.s32 %s24, %s31
      %p33 = scmp.eq.s32.totalorder %s32, 0
      %s35 = sadd.s32 %s34, 1
      %s36 = scalar_select %p33, %s34, %s35
      %p39 = pneg %p33
      %p40 = scmp.eq.s32.totalorder %s24, 1
      %p41 = por %p39, %p40
      %p42 = scmp.ne.s32.totalorder %s34, %s37
      %p43 = scmp.eq.s32.totalorder %s24, 0
      %p44 = por %p42, %p43
      %p45 = scmp.ne.s32.totalorder %s34, %s37
      %p46 = scmp.eq.s32.totalorder %s29, 1
      %p47 = por %p45, %p46
      %p48 = scmp.ne.s32.totalorder %s37, %s38
      %p49 = scmp.eq.s32.totalorder %s29, 0
      %p50 = por %p48, %p49
      %p51 = scmp.ne.s32.totalorder %s37, %s38
      %p52 = scmp.eq.s32.totalorder %s30, 1
      %p53 = por %p51, %p52
      %p55 = scmp.ne.s32.totalorder %s38, %s54
      %p56 = scmp.eq.s32.totalorder %s30, 0
      %p57 = por %p55, %p56
      %s59 = sadd.s32 %s58, 1
      %p62 = scmp.eq.s32.totalorder %s24, 1
      %p63 = scmp.ne.s32.totalorder %s58, %s60
      %p64 = scmp.eq.s32.totalorder %s24, 0
      %p65 = por %p63, %p64
      %p66 = scmp.ne.s32.totalorder %s58, %s60
      %p67 = scmp.eq.s32.totalorder %s29, 1
      %p68 = por %p66, %p67
      %p69 = scmp.ne.s32.totalorder %s60, %s61
      %p70 = scmp.eq.s32.totalorder %s29, 0
      %p71 = por %p69, %p70
      %p72 = scmp.ne.s32.totalorder %s60, %s61
      %p73 = scmp.eq.s32.totalorder %s30, 1
      %p74 = por %p72, %p73
      %p76 = scmp.ne.s32.totalorder %s61, %s75
      %p77 = scmp.eq.s32.totalorder %s30, 0
      %p78 = por %p76, %p77
      %s80 = sadd.s32 %s79, 1
      %p83 = scmp.eq.s32.totalorder %s24, 1
      %p84 = scmp.ne.s32.totalorder %s79, %s81
      %p85 = scmp.eq.s32.totalorder %s24, 0
      %p86 = por %p84, %p85
      %p87 = scmp.ne.s32.totalorder %s79, %s81
      %p88 = scmp.eq.s32.totalorder %s29, 1
      %p89 = por %p87, %p88
      %p90 = scmp.ne.s32.totalorder %s81, %s82
      %p91 = scmp.eq.s32.totalorder %s29, 0
      %p92 = por %p90, %p91
      %p93 = scmp.ne.s32.totalorder %s81, %s82
      %p94 = scmp.eq.s32.totalorder %s30, 1
      %p95 = por %p93, %p94
      %p97 = scmp.ne.s32.totalorder %s82, %s96
      %p98 = scmp.eq.s32.totalorder %s30, 0
      %p99 = por %p97, %p98
      %s101 = sadd.s32 %s100, 1
      %p104 = scmp.eq.s32.totalorder %s24, 1
      %p105 = scmp.ne.s32.totalorder %s100, %s102
      %p106 = scmp.eq.s32.totalorder %s24, 0
      %p107 = por %p105, %p106
      %p108 = scmp.ne.s32.totalorder %s100, %s102
      %p109 = scmp.eq.s32.totalorder %s29, 1
      %p110 = por %p108, %p109
      %p111 = scmp.ne.s32.totalorder %s102, %s103
      %p112 = scmp.eq.s32.totalorder %s29, 0
      %p113 = por %p111, %p112
      %p114 = scmp.ne.s32.totalorder %s102, %s103
      %p115 = scmp.eq.s32.totalorder %s30, 1
      %p116 = por %p114, %p115
      %p118 = scmp.ne.s32.totalorder %s103, %s117
      %p119 = scmp.eq.s32.totalorder %s30, 0
      %p120 = por %p118, %p119
      %s122 = sadd.s32 %s121, 1
      %p125 = scmp.eq.s32.totalorder %s24, 1
      %p126 = scmp.ne.s32.totalorder %s121, %s123
      %p127 = scmp.eq.s32.totalorder %s24, 0
      %p128 = por %p126, %p127
      %p129 = scmp.ne.s32.totalorder %s121, %s123
      %p130 = scmp.eq.s32.totalorder %s29, 1
      %p131 = por %p129, %p130
      %p132 = scmp.ne.s32.totalorder %s123, %s124
      %p133 = scmp.eq.s32.totalorder %s29, 0
      %p134 = por %p132, %p133
      %p135 = scmp.ne.s32.totalorder %s123, %s124
      %p136 = scmp.eq.s32.totalorder %s30, 1
      %p137 = por %p135, %p136
      %p139 = scmp.ne.s32.totalorder %s124, %s138
      %p140 = scmp.eq.s32.totalorder %s30, 0
      %p141 = por %p139, %p140
      %s143 = sadd.s32 %s142, 1
      %p146 = scmp.eq.s32.totalorder %s24, 1
      %p147 = scmp.ne.s32.totalorder %s142, %s144
      %p148 = scmp.eq.s32.totalorder %s24, 0
      %p149 = por %p147, %p148
      %p150 = scmp.ne.s32.totalorder %s142, %s144
      %p151 = scmp.eq.s32.totalorder %s29, 1
      %p152 = por %p150, %p151
      %p153 = scmp.ne.s32.totalorder %s144, %s145
      %p154 = scmp.eq.s32.totalorder %s29, 0
      %p155 = por %p153, %p154
      %p156 = scmp.ne.s32.totalorder %s144, %s145
      %p157 = scmp.eq.s32.totalorder %s30, 1
      %p158 = por %p156, %p157
      %p160 = scmp.ne.s32.totalorder %s145, %s159
      %p161 = scmp.eq.s32.totalorder %s30, 0
      %p162 = por %p160, %p161
      %s164 = sadd.s32 %s163, 1
      %p167 = scmp.eq.s32.totalorder %s24, 1
      %p168 = scmp.ne.s32.totalorder %s163, %s165
      %p169 = scmp.eq.s32.totalorder %s24, 0
      %p170 = por %p168, %p169
      %p171 = scmp.ne.s32.totalorder %s163, %s165
      %p172 = scmp.eq.s32.totalorder %s29, 1
      %p173 = por %p171, %p172
      %p174 = scmp.ne.s32.totalorder %s165, %s166
      %p175 = scmp.eq.s32.totalorder %s29, 0
      %p176 = por %p174, %p175
      %p177 = scmp.ne.s32.totalorder %s165, %s166
      %p178 = scmp.eq.s32.totalorder %s30, 1
      %p179 = por %p177, %p178
      %p181 = scmp.ne.s32.totalorder %s166, %s180
      %p182 = scmp.eq.s32.totalorder %s30, 0
      %p183 = por %p181, %p182
      %s185 = sadd.s32 %s184, 1
      %p188 = scmp.eq.s32.totalorder %s24, 1
      %p189 = scmp.ne.s32.totalorder %s184, %s186
      %p190 = scmp.eq.s32.totalorder %s24, 0
      %p191 = por %p189, %p190
      %p192 = scmp.ne.s32.totalorder %s184, %s186
      %p193 = scmp.eq.s32.totalorder %s29, 1
      %p194 = por %p192, %p193
      %p195 = scmp.ne.s32.totalorder %s186, %s187
      %p196 = scmp.eq.s32.totalorder %s29, 0
      %p197 = por %p195, %p196
      %p198 = scmp.ne.s32.totalorder %s186, %s187
      %p199 = scmp.eq.s32.totalorder %s30, 1
      %p200 = por %p198, %p199
      %p202 = scmp.ne.s32.totalorder %s187, %s201
      %p203 = scmp.eq.s32.totalorder %s30, 0
      %p204 = por %p202, %p203
      %s206 = sadd.s32 %s205, 1
      %p209 = scmp.eq.s32.totalorder %s24, 1
      %p210 = scmp.ne.s32.totalorder %s205, %s207
      %p211 = scmp.eq.s32.totalorder %s24, 0
      %p212 = por %p210, %p211
      %p213 = scmp.ne.s32.totalorder %s205, %s207
      %p214 = scmp.eq.s32.totalorder %s29, 1
      %p215 = por %p213, %p214
      %p216 = scmp.ne.s32.totalorder %s207, %s208
      %p217 = scmp.eq.s32.totalorder %s29, 0
      %p218 = por %p216, %p217
      %p219 = scmp.ne.s32.totalorder %s207, %s208
      %p220 = scmp.eq.s32.totalorder %s30, 1
      %p221 = por %p219, %p220
      %p223 = scmp.ne.s32.totalorder %s208, %s222
      %p224 = scmp.eq.s32.totalorder %s30, 0
      %p225 = por %p223, %p224
      %s227 = sadd.s32 %s226, 1
      %p230 = scmp.eq.s32.totalorder %s24, 1
      %p231 = scmp.ne.s32.totalorder %s226, %s228
      %p232 = scmp.eq.s32.totalorder %s24, 0
      %p233 = por %p231, %p232
      %p234 = scmp.ne.s32.totalorder %s226, %s228
      %p235 = scmp.eq.s32.totalorder %s29, 1
      %p236 = por %p234, %p235
      %p237 = scmp.ne.s32.totalorder %s228, %s229
      %p238 = scmp.eq.s32.totalorder %s29, 0
      %p239 = por %p237, %p238
      %p240 = scmp.ne.s32.totalorder %s228, %s229
      %p241 = scmp.eq.s32.totalorder %s30, 1
      %p242 = por %p240, %p241
      %p244 = scmp.ne.s32.totalorder %s229, %s243
      %p245 = scmp.eq.s32.totalorder %s30, 0
      %p246 = por %p244, %p245
      %s248 = sadd.s32 %s247, 1
      %p251 = scmp.eq.s32.totalorder %s24, 1
      %p252 = scmp.ne.s32.totalorder %s247, %s249
      %p253 = scmp.eq.s32.totalorder %s24, 0
      %p254 = por %p252, %p253
      %p255 = scmp.ne.s32.totalorder %s247, %s249
      %p256 = scmp.eq.s32.totalorder %s29, 1
      %p257 = por %p255, %p256
      %p258 = scmp.ne.s32.totalorder %s249, %s250
      %p259 = scmp.eq.s32.totalorder %s29, 0
      %p260 = por %p258, %p259
      %p261 = scmp.ne.s32.totalorder %s249, %s250
      %p262 = scmp.eq.s32.totalorder %s30, 1
      %p263 = por %p261, %p262
      %p265 = scmp.ne.s32.totalorder %s250, %s264
      %p266 = scmp.eq.s32.totalorder %s30, 0
      %p267 = por %p265, %p266
      %s269 = sadd.s32 %s268, 1
      %p272 = scmp.eq.s32.totalorder %s24, 1
      %p273 = scmp.ne.s32.totalorder %s268, %s270
      %p274 = scmp.eq.s32.totalorder %s24, 0
      %p275 = por %p273, %p274
      %p276 = scmp.ne.s32.totalorder %s268, %s270
      %p277 = scmp.eq.s32.totalorder %s29, 1
      %p278 = por %p276, %p277
      %p279 = scmp.ne.s32.totalorder %s270, %s271
      %p280 = scmp.eq.s32.totalorder %s29, 0
      %p281 = por %p279, %p280
      %p282 = scmp.ne.s32.totalorder %s270, %s271
      %p283 = scmp.eq.s32.totalorder %s30, 1
      %p284 = por %p282, %p283
      %p286 = scmp.ne.s32.totalorder %s271, %s285
      %p287 = scmp.eq.s32.totalorder %s30, 0
      %p288 = por %p286, %p287
      %s290 = sadd.s32 %s289, 1
      %p293 = scmp.eq.s32.totalorder %s24, 1
      %p294 = scmp.ne.s32.totalorder %s289, %s291
      %p295 = scmp.eq.s32.totalorder %s24, 0
      %p296 = por %p294, %p295
      %p297 = scmp.ne.s32.totalorder %s289, %s291
      %p298 = scmp.eq.s32.totalorder %s29, 1
      %p299 = por %p297, %p298
      %p300 = scmp.ne.s32.totalorder %s291, %s292
      %p301 = scmp.eq.s32.totalorder %s29, 0
      %p302 = por %p300, %p301
      %p303 = scmp.ne.s32.totalorder %s291, %s292
      %p304 = scmp.eq.s32.totalorder %s30, 1
      %p305 = por %p303, %p304
      %p307 = scmp.ne.s32.totalorder %s292, %s306
      %p308 = scmp.eq.s32.totalorder %s30, 0
      %p309 = por %p307, %p308
      %s310 = ssub.s32 %s24, %s31
      %p311 = scmp.eq.s32.totalorder %s310, 0
      %s313 = sadd.s32 %s312, 1
      %s314 = scalar_select %p311, %s312, %s313
      %p317 = pneg %p311
      %p318 = scmp.eq.s32.totalorder %s24, 1
      %p319 = por %p317, %p318
      %p320 = scmp.ne.s32.totalorder %s312, %s315
      %p321 = scmp.eq.s32.totalorder %s24, 0
      %p322 = por %p320, %p321
      %p323 = scmp.ne.s32.totalorder %s312, %s315
      %p324 = scmp.eq.s32.totalorder %s29, 1
      %p325 = por %p323, %p324
      %p326 = scmp.ne.s32.totalorder %s315, %s316
      %p327 = scmp.eq.s32.totalorder %s29, 0
      %p328 = por %p326, %p327
      %p329 = scmp.ne.s32.totalorder %s315, %s316
      %p330 = scmp.eq.s32.totalorder %s30, 1
      %p331 = por %p329, %p330
      %p333 = scmp.ne.s32.totalorder %s316, %s332
      %p334 = scmp.eq.s32.totalorder %s30, 0
      %p335 = por %p333, %p334
      %s336 = ssub.s32 %s24, %s31
      %p337 = scmp.eq.s32.totalorder %s336, 0
      %s339 = sadd.s32 %s338, 1
      %s340 = scalar_select %p337, %s338, %s339
      %p343 = pneg %p337
      %p344 = scmp.eq.s32.totalorder %s24, 1
      %p345 = por %p343, %p344
      %p346 = scmp.ne.s32.totalorder %s338, %s341
      %p347 = scmp.eq.s32.totalorder %s24, 0
      %p348 = por %p346, %p347
      %p349 = scmp.ne.s32.totalorder %s338, %s341
      %p350 = scmp.eq.s32.totalorder %s29, 1
      %p351 = por %p349, %p350
      %p352 = scmp.ne.s32.totalorder %s341, %s342
      %p353 = scmp.eq.s32.totalorder %s29, 0
      %p354 = por %p352, %p353
      %p355 = scmp.ne.s32.totalorder %s341, %s342
      %p356 = scmp.eq.s32.totalorder %s30, 1
      %p357 = por %p355, %p356
      %p359 = scmp.ne.s32.totalorder %s342, %s358
      %p360 = scmp.eq.s32.totalorder %s30, 0
      %p361 = por %p359, %p360
      %p362 = scmp.le.s32.totalorder 1, %s24
      %p363 = scmp.lt.s32.totalorder %s24, 3
      %p364 = pnand %p362, %p363
      %p365 = pneg %p364
      // Predicated region
      $region9: #{hmd_former_forward.1} parent=5 // pred_check
        _
      $region10: #{hmd_former_forward.1} parent=5 // pred_check_branch
        %367 = sbr.rel (%p364) target = $region12
      $region11: #{hmd_former_forward.1} parent=5 // pred_region
        %s368 = ssub.s32 %s24, 1
        // Predicated region
        $region13: #{hmd_former_forward.1} parent=11 // pred_check
          %p369 = pneg %p71
        $region14: #{hmd_former_forward.1} parent=11 // pred_check_branch
          %371 = sbr.rel (%p369) target = $region16
        $region15: #{hmd_former_forward.1} parent=11 // pred_region
          _
        $region16: #{hmd_former_forward.1} parent=11 // pred_fallthru
          _
        // Predicated region
        $region17: #{hmd_former_forward.1} parent=11 // pred_check
          %p372 = pneg %p92
        $region18: #{hmd_former_forward.1} parent=11 // pred_check_branch
          %374 = sbr.rel (%p372) target = $region20
        $region19: #{hmd_former_forward.1} parent=11 // pred_region
          _
        $region20: #{hmd_former_forward.1} parent=11 // pred_fallthru
          _
        // Predicated region
        $region21: #{hmd_former_forward.1} parent=11 // pred_check
          %p375 = pneg %p113
        $region22: #{hmd_former_forward.1} parent=11 // pred_check_branch
          %377 = sbr.rel (%p375) target = $region24
        $region23: #{hmd_former_forward.1} parent=11 // pred_region
          _
        $region24: #{hmd_former_forward.1} parent=11 // pred_fallthru
          _
        // Predicated region
        $region25: #{hmd_former_forward.1} parent=11 // pred_check
          %p378 = pneg %p134
        $region26: #{hmd_former_forward.1} parent=11 // pred_check_branch
          %380 = sbr.rel (%p378) target = $region28
        $region27: #{hmd_former_forward.1} parent=11 // pred_region
          _
        $region28: #{hmd_former_forward.1} parent=11 // pred_fallthru
          _
        // Predicated region
        $region29: #{hmd_former_forward.1} parent=11 // pred_check
          %p381 = pneg %p155
        $region30: #{hmd_former_forward.1} parent=11 // pred_check_branch
          %383 = sbr.rel (%p381) target = $region32
        $region31: #{hmd_former_forward.1} parent=11 // pred_region
          _
        $region32: #{hmd_former_forward.1} parent=11 // pred_fallthru
          _
        // Predicated region
        $region33: #{hmd_former_forward.1} parent=11 // pred_check
          %p384 = pneg %p176
        $region34: #{hmd_former_forward.1} parent=11 // pred_check_branch
          %386 = sbr.rel (%p384) target = $region36
        $region35: #{hmd_former_forward.1} parent=11 // pred_region
          _
        $region36: #{hmd_former_forward.1} parent=11 // pred_fallthru
          _
        // Predicated region
        $region37: #{hmd_former_forward.1} parent=11 // pred_check
          %p387 = pneg %p197
        $region38: #{hmd_former_forward.1} parent=11 // pred_check_branch
          %389 = sbr.rel (%p387) target = $region40
        $region39: #{hmd_former_forward.1} parent=11 // pred_region
          _
        $region40: #{hmd_former_forward.1} parent=11 // pred_fallthru
          _
        // Predicated region
        $region41: #{hmd_former_forward.1} parent=11 // pred_check
          %p390 = pneg %p218
        $region42: #{hmd_former_forward.1} parent=11 // pred_check_branch
          %392 = sbr.rel (%p390) target = $region44
        $region43: #{hmd_former_forward.1} parent=11 // pred_region
          _
        $region44: #{hmd_former_forward.1} parent=11 // pred_fallthru
          _
        // Predicated region
        $region45: #{hmd_former_forward.1} parent=11 // pred_check
          %p393 = pneg %p239
        $region46: #{hmd_former_forward.1} parent=11 // pred_check_branch
          %395 = sbr.rel (%p393) target = $region48
        $region47: #{hmd_former_forward.1} parent=11 // pred_region
          _
        $region48: #{hmd_former_forward.1} parent=11 // pred_fallthru
          _
        // Predicated region
        $region49: #{hmd_former_forward.1} parent=11 // pred_check
          %p396 = pneg %p260
        $region50: #{hmd_former_forward.1} parent=11 // pred_check_branch
          %398 = sbr.rel (%p396) target = $region52
        $region51: #{hmd_former_forward.1} parent=11 // pred_region
          _
        $region52: #{hmd_former_forward.1} parent=11 // pred_fallthru
          _
        // Predicated region
        $region53: #{hmd_former_forward.1} parent=11 // pred_check
          %p399 = pneg %p281
        $region54: #{hmd_former_forward.1} parent=11 // pred_check_branch
          %401 = sbr.rel (%p399) target = $region56
        $region55: #{hmd_former_forward.1} parent=11 // pred_region
          _
        $region56: #{hmd_former_forward.1} parent=11 // pred_fallthru
          _
        // Predicated region
        $region57: #{hmd_former_forward.1} parent=11 // pred_check
          %p402 = pneg %p302
        $region58: #{hmd_former_forward.1} parent=11 // pred_check_branch
          %404 = sbr.rel (%p402) target = $region60
        $region59: #{hmd_former_forward.1} parent=11 // pred_region
          _
        $region60: #{hmd_former_forward.1} parent=11 // pred_fallthru
          _
      $region12: #{hmd_former_forward.1} parent=5 // pred_fallthru
        _
      %p405 = scmp.lt.s32.totalorder %s24, 2
      // Predicated region
      $region61: #{hmd_former_forward.1} parent=5 // pred_check
        %p406 = pneg %p405
      $region62: #{hmd_former_forward.1} parent=5 // pred_check_branch
        %408 = sbr.rel (%p406) target = $region64
      $region63: #{hmd_former_forward.1} parent=5 // pred_region
        // Predicated region
        $region65: #{hmd_former_forward.1} parent=63 // pred_check
          %p409 = pneg %p44
        $region66: #{hmd_former_forward.1} parent=63 // pred_check_branch
          %411 = sbr.rel (%p409) target = $region68
        $region67: #{hmd_former_forward.1} parent=63 // pred_region
          %p412 = scmp.lt.s32.totalorder %s24, 1
          %s413 = scalar_select %p412, %s24, 1
          %s414 = smul.addr %s413, 7
          %s415 = smul.addr %s414, 8
          %s416 = scalar_lea.vmem %s0, %s415
        $region68: #{hmd_former_forward.1} parent=63 // pred_fallthru
          _
      $region64: #{hmd_former_forward.1} parent=5 // pred_fallthru
        _
      %p417 = scmp.le.s32.totalorder 1, %s24
      %p418 = scmp.lt.s32.totalorder %s24, 3
      %p419 = pnand %p417, %p418
      %p420 = pneg %p419
      // Predicated region
      $region69: #{hmd_former_forward.1} parent=5 // pred_check
        _
      $region70: #{hmd_former_forward.1} parent=5 // pred_check_branch
        %422 = sbr.rel (%p419) target = $region72
      $region71: #{hmd_former_forward.1} parent=5 // pred_region
        %s423 = ssub.s32 %s24, 1
        %p424 = scmp.lt.s32.totalorder %s29, 1
        %s425 = scalar_select %p424, %s29, 1
        %s426 = smul.addr %s425, 7
        %s427 = smul.addr %s426, 8
        %s428 = scalar_lea.vmem %s0, %s427
        %p429 = pneg %p50
        %p430 = pneg %p47
        %p431 = pneg %p71
        %p432 = pneg %p68
        %p433 = pneg %p92
        %p434 = pneg %p89
        %p435 = pneg %p113
        %p436 = pneg %p110
        %p437 = pneg %p134
        %p438 = pneg %p131
        %p439 = pneg %p155
        %p440 = pneg %p152
        %p441 = pneg %p176
        %p442 = pneg %p173
        %p443 = pneg %p197
        %p444 = pneg %p194
        %p445 = pneg %p218
        %p446 = pneg %p215
        %p447 = pneg %p239
        %p448 = pneg %p236
        %p449 = pneg %p260
        %p450 = pneg %p257
        %p451 = pneg %p281
        %p452 = pneg %p278
        %p453 = pneg %p302
        %p454 = pneg %p299
        %p455 = pneg %p328
        %p456 = pneg %p325
        %s457 = sand.u32 %s315, 1
        %s458 = scalar_lea.sflag [#allocation3], %s457
        %s459 = sand.u32 %s315, 1
        %s460 = scalar_lea.vmem [#allocation2], %s459
        %p461 = pneg %p354
        %p462 = pneg %p351
        %p463 = scmp.lt.s32.totalorder %s29, 1
        %s464 = scalar_select %p463, %s29, 1
        %s465 = smul.addr %s464, 54
        %s466 = smul.addr %s465, 8
        %s467 = scalar_lea.vmem %s14, %s466
        %p468 = scmp.lt.s32.totalorder %s29, 1
        %s469 = scalar_select %p468, %s29, 1
        %s470 = smul.addr %s469, 7
        %s471 = smul.addr %s470, 8
        %s472 = scalar_lea.vmem %s0, %s471
        %p473 = scmp.lt.s32.totalorder %s29, 1
        %s474 = scalar_select %p473, %s29, 1
        %s475 = smul.addr %s474, 54
        %s476 = smul.addr %s475, 8
        %s477 = scalar_lea.vmem %s14, %s476
        %v479 = vld [vmem:[%s1] sm:$0xff]
        %v480 = vld [vmem:[%s1 + $0x8] sm:$0xff]
        %v481 = vld [vmem:[%s1 + $0x10] sm:$0xff]
        %v482 = vld [vmem:[%s1 + $0x18] sm:$0xff]
        %v483 = vld [vmem:[%s1 + $0x20] sm:$0xff]
        %v484 = vld [vmem:[%s1 + $0x28] sm:$0xff]
        %v485 = vld [vmem:[%s1 + $0x30] sm:$0xff]
        %v486 = vld [vmem:[%s1 + $0x38] sm:$0xff]
        %v487 = vld [vmem:[%s2] sm:$0xff]
        %v488 = vld [vmem:[%s2 + $0x8] sm:$0xff]
        %v489 = vld [vmem:[%s3] sm:$0xff]
        %v490 = vld [vmem:[%s3 + $0x8] sm:$0xff]
        %v491 = vld [vmem:[%s3 + $0x10] sm:$0xff]
        %v492 = vld [vmem:[%s3 + $0x18] sm:$0xff]
        %v493 = vld [vmem:[%s3 + $0x20] sm:$0xff]
        %v494 = vld [vmem:[%s3 + $0x28] sm:$0xff]
        %v495 = vld [vmem:[%s3 + $0x30] sm:$0x1]
        %v496 = vld [vmem:[%s4] sm:$0xf]
        %v497 = vld [vmem:[%s4 + $0x4] sm:$0xf]
        %v498 = vld [vmem:[%s4 + $0x8] sm:$0xf]
        %v499 = vld [vmem:[%s4 + $0xc] sm:$0xf]
        %v500 = vld [vmem:[%s4 + $0x10] sm:$0xf]
        %v501 = vld [vmem:[%s4 + $0x14] sm:$0xf]
        %v502 = vld [vmem:[%s4 + $0x18] sm:$0xf]
        %v503 = vld [vmem:[%s4 + $0x1c] sm:$0xf]
        %v504 = vld [vmem:[%s4 + $0x20] sm:$0xf]
        %v505 = vld [vmem:[%s4 + $0x24] sm:$0xf]
        %v506 = vld [vmem:[%s4 + $0x28] sm:$0xf]
        %v507 = vld [vmem:[%s4 + $0x2c] sm:$0xf]
        %v508 = vld [vmem:[%s4 + $0x30] sm:$0xf]
        %v509 = vld [vmem:[%s4 + $0x34] sm:$0xf]
        %v510 = vld [vmem:[%s4 + $0x38] sm:$0xf]
        %v511 = vld [vmem:[%s4 + $0x3c] sm:$0xf]
        %v512 = vld [vmem:[%s4 + $0x40] sm:$0xf]
        %v513 = vld [vmem:[%s4 + $0x44] sm:$0xf]
        %v514 = vld [vmem:[%s4 + $0x48] sm:$0xf]
        %v515 = vld [vmem:[%s4 + $0x4c] sm:$0xf]
        %v516 = vld [vmem:[%s4 + $0x50] sm:$0xf]
        %v517 = vld [vmem:[%s4 + $0x54] sm:$0xf]
        %v518 = vld [vmem:[%s4 + $0x58] sm:$0xf]
        %v519 = vld [vmem:[%s4 + $0x5c] sm:$0xf]
        %v520 = vld [vmem:[%s4 + $0x60] sm:$0xf]
        %v521 = vld [vmem:[%s4 + $0x64] sm:$0xf]
        %v522 = vld [vmem:[%s4 + $0x68] sm:$0xf]
        %v523 = vld [vmem:[%s4 + $0x6c] sm:$0xf]
        %v524 = vld [vmem:[%s4 + $0x70] sm:$0xf]
        %v525 = vld [vmem:[%s4 + $0x74] sm:$0xf]
        %v526 = vld [vmem:[%s4 + $0x78] sm:$0xf]
        %v527 = vld [vmem:[%s4 + $0x7c] sm:$0xf]
        %v528 = vld [vmem:[%s4 + $0x80] sm:$0xf]
        %v529 = vld [vmem:[%s4 + $0x84] sm:$0xf]
        %v530 = vld [vmem:[%s4 + $0x88] sm:$0xf]
        %v531 = vld [vmem:[%s4 + $0x8c] sm:$0xf]
        %v532 = vld [vmem:[%s4 + $0x90] sm:$0xf]
        %v533 = vld [vmem:[%s4 + $0x94] sm:$0xf]
        %v534 = vld [vmem:[%s4 + $0x98] sm:$0xf]
        %v535 = vld [vmem:[%s4 + $0x9c] sm:$0xf]
        %v536 = vld [vmem:[%s4 + $0xa0] sm:$0xf]
        %v537 = vld [vmem:[%s4 + $0xa4] sm:$0xf]
        %v538 = vld [vmem:[%s4 + $0xa8] sm:$0xf]
        %v539 = vld [vmem:[%s4 + $0xac] sm:$0xf]
        %v540 = vld [vmem:[%s4 + $0xb0] sm:$0xf]
        %v541 = vld [vmem:[%s4 + $0xb4] sm:$0xf]
        %v542 = vld [vmem:[%s4 + $0xb8] sm:$0xf]
        %v543 = vld [vmem:[%s4 + $0xbc] sm:$0xf]
        %v544 = vld [vmem:[%s4 + $0xc0] sm:$0xf]
        %v545 = vld [vmem:[%s4 + $0xc4] sm:$0xf]
        %v546 = vld [vmem:[%s4 + $0xc8] sm:$0xf]
        %v547 = vld [vmem:[%s4 + $0xcc] sm:$0xf]
        %v548 = vld [vmem:[%s4 + $0xd0] sm:$0xf]
        %v549 = vld [vmem:[%s4 + $0xd4] sm:$0xf]
        %v550 = vld [vmem:[%s4 + $0xd8] sm:$0xf]
        %v551 = vld [vmem:[%s4 + $0xdc] sm:$0xf]
        %v552 = vld [vmem:[%s4 + $0xe0] sm:$0xf]
        %v553 = vld [vmem:[%s4 + $0xe4] sm:$0xf]
        %v554 = vld [vmem:[%s4 + $0xe8] sm:$0xf]
        %v555 = vld [vmem:[%s4 + $0xec] sm:$0xf]
        %v556 = vld [vmem:[%s4 + $0xf0] sm:$0xf]
        %v557 = vld [vmem:[%s4 + $0xf4] sm:$0xf]
        %v558 = vld [vmem:[%s4 + $0xf8] sm:$0xf]
        %v559 = vld [vmem:[%s4 + $0xfc] sm:$0xf]
        %v560 = vld [vmem:[%s4 + $0x100] sm:$0xf]
        %v561 = vld [vmem:[%s4 + $0x104] sm:$0xf]
        %v562 = vld [vmem:[%s4 + $0x108] sm:$0xf]
        %v563 = vld [vmem:[%s4 + $0x10c] sm:$0xf]
        %v564 = vld [vmem:[%s4 + $0x110] sm:$0xf]
        %v565 = vld [vmem:[%s4 + $0x114] sm:$0xf]
        %v566 = vld [vmem:[%s4 + $0x118] sm:$0xf]
        %v567 = vld [vmem:[%s4 + $0x11c] sm:$0xf]
        %v568 = vld [vmem:[%s4 + $0x120] sm:$0xf]
        %v569 = vld [vmem:[%s4 + $0x124] sm:$0xf]
        %v570 = vld [vmem:[%s4 + $0x128] sm:$0xf]
        %v571 = vld [vmem:[%s4 + $0x12c] sm:$0xf]
        %v572 = vld [vmem:[%s4 + $0x130] sm:$0xf]
        %v573 = vld [vmem:[%s4 + $0x134] sm:$0xf]
        %v574 = vld [vmem:[%s4 + $0x138] sm:$0xf]
        %v575 = vld [vmem:[%s4 + $0x13c] sm:$0xf]
        %v576 = vld [vmem:[%s4 + $0x140] sm:$0xf]
        %v577 = vld [vmem:[%s4 + $0x144] sm:$0xf]
        %v578 = vld [vmem:[%s4 + $0x148] sm:$0xf]
        %v579 = vld [vmem:[%s4 + $0x14c] sm:$0xf]
        %v580 = vld [vmem:[%s4 + $0x150] sm:$0xf]
        %v581 = vld [vmem:[%s4 + $0x154] sm:$0xf]
        %v582 = vld [vmem:[%s4 + $0x158] sm:$0xf]
        %v583 = vld [vmem:[%s4 + $0x15c] sm:$0xf]
        %v584 = vld [vmem:[%s4 + $0x160] sm:$0xf]
        %v585 = vld [vmem:[%s4 + $0x164] sm:$0xf]
        %v586 = vld [vmem:[%s4 + $0x168] sm:$0xf]
        %v587 = vld [vmem:[%s4 + $0x16c] sm:$0xf]
        %v588 = vld [vmem:[%s4 + $0x170] sm:$0xf]
        %v589 = vld [vmem:[%s4 + $0x174] sm:$0xf]
        %v590 = vld [vmem:[%s4 + $0x178] sm:$0xf]
        %v591 = vld [vmem:[%s4 + $0x17c] sm:$0xf]
        %v592 = vld [vmem:[%s4 + $0x180] sm:$0xf]
        %v593 = vld [vmem:[%s4 + $0x184] sm:$0xf]
        %v594 = vld [vmem:[%s4 + $0x188] sm:$0xf]
        %v595 = vld [vmem:[%s4 + $0x18c] sm:$0xf]
        %v596 = vld [vmem:[%s4 + $0x190] sm:$0xf]
        %v597 = vld [vmem:[%s4 + $0x194] sm:$0xf]
        %v598 = vld [vmem:[%s4 + $0x198] sm:$0xf]
        %v599 = vld [vmem:[%s4 + $0x19c] sm:$0xf]
        %v600 = vld [vmem:[%s4 + $0x1a0] sm:$0xf]
        %v601 = vld [vmem:[%s4 + $0x1a4] sm:$0xf]
        %v602 = vld [vmem:[%s4 + $0x1a8] sm:$0xf]
        %v603 = vld [vmem:[%s4 + $0x1ac] sm:$0xf]
        %v604 = vld [vmem:[%s4 + $0x1b0] sm:$0xf]
        %v605 = vld [vmem:[%s4 + $0x1b4] sm:$0xf]
        %v606 = vld [vmem:[%s4 + $0x1b8] sm:$0xf]
        %v607 = vld [vmem:[%s4 + $0x1bc] sm:$0xf]
        %v608 = vld [vmem:[%s4 + $0x1c0] sm:$0xf]
        %v609 = vld [vmem:[%s4 + $0x1c4] sm:$0xf]
        %v610 = vld [vmem:[%s4 + $0x1c8] sm:$0xf]
        %v611 = vld [vmem:[%s4 + $0x1cc] sm:$0xf]
        %v612 = vld [vmem:[%s4 + $0x1d0] sm:$0xf]
        %v613 = vld [vmem:[%s4 + $0x1d4] sm:$0xf]
        %v614 = vld [vmem:[%s4 + $0x1d8] sm:$0xf]
        %v615 = vld [vmem:[%s4 + $0x1dc] sm:$0xf]
        %v616 = vld [vmem:[%s4 + $0x1e0] sm:$0xf]
        %v617 = vld [vmem:[%s4 + $0x1e4] sm:$0xf]
        %v618 = vld [vmem:[%s4 + $0x1e8] sm:$0xf]
        %v619 = vld [vmem:[%s4 + $0x1ec] sm:$0xf]
        %v620 = vld [vmem:[%s4 + $0x1f0] sm:$0xf]
        %v621 = vld [vmem:[%s4 + $0x1f4] sm:$0xf]
        %v622 = vld [vmem:[%s4 + $0x1f8] sm:$0xf]
        %v623 = vld [vmem:[%s4 + $0x1fc] sm:$0xf]
        %v624 = vld [vmem:[%s4 + $0x200] sm:$0xf]
        %v625 = vld [vmem:[%s4 + $0x204] sm:$0xf]
        %v626 = vld [vmem:[%s4 + $0x208] sm:$0xf]
        %v627 = vld [vmem:[%s4 + $0x20c] sm:$0xf]
        %v628 = vld [vmem:[%s4 + $0x210] sm:$0xf]
        %v629 = vld [vmem:[%s4 + $0x214] sm:$0xf]
        %v630 = vld [vmem:[%s4 + $0x218] sm:$0xf]
        %v631 = vld [vmem:[%s4 + $0x21c] sm:$0xf]
        %v632 = vld [vmem:[%s4 + $0x220] sm:$0xf]
        %v633 = vld [vmem:[%s4 + $0x224] sm:$0xf]
        %v634 = vld [vmem:[%s4 + $0x228] sm:$0xf]
        %v635 = vld [vmem:[%s4 + $0x22c] sm:$0xf]
        %v636 = vld [vmem:[%s4 + $0x230] sm:$0xf]
        %v637 = vld [vmem:[%s4 + $0x234] sm:$0xf]
        %v638 = vld [vmem:[%s4 + $0x238] sm:$0xf]
        %v639 = vld [vmem:[%s4 + $0x23c] sm:$0xf]
        %v640 = vld [vmem:[%s4 + $0x240] sm:$0xf]
        %v641 = vld [vmem:[%s4 + $0x244] sm:$0xf]
        %v642 = vld [vmem:[%s4 + $0x248] sm:$0xf]
        %v643 = vld [vmem:[%s4 + $0x24c] sm:$0xf]
        %v644 = vld [vmem:[%s4 + $0x250] sm:$0xf]
        %v645 = vld [vmem:[%s4 + $0x254] sm:$0xf]
        %v646 = vld [vmem:[%s4 + $0x258] sm:$0xf]
        %v647 = vld [vmem:[%s4 + $0x25c] sm:$0xf]
        %v648 = vld [vmem:[%s4 + $0x260] sm:$0xf]
        %v649 = vld [vmem:[%s4 + $0x264] sm:$0xf]
        %v650 = vld [vmem:[%s4 + $0x268] sm:$0xf]
        %v651 = vld [vmem:[%s4 + $0x26c] sm:$0xf]
        %v652 = vld [vmem:[%s4 + $0x270] sm:$0xf]
        %v653 = vld [vmem:[%s4 + $0x274] sm:$0xf]
        %v654 = vld [vmem:[%s4 + $0x278] sm:$0xf]
        %v655 = vld [vmem:[%s4 + $0x27c] sm:$0xf]
        %v656 = vld [vmem:[%s4 + $0x280] sm:$0xf]
        %v657 = vld [vmem:[%s4 + $0x284] sm:$0xf]
        %v658 = vld [vmem:[%s4 + $0x288] sm:$0xf]
        %v659 = vld [vmem:[%s4 + $0x28c] sm:$0xf]
        %v660 = vld [vmem:[%s4 + $0x290] sm:$0xf]
        %v661 = vld [vmem:[%s4 + $0x294] sm:$0xf]
        %v662 = vld [vmem:[%s4 + $0x298] sm:$0xf]
        %v663 = vld [vmem:[%s4 + $0x29c] sm:$0xf]
        %v664 = vld [vmem:[%s4 + $0x2a0] sm:$0xf]
        %v665 = vld [vmem:[%s4 + $0x2a4] sm:$0xf]
        %v666 = vld [vmem:[%s4 + $0x2a8] sm:$0xf]
        %v667 = vld [vmem:[%s4 + $0x2ac] sm:$0xf]
        %v668 = vld [vmem:[%s4 + $0x2b0] sm:$0xf]
        %v669 = vld [vmem:[%s4 + $0x2b4] sm:$0xf]
        %v670 = vld [vmem:[%s4 + $0x2b8] sm:$0xf]
        %v671 = vld [vmem:[%s4 + $0x2bc] sm:$0xf]
        %v672 = vld [vmem:[%s4 + $0x2c0] sm:$0xf]
        %v673 = vld [vmem:[%s4 + $0x2c4] sm:$0xf]
        %v674 = vld [vmem:[%s4 + $0x2c8] sm:$0xf]
        %v675 = vld [vmem:[%s4 + $0x2cc] sm:$0xf]
        %v676 = vld [vmem:[%s4 + $0x2d0] sm:$0xf]
        %v677 = vld [vmem:[%s4 + $0x2d4] sm:$0xf]
        %v678 = vld [vmem:[%s4 + $0x2d8] sm:$0xf]
        %v679 = vld [vmem:[%s4 + $0x2dc] sm:$0xf]
        %v680 = vld [vmem:[%s4 + $0x2e0] sm:$0xf]
        %v681 = vld [vmem:[%s4 + $0x2e4] sm:$0xf]
        %v682 = vld [vmem:[%s4 + $0x2e8] sm:$0xf]
        %v683 = vld [vmem:[%s4 + $0x2ec] sm:$0xf]
        %v684 = vld [vmem:[%s4 + $0x2f0] sm:$0xf]
        %v685 = vld [vmem:[%s4 + $0x2f4] sm:$0xf]
        %v686 = vld [vmem:[%s4 + $0x2f8] sm:$0xf]
        %v687 = vld [vmem:[%s4 + $0x2fc] sm:$0xf]
        %v688 = vld [vmem:[%s4 + $0x300] sm:$0xf]
        %v689 = vld [vmem:[%s4 + $0x304] sm:$0xf]
        %v690 = vld [vmem:[%s4 + $0x308] sm:$0xf]
        %v691 = vld [vmem:[%s4 + $0x30c] sm:$0xf]
        %v692 = vld [vmem:[%s4 + $0x310] sm:$0xf]
        %v693 = vld [vmem:[%s4 + $0x314] sm:$0xf]
        %v694 = vld [vmem:[%s4 + $0x318] sm:$0xf]
        %v695 = vld [vmem:[%s4 + $0x31c] sm:$0xf]
        %v696 = vld [vmem:[%s4 + $0x320] sm:$0xf]
        %v697 = vld [vmem:[%s4 + $0x324] sm:$0xf]
        %v698 = vld [vmem:[%s4 + $0x328] sm:$0xf]
        %v699 = vld [vmem:[%s4 + $0x32c] sm:$0xf]
        %v700 = vld [vmem:[%s4 + $0x330] sm:$0xf]
        %v701 = vld [vmem:[%s4 + $0x334] sm:$0xf]
        %v702 = vld [vmem:[%s4 + $0x338] sm:$0xf]
        %v703 = vld [vmem:[%s4 + $0x33c] sm:$0xf]
        %v704 = vld [vmem:[%s4 + $0x340] sm:$0xf]
        %v705 = vld [vmem:[%s4 + $0x344] sm:$0xf]
        %v706 = vld [vmem:[%s4 + $0x348] sm:$0xf]
        %v707 = vld [vmem:[%s4 + $0x34c] sm:$0xf]
        %v708 = vld [vmem:[%s4 + $0x350] sm:$0xf]
        %v709 = vld [vmem:[%s4 + $0x354] sm:$0xf]
        %v710 = vld [vmem:[%s4 + $0x358] sm:$0xf]
        %v711 = vld [vmem:[%s4 + $0x35c] sm:$0xf]
        %v712 = vld [vmem:[%s4 + $0x360] sm:$0xf]
        %v713 = vld [vmem:[%s4 + $0x364] sm:$0xf]
        %v714 = vld [vmem:[%s4 + $0x368] sm:$0xf]
        %v715 = vld [vmem:[%s4 + $0x36c] sm:$0xf]
        %v716 = vld [vmem:[%s4 + $0x370] sm:$0xf]
        %v717 = vld [vmem:[%s4 + $0x374] sm:$0xf]
        %v718 = vld [vmem:[%s4 + $0x378] sm:$0xf]
        %v719 = vld [vmem:[%s4 + $0x37c] sm:$0xf]
        %v720 = vld [vmem:[%s4 + $0x380] sm:$0xf]
        %v721 = vld [vmem:[%s4 + $0x384] sm:$0xf]
        %v722 = vld [vmem:[%s4 + $0x388] sm:$0xf]
        %v723 = vld [vmem:[%s4 + $0x38c] sm:$0xf]
        %v724 = vld [vmem:[%s4 + $0x390] sm:$0xf]
        %v725 = vld [vmem:[%s4 + $0x394] sm:$0xf]
        %v726 = vld [vmem:[%s4 + $0x398] sm:$0xf]
        %v727 = vld [vmem:[%s4 + $0x39c] sm:$0xf]
        %v728 = vld [vmem:[%s4 + $0x3a0] sm:$0xf]
        %v729 = vld [vmem:[%s4 + $0x3a4] sm:$0xf]
        %v730 = vld [vmem:[%s4 + $0x3a8] sm:$0xf]
        %v731 = vld [vmem:[%s4 + $0x3ac] sm:$0xf]
        %v732 = vld [vmem:[%s4 + $0x3b0] sm:$0xf]
        %v733 = vld [vmem:[%s4 + $0x3b4] sm:$0xf]
        %v734 = vld [vmem:[%s4 + $0x3b8] sm:$0xf]
        %v735 = vld [vmem:[%s4 + $0x3bc] sm:$0xf]
        %v736 = vld [vmem:[%s4 + $0x3c0] sm:$0xf]
        %v737 = vld [vmem:[%s4 + $0x3c4] sm:$0xf]
        %v738 = vld [vmem:[%s4 + $0x3c8] sm:$0xf]
        %v739 = vld [vmem:[%s4 + $0x3cc] sm:$0xf]
        %v740 = vld [vmem:[%s4 + $0x3d0] sm:$0xf]
        %v741 = vld [vmem:[%s4 + $0x3d4] sm:$0xf]
        %v742 = vld [vmem:[%s4 + $0x3d8] sm:$0xf]
        %v743 = vld [vmem:[%s4 + $0x3dc] sm:$0xf]
        %v744 = vld [vmem:[%s4 + $0x3e0] sm:$0xf]
        %v745 = vld [vmem:[%s4 + $0x3e4] sm:$0xf]
        %v746 = vld [vmem:[%s4 + $0x3e8] sm:$0xf]
        %v747 = vld [vmem:[%s4 + $0x3ec] sm:$0xf]
        %v748 = vld [vmem:[%s4 + $0x3f0] sm:$0xf]
        %v749 = vld [vmem:[%s4 + $0x3f4] sm:$0xf]
        %v750 = vld [vmem:[%s4 + $0x3f8] sm:$0xf]
        %v751 = vld [vmem:[%s4 + $0x3fc] sm:$0xf]
        %v752 = vld [vmem:[%s5] sm:$0x1]
        %v753 = vld [vmem:[%s6] sm:$0xff]
        %v754 = vld [vmem:[%s6 + $0x8] sm:$0xff]
        %v755 = vld [vmem:[%s6 + $0x10] sm:$0xff]
        %v756 = vld [vmem:[%s6 + $0x18] sm:$0xff]
        %v757 = vld [vmem:[%s6 + $0x20] sm:$0xff]
        %v758 = vld [vmem:[%s6 + $0x28] sm:$0xff]
        %v759 = vld [vmem:[%s6 + $0x30] sm:$0xff]
        %v760 = vld [vmem:[%s6 + $0x38] sm:$0xff]
        %v761 = vld [vmem:[%s7] sm:$0x1]
        %v762 = vld [vmem:[%s8] sm:$0xf]
        %v763 = vld [vmem:[%s8 + $0x4] sm:$0xf]
        %v764 = vld [vmem:[%s8 + $0x8] sm:$0xf]
        %v765 = vld [vmem:[%s8 + $0xc] sm:$0xf]
        %v766 = vld [vmem:[%s8 + $0x10] sm:$0xf]
        %v767 = vld [vmem:[%s8 + $0x14] sm:$0xf]
        %v768 = vld [vmem:[%s8 + $0x18] sm:$0xf]
        %v769 = vld [vmem:[%s8 + $0x1c] sm:$0xf]
        %v770 = vld [vmem:[%s8 + $0x20] sm:$0xf]
        %v771 = vld [vmem:[%s8 + $0x24] sm:$0xf]
        %v772 = vld [vmem:[%s8 + $0x28] sm:$0xf]
        %v773 = vld [vmem:[%s8 + $0x2c] sm:$0xf]
        %v774 = vld [vmem:[%s8 + $0x30] sm:$0xf]
        %v775 = vld [vmem:[%s8 + $0x34] sm:$0xf]
        %v776 = vld [vmem:[%s8 + $0x38] sm:$0xf]
        %v777 = vld [vmem:[%s8 + $0x3c] sm:$0xf]
        %v778 = vld [vmem:[%s8 + $0x40] sm:$0xf]
        %v779 = vld [vmem:[%s8 + $0x44] sm:$0xf]
        %v780 = vld [vmem:[%s8 + $0x48] sm:$0xf]
        %v781 = vld [vmem:[%s8 + $0x4c] sm:$0xf]
        %v782 = vld [vmem:[%s8 + $0x50] sm:$0xf]
        %v783 = vld [vmem:[%s8 + $0x54] sm:$0xf]
        %v784 = vld [vmem:[%s8 + $0x58] sm:$0xf]
        %v785 = vld [vmem:[%s8 + $0x5c] sm:$0xf]
        %v786 = vld [vmem:[%s8 + $0x60] sm:$0xf]
        %v787 = vld [vmem:[%s8 + $0x64] sm:$0xf]
        %v788 = vld [vmem:[%s8 + $0x68] sm:$0xf]
        %v789 = vld [vmem:[%s8 + $0x6c] sm:$0xf]
        %v790 = vld [vmem:[%s8 + $0x70] sm:$0xf]
        %v791 = vld [vmem:[%s8 + $0x74] sm:$0xf]
        %v792 = vld [vmem:[%s8 + $0x78] sm:$0xf]
        %v793 = vld [vmem:[%s8 + $0x7c] sm:$0xf]
        %v794 = vld [vmem:[%s8 + $0x80] sm:$0xf]
        %v795 = vld [vmem:[%s8 + $0x84] sm:$0xf]
        %v796 = vld [vmem:[%s8 + $0x88] sm:$0xf]
        %v797 = vld [vmem:[%s8 + $0x8c] sm:$0xf]
        %v798 = vld [vmem:[%s8 + $0x90] sm:$0xf]
        %v799 = vld [vmem:[%s8 + $0x94] sm:$0xf]
        %v800 = vld [vmem:[%s8 + $0x98] sm:$0xf]
        %v801 = vld [vmem:[%s8 + $0x9c] sm:$0xf]
        %v802 = vld [vmem:[%s8 + $0xa0] sm:$0xf]
        %v803 = vld [vmem:[%s8 + $0xa4] sm:$0xf]
        %v804 = vld [vmem:[%s8 + $0xa8] sm:$0xf]
        %v805 = vld [vmem:[%s8 + $0xac] sm:$0xf]
        %v806 = vld [vmem:[%s8 + $0xb0] sm:$0xf]
        %v807 = vld [vmem:[%s8 + $0xb4] sm:$0xf]
        %v808 = vld [vmem:[%s8 + $0xb8] sm:$0xf]
        %v809 = vld [vmem:[%s8 + $0xbc] sm:$0xf]
        %v810 = vld [vmem:[%s8 + $0xc0] sm:$0xf]
        %v811 = vld [vmem:[%s8 + $0xc4] sm:$0xf]
        %v812 = vld [vmem:[%s8 + $0xc8] sm:$0xf]
        %v813 = vld [vmem:[%s8 + $0xcc] sm:$0xf]
        %v814 = vld [vmem:[%s8 + $0xd0] sm:$0xf]
        %v815 = vld [vmem:[%s8 + $0xd4] sm:$0xf]
        %v816 = vld [vmem:[%s9] sm:$0xff]
        %v817 = vld [vmem:[%s9 + $0x8] sm:$0xff]
        %v818 = vld [vmem:[%s9 + $0x10] sm:$0xff]
        %v819 = vld [vmem:[%s9 + $0x18] sm:$0xff]
        %v820 = vld [vmem:[%s9 + $0x20] sm:$0xff]
        %v821 = vld [vmem:[%s9 + $0x28] sm:$0xff]
        %v822 = vld [vmem:[%s9 + $0x30] sm:$0xff]
        %v823 = vld [vmem:[%s9 + $0x38] sm:$0xff]
        %v824 = vld [vmem:[%s9 + $0x40] sm:$0xff]
        %v825 = vld [vmem:[%s9 + $0x48] sm:$0xff]
        %v826 = vld [vmem:[%s9 + $0x50] sm:$0xff]
        %v827 = vld [vmem:[%s9 + $0x58] sm:$0xff]
        %v828 = vld [vmem:[%s9 + $0x60] sm:$0xff]
        %v829 = vld [vmem:[%s9 + $0x68] sm:$0xff]
        %v830 = vld [vmem:[%s9 + $0x70] sm:$0xff]
        %v831 = vld [vmem:[%s9 + $0x78] sm:$0xff]
        %v832 = vld [vmem:[%s9 + $0x80] sm:$0xff]
        %v833 = vld [vmem:[%s9 + $0x88] sm:$0xff]
        %v834 = vld [vmem:[%s9 + $0x90] sm:$0xff]
        %v835 = vld [vmem:[%s9 + $0x98] sm:$0xff]
        %v836 = vld [vmem:[%s9 + $0xa0] sm:$0xff]
        %v837 = vld [vmem:[%s9 + $0xa8] sm:$0xff]
        %v838 = vld [vmem:[%s9 + $0xb0] sm:$0xff]
        %v839 = vld [vmem:[%s9 + $0xb8] sm:$0xff]
        %v840 = vld [vmem:[%s9 + $0xc0] sm:$0xff]
        %v841 = vld [vmem:[%s9 + $0xc8] sm:$0xff]
        %v842 = vld [vmem:[%s9 + $0xd0] sm:$0xff]
        %v843 = vld [vmem:[%s9 + $0xd8] sm:$0xff]
        %v844 = vld [vmem:[%s9 + $0xe0] sm:$0xff]
        %v845 = vld [vmem:[%s9 + $0xe8] sm:$0xff]
        %v846 = vld [vmem:[%s9 + $0xf0] sm:$0xff]
        %v847 = vld [vmem:[%s9 + $0xf8] sm:$0xff]
        %v848 = vld [vmem:[%s9 + $0x100] sm:$0xff]
        %v849 = vld [vmem:[%s9 + $0x108] sm:$0xff]
        %v850 = vld [vmem:[%s9 + $0x110] sm:$0xff]
        %v851 = vld [vmem:[%s9 + $0x118] sm:$0xff]
        %v852 = vld [vmem:[%s9 + $0x120] sm:$0xff]
        %v853 = vld [vmem:[%s9 + $0x128] sm:$0xff]
        %v854 = vld [vmem:[%s9 + $0x130] sm:$0xff]
        %v855 = vld [vmem:[%s9 + $0x138] sm:$0xff]
        %v856 = vld [vmem:[%s9 + $0x140] sm:$0xff]
        %v857 = vld [vmem:[%s9 + $0x148] sm:$0xff]
        %v858 = vld [vmem:[%s9 + $0x150] sm:$0xff]
        %v859 = vld [vmem:[%s9 + $0x158] sm:$0xff]
        %v860 = vld [vmem:[%s9 + $0x160] sm:$0xff]
        %v861 = vld [vmem:[%s9 + $0x168] sm:$0xff]
        %v862 = vld [vmem:[%s9 + $0x170] sm:$0xff]
        %v863 = vld [vmem:[%s9 + $0x178] sm:$0xff]
        %v864 = vld [vmem:[%s9 + $0x180] sm:$0xff]
        %v865 = vld [vmem:[%s9 + $0x188] sm:$0xff]
        %v866 = vld [vmem:[%s9 + $0x190] sm:$0xff]
        %v867 = vld [vmem:[%s9 + $0x198] sm:$0xff]
        %v868 = vld [vmem:[%s9 + $0x1a0] sm:$0xff]
        %v869 = vld [vmem:[%s9 + $0x1a8] sm:$0xff]
        %v870 = vld [vmem:[%s9 + $0x1b0] sm:$0xff]
        %v871 = vld [vmem:[%s9 + $0x1b8] sm:$0xff]
        %v872 = vld [vmem:[%s9 + $0x1c0] sm:$0xff]
        %v873 = vld [vmem:[%s9 + $0x1c8] sm:$0xff]
        %v874 = vld [vmem:[%s9 + $0x1d0] sm:$0xff]
        %v875 = vld [vmem:[%s9 + $0x1d8] sm:$0xff]
        %v876 = vld [vmem:[%s9 + $0x1e0] sm:$0xff]
        %v877 = vld [vmem:[%s9 + $0x1e8] sm:$0xff]
        %v878 = vld [vmem:[%s9 + $0x1f0] sm:$0xff]
        %v879 = vld [vmem:[%s9 + $0x1f8] sm:$0xff]
        %v880 = vld [vmem:[%s9 + $0x200] sm:$0xff]
        %v881 = vld [vmem:[%s9 + $0x208] sm:$0xff]
        %v882 = vld [vmem:[%s9 + $0x210] sm:$0xff]
        %v883 = vld [vmem:[%s9 + $0x218] sm:$0xff]
        %v884 = vld [vmem:[%s9 + $0x220] sm:$0xff]
        %v885 = vld [vmem:[%s9 + $0x228] sm:$0xff]
        %v886 = vld [vmem:[%s9 + $0x230] sm:$0xff]
        %v887 = vld [vmem:[%s9 + $0x238] sm:$0xff]
        %v888 = vld [vmem:[%s9 + $0x240] sm:$0xff]
        %v889 = vld [vmem:[%s9 + $0x248] sm:$0xff]
        %v890 = vld [vmem:[%s9 + $0x250] sm:$0xff]
        %v891 = vld [vmem:[%s9 + $0x258] sm:$0xff]
        %v892 = vld [vmem:[%s9 + $0x260] sm:$0xff]
        %v893 = vld [vmem:[%s9 + $0x268] sm:$0xff]
        %v894 = vld [vmem:[%s9 + $0x270] sm:$0xff]
        %v895 = vld [vmem:[%s9 + $0x278] sm:$0xff]
        %v896 = vld [vmem:[%s9 + $0x280] sm:$0xff]
        %v897 = vld [vmem:[%s9 + $0x288] sm:$0xff]
        %v898 = vld [vmem:[%s9 + $0x290] sm:$0xff]
        %v899 = vld [vmem:[%s9 + $0x298] sm:$0xff]
        %v900 = vld [vmem:[%s9 + $0x2a0] sm:$0xff]
        %v901 = vld [vmem:[%s9 + $0x2a8] sm:$0xff]
        %v902 = vld [vmem:[%s9 + $0x2b0] sm:$0xff]
        %v903 = vld [vmem:[%s9 + $0x2b8] sm:$0xff]
        %v904 = vld [vmem:[%s9 + $0x2c0] sm:$0xff]
        %v905 = vld [vmem:[%s9 + $0x2c8] sm:$0xff]
        %v906 = vld [vmem:[%s9 + $0x2d0] sm:$0xff]
        %v907 = vld [vmem:[%s9 + $0x2d8] sm:$0xff]
        %v908 = vld [vmem:[%s9 + $0x2e0] sm:$0xff]
        %v909 = vld [vmem:[%s9 + $0x2e8] sm:$0xff]
        %v910 = vld [vmem:[%s9 + $0x2f0] sm:$0xff]
        %v911 = vld [vmem:[%s9 + $0x2f8] sm:$0xff]
        %v912 = vld [vmem:[%s9 + $0x300] sm:$0xff]
        %v913 = vld [vmem:[%s9 + $0x308] sm:$0xff]
        %v914 = vld [vmem:[%s9 + $0x310] sm:$0xff]
        %v915 = vld [vmem:[%s9 + $0x318] sm:$0xff]
        %v916 = vld [vmem:[%s9 + $0x320] sm:$0xff]
        %v917 = vld [vmem:[%s9 + $0x328] sm:$0xff]
        %v918 = vld [vmem:[%s9 + $0x330] sm:$0xff]
        %v919 = vld [vmem:[%s9 + $0x338] sm:$0xff]
        %v920 = vld [vmem:[%s9 + $0x340] sm:$0xff]
        %v921 = vld [vmem:[%s9 + $0x348] sm:$0xff]
        %v922 = vld [vmem:[%s9 + $0x350] sm:$0xff]
        %v923 = vld [vmem:[%s9 + $0x358] sm:$0xff]
        %v924 = vld [vmem:[%s9 + $0x360] sm:$0xff]
        %v925 = vld [vmem:[%s9 + $0x368] sm:$0xff]
        %v926 = vld [vmem:[%s9 + $0x370] sm:$0xff]
        %v927 = vld [vmem:[%s9 + $0x378] sm:$0xff]
        %v928 = vld [vmem:[%s9 + $0x380] sm:$0xff]
        %v929 = vld [vmem:[%s9 + $0x388] sm:$0xff]
        %v930 = vld [vmem:[%s9 + $0x390] sm:$0xff]
        %v931 = vld [vmem:[%s9 + $0x398] sm:$0xff]
        %v932 = vld [vmem:[%s9 + $0x3a0] sm:$0xff]
        %v933 = vld [vmem:[%s9 + $0x3a8] sm:$0xff]
        %v934 = vld [vmem:[%s9 + $0x3b0] sm:$0xff]
        %v935 = vld [vmem:[%s9 + $0x3b8] sm:$0xff]
        %v936 = vld [vmem:[%s9 + $0x3c0] sm:$0xff]
        %v937 = vld [vmem:[%s9 + $0x3c8] sm:$0xff]
        %v938 = vld [vmem:[%s9 + $0x3d0] sm:$0xff]
        %v939 = vld [vmem:[%s9 + $0x3d8] sm:$0xff]
        %v940 = vld [vmem:[%s9 + $0x3e0] sm:$0xff]
        %v941 = vld [vmem:[%s9 + $0x3e8] sm:$0xff]
        %v942 = vld [vmem:[%s9 + $0x3f0] sm:$0xff]
        %v943 = vld [vmem:[%s9 + $0x3f8] sm:$0xff]
        %v944 = vld [vmem:[%s9 + $0x400] sm:$0xff]
        %v945 = vld [vmem:[%s9 + $0x408] sm:$0xff]
        %v946 = vld [vmem:[%s9 + $0x410] sm:$0xff]
        %v947 = vld [vmem:[%s9 + $0x418] sm:$0xff]
        %v948 = vld [vmem:[%s9 + $0x420] sm:$0xff]
        %v949 = vld [vmem:[%s9 + $0x428] sm:$0xff]
        %v950 = vld [vmem:[%s9 + $0x430] sm:$0xff]
        %v951 = vld [vmem:[%s9 + $0x438] sm:$0xff]
        %v952 = vld [vmem:[%s9 + $0x440] sm:$0xff]
        %v953 = vld [vmem:[%s9 + $0x448] sm:$0xff]
        %v954 = vld [vmem:[%s9 + $0x450] sm:$0xff]
        %v955 = vld [vmem:[%s9 + $0x458] sm:$0xff]
        %v956 = vld [vmem:[%s9 + $0x460] sm:$0xff]
        %v957 = vld [vmem:[%s9 + $0x468] sm:$0xff]
        %v958 = vld [vmem:[%s9 + $0x470] sm:$0xff]
        %v959 = vld [vmem:[%s9 + $0x478] sm:$0xff]
        %v960 = vld [vmem:[%s9 + $0x480] sm:$0xff]
        %v961 = vld [vmem:[%s9 + $0x488] sm:$0xff]
        %v962 = vld [vmem:[%s9 + $0x490] sm:$0xff]
        %v963 = vld [vmem:[%s9 + $0x498] sm:$0xff]
        %v964 = vld [vmem:[%s9 + $0x4a0] sm:$0xff]
        %v965 = vld [vmem:[%s9 + $0x4a8] sm:$0xff]
        %v966 = vld [vmem:[%s9 + $0x4b0] sm:$0xff]
        %v967 = vld [vmem:[%s9 + $0x4b8] sm:$0xff]
        %v968 = vld [vmem:[%s9 + $0x4c0] sm:$0xff]
        %v969 = vld [vmem:[%s9 + $0x4c8] sm:$0xff]
        %v970 = vld [vmem:[%s9 + $0x4d0] sm:$0xff]
        %v971 = vld [vmem:[%s9 + $0x4d8] sm:$0xff]
        %v972 = vld [vmem:[%s9 + $0x4e0] sm:$0xff]
        %v973 = vld [vmem:[%s9 + $0x4e8] sm:$0xff]
        %v974 = vld [vmem:[%s9 + $0x4f0] sm:$0xff]
        %v975 = vld [vmem:[%s9 + $0x4f8] sm:$0xff]
        %v976 = vld [vmem:[%s9 + $0x500] sm:$0xff]
        %v977 = vld [vmem:[%s9 + $0x508] sm:$0xff]
        %v978 = vld [vmem:[%s9 + $0x510] sm:$0xff]
        %v979 = vld [vmem:[%s9 + $0x518] sm:$0xff]
        %v980 = vld [vmem:[%s9 + $0x520] sm:$0xff]
        %v981 = vld [vmem:[%s9 + $0x528] sm:$0xff]
        %v982 = vld [vmem:[%s9 + $0x530] sm:$0xff]
        %v983 = vld [vmem:[%s9 + $0x538] sm:$0xff]
        %v984 = vld [vmem:[%s9 + $0x540] sm:$0xff]
        %v985 = vld [vmem:[%s9 + $0x548] sm:$0xff]
        %v986 = vld [vmem:[%s9 + $0x550] sm:$0xff]
        %v987 = vld [vmem:[%s9 + $0x558] sm:$0xff]
        %v988 = vld [vmem:[%s9 + $0x560] sm:$0xff]
        %v989 = vld [vmem:[%s9 + $0x568] sm:$0xff]
        %v990 = vld [vmem:[%s9 + $0x570] sm:$0xff]
        %v991 = vld [vmem:[%s9 + $0x578] sm:$0xff]
        %v992 = vld [vmem:[%s9 + $0x580] sm:$0xff]
        %v993 = vld [vmem:[%s9 + $0x588] sm:$0xff]
        %v994 = vld [vmem:[%s9 + $0x590] sm:$0xff]
        %v995 = vld [vmem:[%s9 + $0x598] sm:$0xff]
        %v996 = vld [vmem:[%s9 + $0x5a0] sm:$0xff]
        %v997 = vld [vmem:[%s9 + $0x5a8] sm:$0xff]
        %v998 = vld [vmem:[%s9 + $0x5b0] sm:$0xff]
        %v999 = vld [vmem:[%s9 + $0x5b8] sm:$0xff]
        %v1000 = vld [vmem:[%s9 + $0x5c0] sm:$0xff]
        %v1001 = vld [vmem:[%s9 + $0x5c8] sm:$0xff]
        %v1002 = vld [vmem:[%s9 + $0x5d0] sm:$0xff]
        %v1003 = vld [vmem:[%s9 + $0x5d8] sm:$0xff]
        %v1004 = vld [vmem:[%s9 + $0x5e0] sm:$0xff]
        %v1005 = vld [vmem:[%s9 + $0x5e8] sm:$0xff]
        %v1006 = vld [vmem:[%s9 + $0x5f0] sm:$0xff]
        %v1007 = vld [vmem:[%s9 + $0x5f8] sm:$0xff]
        %v1008 = vld [vmem:[%s9 + $0x600] sm:$0xff]
        %v1009 = vld [vmem:[%s9 + $0x608] sm:$0xff]
        %v1010 = vld [vmem:[%s9 + $0x610] sm:$0xff]
        %v1011 = vld [vmem:[%s9 + $0x618] sm:$0xff]
        %v1012 = vld [vmem:[%s9 + $0x620] sm:$0xff]
        %v1013 = vld [vmem:[%s9 + $0x628] sm:$0xff]
        %v1014 = vld [vmem:[%s9 + $0x630] sm:$0xff]
        %v1015 = vld [vmem:[%s9 + $0x638] sm:$0xff]
        %v1016 = vld [vmem:[%s9 + $0x640] sm:$0xff]
        %v1017 = vld [vmem:[%s9 + $0x648] sm:$0xff]
        %v1018 = vld [vmem:[%s9 + $0x650] sm:$0xff]
        %v1019 = vld [vmem:[%s9 + $0x658] sm:$0xff]
        %v1020 = vld [vmem:[%s9 + $0x660] sm:$0xff]
        %v1021 = vld [vmem:[%s9 + $0x668] sm:$0xff]
        %v1022 = vld [vmem:[%s9 + $0x670] sm:$0xff]
        %v1023 = vld [vmem:[%s9 + $0x678] sm:$0xff]
        %v1024 = vld [vmem:[%s9 + $0x680] sm:$0xff]
        %v1025 = vld [vmem:[%s9 + $0x688] sm:$0xff]
        %v1026 = vld [vmem:[%s9 + $0x690] sm:$0xff]
        %v1027 = vld [vmem:[%s9 + $0x698] sm:$0xff]
        %v1028 = vld [vmem:[%s9 + $0x6a0] sm:$0xff]
        %v1029 = vld [vmem:[%s9 + $0x6a8] sm:$0xff]
        %v1030 = vld [vmem:[%s9 + $0x6b0] sm:$0xff]
        %v1031 = vld [vmem:[%s9 + $0x6b8] sm:$0xff]
        %v1032 = vld [vmem:[%s9 + $0x6c0] sm:$0xff]
        %v1033 = vld [vmem:[%s9 + $0x6c8] sm:$0xff]
        %v1034 = vld [vmem:[%s9 + $0x6d0] sm:$0xff]
        %v1035 = vld [vmem:[%s9 + $0x6d8] sm:$0xff]
        %v1036 = vld [vmem:[%s9 + $0x6e0] sm:$0xff]
        %v1037 = vld [vmem:[%s9 + $0x6e8] sm:$0xff]
        %v1038 = vld [vmem:[%s9 + $0x6f0] sm:$0xff]
        %v1039 = vld [vmem:[%s9 + $0x6f8] sm:$0xff]
        %v1040 = vld [vmem:[%s9 + $0x700] sm:$0xff]
        %v1041 = vld [vmem:[%s9 + $0x708] sm:$0xff]
        %v1042 = vld [vmem:[%s9 + $0x710] sm:$0xff]
        %v1043 = vld [vmem:[%s9 + $0x718] sm:$0xff]
        %v1044 = vld [vmem:[%s9 + $0x720] sm:$0xff]
        %v1045 = vld [vmem:[%s9 + $0x728] sm:$0xff]
        %v1046 = vld [vmem:[%s9 + $0x730] sm:$0xff]
        %v1047 = vld [vmem:[%s9 + $0x738] sm:$0xff]
        %v1048 = vld [vmem:[%s9 + $0x740] sm:$0xff]
        %v1049 = vld [vmem:[%s9 + $0x748] sm:$0xff]
        %v1050 = vld [vmem:[%s9 + $0x750] sm:$0xff]
        %v1051 = vld [vmem:[%s9 + $0x758] sm:$0xff]
        %v1052 = vld [vmem:[%s9 + $0x760] sm:$0xff]
        %v1053 = vld [vmem:[%s9 + $0x768] sm:$0xff]
        %v1054 = vld [vmem:[%s9 + $0x770] sm:$0xff]
        %v1055 = vld [vmem:[%s9 + $0x778] sm:$0xff]
        %v1056 = vld [vmem:[%s9 + $0x780] sm:$0xff]
        %v1057 = vld [vmem:[%s9 + $0x788] sm:$0xff]
        %v1058 = vld [vmem:[%s9 + $0x790] sm:$0xff]
        %v1059 = vld [vmem:[%s9 + $0x798] sm:$0xff]
        %v1060 = vld [vmem:[%s9 + $0x7a0] sm:$0xff]
        %v1061 = vld [vmem:[%s9 + $0x7a8] sm:$0xff]
        %v1062 = vld [vmem:[%s9 + $0x7b0] sm:$0xff]
        %v1063 = vld [vmem:[%s9 + $0x7b8] sm:$0xff]
        %v1064 = vld [vmem:[%s9 + $0x7c0] sm:$0xff]
        %v1065 = vld [vmem:[%s9 + $0x7c8] sm:$0xff]
        %v1066 = vld [vmem:[%s9 + $0x7d0] sm:$0xff]
        %v1067 = vld [vmem:[%s9 + $0x7d8] sm:$0xff]
        %v1068 = vld [vmem:[%s9 + $0x7e0] sm:$0xff]
        %v1069 = vld [vmem:[%s9 + $0x7e8] sm:$0xff]
        %v1070 = vld [vmem:[%s9 + $0x7f0] sm:$0xff]
        %v1071 = vld [vmem:[%s9 + $0x7f8] sm:$0xff]
        %v1072 = vld [vmem:[%s9 + $0x800] sm:$0xff]
        %v1073 = vld [vmem:[%s9 + $0x808] sm:$0xff]
        %v1074 = vld [vmem:[%s9 + $0x810] sm:$0xff]
        %v1075 = vld [vmem:[%s9 + $0x818] sm:$0xff]
        %v1076 = vld [vmem:[%s9 + $0x820] sm:$0xff]
        %v1077 = vld [vmem:[%s9 + $0x828] sm:$0xff]
        %v1078 = vld [vmem:[%s9 + $0x830] sm:$0xff]
        %v1079 = vld [vmem:[%s9 + $0x838] sm:$0xff]
        %v1080 = vld [vmem:[%s9 + $0x840] sm:$0xff]
        %v1081 = vld [vmem:[%s9 + $0x848] sm:$0xff]
        %v1082 = vld [vmem:[%s9 + $0x850] sm:$0xff]
        %v1083 = vld [vmem:[%s9 + $0x858] sm:$0xff]
        %v1084 = vld [vmem:[%s9 + $0x860] sm:$0xff]
        %v1085 = vld [vmem:[%s9 + $0x868] sm:$0xff]
        %v1086 = vld [vmem:[%s9 + $0x870] sm:$0xff]
        %v1087 = vld [vmem:[%s9 + $0x878] sm:$0xff]
        %v1088 = vld [vmem:[%s9 + $0x880] sm:$0xff]
        %v1089 = vld [vmem:[%s9 + $0x888] sm:$0xff]
        %v1090 = vld [vmem:[%s9 + $0x890] sm:$0xff]
        %v1091 = vld [vmem:[%s9 + $0x898] sm:$0xff]
        %v1092 = vld [vmem:[%s9 + $0x8a0] sm:$0xff]
        %v1093 = vld [vmem:[%s9 + $0x8a8] sm:$0xff]
        %v1094 = vld [vmem:[%s9 + $0x8b0] sm:$0xff]
        %v1095 = vld [vmem:[%s9 + $0x8b8] sm:$0xff]
        %v1096 = vld [vmem:[%s9 + $0x8c0] sm:$0xff]
        %v1097 = vld [vmem:[%s9 + $0x8c8] sm:$0xff]
        %v1098 = vld [vmem:[%s9 + $0x8d0] sm:$0xff]
        %v1099 = vld [vmem:[%s9 + $0x8d8] sm:$0xff]
        %v1100 = vld [vmem:[%s9 + $0x8e0] sm:$0xff]
        %v1101 = vld [vmem:[%s9 + $0x8e8] sm:$0xff]
        %v1102 = vld [vmem:[%s9 + $0x8f0] sm:$0xff]
        %v1103 = vld [vmem:[%s9 + $0x8f8] sm:$0xff]
        %v1104 = vld [vmem:[%s9 + $0x900] sm:$0xff]
        %v1105 = vld [vmem:[%s9 + $0x908] sm:$0xff]
        %v1106 = vld [vmem:[%s9 + $0x910] sm:$0xff]
        %v1107 = vld [vmem:[%s9 + $0x918] sm:$0xff]
        %v1108 = vld [vmem:[%s9 + $0x920] sm:$0xff]
        %v1109 = vld [vmem:[%s9 + $0x928] sm:$0xff]
        %v1110 = vld [vmem:[%s9 + $0x930] sm:$0xff]
        %v1111 = vld [vmem:[%s9 + $0x938] sm:$0xff]
        %v1112 = vld [vmem:[%s9 + $0x940] sm:$0xff]
        %v1113 = vld [vmem:[%s9 + $0x948] sm:$0xff]
        %v1114 = vld [vmem:[%s9 + $0x950] sm:$0xff]
        %v1115 = vld [vmem:[%s9 + $0x958] sm:$0xff]
        %v1116 = vld [vmem:[%s9 + $0x960] sm:$0xff]
        %v1117 = vld [vmem:[%s9 + $0x968] sm:$0xff]
        %v1118 = vld [vmem:[%s9 + $0x970] sm:$0xff]
        %v1119 = vld [vmem:[%s9 + $0x978] sm:$0xff]
        %v1120 = vld [vmem:[%s9 + $0x980] sm:$0xff]
        %v1121 = vld [vmem:[%s9 + $0x988] sm:$0xff]
        %v1122 = vld [vmem:[%s9 + $0x990] sm:$0xff]
        %v1123 = vld [vmem:[%s9 + $0x998] sm:$0xff]
        %v1124 = vld [vmem:[%s9 + $0x9a0] sm:$0xff]
        %v1125 = vld [vmem:[%s9 + $0x9a8] sm:$0xff]
        %v1126 = vld [vmem:[%s9 + $0x9b0] sm:$0xff]
        %v1127 = vld [vmem:[%s9 + $0x9b8] sm:$0xff]
        %v1128 = vld [vmem:[%s9 + $0x9c0] sm:$0xff]
        %v1129 = vld [vmem:[%s9 + $0x9c8] sm:$0xff]
        %v1130 = vld [vmem:[%s9 + $0x9d0] sm:$0xff]
        %v1131 = vld [vmem:[%s9 + $0x9d8] sm:$0xff]
        %v1132 = vld [vmem:[%s9 + $0x9e0] sm:$0xff]
        %v1133 = vld [vmem:[%s9 + $0x9e8] sm:$0xff]
        %v1134 = vld [vmem:[%s9 + $0x9f0] sm:$0xff]
        %v1135 = vld [vmem:[%s9 + $0x9f8] sm:$0xff]
        %v1136 = vld [vmem:[%s9 + $0xa00] sm:$0xff]
        %v1137 = vld [vmem:[%s9 + $0xa08] sm:$0xff]
        %v1138 = vld [vmem:[%s9 + $0xa10] sm:$0xff]
        %v1139 = vld [vmem:[%s9 + $0xa18] sm:$0xff]
        %v1140 = vld [vmem:[%s9 + $0xa20] sm:$0xff]
        %v1141 = vld [vmem:[%s9 + $0xa28] sm:$0xff]
        %v1142 = vld [vmem:[%s9 + $0xa30] sm:$0xff]
        %v1143 = vld [vmem:[%s9 + $0xa38] sm:$0xff]
        %v1144 = vld [vmem:[%s9 + $0xa40] sm:$0xff]
        %v1145 = vld [vmem:[%s9 + $0xa48] sm:$0xff]
        %v1146 = vld [vmem:[%s9 + $0xa50] sm:$0xff]
        %v1147 = vld [vmem:[%s9 + $0xa58] sm:$0xff]
        %v1148 = vld [vmem:[%s9 + $0xa60] sm:$0xff]
        %v1149 = vld [vmem:[%s9 + $0xa68] sm:$0xff]
        %v1150 = vld [vmem:[%s9 + $0xa70] sm:$0xff]
        %v1151 = vld [vmem:[%s9 + $0xa78] sm:$0xff]
        %v1152 = vld [vmem:[%s9 + $0xa80] sm:$0xff]
        %v1153 = vld [vmem:[%s9 + $0xa88] sm:$0xff]
        %v1154 = vld [vmem:[%s9 + $0xa90] sm:$0xff]
        %v1155 = vld [vmem:[%s9 + $0xa98] sm:$0xff]
        %v1156 = vld [vmem:[%s9 + $0xaa0] sm:$0xff]
        %v1157 = vld [vmem:[%s9 + $0xaa8] sm:$0xff]
        %v1158 = vld [vmem:[%s9 + $0xab0] sm:$0xff]
        %v1159 = vld [vmem:[%s9 + $0xab8] sm:$0xff]
        %v1160 = vld [vmem:[%s9 + $0xac0] sm:$0xff]
        %v1161 = vld [vmem:[%s9 + $0xac8] sm:$0xff]
        %v1162 = vld [vmem:[%s9 + $0xad0] sm:$0xff]
        %v1163 = vld [vmem:[%s9 + $0xad8] sm:$0xff]
        %v1164 = vld [vmem:[%s9 + $0xae0] sm:$0xff]
        %v1165 = vld [vmem:[%s9 + $0xae8] sm:$0xff]
        %v1166 = vld [vmem:[%s9 + $0xaf0] sm:$0xff]
        %v1167 = vld [vmem:[%s9 + $0xaf8] sm:$0xff]
        %v1168 = vld [vmem:[%s9 + $0xb00] sm:$0xff]
        %v1169 = vld [vmem:[%s9 + $0xb08] sm:$0xff]
        %v1170 = vld [vmem:[%s9 + $0xb10] sm:$0xff]
        %v1171 = vld [vmem:[%s9 + $0xb18] sm:$0xff]
        %v1172 = vld [vmem:[%s9 + $0xb20] sm:$0xff]
        %v1173 = vld [vmem:[%s9 + $0xb28] sm:$0xff]
        %v1174 = vld [vmem:[%s9 + $0xb30] sm:$0xff]
        %v1175 = vld [vmem:[%s9 + $0xb38] sm:$0xff]
        %v1176 = vld [vmem:[%s9 + $0xb40] sm:$0xff]
        %v1177 = vld [vmem:[%s9 + $0xb48] sm:$0xff]
        %v1178 = vld [vmem:[%s9 + $0xb50] sm:$0xff]
        %v1179 = vld [vmem:[%s9 + $0xb58] sm:$0xff]
        %v1180 = vld [vmem:[%s9 + $0xb60] sm:$0xff]
        %v1181 = vld [vmem:[%s9 + $0xb68] sm:$0xff]
        %v1182 = vld [vmem:[%s9 + $0xb70] sm:$0xff]
        %v1183 = vld [vmem:[%s9 + $0xb78] sm:$0xff]
        %v1184 = vld [vmem:[%s9 + $0xb80] sm:$0xff]
        %v1185 = vld [vmem:[%s9 + $0xb88] sm:$0xff]
        %v1186 = vld [vmem:[%s9 + $0xb90] sm:$0xff]
        %v1187 = vld [vmem:[%s9 + $0xb98] sm:$0xff]
        %v1188 = vld [vmem:[%s9 + $0xba0] sm:$0xff]
        %v1189 = vld [vmem:[%s9 + $0xba8] sm:$0xff]
        %v1190 = vld [vmem:[%s9 + $0xbb0] sm:$0xff]
        %v1191 = vld [vmem:[%s9 + $0xbb8] sm:$0xff]
        %v1192 = vld [vmem:[%s9 + $0xbc0] sm:$0xff]
        %v1193 = vld [vmem:[%s9 + $0xbc8] sm:$0xff]
        %v1194 = vld [vmem:[%s9 + $0xbd0] sm:$0xff]
        %v1195 = vld [vmem:[%s9 + $0xbd8] sm:$0xff]
        %v1196 = vld [vmem:[%s9 + $0xbe0] sm:$0xff]
        %v1197 = vld [vmem:[%s9 + $0xbe8] sm:$0xff]
        %v1198 = vld [vmem:[%s9 + $0xbf0] sm:$0xff]
        %v1199 = vld [vmem:[%s9 + $0xbf8] sm:$0xff]
        %v1200 = vld [vmem:[%s9 + $0xc00] sm:$0xff]
        %v1201 = vld [vmem:[%s9 + $0xc08] sm:$0xff]
        %v1202 = vld [vmem:[%s9 + $0xc10] sm:$0xff]
        %v1203 = vld [vmem:[%s9 + $0xc18] sm:$0xff]
        %v1204 = vld [vmem:[%s9 + $0xc20] sm:$0xff]
        %v1205 = vld [vmem:[%s9 + $0xc28] sm:$0xff]
        %v1206 = vld [vmem:[%s9 + $0xc30] sm:$0xff]
        %v1207 = vld [vmem:[%s9 + $0xc38] sm:$0xff]
        %v1208 = vld [vmem:[%s9 + $0xc40] sm:$0xff]
        %v1209 = vld [vmem:[%s9 + $0xc48] sm:$0xff]
        %v1210 = vld [vmem:[%s9 + $0xc50] sm:$0xff]
        %v1211 = vld [vmem:[%s9 + $0xc58] sm:$0xff]
        %v1212 = vld [vmem:[%s9 + $0xc60] sm:$0xff]
        %v1213 = vld [vmem:[%s9 + $0xc68] sm:$0xff]
        %v1214 = vld [vmem:[%s9 + $0xc70] sm:$0xff]
        %v1215 = vld [vmem:[%s9 + $0xc78] sm:$0xff]
        %v1216 = vld [vmem:[%s9 + $0xc80] sm:$0xff]
        %v1217 = vld [vmem:[%s9 + $0xc88] sm:$0xff]
        %v1218 = vld [vmem:[%s9 + $0xc90] sm:$0xff]
        %v1219 = vld [vmem:[%s9 + $0xc98] sm:$0xff]
        %v1220 = vld [vmem:[%s9 + $0xca0] sm:$0xff]
        %v1221 = vld [vmem:[%s9 + $0xca8] sm:$0xff]
        %v1222 = vld [vmem:[%s9 + $0xcb0] sm:$0xff]
        %v1223 = vld [vmem:[%s9 + $0xcb8] sm:$0xff]
        %v1224 = vld [vmem:[%s9 + $0xcc0] sm:$0xff]
        %v1225 = vld [vmem:[%s9 + $0xcc8] sm:$0xff]
        %v1226 = vld [vmem:[%s9 + $0xcd0] sm:$0xff]
        %v1227 = vld [vmem:[%s9 + $0xcd8] sm:$0xff]
        %v1228 = vld [vmem:[%s9 + $0xce0] sm:$0xff]
        %v1229 = vld [vmem:[%s9 + $0xce8] sm:$0xff]
        %v1230 = vld [vmem:[%s9 + $0xcf0] sm:$0xff]
        %v1231 = vld [vmem:[%s9 + $0xcf8] sm:$0xff]
        %v1232 = vld [vmem:[%s9 + $0xd00] sm:$0xff]
        %v1233 = vld [vmem:[%s9 + $0xd08] sm:$0xff]
        %v1234 = vld [vmem:[%s9 + $0xd10] sm:$0xff]
        %v1235 = vld [vmem:[%s9 + $0xd18] sm:$0xff]
        %v1236 = vld [vmem:[%s9 + $0xd20] sm:$0xff]
        %v1237 = vld [vmem:[%s9 + $0xd28] sm:$0xff]
        %v1238 = vld [vmem:[%s9 + $0xd30] sm:$0xff]
        %v1239 = vld [vmem:[%s9 + $0xd38] sm:$0xff]
        %v1240 = vld [vmem:[%s9 + $0xd40] sm:$0xff]
        %v1241 = vld [vmem:[%s9 + $0xd48] sm:$0xff]
        %v1242 = vld [vmem:[%s9 + $0xd50] sm:$0xff]
        %v1243 = vld [vmem:[%s9 + $0xd58] sm:$0xff]
        %v1244 = vld [vmem:[%s9 + $0xd60] sm:$0xff]
        %v1245 = vld [vmem:[%s9 + $0xd68] sm:$0xff]
        %v1246 = vld [vmem:[%s9 + $0xd70] sm:$0xff]
        %v1247 = vld [vmem:[%s9 + $0xd78] sm:$0xff]
        %v1248 = vld [vmem:[%s9 + $0xd80] sm:$0xff]
        %v1249 = vld [vmem:[%s9 + $0xd88] sm:$0xff]
        %v1250 = vld [vmem:[%s9 + $0xd90] sm:$0xff]
        %v1251 = vld [vmem:[%s9 + $0xd98] sm:$0xff]
        %v1252 = vld [vmem:[%s9 + $0xda0] sm:$0xff]
        %v1253 = vld [vmem:[%s9 + $0xda8] sm:$0xff]
        %v1254 = vld [vmem:[%s9 + $0xdb0] sm:$0xff]
        %v1255 = vld [vmem:[%s9 + $0xdb8] sm:$0xff]
        %v1256 = vld [vmem:[%s9 + $0xdc0] sm:$0xff]
        %v1257 = vld [vmem:[%s9 + $0xdc8] sm:$0xff]
        %v1258 = vld [vmem:[%s9 + $0xdd0] sm:$0xff]
        %v1259 = vld [vmem:[%s9 + $0xdd8] sm:$0xff]
        %v1260 = vld [vmem:[%s9 + $0xde0] sm:$0xff]
        %v1261 = vld [vmem:[%s9 + $0xde8] sm:$0xff]
        %v1262 = vld [vmem:[%s9 + $0xdf0] sm:$0xff]
        %v1263 = vld [vmem:[%s9 + $0xdf8] sm:$0xff]
        %v1264 = vld [vmem:[%s9 + $0xe00] sm:$0xff]
        %v1265 = vld [vmem:[%s9 + $0xe08] sm:$0xff]
        %v1266 = vld [vmem:[%s9 + $0xe10] sm:$0xff]
        %v1267 = vld [vmem:[%s9 + $0xe18] sm:$0xff]
        %v1268 = vld [vmem:[%s9 + $0xe20] sm:$0xff]
        %v1269 = vld [vmem:[%s9 + $0xe28] sm:$0xff]
        %v1270 = vld [vmem:[%s9 + $0xe30] sm:$0xff]
        %v1271 = vld [vmem:[%s9 + $0xe38] sm:$0xff]
        %v1272 = vld [vmem:[%s9 + $0xe40] sm:$0xff]
        %v1273 = vld [vmem:[%s9 + $0xe48] sm:$0xff]
        %v1274 = vld [vmem:[%s9 + $0xe50] sm:$0xff]
        %v1275 = vld [vmem:[%s9 + $0xe58] sm:$0xff]
        %v1276 = vld [vmem:[%s9 + $0xe60] sm:$0xff]
        %v1277 = vld [vmem:[%s9 + $0xe68] sm:$0xff]
        %v1278 = vld [vmem:[%s9 + $0xe70] sm:$0xff]
        %v1279 = vld [vmem:[%s9 + $0xe78] sm:$0xff]
        %v1280 = vld [vmem:[%s9 + $0xe80] sm:$0xff]
        %v1281 = vld [vmem:[%s9 + $0xe88] sm:$0xff]
        %v1282 = vld [vmem:[%s9 + $0xe90] sm:$0xff]
        %v1283 = vld [vmem:[%s9 + $0xe98] sm:$0xff]
        %v1284 = vld [vmem:[%s9 + $0xea0] sm:$0xff]
        %v1285 = vld [vmem:[%s9 + $0xea8] sm:$0xff]
        %v1286 = vld [vmem:[%s9 + $0xeb0] sm:$0xff]
        %v1287 = vld [vmem:[%s9 + $0xeb8] sm:$0xff]
        %v1288 = vld [vmem:[%s9 + $0xec0] sm:$0xff]
        %v1289 = vld [vmem:[%s9 + $0xec8] sm:$0xff]
        %v1290 = vld [vmem:[%s9 + $0xed0] sm:$0xff]
        %v1291 = vld [vmem:[%s9 + $0xed8] sm:$0xff]
        %v1292 = vld [vmem:[%s9 + $0xee0] sm:$0xff]
        %v1293 = vld [vmem:[%s9 + $0xee8] sm:$0xff]
        %v1294 = vld [vmem:[%s9 + $0xef0] sm:$0xff]
        %v1295 = vld [vmem:[%s9 + $0xef8] sm:$0xff]
        %v1296 = vld [vmem:[%s9 + $0xf00] sm:$0xff]
        %v1297 = vld [vmem:[%s9 + $0xf08] sm:$0xff]
        %v1298 = vld [vmem:[%s9 + $0xf10] sm:$0xff]
        %v1299 = vld [vmem:[%s9 + $0xf18] sm:$0xff]
        %v1300 = vld [vmem:[%s9 + $0xf20] sm:$0xff]
        %v1301 = vld [vmem:[%s9 + $0xf28] sm:$0xff]
        %v1302 = vld [vmem:[%s9 + $0xf30] sm:$0xff]
        %v1303 = vld [vmem:[%s9 + $0xf38] sm:$0xff]
        %v1304 = vld [vmem:[%s9 + $0xf40] sm:$0xff]
        %v1305 = vld [vmem:[%s9 + $0xf48] sm:$0xff]
        %v1306 = vld [vmem:[%s9 + $0xf50] sm:$0xff]
        %v1307 = vld [vmem:[%s9 + $0xf58] sm:$0xff]
        %v1308 = vld [vmem:[%s9 + $0xf60] sm:$0xff]
        %v1309 = vld [vmem:[%s9 + $0xf68] sm:$0xff]
        %v1310 = vld [vmem:[%s9 + $0xf70] sm:$0xff]
        %v1311 = vld [vmem:[%s9 + $0xf78] sm:$0xff]
        %v1312 = vld [vmem:[%s9 + $0xf80] sm:$0xff]
        %v1313 = vld [vmem:[%s9 + $0xf88] sm:$0xff]
        %v1314 = vld [vmem:[%s9 + $0xf90] sm:$0xff]
        %v1315 = vld [vmem:[%s9 + $0xf98] sm:$0xff]
        %v1316 = vld [vmem:[%s9 + $0xfa0] sm:$0xff]
        %v1317 = vld [vmem:[%s9 + $0xfa8] sm:$0xff]
        %v1318 = vld [vmem:[%s9 + $0xfb0] sm:$0xff]
        %v1319 = vld [vmem:[%s9 + $0xfb8] sm:$0xff]
        %v1320 = vld [vmem:[%s9 + $0xfc0] sm:$0xff]
        %v1321 = vld [vmem:[%s9 + $0xfc8] sm:$0xff]
        %v1322 = vld [vmem:[%s9 + $0xfd0] sm:$0xff]
        %v1323 = vld [vmem:[%s9 + $0xfd8] sm:$0xff]
        %v1324 = vld [vmem:[%s9 + $0xfe0] sm:$0xff]
        %v1325 = vld [vmem:[%s9 + $0xfe8] sm:$0xff]
        %v1326 = vld [vmem:[%s9 + $0xff0] sm:$0xff]
        %v1327 = vld [vmem:[%s9 + $0xff8] sm:$0xff]
        %v1328 = vld [vmem:[%s10] sm:$0xf]
        %v1329 = vld [vmem:[%s11] sm:$0xf]
        %v1330 = vld [vmem:[%s11 + $0x4] sm:$0xf]
        %v1331 = vld [vmem:[%s11 + $0x8] sm:$0xf]
        %v1332 = vld [vmem:[%s11 + $0xc] sm:$0xf]
        %v1333 = vld [vmem:[%s11 + $0x10] sm:$0xf]
        %v1334 = vld [vmem:[%s11 + $0x14] sm:$0xf]
        %v1335 = vld [vmem:[%s11 + $0x18] sm:$0xf]
        %v1336 = vld [vmem:[%s11 + $0x1c] sm:$0xf]
        %v1337 = vld [vmem:[%s11 + $0x20] sm:$0xf]
        %v1338 = vld [vmem:[%s11 + $0x24] sm:$0xf]
        %v1339 = vld [vmem:[%s11 + $0x28] sm:$0xf]
        %v1340 = vld [vmem:[%s11 + $0x2c] sm:$0xf]
        %v1341 = vld [vmem:[%s11 + $0x30] sm:$0xf]
        %v1342 = vld [vmem:[%s11 + $0x34] sm:$0xf]
        %v1343 = vld [vmem:[%s11 + $0x38] sm:$0xf]
        %v1344 = vld [vmem:[%s11 + $0x3c] sm:$0xf]
        %v1345 = vld [vmem:[%s11 + $0x40] sm:$0xf]
        %v1346 = vld [vmem:[%s11 + $0x44] sm:$0xf]
        %v1347 = vld [vmem:[%s11 + $0x48] sm:$0xf]
        %v1348 = vld [vmem:[%s11 + $0x4c] sm:$0xf]
        %v1349 = vld [vmem:[%s11 + $0x50] sm:$0xf]
        %v1350 = vld [vmem:[%s11 + $0x54] sm:$0xf]
        %v1351 = vld [vmem:[%s11 + $0x58] sm:$0xf]
        %v1352 = vld [vmem:[%s11 + $0x5c] sm:$0xf]
        %v1353 = vld [vmem:[%s11 + $0x60] sm:$0xf]
        %v1354 = vld [vmem:[%s11 + $0x64] sm:$0xf]
        %v1355 = vld [vmem:[%s11 + $0x68] sm:$0xf]
        %v1356 = vld [vmem:[%s11 + $0x6c] sm:$0xf]
        %v1357 = vld [vmem:[%s11 + $0x70] sm:$0xf]
        %v1358 = vld [vmem:[%s11 + $0x74] sm:$0xf]
        %v1359 = vld [vmem:[%s11 + $0x78] sm:$0xf]
        %v1360 = vld [vmem:[%s11 + $0x7c] sm:$0xf]
        %v1361 = vld [vmem:[%s11 + $0x80] sm:$0xf]
        %v1362 = vld [vmem:[%s11 + $0x84] sm:$0xf]
        %v1363 = vld [vmem:[%s11 + $0x88] sm:$0xf]
        %v1364 = vld [vmem:[%s11 + $0x8c] sm:$0xf]
        %v1365 = vld [vmem:[%s11 + $0x90] sm:$0xf]
        %v1366 = vld [vmem:[%s11 + $0x94] sm:$0xf]
        %v1367 = vld [vmem:[%s11 + $0x98] sm:$0xf]
        %v1368 = vld [vmem:[%s11 + $0x9c] sm:$0xf]
        %v1369 = vld [vmem:[%s11 + $0xa0] sm:$0xf]
        %v1370 = vld [vmem:[%s11 + $0xa4] sm:$0xf]
        %v1371 = vld [vmem:[%s11 + $0xa8] sm:$0xf]
        %v1372 = vld [vmem:[%s11 + $0xac] sm:$0xf]
        %v1373 = vld [vmem:[%s11 + $0xb0] sm:$0xf]
        %v1374 = vld [vmem:[%s11 + $0xb4] sm:$0xf]
        %v1375 = vld [vmem:[%s11 + $0xb8] sm:$0xf]
        %v1376 = vld [vmem:[%s11 + $0xbc] sm:$0xf]
        %v1377 = vld [vmem:[%s11 + $0xc0] sm:$0xf]
        %v1378 = vld [vmem:[%s11 + $0xc4] sm:$0xf]
        %v1379 = vld [vmem:[%s11 + $0xc8] sm:$0xf]
        %v1380 = vld [vmem:[%s11 + $0xcc] sm:$0xf]
        %v1381 = vld [vmem:[%s11 + $0xd0] sm:$0xf]
        %v1382 = vld [vmem:[%s11 + $0xd4] sm:$0xf]
        %v1383 = vld [vmem:[%s11 + $0xd8] sm:$0xf]
        %v1384 = vld [vmem:[%s11 + $0xdc] sm:$0xf]
        %v1385 = vld [vmem:[%s11 + $0xe0] sm:$0xf]
        %v1386 = vld [vmem:[%s11 + $0xe4] sm:$0xf]
        %v1387 = vld [vmem:[%s11 + $0xe8] sm:$0xf]
        %v1388 = vld [vmem:[%s11 + $0xec] sm:$0xf]
        %v1389 = vld [vmem:[%s11 + $0xf0] sm:$0xf]
        %v1390 = vld [vmem:[%s11 + $0xf4] sm:$0xf]
        %v1391 = vld [vmem:[%s11 + $0xf8] sm:$0xf]
        %v1392 = vld [vmem:[%s11 + $0xfc] sm:$0xf]
        %v1393 = vld [vmem:[%s12] sm:$0x1]
        %v1394 = vld [vmem:[%s472] sm:$0xff]
        %v1395 = vld [vmem:[%s472 + $0x8] sm:$0xff]
        %v1396 = vld [vmem:[%s472 + $0x10] sm:$0xff]
        %v1397 = vld [vmem:[%s472 + $0x18] sm:$0xff]
        %v1398 = vld [vmem:[%s472 + $0x20] sm:$0xff]
        %v1399 = vld [vmem:[%s472 + $0x28] sm:$0xff]
        %v1400 = vld [vmem:[%s472 + $0x30] sm:$0x1]
        %1402 = vset.pattern.permute.xlu0 0
        %1403 = vperm.xlu0 %1402, %v1394
        %v1404 = vpop.permute.xlu0 %1403
        %1407 = vset.pattern.permute.xlu0 0
        %1408 = vperm.xlu0 %1407, %v1395
        %v1409 = vpop.permute.xlu0 %1408
        %1412 = vset.pattern.permute.xlu0 0
        %1413 = vperm.xlu0 %1412, %v1396
        %v1414 = vpop.permute.xlu0 %1413
        %1417 = vset.pattern.permute.xlu0 0
        %1418 = vperm.xlu0 %1417, %v1397
        %v1419 = vpop.permute.xlu0 %1418
        %1422 = vset.pattern.permute.xlu0 0
        %1423 = vperm.xlu0 %1422, %v1398
        %v1424 = vpop.permute.xlu0 %1423
        %1427 = vset.pattern.permute.xlu0 0
        %1428 = vperm.xlu0 %1427, %v1399
        %v1429 = vpop.permute.xlu0 %1428
        %1432 = vset.pattern.permute.xlu0 0
        %1433 = vperm.xlu0 %1432, %v1400
        %v1434 = vpop.permute.xlu0 %1433
        %v1444 = vlaneseq
        %v1445 = vshrl.u32 %v1444, 7
        %v1446 = vsub.s32 0, %v1445
        %v1447 = vrot.slane %v479, %v1446
        %v1448 = vlaneseq
        %v1449 = vshrl.u32 %v1448, 7
        %v1450 = vsub.s32 4, %v1449
        %v1451 = vrot.slane %v479, %v1450
        %v1452 = vlaneseq
        %v1453 = vshrl.u32 %v1452, 7
        %v1454 = vsub.s32 0, %v1453
        %v1455 = vrot.slane %v480, %v1454
        %v1456 = vlaneseq
        %v1457 = vshrl.u32 %v1456, 7
        %v1458 = vsub.s32 4, %v1457
        %v1459 = vrot.slane %v480, %v1458
        %v1460 = vlaneseq
        %v1461 = vshrl.u32 %v1460, 7
        %v1462 = vsub.s32 0, %v1461
        %v1463 = vrot.slane %v481, %v1462
        %v1464 = vlaneseq
        %v1465 = vshrl.u32 %v1464, 7
        %v1466 = vsub.s32 4, %v1465
        %v1467 = vrot.slane %v481, %v1466
        %v1468 = vlaneseq
        %v1469 = vshrl.u32 %v1468, 7
        %v1470 = vsub.s32 0, %v1469
        %v1471 = vrot.slane %v482, %v1470
        %v1472 = vlaneseq
        %v1473 = vshrl.u32 %v1472, 7
        %v1474 = vsub.s32 4, %v1473
        %v1475 = vrot.slane %v482, %v1474
        %v1476 = vlaneseq
        %v1477 = vshrl.u32 %v1476, 7
        %v1478 = vsub.s32 0, %v1477
        %v1479 = vrot.slane %v483, %v1478
        %v1480 = vlaneseq
        %v1481 = vshrl.u32 %v1480, 7
        %v1482 = vsub.s32 4, %v1481
        %v1483 = vrot.slane %v483, %v1482
        %v1484 = vlaneseq
        %v1485 = vshrl.u32 %v1484, 7
        %v1486 = vsub.s32 0, %v1485
        %v1487 = vrot.slane %v484, %v1486
        %v1488 = vlaneseq
        %v1489 = vshrl.u32 %v1488, 7
        %v1490 = vsub.s32 4, %v1489
        %v1491 = vrot.slane %v484, %v1490
        %v1492 = vlaneseq
        %v1493 = vshrl.u32 %v1492, 7
        %v1494 = vsub.s32 0, %v1493
        %v1495 = vrot.slane %v485, %v1494
        %v1496 = vlaneseq
        %v1497 = vshrl.u32 %v1496, 7
        %v1498 = vsub.s32 4, %v1497
        %v1499 = vrot.slane %v485, %v1498
        %v1500 = vlaneseq
        %v1501 = vshrl.u32 %v1500, 7
        %v1502 = vsub.s32 0, %v1501
        %v1503 = vrot.slane %v486, %v1502
        %v1504 = vlaneseq
        %v1505 = vshrl.u32 %v1504, 7
        %v1506 = vsub.s32 4, %v1505
        %v1507 = vrot.slane %v486, %v1506
        %v1524 = vlaneseq
        %v1525 = vshrl.u32 %v1524, 7
        %v1526 = vsub.s32 0, %v1525
        %v1527 = vrot.slane %v1447, %v1526
        %v1528 = vlaneseq
        %v1529 = vshrl.u32 %v1528, 7
        %v1530 = vsub.s32 0, %v1529
        %v1531 = vrot.slane %v1451, %v1530
        %v1532 = vlaneseq
        %v1533 = vshrl.u32 %v1532, 7
        %v1534 = vsub.s32 0, %v1533
        %v1535 = vrot.slane %v1455, %v1534
        %v1536 = vlaneseq
        %v1537 = vshrl.u32 %v1536, 7
        %v1538 = vsub.s32 0, %v1537
        %v1539 = vrot.slane %v1459, %v1538
        %v1540 = vlaneseq
        %v1541 = vshrl.u32 %v1540, 7
        %v1542 = vsub.s32 0, %v1541
        %v1543 = vrot.slane %v1463, %v1542
        %v1544 = vlaneseq
        %v1545 = vshrl.u32 %v1544, 7
        %v1546 = vsub.s32 0, %v1545
        %v1547 = vrot.slane %v1467, %v1546
        %v1548 = vlaneseq
        %v1549 = vshrl.u32 %v1548, 7
        %v1550 = vsub.s32 0, %v1549
        %v1551 = vrot.slane %v1471, %v1550
        %v1552 = vlaneseq
        %v1553 = vshrl.u32 %v1552, 7
        %v1554 = vsub.s32 0, %v1553
        %v1555 = vrot.slane %v1475, %v1554
        %v1556 = vlaneseq
        %v1557 = vshrl.u32 %v1556, 7
        %v1558 = vsub.s32 0, %v1557
        %v1559 = vrot.slane %v1479, %v1558
        %v1560 = vlaneseq
        %v1561 = vshrl.u32 %v1560, 7
        %v1562 = vsub.s32 0, %v1561
        %v1563 = vrot.slane %v1483, %v1562
        %v1564 = vlaneseq
        %v1565 = vshrl.u32 %v1564, 7
        %v1566 = vsub.s32 0, %v1565
        %v1567 = vrot.slane %v1487, %v1566
        %v1568 = vlaneseq
        %v1569 = vshrl.u32 %v1568, 7
        %v1570 = vsub.s32 0, %v1569
        %v1571 = vrot.slane %v1491, %v1570
        %v1572 = vlaneseq
        %v1573 = vshrl.u32 %v1572, 7
        %v1574 = vsub.s32 0, %v1573
        %v1575 = vrot.slane %v1495, %v1574
        %v1576 = vlaneseq
        %v1577 = vshrl.u32 %v1576, 7
        %v1578 = vsub.s32 0, %v1577
        %v1579 = vrot.slane %v1499, %v1578
        %v1580 = vlaneseq
        %v1581 = vshrl.u32 %v1580, 7
        %v1582 = vsub.s32 0, %v1581
        %v1583 = vrot.slane %v1503, %v1582
        %v1584 = vlaneseq
        %v1585 = vshrl.u32 %v1584, 7
        %v1586 = vsub.s32 0, %v1585
        %v1587 = vrot.slane %v1507, %v1586
        %v1588 = vmul.f32 %v1404, %v1527
        %v1589 = vmul.f32 %v1404, %v1531
        %v1590 = vmul.f32 %v1404, %v1535
        %v1591 = vmul.f32 %v1404, %v1539
        %v1592 = vmul.f32 %v1404, %v1543
        %v1593 = vmul.f32 %v1404, %v1547
        %v1594 = vmul.f32 %v1404, %v1551
        %v1595 = vmul.f32 %v1404, %v1555
        %v1596 = vmul.f32 %v1404, %v1559
        %v1597 = vmul.f32 %v1404, %v1563
        %v1598 = vmul.f32 %v1404, %v1567
        %v1599 = vmul.f32 %v1404, %v1571
        %v1600 = vmul.f32 %v1404, %v1575
        %v1601 = vmul.f32 %v1404, %v1579
        %v1602 = vmul.f32 %v1404, %v1583
        %v1603 = vmul.f32 %v1404, %v1587
        %v1604 = vmul.f32 %v1409, %v1527
        %v1605 = vmul.f32 %v1409, %v1531
        %v1606 = vmul.f32 %v1409, %v1535
        %v1607 = vmul.f32 %v1409, %v1539
        %v1608 = vmul.f32 %v1409, %v1543
        %v1609 = vmul.f32 %v1409, %v1547
        %v1610 = vmul.f32 %v1409, %v1551
        %v1611 = vmul.f32 %v1409, %v1555
        %v1612 = vmul.f32 %v1409, %v1559
        %v1613 = vmul.f32 %v1409, %v1563
        %v1614 = vmul.f32 %v1409, %v1567
        %v1615 = vmul.f32 %v1409, %v1571
        %v1616 = vmul.f32 %v1409, %v1575
        %v1617 = vmul.f32 %v1409, %v1579
        %v1618 = vmul.f32 %v1409, %v1583
        %v1619 = vmul.f32 %v1409, %v1587
        %v1620 = vmul.f32 %v1414, %v1527
        %v1621 = vmul.f32 %v1414, %v1531
        %v1622 = vmul.f32 %v1414, %v1535
        %v1623 = vmul.f32 %v1414, %v1539
        %v1624 = vmul.f32 %v1414, %v1543
        %v1625 = vmul.f32 %v1414, %v1547
        %v1626 = vmul.f32 %v1414, %v1551
        %v1627 = vmul.f32 %v1414, %v1555
        %v1628 = vmul.f32 %v1414, %v1559
        %v1629 = vmul.f32 %v1414, %v1563
        %v1630 = vmul.f32 %v1414, %v1567
        %v1631 = vmul.f32 %v1414, %v1571
        %v1632 = vmul.f32 %v1414, %v1575
        %v1633 = vmul.f32 %v1414, %v1579
        %v1634 = vmul.f32 %v1414, %v1583
        %v1635 = vmul.f32 %v1414, %v1587
        %v1636 = vmul.f32 %v1419, %v1527
        %v1637 = vmul.f32 %v1419, %v1531
        %v1638 = vmul.f32 %v1419, %v1535
        %v1639 = vmul.f32 %v1419, %v1539
        %v1640 = vmul.f32 %v1419, %v1543
        %v1641 = vmul.f32 %v1419, %v1547
        %v1642 = vmul.f32 %v1419, %v1551
        %v1643 = vmul.f32 %v1419, %v1555
        %v1644 = vmul.f32 %v1419, %v1559
        %v1645 = vmul.f32 %v1419, %v1563
        %v1646 = vmul.f32 %v1419, %v1567
        %v1647 = vmul.f32 %v1419, %v1571
        %v1648 = vmul.f32 %v1419, %v1575
        %v1649 = vmul.f32 %v1419, %v1579
        %v1650 = vmul.f32 %v1419, %v1583
        %v1651 = vmul.f32 %v1419, %v1587
        %v1652 = vmul.f32 %v1424, %v1527
        %v1653 = vmul.f32 %v1424, %v1531
        %v1654 = vmul.f32 %v1424, %v1535
        %v1655 = vmul.f32 %v1424, %v1539
        %v1656 = vmul.f32 %v1424, %v1543
        %v1657 = vmul.f32 %v1424, %v1547
        %v1658 = vmul.f32 %v1424, %v1551
        %v1659 = vmul.f32 %v1424, %v1555
        %v1660 = vmul.f32 %v1424, %v1559
        %v1661 = vmul.f32 %v1424, %v1563
        %v1662 = vmul.f32 %v1424, %v1567
        %v1663 = vmul.f32 %v1424, %v1571
        %v1664 = vmul.f32 %v1424, %v1575
        %v1665 = vmul.f32 %v1424, %v1579
        %v1666 = vmul.f32 %v1424, %v1583
        %v1667 = vmul.f32 %v1424, %v1587
        %v1668 = vmul.f32 %v1429, %v1527
        %v1669 = vmul.f32 %v1429, %v1531
        %v1670 = vmul.f32 %v1429, %v1535
        %v1671 = vmul.f32 %v1429, %v1539
        %v1672 = vmul.f32 %v1429, %v1543
        %v1673 = vmul.f32 %v1429, %v1547
        %v1674 = vmul.f32 %v1429, %v1551
        %v1675 = vmul.f32 %v1429, %v1555
        %v1676 = vmul.f32 %v1429, %v1559
        %v1677 = vmul.f32 %v1429, %v1563
        %v1678 = vmul.f32 %v1429, %v1567
        %v1679 = vmul.f32 %v1429, %v1571
        %v1680 = vmul.f32 %v1429, %v1575
        %v1681 = vmul.f32 %v1429, %v1579
        %v1682 = vmul.f32 %v1429, %v1583
        %v1683 = vmul.f32 %v1429, %v1587
        %v1684 = vmul.f32 %v1434, %v1527
        %v1685 = vmul.f32 %v1434, %v1531
        %v1686 = vmul.f32 %v1434, %v1535
        %v1687 = vmul.f32 %v1434, %v1539
        %v1688 = vmul.f32 %v1434, %v1543
        %v1689 = vmul.f32 %v1434, %v1547
        %v1690 = vmul.f32 %v1434, %v1551
        %v1691 = vmul.f32 %v1434, %v1555
        %v1692 = vmul.f32 %v1434, %v1559
        %v1693 = vmul.f32 %v1434, %v1563
        %v1694 = vmul.f32 %v1434, %v1567
        %v1695 = vmul.f32 %v1434, %v1571
        %v1696 = vmul.f32 %v1434, %v1575
        %v1697 = vmul.f32 %v1434, %v1579
        %v1698 = vmul.f32 %v1434, %v1583
        %v1699 = vmul.f32 %v1434, %v1587
        %v1702 = vlaneseq
        %v1703 = vshrl.u32 %v1702, 7
        %v1704 = vsub.s32 0, %v1703
        %v1705 = vrot.slane %v487, %v1704
        %v1706 = vlaneseq
        %v1707 = vshrl.u32 %v1706, 7
        %v1708 = vsub.s32 1, %v1707
        %v1709 = vrot.slane %v487, %v1708
        %v1710 = vlaneseq
        %v1711 = vshrl.u32 %v1710, 7
        %v1712 = vsub.s32 2, %v1711
        %v1713 = vrot.slane %v487, %v1712
        %v1714 = vlaneseq
        %v1715 = vshrl.u32 %v1714, 7
        %v1716 = vsub.s32 3, %v1715
        %v1717 = vrot.slane %v487, %v1716
        %v1718 = vlaneseq
        %v1719 = vshrl.u32 %v1718, 7
        %v1720 = vsub.s32 4, %v1719
        %v1721 = vrot.slane %v487, %v1720
        %v1722 = vlaneseq
        %v1723 = vshrl.u32 %v1722, 7
        %v1724 = vsub.s32 5, %v1723
        %v1725 = vrot.slane %v487, %v1724
        %v1726 = vlaneseq
        %v1727 = vshrl.u32 %v1726, 7
        %v1728 = vsub.s32 6, %v1727
        %v1729 = vrot.slane %v487, %v1728
        %v1730 = vlaneseq
        %v1731 = vshrl.u32 %v1730, 7
        %v1732 = vsub.s32 7, %v1731
        %v1733 = vrot.slane %v487, %v1732
        %v1734 = vlaneseq
        %v1735 = vshrl.u32 %v1734, 7
        %v1736 = vsub.s32 0, %v1735
        %v1737 = vrot.slane %v488, %v1736
        %v1738 = vlaneseq
        %v1739 = vshrl.u32 %v1738, 7
        %v1740 = vsub.s32 1, %v1739
        %v1741 = vrot.slane %v488, %v1740
        %v1742 = vlaneseq
        %v1743 = vshrl.u32 %v1742, 7
        %v1744 = vsub.s32 2, %v1743
        %v1745 = vrot.slane %v488, %v1744
        %v1746 = vlaneseq
        %v1747 = vshrl.u32 %v1746, 7
        %v1748 = vsub.s32 3, %v1747
        %v1749 = vrot.slane %v488, %v1748
        %v1750 = vlaneseq
        %v1751 = vshrl.u32 %v1750, 7
        %v1752 = vsub.s32 4, %v1751
        %v1753 = vrot.slane %v488, %v1752
        %v1754 = vlaneseq
        %v1755 = vshrl.u32 %v1754, 7
        %v1756 = vsub.s32 5, %v1755
        %v1757 = vrot.slane %v488, %v1756
        %v1758 = vlaneseq
        %v1759 = vshrl.u32 %v1758, 7
        %v1760 = vsub.s32 6, %v1759
        %v1761 = vrot.slane %v488, %v1760
        %v1762 = vlaneseq
        %v1763 = vshrl.u32 %v1762, 7
        %v1764 = vsub.s32 7, %v1763
        %v1765 = vrot.slane %v488, %v1764
        %v1782 = vadd.f32 %v1705, %v1588
        %v1783 = vadd.f32 %v1709, %v1589
        %v1784 = vadd.f32 %v1713, %v1590
        %v1785 = vadd.f32 %v1717, %v1591
        %v1786 = vadd.f32 %v1721, %v1592
        %v1787 = vadd.f32 %v1725, %v1593
        %v1788 = vadd.f32 %v1729, %v1594
        %v1789 = vadd.f32 %v1733, %v1595
        %v1790 = vadd.f32 %v1737, %v1596
        %v1791 = vadd.f32 %v1741, %v1597
        %v1792 = vadd.f32 %v1745, %v1598
        %v1793 = vadd.f32 %v1749, %v1599
        %v1794 = vadd.f32 %v1753, %v1600
        %v1795 = vadd.f32 %v1757, %v1601
        %v1796 = vadd.f32 %v1761, %v1602
        %v1797 = vadd.f32 %v1765, %v1603
        %v1798 = vadd.f32 %v1705, %v1604
        %v1799 = vadd.f32 %v1709, %v1605
        %v1800 = vadd.f32 %v1713, %v1606
        %v1801 = vadd.f32 %v1717, %v1607
        %v1802 = vadd.f32 %v1721, %v1608
        %v1803 = vadd.f32 %v1725, %v1609
        %v1804 = vadd.f32 %v1729, %v1610
        %v1805 = vadd.f32 %v1733, %v1611
        %v1806 = vadd.f32 %v1737, %v1612
        %v1807 = vadd.f32 %v1741, %v1613
        %v1808 = vadd.f32 %v1745, %v1614
        %v1809 = vadd.f32 %v1749, %v1615
        %v1810 = vadd.f32 %v1753, %v1616
        %v1811 = vadd.f32 %v1757, %v1617
        %v1812 = vadd.f32 %v1761, %v1618
        %v1813 = vadd.f32 %v1765, %v1619
        %v1814 = vadd.f32 %v1705, %v1620
        %v1815 = vadd.f32 %v1709, %v1621
        %v1816 = vadd.f32 %v1713, %v1622
        %v1817 = vadd.f32 %v1717, %v1623
        %v1818 = vadd.f32 %v1721, %v1624
        %v1819 = vadd.f32 %v1725, %v1625
        %v1820 = vadd.f32 %v1729, %v1626
        %v1821 = vadd.f32 %v1733, %v1627
        %v1822 = vadd.f32 %v1737, %v1628
        %v1823 = vadd.f32 %v1741, %v1629
        %v1824 = vadd.f32 %v1745, %v1630
        %v1825 = vadd.f32 %v1749, %v1631
        %v1826 = vadd.f32 %v1753, %v1632
        %v1827 = vadd.f32 %v1757, %v1633
        %v1828 = vadd.f32 %v1761, %v1634
        %v1829 = vadd.f32 %v1765, %v1635
        %v1830 = vadd.f32 %v1705, %v1636
        %v1831 = vadd.f32 %v1709, %v1637
        %v1832 = vadd.f32 %v1713, %v1638
        %v1833 = vadd.f32 %v1717, %v1639
        %v1834 = vadd.f32 %v1721, %v1640
        %v1835 = vadd.f32 %v1725, %v1641
        %v1836 = vadd.f32 %v1729, %v1642
        %v1837 = vadd.f32 %v1733, %v1643
        %v1838 = vadd.f32 %v1737, %v1644
        %v1839 = vadd.f32 %v1741, %v1645
        %v1840 = vadd.f32 %v1745, %v1646
        %v1841 = vadd.f32 %v1749, %v1647
        %v1842 = vadd.f32 %v1753, %v1648
        %v1843 = vadd.f32 %v1757, %v1649
        %v1844 = vadd.f32 %v1761, %v1650
        %v1845 = vadd.f32 %v1765, %v1651
        %v1846 = vadd.f32 %v1705, %v1652
        %v1847 = vadd.f32 %v1709, %v1653
        %v1848 = vadd.f32 %v1713, %v1654
        %v1849 = vadd.f32 %v1717, %v1655
        %v1850 = vadd.f32 %v1721, %v1656
        %v1851 = vadd.f32 %v1725, %v1657
        %v1852 = vadd.f32 %v1729, %v1658
        %v1853 = vadd.f32 %v1733, %v1659
        %v1854 = vadd.f32 %v1737, %v1660
        %v1855 = vadd.f32 %v1741, %v1661
        %v1856 = vadd.f32 %v1745, %v1662
        %v1857 = vadd.f32 %v1749, %v1663
        %v1858 = vadd.f32 %v1753, %v1664
        %v1859 = vadd.f32 %v1757, %v1665
        %v1860 = vadd.f32 %v1761, %v1666
        %v1861 = vadd.f32 %v1765, %v1667
        %v1862 = vadd.f32 %v1705, %v1668
        %v1863 = vadd.f32 %v1709, %v1669
        %v1864 = vadd.f32 %v1713, %v1670
        %v1865 = vadd.f32 %v1717, %v1671
        %v1866 = vadd.f32 %v1721, %v1672
        %v1867 = vadd.f32 %v1725, %v1673
        %v1868 = vadd.f32 %v1729, %v1674
        %v1869 = vadd.f32 %v1733, %v1675
        %v1870 = vadd.f32 %v1737, %v1676
        %v1871 = vadd.f32 %v1741, %v1677
        %v1872 = vadd.f32 %v1745, %v1678
        %v1873 = vadd.f32 %v1749, %v1679
        %v1874 = vadd.f32 %v1753, %v1680
        %v1875 = vadd.f32 %v1757, %v1681
        %v1876 = vadd.f32 %v1761, %v1682
        %v1877 = vadd.f32 %v1765, %v1683
        %v1878 = vadd.f32 %v1705, %v1684
        %v1879 = vadd.f32 %v1709, %v1685
        %v1880 = vadd.f32 %v1713, %v1686
        %v1881 = vadd.f32 %v1717, %v1687
        %v1882 = vadd.f32 %v1721, %v1688
        %v1883 = vadd.f32 %v1725, %v1689
        %v1884 = vadd.f32 %v1729, %v1690
        %v1885 = vadd.f32 %v1733, %v1691
        %v1886 = vadd.f32 %v1737, %v1692
        %v1887 = vadd.f32 %v1741, %v1693
        %v1888 = vadd.f32 %v1745, %v1694
        %v1889 = vadd.f32 %v1749, %v1695
        %v1890 = vadd.f32 %v1753, %v1696
        %v1891 = vadd.f32 %v1757, %v1697
        %v1892 = vadd.f32 %v1761, %v1698
        %v1893 = vadd.f32 %v1765, %v1699
        %1894 = vset.pattern.permute.xlu0 1
        %1895 = vperm.xlu0 %1894, %v1394
        %v1896 = vpop.permute.xlu0 %1895
        %1898 = vset.pattern.permute.xlu0 1
        %1899 = vperm.xlu0 %1898, %v1395
        %v1900 = vpop.permute.xlu0 %1899
        %1902 = vset.pattern.permute.xlu0 1
        %1903 = vperm.xlu0 %1902, %v1396
        %v1904 = vpop.permute.xlu0 %1903
        %1906 = vset.pattern.permute.xlu0 1
        %1907 = vperm.xlu0 %1906, %v1397
        %v1908 = vpop.permute.xlu0 %1907
        %1910 = vset.pattern.permute.xlu0 1
        %1911 = vperm.xlu0 %1910, %v1398
        %v1912 = vpop.permute.xlu0 %1911
        %1914 = vset.pattern.permute.xlu0 1
        %1915 = vperm.xlu0 %1914, %v1399
        %v1916 = vpop.permute.xlu0 %1915
        %1918 = vset.pattern.permute.xlu0 1
        %1919 = vperm.xlu0 %1918, %v1400
        %v1920 = vpop.permute.xlu0 %1919
        %v1922 = vlaneseq
        %v1923 = vshrl.u32 %v1922, 7
        %v1924 = vsub.s32 1, %v1923
        %v1925 = vrot.slane %v479, %v1924
        %v1926 = vlaneseq
        %v1927 = vshrl.u32 %v1926, 7
        %v1928 = vsub.s32 5, %v1927
        %v1929 = vrot.slane %v479, %v1928
        %v1930 = vlaneseq
        %v1931 = vshrl.u32 %v1930, 7
        %v1932 = vsub.s32 1, %v1931
        %v1933 = vrot.slane %v480, %v1932
        %v1934 = vlaneseq
        %v1935 = vshrl.u32 %v1934, 7
        %v1936 = vsub.s32 5, %v1935
        %v1937 = vrot.slane %v480, %v1936
        %v1938 = vlaneseq
        %v1939 = vshrl.u32 %v1938, 7
        %v1940 = vsub.s32 1, %v1939
        %v1941 = vrot.slane %v481, %v1940
        %v1942 = vlaneseq
        %v1943 = vshrl.u32 %v1942, 7
        %v1944 = vsub.s32 5, %v1943
        %v1945 = vrot.slane %v481, %v1944
        %v1946 = vlaneseq
        %v1947 = vshrl.u32 %v1946, 7
        %v1948 = vsub.s32 1, %v1947
        %v1949 = vrot.slane %v482, %v1948
        %v1950 = vlaneseq
        %v1951 = vshrl.u32 %v1950, 7
        %v1952 = vsub.s32 5, %v1951
        %v1953 = vrot.slane %v482, %v1952
        %v1954 = vlaneseq
        %v1955 = vshrl.u32 %v1954, 7
        %v1956 = vsub.s32 1, %v1955
        %v1957 = vrot.slane %v483, %v1956
        %v1958 = vlaneseq
        %v1959 = vshrl.u32 %v1958, 7
        %v1960 = vsub.s32 5, %v1959
        %v1961 = vrot.slane %v483, %v1960
        %v1962 = vlaneseq
        %v1963 = vshrl.u32 %v1962, 7
        %v1964 = vsub.s32 1, %v1963
        %v1965 = vrot.slane %v484, %v1964
        %v1966 = vlaneseq
        %v1967 = vshrl.u32 %v1966, 7
        %v1968 = vsub.s32 5, %v1967
        %v1969 = vrot.slane %v484, %v1968
        %v1970 = vlaneseq
        %v1971 = vshrl.u32 %v1970, 7
        %v1972 = vsub.s32 1, %v1971
        %v1973 = vrot.slane %v485, %v1972
        %v1974 = vlaneseq
        %v1975 = vshrl.u32 %v1974, 7
        %v1976 = vsub.s32 5, %v1975
        %v1977 = vrot.slane %v485, %v1976
        %v1978 = vlaneseq
        %v1979 = vshrl.u32 %v1978, 7
        %v1980 = vsub.s32 1, %v1979
        %v1981 = vrot.slane %v486, %v1980
        %v1982 = vlaneseq
        %v1983 = vshrl.u32 %v1982, 7
        %v1984 = vsub.s32 5, %v1983
        %v1985 = vrot.slane %v486, %v1984
        %v2002 = vlaneseq
        %v2003 = vshrl.u32 %v2002, 7
        %v2004 = vsub.s32 1, %v2003
        %v2005 = vrot.slane %v1925, %v2004
        %v2006 = vlaneseq
        %v2007 = vshrl.u32 %v2006, 7
        %v2008 = vsub.s32 1, %v2007
        %v2009 = vrot.slane %v1929, %v2008
        %v2010 = vlaneseq
        %v2011 = vshrl.u32 %v2010, 7
        %v2012 = vsub.s32 1, %v2011
        %v2013 = vrot.slane %v1933, %v2012
        %v2014 = vlaneseq
        %v2015 = vshrl.u32 %v2014, 7
        %v2016 = vsub.s32 1, %v2015
        %v2017 = vrot.slane %v1937, %v2016
        %v2018 = vlaneseq
        %v2019 = vshrl.u32 %v2018, 7
        %v2020 = vsub.s32 1, %v2019
        %v2021 = vrot.slane %v1941, %v2020
        %v2022 = vlaneseq
        %v2023 = vshrl.u32 %v2022, 7
        %v2024 = vsub.s32 1, %v2023
        %v2025 = vrot.slane %v1945, %v2024
        %v2026 = vlaneseq
        %v2027 = vshrl.u32 %v2026, 7
        %v2028 = vsub.s32 1, %v2027
        %v2029 = vrot.slane %v1949, %v2028
        %v2030 = vlaneseq
        %v2031 = vshrl.u32 %v2030, 7
        %v2032 = vsub.s32 1, %v2031
        %v2033 = vrot.slane %v1953, %v2032
        %v2034 = vlaneseq
        %v2035 = vshrl.u32 %v2034, 7
        %v2036 = vsub.s32 1, %v2035
        %v2037 = vrot.slane %v1957, %v2036
        %v2038 = vlaneseq
        %v2039 = vshrl.u32 %v2038, 7
        %v2040 = vsub.s32 1, %v2039
        %v2041 = vrot.slane %v1961, %v2040
        %v2042 = vlaneseq
        %v2043 = vshrl.u32 %v2042, 7
        %v2044 = vsub.s32 1, %v2043
        %v2045 = vrot.slane %v1965, %v2044
        %v2046 = vlaneseq
        %v2047 = vshrl.u32 %v2046, 7
        %v2048 = vsub.s32 1, %v2047
        %v2049 = vrot.slane %v1969, %v2048
        %v2050 = vlaneseq
        %v2051 = vshrl.u32 %v2050, 7
        %v2052 = vsub.s32 1, %v2051
        %v2053 = vrot.slane %v1973, %v2052
        %v2054 = vlaneseq
        %v2055 = vshrl.u32 %v2054, 7
        %v2056 = vsub.s32 1, %v2055
        %v2057 = vrot.slane %v1977, %v2056
        %v2058 = vlaneseq
        %v2059 = vshrl.u32 %v2058, 7
        %v2060 = vsub.s32 1, %v2059
        %v2061 = vrot.slane %v1981, %v2060
        %v2062 = vlaneseq
        %v2063 = vshrl.u32 %v2062, 7
        %v2064 = vsub.s32 1, %v2063
        %v2065 = vrot.slane %v1985, %v2064
        %v2066 = vmul.f32 %v1896, %v2005
        %v2067 = vmul.f32 %v1896, %v2009
        %v2068 = vmul.f32 %v1896, %v2013
        %v2069 = vmul.f32 %v1896, %v2017
        %v2070 = vmul.f32 %v1896, %v2021
        %v2071 = vmul.f32 %v1896, %v2025
        %v2072 = vmul.f32 %v1896, %v2029
        %v2073 = vmul.f32 %v1896, %v2033
        %v2074 = vmul.f32 %v1896, %v2037
        %v2075 = vmul.f32 %v1896, %v2041
        %v2076 = vmul.f32 %v1896, %v2045
        %v2077 = vmul.f32 %v1896, %v2049
        %v2078 = vmul.f32 %v1896, %v2053
        %v2079 = vmul.f32 %v1896, %v2057
        %v2080 = vmul.f32 %v1896, %v2061
        %v2081 = vmul.f32 %v1896, %v2065
        %v2082 = vmul.f32 %v1900, %v2005
        %v2083 = vmul.f32 %v1900, %v2009
        %v2084 = vmul.f32 %v1900, %v2013
        %v2085 = vmul.f32 %v1900, %v2017
        %v2086 = vmul.f32 %v1900, %v2021
        %v2087 = vmul.f32 %v1900, %v2025
        %v2088 = vmul.f32 %v1900, %v2029
        %v2089 = vmul.f32 %v1900, %v2033
        %v2090 = vmul.f32 %v1900, %v2037
        %v2091 = vmul.f32 %v1900, %v2041
        %v2092 = vmul.f32 %v1900, %v2045
        %v2093 = vmul.f32 %v1900, %v2049
        %v2094 = vmul.f32 %v1900, %v2053
        %v2095 = vmul.f32 %v1900, %v2057
        %v2096 = vmul.f32 %v1900, %v2061
        %v2097 = vmul.f32 %v1900, %v2065
        %v2098 = vmul.f32 %v1904, %v2005
        %v2099 = vmul.f32 %v1904, %v2009
        %v2100 = vmul.f32 %v1904, %v2013
        %v2101 = vmul.f32 %v1904, %v2017
        %v2102 = vmul.f32 %v1904, %v2021
        %v2103 = vmul.f32 %v1904, %v2025
        %v2104 = vmul.f32 %v1904, %v2029
        %v2105 = vmul.f32 %v1904, %v2033
        %v2106 = vmul.f32 %v1904, %v2037
        %v2107 = vmul.f32 %v1904, %v2041
        %v2108 = vmul.f32 %v1904, %v2045
        %v2109 = vmul.f32 %v1904, %v2049
        %v2110 = vmul.f32 %v1904, %v2053
        %v2111 = vmul.f32 %v1904, %v2057
        %v2112 = vmul.f32 %v1904, %v2061
        %v2113 = vmul.f32 %v1904, %v2065
        %v2114 = vmul.f32 %v1908, %v2005
        %v2115 = vmul.f32 %v1908, %v2009
        %v2116 = vmul.f32 %v1908, %v2013
        %v2117 = vmul.f32 %v1908, %v2017
        %v2118 = vmul.f32 %v1908, %v2021
        %v2119 = vmul.f32 %v1908, %v2025
        %v2120 = vmul.f32 %v1908, %v2029
        %v2121 = vmul.f32 %v1908, %v2033
        %v2122 = vmul.f32 %v1908, %v2037
        %v2123 = vmul.f32 %v1908, %v2041
        %v2124 = vmul.f32 %v1908, %v2045
        %v2125 = vmul.f32 %v1908, %v2049
        %v2126 = vmul.f32 %v1908, %v2053
        %v2127 = vmul.f32 %v1908, %v2057
        %v2128 = vmul.f32 %v1908, %v2061
        %v2129 = vmul.f32 %v1908, %v2065
        %v2130 = vmul.f32 %v1912, %v2005
        %v2131 = vmul.f32 %v1912, %v2009
        %v2132 = vmul.f32 %v1912, %v2013
        %v2133 = vmul.f32 %v1912, %v2017
        %v2134 = vmul.f32 %v1912, %v2021
        %v2135 = vmul.f32 %v1912, %v2025
        %v2136 = vmul.f32 %v1912, %v2029
        %v2137 = vmul.f32 %v1912, %v2033
        %v2138 = vmul.f32 %v1912, %v2037
        %v2139 = vmul.f32 %v1912, %v2041
        %v2140 = vmul.f32 %v1912, %v2045
        %v2141 = vmul.f32 %v1912, %v2049
        %v2142 = vmul.f32 %v1912, %v2053
        %v2143 = vmul.f32 %v1912, %v2057
        %v2144 = vmul.f32 %v1912, %v2061
        %v2145 = vmul.f32 %v1912, %v2065
        %v2146 = vmul.f32 %v1916, %v2005
        %v2147 = vmul.f32 %v1916, %v2009
        %v2148 = vmul.f32 %v1916, %v2013
        %v2149 = vmul.f32 %v1916, %v2017
        %v2150 = vmul.f32 %v1916, %v2021
        %v2151 = vmul.f32 %v1916, %v2025
        %v2152 = vmul.f32 %v1916, %v2029
        %v2153 = vmul.f32 %v1916, %v2033
        %v2154 = vmul.f32 %v1916, %v2037
        %v2155 = vmul.f32 %v1916, %v2041
        %v2156 = vmul.f32 %v1916, %v2045
        %v2157 = vmul.f32 %v1916, %v2049
        %v2158 = vmul.f32 %v1916, %v2053
        %v2159 = vmul.f32 %v1916, %v2057
        %v2160 = vmul.f32 %v1916, %v2061
        %v2161 = vmul.f32 %v1916, %v2065
        %v2162 = vmul.f32 %v1920, %v2005
        %v2163 = vmul.f32 %v1920, %v2009
        %v2164 = vmul.f32 %v1920, %v2013
        %v2165 = vmul.f32 %v1920, %v2017
        %v2166 = vmul.f32 %v1920, %v2021
        %v2167 = vmul.f32 %v1920, %v2025
        %v2168 = vmul.f32 %v1920, %v2029
        %v2169 = vmul.f32 %v1920, %v2033
        %v2170 = vmul.f32 %v1920, %v2037
        %v2171 = vmul.f32 %v1920, %v2041
        %v2172 = vmul.f32 %v1920, %v2045
        %v2173 = vmul.f32 %v1920, %v2049
        %v2174 = vmul.f32 %v1920, %v2053
        %v2175 = vmul.f32 %v1920, %v2057
        %v2176 = vmul.f32 %v1920, %v2061
        %v2177 = vmul.f32 %v1920, %v2065
        %v2178 = vadd.f32 %v1782, %v2066
        %v2179 = vadd.f32 %v1783, %v2067
        %v2180 = vadd.f32 %v1784, %v2068
        %v2181 = vadd.f32 %v1785, %v2069
        %v2182 = vadd.f32 %v1786, %v2070
        %v2183 = vadd.f32 %v1787, %v2071
        %v2184 = vadd.f32 %v1788, %v2072
        %v2185 = vadd.f32 %v1789, %v2073
        %v2186 = vadd.f32 %v1790, %v2074
        %v2187 = vadd.f32 %v1791, %v2075
        %v2188 = vadd.f32 %v1792, %v2076
        %v2189 = vadd.f32 %v1793, %v2077
        %v2190 = vadd.f32 %v1794, %v2078
        %v2191 = vadd.f32 %v1795, %v2079
        %v2192 = vadd.f32 %v1796, %v2080
        %v2193 = vadd.f32 %v1797, %v2081
        %v2194 = vadd.f32 %v1798, %v2082
        %v2195 = vadd.f32 %v1799, %v2083
        %v2196 = vadd.f32 %v1800, %v2084
        %v2197 = vadd.f32 %v1801, %v2085
        %v2198 = vadd.f32 %v1802, %v2086
        %v2199 = vadd.f32 %v1803, %v2087
        %v2200 = vadd.f32 %v1804, %v2088
        %v2201 = vadd.f32 %v1805, %v2089
        %v2202 = vadd.f32 %v1806, %v2090
        %v2203 = vadd.f32 %v1807, %v2091
        %v2204 = vadd.f32 %v1808, %v2092
        %v2205 = vadd.f32 %v1809, %v2093
        %v2206 = vadd.f32 %v1810, %v2094
        %v2207 = vadd.f32 %v1811, %v2095
        %v2208 = vadd.f32 %v1812, %v2096
        %v2209 = vadd.f32 %v1813, %v2097
        %v2210 = vadd.f32 %v1814, %v2098
        %v2211 = vadd.f32 %v1815, %v2099
        %v2212 = vadd.f32 %v1816, %v2100
        %v2213 = vadd.f32 %v1817, %v2101
        %v2214 = vadd.f32 %v1818, %v2102
        %v2215 = vadd.f32 %v1819, %v2103
        %v2216 = vadd.f32 %v1820, %v2104
        %v2217 = vadd.f32 %v1821, %v2105
        %v2218 = vadd.f32 %v1822, %v2106
        %v2219 = vadd.f32 %v1823, %v2107
        %v2220 = vadd.f32 %v1824, %v2108
        %v2221 = vadd.f32 %v1825, %v2109
        %v2222 = vadd.f32 %v1826, %v2110
        %v2223 = vadd.f32 %v1827, %v2111
        %v2224 = vadd.f32 %v1828, %v2112
        %v2225 = vadd.f32 %v1829, %v2113
        %v2226 = vadd.f32 %v1830, %v2114
        %v2227 = vadd.f32 %v1831, %v2115
        %v2228 = vadd.f32 %v1832, %v2116
        %v2229 = vadd.f32 %v1833, %v2117
        %v2230 = vadd.f32 %v1834, %v2118
        %v2231 = vadd.f32 %v1835, %v2119
        %v2232 = vadd.f32 %v1836, %v2120
        %v2233 = vadd.f32 %v1837, %v2121
        %v2234 = vadd.f32 %v1838, %v2122
        %v2235 = vadd.f32 %v1839, %v2123
        %v2236 = vadd.f32 %v1840, %v2124
        %v2237 = vadd.f32 %v1841, %v2125
        %v2238 = vadd.f32 %v1842, %v2126
        %v2239 = vadd.f32 %v1843, %v2127
        %v2240 = vadd.f32 %v1844, %v2128
        %v2241 = vadd.f32 %v1845, %v2129
        %v2242 = vadd.f32 %v1846, %v2130
        %v2243 = vadd.f32 %v1847, %v2131
        %v2244 = vadd.f32 %v1848, %v2132
        %v2245 = vadd.f32 %v1849, %v2133
        %v2246 = vadd.f32 %v1850, %v2134
        %v2247 = vadd.f32 %v1851, %v2135
        %v2248 = vadd.f32 %v1852, %v2136
        %v2249 = vadd.f32 %v1853, %v2137
        %v2250 = vadd.f32 %v1854, %v2138
        %v2251 = vadd.f32 %v1855, %v2139
        %v2252 = vadd.f32 %v1856, %v2140
        %v2253 = vadd.f32 %v1857, %v2141
        %v2254 = vadd.f32 %v1858, %v2142
        %v2255 = vadd.f32 %v1859, %v2143
        %v2256 = vadd.f32 %v1860, %v2144
        %v2257 = vadd.f32 %v1861, %v2145
        %v2258 = vadd.f32 %v1862, %v2146
        %v2259 = vadd.f32 %v1863, %v2147
        %v2260 = vadd.f32 %v1864, %v2148
        %v2261 = vadd.f32 %v1865, %v2149
        %v2262 = vadd.f32 %v1866, %v2150
        %v2263 = vadd.f32 %v1867, %v2151
        %v2264 = vadd.f32 %v1868, %v2152
        %v2265 = vadd.f32 %v1869, %v2153
        %v2266 = vadd.f32 %v1870, %v2154
        %v2267 = vadd.f32 %v1871, %v2155
        %v2268 = vadd.f32 %v1872, %v2156
        %v2269 = vadd.f32 %v1873, %v2157
        %v2270 = vadd.f32 %v1874, %v2158
        %v2271 = vadd.f32 %v1875, %v2159
        %v2272 = vadd.f32 %v1876, %v2160
        %v2273 = vadd.f32 %v1877, %v2161
        %v2274 = vadd.f32 %v1878, %v2162
        %v2275 = vadd.f32 %v1879, %v2163
        %v2276 = vadd.f32 %v1880, %v2164
        %v2277 = vadd.f32 %v1881, %v2165
        %v2278 = vadd.f32 %v1882, %v2166
        %v2279 = vadd.f32 %v1883, %v2167
        %v2280 = vadd.f32 %v1884, %v2168
        %v2281 = vadd.f32 %v1885, %v2169
        %v2282 = vadd.f32 %v1886, %v2170
        %v2283 = vadd.f32 %v1887, %v2171
        %v2284 = vadd.f32 %v1888, %v2172
        %v2285 = vadd.f32 %v1889, %v2173
        %v2286 = vadd.f32 %v1890, %v2174
        %v2287 = vadd.f32 %v1891, %v2175
        %v2288 = vadd.f32 %v1892, %v2176
        %v2289 = vadd.f32 %v1893, %v2177
        %2290 = vset.pattern.permute.xlu0 2
        %2291 = vperm.xlu0 %2290, %v1394
        %v2292 = vpop.permute.xlu0 %2291
        %2294 = vset.pattern.permute.xlu0 2
        %2295 = vperm.xlu0 %2294, %v1395
        %v2296 = vpop.permute.xlu0 %2295
        %2298 = vset.pattern.permute.xlu0 2
        %2299 = vperm.xlu0 %2298, %v1396
        %v2300 = vpop.permute.xlu0 %2299
        %2302 = vset.pattern.permute.xlu0 2
        %2303 = vperm.xlu0 %2302, %v1397
        %v2304 = vpop.permute.xlu0 %2303
        %2306 = vset.pattern.permute.xlu0 2
        %2307 = vperm.xlu0 %2306, %v1398
        %v2308 = vpop.permute.xlu0 %2307
        %2310 = vset.pattern.permute.xlu0 2
        %2311 = vperm.xlu0 %2310, %v1399
        %v2312 = vpop.permute.xlu0 %2311
        %2314 = vset.pattern.permute.xlu0 2
        %2315 = vperm.xlu0 %2314, %v1400
        %v2316 = vpop.permute.xlu0 %2315
        %v2318 = vlaneseq
        %v2319 = vshrl.u32 %v2318, 7
        %v2320 = vsub.s32 2, %v2319
        %v2321 = vrot.slane %v479, %v2320
        %v2322 = vlaneseq
        %v2323 = vshrl.u32 %v2322, 7
        %v2324 = vsub.s32 6, %v2323
        %v2325 = vrot.slane %v479, %v2324
        %v2326 = vlaneseq
        %v2327 = vshrl.u32 %v2326, 7
        %v2328 = vsub.s32 2, %v2327
        %v2329 = vrot.slane %v480, %v2328
        %v2330 = vlaneseq
        %v2331 = vshrl.u32 %v2330, 7
        %v2332 = vsub.s32 6, %v2331
        %v2333 = vrot.slane %v480, %v2332
        %v2334 = vlaneseq
        %v2335 = vshrl.u32 %v2334, 7
        %v2336 = vsub.s32 2, %v2335
        %v2337 = vrot.slane %v481, %v2336
        %v2338 = vlaneseq
        %v2339 = vshrl.u32 %v2338, 7
        %v2340 = vsub.s32 6, %v2339
        %v2341 = vrot.slane %v481, %v2340
        %v2342 = vlaneseq
        %v2343 = vshrl.u32 %v2342, 7
        %v2344 = vsub.s32 2, %v2343
        %v2345 = vrot.slane %v482, %v2344
        %v2346 = vlaneseq
        %v2347 = vshrl.u32 %v2346, 7
        %v2348 = vsub.s32 6, %v2347
        %v2349 = vrot.slane %v482, %v2348
        %v2350 = vlaneseq
        %v2351 = vshrl.u32 %v2350, 7
        %v2352 = vsub.s32 2, %v2351
        %v2353 = vrot.slane %v483, %v2352
        %v2354 = vlaneseq
        %v2355 = vshrl.u32 %v2354, 7
        %v2356 = vsub.s32 6, %v2355
        %v2357 = vrot.slane %v483, %v2356
        %v2358 = vlaneseq
        %v2359 = vshrl.u32 %v2358, 7
        %v2360 = vsub.s32 2, %v2359
        %v2361 = vrot.slane %v484, %v2360
        %v2362 = vlaneseq
        %v2363 = vshrl.u32 %v2362, 7
        %v2364 = vsub.s32 6, %v2363
        %v2365 = vrot.slane %v484, %v2364
        %v2366 = vlaneseq
        %v2367 = vshrl.u32 %v2366, 7
        %v2368 = vsub.s32 2, %v2367
        %v2369 = vrot.slane %v485, %v2368
        %v2370 = vlaneseq
        %v2371 = vshrl.u32 %v2370, 7
        %v2372 = vsub.s32 6, %v2371
        %v2373 = vrot.slane %v485, %v2372
        %v2374 = vlaneseq
        %v2375 = vshrl.u32 %v2374, 7
        %v2376 = vsub.s32 2, %v2375
        %v2377 = vrot.slane %v486, %v2376
        %v2378 = vlaneseq
        %v2379 = vshrl.u32 %v2378, 7
        %v2380 = vsub.s32 6, %v2379
        %v2381 = vrot.slane %v486, %v2380
        %v2398 = vlaneseq
        %v2399 = vshrl.u32 %v2398, 7
        %v2400 = vsub.s32 2, %v2399
        %v2401 = vrot.slane %v2321, %v2400
        %v2402 = vlaneseq
        %v2403 = vshrl.u32 %v2402, 7
        %v2404 = vsub.s32 2, %v2403
        %v2405 = vrot.slane %v2325, %v2404
        %v2406 = vlaneseq
        %v2407 = vshrl.u32 %v2406, 7
        %v2408 = vsub.s32 2, %v2407
        %v2409 = vrot.slane %v2329, %v2408
        %v2410 = vlaneseq
        %v2411 = vshrl.u32 %v2410, 7
        %v2412 = vsub.s32 2, %v2411
        %v2413 = vrot.slane %v2333, %v2412
        %v2414 = vlaneseq
        %v2415 = vshrl.u32 %v2414, 7
        %v2416 = vsub.s32 2, %v2415
        %v2417 = vrot.slane %v2337, %v2416
        %v2418 = vlaneseq
        %v2419 = vshrl.u32 %v2418, 7
        %v2420 = vsub.s32 2, %v2419
        %v2421 = vrot.slane %v2341, %v2420
        %v2422 = vlaneseq
        %v2423 = vshrl.u32 %v2422, 7
        %v2424 = vsub.s32 2, %v2423
        %v2425 = vrot.slane %v2345, %v2424
        %v2426 = vlaneseq
        %v2427 = vshrl.u32 %v2426, 7
        %v2428 = vsub.s32 2, %v2427
        %v2429 = vrot.slane %v2349, %v2428
        %v2430 = vlaneseq
        %v2431 = vshrl.u32 %v2430, 7
        %v2432 = vsub.s32 2, %v2431
        %v2433 = vrot.slane %v2353, %v2432
        %v2434 = vlaneseq
        %v2435 = vshrl.u32 %v2434, 7
        %v2436 = vsub.s32 2, %v2435
        %v2437 = vrot.slane %v2357, %v2436
        %v2438 = vlaneseq
        %v2439 = vshrl.u32 %v2438, 7
        %v2440 = vsub.s32 2, %v2439
        %v2441 = vrot.slane %v2361, %v2440
        %v2442 = vlaneseq
        %v2443 = vshrl.u32 %v2442, 7
        %v2444 = vsub.s32 2, %v2443
        %v2445 = vrot.slane %v2365, %v2444
        %v2446 = vlaneseq
        %v2447 = vshrl.u32 %v2446, 7
        %v2448 = vsub.s32 2, %v2447
        %v2449 = vrot.slane %v2369, %v2448
        %v2450 = vlaneseq
        %v2451 = vshrl.u32 %v2450, 7
        %v2452 = vsub.s32 2, %v2451
        %v2453 = vrot.slane %v2373, %v2452
        %v2454 = vlaneseq
        %v2455 = vshrl.u32 %v2454, 7
        %v2456 = vsub.s32 2, %v2455
        %v2457 = vrot.slane %v2377, %v2456
        %v2458 = vlaneseq
        %v2459 = vshrl.u32 %v2458, 7
        %v2460 = vsub.s32 2, %v2459
        %v2461 = vrot.slane %v2381, %v2460
        %v2462 = vmul.f32 %v2292, %v2401
        %v2463 = vmul.f32 %v2292, %v2405
        %v2464 = vmul.f32 %v2292, %v2409
        %v2465 = vmul.f32 %v2292, %v2413
        %v2466 = vmul.f32 %v2292, %v2417
        %v2467 = vmul.f32 %v2292, %v2421
        %v2468 = vmul.f32 %v2292, %v2425
        %v2469 = vmul.f32 %v2292, %v2429
        %v2470 = vmul.f32 %v2292, %v2433
        %v2471 = vmul.f32 %v2292, %v2437
        %v2472 = vmul.f32 %v2292, %v2441
        %v2473 = vmul.f32 %v2292, %v2445
        %v2474 = vmul.f32 %v2292, %v2449
        %v2475 = vmul.f32 %v2292, %v2453
        %v2476 = vmul.f32 %v2292, %v2457
        %v2477 = vmul.f32 %v2292, %v2461
        %v2478 = vmul.f32 %v2296, %v2401
        %v2479 = vmul.f32 %v2296, %v2405
        %v2480 = vmul.f32 %v2296, %v2409
        %v2481 = vmul.f32 %v2296, %v2413
        %v2482 = vmul.f32 %v2296, %v2417
        %v2483 = vmul.f32 %v2296, %v2421
        %v2484 = vmul.f32 %v2296, %v2425
        %v2485 = vmul.f32 %v2296, %v2429
        %v2486 = vmul.f32 %v2296, %v2433
        %v2487 = vmul.f32 %v2296, %v2437
        %v2488 = vmul.f32 %v2296, %v2441
        %v2489 = vmul.f32 %v2296, %v2445
        %v2490 = vmul.f32 %v2296, %v2449
        %v2491 = vmul.f32 %v2296, %v2453
        %v2492 = vmul.f32 %v2296, %v2457
        %v2493 = vmul.f32 %v2296, %v2461
        %v2494 = vmul.f32 %v2300, %v2401
        %v2495 = vmul.f32 %v2300, %v2405
        %v2496 = vmul.f32 %v2300, %v2409
        %v2497 = vmul.f32 %v2300, %v2413
        %v2498 = vmul.f32 %v2300, %v2417
        %v2499 = vmul.f32 %v2300, %v2421
        %v2500 = vmul.f32 %v2300, %v2425
        %v2501 = vmul.f32 %v2300, %v2429
        %v2502 = vmul.f32 %v2300, %v2433
        %v2503 = vmul.f32 %v2300, %v2437
        %v2504 = vmul.f32 %v2300, %v2441
        %v2505 = vmul.f32 %v2300, %v2445
        %v2506 = vmul.f32 %v2300, %v2449
        %v2507 = vmul.f32 %v2300, %v2453
        %v2508 = vmul.f32 %v2300, %v2457
        %v2509 = vmul.f32 %v2300, %v2461
        %v2510 = vmul.f32 %v2304, %v2401
        %v2511 = vmul.f32 %v2304, %v2405
        %v2512 = vmul.f32 %v2304, %v2409
        %v2513 = vmul.f32 %v2304, %v2413
        %v2514 = vmul.f32 %v2304, %v2417
        %v2515 = vmul.f32 %v2304, %v2421
        %v2516 = vmul.f32 %v2304, %v2425
        %v2517 = vmul.f32 %v2304, %v2429
        %v2518 = vmul.f32 %v2304, %v2433
        %v2519 = vmul.f32 %v2304, %v2437
        %v2520 = vmul.f32 %v2304, %v2441
        %v2521 = vmul.f32 %v2304, %v2445
        %v2522 = vmul.f32 %v2304, %v2449
        %v2523 = vmul.f32 %v2304, %v2453
        %v2524 = vmul.f32 %v2304, %v2457
        %v2525 = vmul.f32 %v2304, %v2461
        %v2526 = vmul.f32 %v2308, %v2401
        %v2527 = vmul.f32 %v2308, %v2405
        %v2528 = vmul.f32 %v2308, %v2409
        %v2529 = vmul.f32 %v2308, %v2413
        %v2530 = vmul.f32 %v2308, %v2417
        %v2531 = vmul.f32 %v2308, %v2421
        %v2532 = vmul.f32 %v2308, %v2425
        %v2533 = vmul.f32 %v2308, %v2429
        %v2534 = vmul.f32 %v2308, %v2433
        %v2535 = vmul.f32 %v2308, %v2437
        %v2536 = vmul.f32 %v2308, %v2441
        %v2537 = vmul.f32 %v2308, %v2445
        %v2538 = vmul.f32 %v2308, %v2449
        %v2539 = vmul.f32 %v2308, %v2453
        %v2540 = vmul.f32 %v2308, %v2457
        %v2541 = vmul.f32 %v2308, %v2461
        %v2542 = vmul.f32 %v2312, %v2401
        %v2543 = vmul.f32 %v2312, %v2405
        %v2544 = vmul.f32 %v2312, %v2409
        %v2545 = vmul.f32 %v2312, %v2413
        %v2546 = vmul.f32 %v2312, %v2417
        %v2547 = vmul.f32 %v2312, %v2421
        %v2548 = vmul.f32 %v2312, %v2425
        %v2549 = vmul.f32 %v2312, %v2429
        %v2550 = vmul.f32 %v2312, %v2433
        %v2551 = vmul.f32 %v2312, %v2437
        %v2552 = vmul.f32 %v2312, %v2441
        %v2553 = vmul.f32 %v2312, %v2445
        %v2554 = vmul.f32 %v2312, %v2449
        %v2555 = vmul.f32 %v2312, %v2453
        %v2556 = vmul.f32 %v2312, %v2457
        %v2557 = vmul.f32 %v2312, %v2461
        %v2558 = vmul.f32 %v2316, %v2401
        %v2559 = vmul.f32 %v2316, %v2405
        %v2560 = vmul.f32 %v2316, %v2409
        %v2561 = vmul.f32 %v2316, %v2413
        %v2562 = vmul.f32 %v2316, %v2417
        %v2563 = vmul.f32 %v2316, %v2421
        %v2564 = vmul.f32 %v2316, %v2425
        %v2565 = vmul.f32 %v2316, %v2429
        %v2566 = vmul.f32 %v2316, %v2433
        %v2567 = vmul.f32 %v2316, %v2437
        %v2568 = vmul.f32 %v2316, %v2441
        %v2569 = vmul.f32 %v2316, %v2445
        %v2570 = vmul.f32 %v2316, %v2449
        %v2571 = vmul.f32 %v2316, %v2453
        %v2572 = vmul.f32 %v2316, %v2457
        %v2573 = vmul.f32 %v2316, %v2461
        %v2574 = vadd.f32 %v2178, %v2462
        %v2575 = vadd.f32 %v2179, %v2463
        %v2576 = vadd.f32 %v2180, %v2464
        %v2577 = vadd.f32 %v2181, %v2465
        %v2578 = vadd.f32 %v2182, %v2466
        %v2579 = vadd.f32 %v2183, %v2467
        %v2580 = vadd.f32 %v2184, %v2468
        %v2581 = vadd.f32 %v2185, %v2469
        %v2582 = vadd.f32 %v2186, %v2470
        %v2583 = vadd.f32 %v2187, %v2471
        %v2584 = vadd.f32 %v2188, %v2472
        %v2585 = vadd.f32 %v2189, %v2473
        %v2586 = vadd.f32 %v2190, %v2474
        %v2587 = vadd.f32 %v2191, %v2475
        %v2588 = vadd.f32 %v2192, %v2476
        %v2589 = vadd.f32 %v2193, %v2477
        %v2590 = vadd.f32 %v2194, %v2478
        %v2591 = vadd.f32 %v2195, %v2479
        %v2592 = vadd.f32 %v2196, %v2480
        %v2593 = vadd.f32 %v2197, %v2481
        %v2594 = vadd.f32 %v2198, %v2482
        %v2595 = vadd.f32 %v2199, %v2483
        %v2596 = vadd.f32 %v2200, %v2484
        %v2597 = vadd.f32 %v2201, %v2485
        %v2598 = vadd.f32 %v2202, %v2486
        %v2599 = vadd.f32 %v2203, %v2487
        %v2600 = vadd.f32 %v2204, %v2488
        %v2601 = vadd.f32 %v2205, %v2489
        %v2602 = vadd.f32 %v2206, %v2490
        %v2603 = vadd.f32 %v2207, %v2491
        %v2604 = vadd.f32 %v2208, %v2492
        %v2605 = vadd.f32 %v2209, %v2493
        %v2606 = vadd.f32 %v2210, %v2494
        %v2607 = vadd.f32 %v2211, %v2495
        %v2608 = vadd.f32 %v2212, %v2496
        %v2609 = vadd.f32 %v2213, %v2497
        %v2610 = vadd.f32 %v2214, %v2498
        %v2611 = vadd.f32 %v2215, %v2499
        %v2612 = vadd.f32 %v2216, %v2500
        %v2613 = vadd.f32 %v2217, %v2501
        %v2614 = vadd.f32 %v2218, %v2502
        %v2615 = vadd.f32 %v2219, %v2503
        %v2616 = vadd.f32 %v2220, %v2504
        %v2617 = vadd.f32 %v2221, %v2505
        %v2618 = vadd.f32 %v2222, %v2506
        %v2619 = vadd.f32 %v2223, %v2507
        %v2620 = vadd.f32 %v2224, %v2508
        %v2621 = vadd.f32 %v2225, %v2509
        %v2622 = vadd.f32 %v2226, %v2510
        %v2623 = vadd.f32 %v2227, %v2511
        %v2624 = vadd.f32 %v2228, %v2512
        %v2625 = vadd.f32 %v2229, %v2513
        %v2626 = vadd.f32 %v2230, %v2514
        %v2627 = vadd.f32 %v2231, %v2515
        %v2628 = vadd.f32 %v2232, %v2516
        %v2629 = vadd.f32 %v2233, %v2517
        %v2630 = vadd.f32 %v2234, %v2518
        %v2631 = vadd.f32 %v2235, %v2519
        %v2632 = vadd.f32 %v2236, %v2520
        %v2633 = vadd.f32 %v2237, %v2521
        %v2634 = vadd.f32 %v2238, %v2522
        %v2635 = vadd.f32 %v2239, %v2523
        %v2636 = vadd.f32 %v2240, %v2524
        %v2637 = vadd.f32 %v2241, %v2525
        %v2638 = vadd.f32 %v2242, %v2526
        %v2639 = vadd.f32 %v2243, %v2527
        %v2640 = vadd.f32 %v2244, %v2528
        %v2641 = vadd.f32 %v2245, %v2529
        %v2642 = vadd.f32 %v2246, %v2530
        %v2643 = vadd.f32 %v2247, %v2531
        %v2644 = vadd.f32 %v2248, %v2532
        %v2645 = vadd.f32 %v2249, %v2533
        %v2646 = vadd.f32 %v2250, %v2534
        %v2647 = vadd.f32 %v2251, %v2535
        %v2648 = vadd.f32 %v2252, %v2536
        %v2649 = vadd.f32 %v2253, %v2537
        %v2650 = vadd.f32 %v2254, %v2538
        %v2651 = vadd.f32 %v2255, %v2539
        %v2652 = vadd.f32 %v2256, %v2540
        %v2653 = vadd.f32 %v2257, %v2541
        %v2654 = vadd.f32 %v2258, %v2542
        %v2655 = vadd.f32 %v2259, %v2543
        %v2656 = vadd.f32 %v2260, %v2544
        %v2657 = vadd.f32 %v2261, %v2545
        %v2658 = vadd.f32 %v2262, %v2546
        %v2659 = vadd.f32 %v2263, %v2547
        %v2660 = vadd.f32 %v2264, %v2548
        %v2661 = vadd.f32 %v2265, %v2549
        %v2662 = vadd.f32 %v2266, %v2550
        %v2663 = vadd.f32 %v2267, %v2551
        %v2664 = vadd.f32 %v2268, %v2552
        %v2665 = vadd.f32 %v2269, %v2553
        %v2666 = vadd.f32 %v2270, %v2554
        %v2667 = vadd.f32 %v2271, %v2555
        %v2668 = vadd.f32 %v2272, %v2556
        %v2669 = vadd.f32 %v2273, %v2557
        %v2670 = vadd.f32 %v2274, %v2558
        %v2671 = vadd.f32 %v2275, %v2559
        %v2672 = vadd.f32 %v2276, %v2560
        %v2673 = vadd.f32 %v2277, %v2561
        %v2674 = vadd.f32 %v2278, %v2562
        %v2675 = vadd.f32 %v2279, %v2563
        %v2676 = vadd.f32 %v2280, %v2564
        %v2677 = vadd.f32 %v2281, %v2565
        %v2678 = vadd.f32 %v2282, %v2566
        %v2679 = vadd.f32 %v2283, %v2567
        %v2680 = vadd.f32 %v2284, %v2568
        %v2681 = vadd.f32 %v2285, %v2569
        %v2682 = vadd.f32 %v2286, %v2570
        %v2683 = vadd.f32 %v2287, %v2571
        %v2684 = vadd.f32 %v2288, %v2572
        %v2685 = vadd.f32 %v2289, %v2573
        %2686 = vset.pattern.permute.xlu0 3
        %2687 = vperm.xlu0 %2686, %v1394
        %v2688 = vpop.permute.xlu0 %2687
        %2690 = vset.pattern.permute.xlu0 3
        %2691 = vperm.xlu0 %2690, %v1395
        %v2692 = vpop.permute.xlu0 %2691
        %2694 = vset.pattern.permute.xlu0 3
        %2695 = vperm.xlu0 %2694, %v1396
        %v2696 = vpop.permute.xlu0 %2695
        %2698 = vset.pattern.permute.xlu0 3
        %2699 = vperm.xlu0 %2698, %v1397
        %v2700 = vpop.permute.xlu0 %2699
        %2702 = vset.pattern.permute.xlu0 3
        %2703 = vperm.xlu0 %2702, %v1398
        %v2704 = vpop.permute.xlu0 %2703
        %2706 = vset.pattern.permute.xlu0 3
        %2707 = vperm.xlu0 %2706, %v1399
        %v2708 = vpop.permute.xlu0 %2707
        %2710 = vset.pattern.permute.xlu0 3
        %2711 = vperm.xlu0 %2710, %v1400
        %v2712 = vpop.permute.xlu0 %2711
        %v2714 = vlaneseq
        %v2715 = vshrl.u32 %v2714, 7
        %v2716 = vsub.s32 3, %v2715
        %v2717 = vrot.slane %v479, %v2716
        %v2718 = vlaneseq
        %v2719 = vshrl.u32 %v2718, 7
        %v2720 = vsub.s32 7, %v2719
        %v2721 = vrot.slane %v479, %v2720
        %v2722 = vlaneseq
        %v2723 = vshrl.u32 %v2722, 7
        %v2724 = vsub.s32 3, %v2723
        %v2725 = vrot.slane %v480, %v2724
        %v2726 = vlaneseq
        %v2727 = vshrl.u32 %v2726, 7
        %v2728 = vsub.s32 7, %v2727
        %v2729 = vrot.slane %v480, %v2728
        %v2730 = vlaneseq
        %v2731 = vshrl.u32 %v2730, 7
        %v2732 = vsub.s32 3, %v2731
        %v2733 = vrot.slane %v481, %v2732
        %v2734 = vlaneseq
        %v2735 = vshrl.u32 %v2734, 7
        %v2736 = vsub.s32 7, %v2735
        %v2737 = vrot.slane %v481, %v2736
        %v2738 = vlaneseq
        %v2739 = vshrl.u32 %v2738, 7
        %v2740 = vsub.s32 3, %v2739
        %v2741 = vrot.slane %v482, %v2740
        %v2742 = vlaneseq
        %v2743 = vshrl.u32 %v2742, 7
        %v2744 = vsub.s32 7, %v2743
        %v2745 = vrot.slane %v482, %v2744
        %v2746 = vlaneseq
        %v2747 = vshrl.u32 %v2746, 7
        %v2748 = vsub.s32 3, %v2747
        %v2749 = vrot.slane %v483, %v2748
        %v2750 = vlaneseq
        %v2751 = vshrl.u32 %v2750, 7
        %v2752 = vsub.s32 7, %v2751
        %v2753 = vrot.slane %v483, %v2752
        %v2754 = vlaneseq
        %v2755 = vshrl.u32 %v2754, 7
        %v2756 = vsub.s32 3, %v2755
        %v2757 = vrot.slane %v484, %v2756
        %v2758 = vlaneseq
        %v2759 = vshrl.u32 %v2758, 7
        %v2760 = vsub.s32 7, %v2759
        %v2761 = vrot.slane %v484, %v2760
        %v2762 = vlaneseq
        %v2763 = vshrl.u32 %v2762, 7
        %v2764 = vsub.s32 3, %v2763
        %v2765 = vrot.slane %v485, %v2764
        %v2766 = vlaneseq
        %v2767 = vshrl.u32 %v2766, 7
        %v2768 = vsub.s32 7, %v2767
        %v2769 = vrot.slane %v485, %v2768
        %v2770 = vlaneseq
        %v2771 = vshrl.u32 %v2770, 7
        %v2772 = vsub.s32 3, %v2771
        %v2773 = vrot.slane %v486, %v2772
        %v2774 = vlaneseq
        %v2775 = vshrl.u32 %v2774, 7
        %v2776 = vsub.s32 7, %v2775
        %v2777 = vrot.slane %v486, %v2776
        %v2794 = vlaneseq
        %v2795 = vshrl.u32 %v2794, 7
        %v2796 = vsub.s32 3, %v2795
        %v2797 = vrot.slane %v2717, %v2796
        %v2798 = vlaneseq
        %v2799 = vshrl.u32 %v2798, 7
        %v2800 = vsub.s32 3, %v2799
        %v2801 = vrot.slane %v2721, %v2800
        %v2802 = vlaneseq
        %v2803 = vshrl.u32 %v2802, 7
        %v2804 = vsub.s32 3, %v2803
        %v2805 = vrot.slane %v2725, %v2804
        %v2806 = vlaneseq
        %v2807 = vshrl.u32 %v2806, 7
        %v2808 = vsub.s32 3, %v2807
        %v2809 = vrot.slane %v2729, %v2808
        %v2810 = vlaneseq
        %v2811 = vshrl.u32 %v2810, 7
        %v2812 = vsub.s32 3, %v2811
        %v2813 = vrot.slane %v2733, %v2812
        %v2814 = vlaneseq
        %v2815 = vshrl.u32 %v2814, 7
        %v2816 = vsub.s32 3, %v2815
        %v2817 = vrot.slane %v2737, %v2816
        %v2818 = vlaneseq
        %v2819 = vshrl.u32 %v2818, 7
        %v2820 = vsub.s32 3, %v2819
        %v2821 = vrot.slane %v2741, %v2820
        %v2822 = vlaneseq
        %v2823 = vshrl.u32 %v2822, 7
        %v2824 = vsub.s32 3, %v2823
        %v2825 = vrot.slane %v2745, %v2824
        %v2826 = vlaneseq
        %v2827 = vshrl.u32 %v2826, 7
        %v2828 = vsub.s32 3, %v2827
        %v2829 = vrot.slane %v2749, %v2828
        %v2830 = vlaneseq
        %v2831 = vshrl.u32 %v2830, 7
        %v2832 = vsub.s32 3, %v2831
        %v2833 = vrot.slane %v2753, %v2832
        %v2834 = vlaneseq
        %v2835 = vshrl.u32 %v2834, 7
        %v2836 = vsub.s32 3, %v2835
        %v2837 = vrot.slane %v2757, %v2836
        %v2838 = vlaneseq
        %v2839 = vshrl.u32 %v2838, 7
        %v2840 = vsub.s32 3, %v2839
        %v2841 = vrot.slane %v2761, %v2840
        %v2842 = vlaneseq
        %v2843 = vshrl.u32 %v2842, 7
        %v2844 = vsub.s32 3, %v2843
        %v2845 = vrot.slane %v2765, %v2844
        %v2846 = vlaneseq
        %v2847 = vshrl.u32 %v2846, 7
        %v2848 = vsub.s32 3, %v2847
        %v2849 = vrot.slane %v2769, %v2848
        %v2850 = vlaneseq
        %v2851 = vshrl.u32 %v2850, 7
        %v2852 = vsub.s32 3, %v2851
        %v2853 = vrot.slane %v2773, %v2852
        %v2854 = vlaneseq
        %v2855 = vshrl.u32 %v2854, 7
        %v2856 = vsub.s32 3, %v2855
        %v2857 = vrot.slane %v2777, %v2856
        %v2858 = vmul.f32 %v2688, %v2797
        %v2859 = vmul.f32 %v2688, %v2801
        %v2860 = vmul.f32 %v2688, %v2805
        %v2861 = vmul.f32 %v2688, %v2809
        %v2862 = vmul.f32 %v2688, %v2813
        %v2863 = vmul.f32 %v2688, %v2817
        %v2864 = vmul.f32 %v2688, %v2821
        %v2865 = vmul.f32 %v2688, %v2825
        %v2866 = vmul.f32 %v2688, %v2829
        %v2867 = vmul.f32 %v2688, %v2833
        %v2868 = vmul.f32 %v2688, %v2837
        %v2869 = vmul.f32 %v2688, %v2841
        %v2870 = vmul.f32 %v2688, %v2845
        %v2871 = vmul.f32 %v2688, %v2849
        %v2872 = vmul.f32 %v2688, %v2853
        %v2873 = vmul.f32 %v2688, %v2857
        %v2874 = vmul.f32 %v2692, %v2797
        %v2875 = vmul.f32 %v2692, %v2801
        %v2876 = vmul.f32 %v2692, %v2805
        %v2877 = vmul.f32 %v2692, %v2809
        %v2878 = vmul.f32 %v2692, %v2813
        %v2879 = vmul.f32 %v2692, %v2817
        %v2880 = vmul.f32 %v2692, %v2821
        %v2881 = vmul.f32 %v2692, %v2825
        %v2882 = vmul.f32 %v2692, %v2829
        %v2883 = vmul.f32 %v2692, %v2833
        %v2884 = vmul.f32 %v2692, %v2837
        %v2885 = vmul.f32 %v2692, %v2841
        %v2886 = vmul.f32 %v2692, %v2845
        %v2887 = vmul.f32 %v2692, %v2849
        %v2888 = vmul.f32 %v2692, %v2853
        %v2889 = vmul.f32 %v2692, %v2857
        %v2890 = vmul.f32 %v2696, %v2797
        %v2891 = vmul.f32 %v2696, %v2801
        %v2892 = vmul.f32 %v2696, %v2805
        %v2893 = vmul.f32 %v2696, %v2809
        %v2894 = vmul.f32 %v2696, %v2813
        %v2895 = vmul.f32 %v2696, %v2817
        %v2896 = vmul.f32 %v2696, %v2821
        %v2897 = vmul.f32 %v2696, %v2825
        %v2898 = vmul.f32 %v2696, %v2829
        %v2899 = vmul.f32 %v2696, %v2833
        %v2900 = vmul.f32 %v2696, %v2837
        %v2901 = vmul.f32 %v2696, %v2841
        %v2902 = vmul.f32 %v2696, %v2845
        %v2903 = vmul.f32 %v2696, %v2849
        %v2904 = vmul.f32 %v2696, %v2853
        %v2905 = vmul.f32 %v2696, %v2857
        %v2906 = vmul.f32 %v2700, %v2797
        %v2907 = vmul.f32 %v2700, %v2801
        %v2908 = vmul.f32 %v2700, %v2805
        %v2909 = vmul.f32 %v2700, %v2809
        %v2910 = vmul.f32 %v2700, %v2813
        %v2911 = vmul.f32 %v2700, %v2817
        %v2912 = vmul.f32 %v2700, %v2821
        %v2913 = vmul.f32 %v2700, %v2825
        %v2914 = vmul.f32 %v2700, %v2829
        %v2915 = vmul.f32 %v2700, %v2833
        %v2916 = vmul.f32 %v2700, %v2837
        %v2917 = vmul.f32 %v2700, %v2841
        %v2918 = vmul.f32 %v2700, %v2845
        %v2919 = vmul.f32 %v2700, %v2849
        %v2920 = vmul.f32 %v2700, %v2853
        %v2921 = vmul.f32 %v2700, %v2857
        %v2922 = vmul.f32 %v2704, %v2797
        %v2923 = vmul.f32 %v2704, %v2801
        %v2924 = vmul.f32 %v2704, %v2805
        %v2925 = vmul.f32 %v2704, %v2809
        %v2926 = vmul.f32 %v2704, %v2813
        %v2927 = vmul.f32 %v2704, %v2817
        %v2928 = vmul.f32 %v2704, %v2821
        %v2929 = vmul.f32 %v2704, %v2825
        %v2930 = vmul.f32 %v2704, %v2829
        %v2931 = vmul.f32 %v2704, %v2833
        %v2932 = vmul.f32 %v2704, %v2837
        %v2933 = vmul.f32 %v2704, %v2841
        %v2934 = vmul.f32 %v2704, %v2845
        %v2935 = vmul.f32 %v2704, %v2849
        %v2936 = vmul.f32 %v2704, %v2853
        %v2937 = vmul.f32 %v2704, %v2857
        %v2938 = vmul.f32 %v2708, %v2797
        %v2939 = vmul.f32 %v2708, %v2801
        %v2940 = vmul.f32 %v2708, %v2805
        %v2941 = vmul.f32 %v2708, %v2809
        %v2942 = vmul.f32 %v2708, %v2813
        %v2943 = vmul.f32 %v2708, %v2817
        %v2944 = vmul.f32 %v2708, %v2821
        %v2945 = vmul.f32 %v2708, %v2825
        %v2946 = vmul.f32 %v2708, %v2829
        %v2947 = vmul.f32 %v2708, %v2833
        %v2948 = vmul.f32 %v2708, %v2837
        %v2949 = vmul.f32 %v2708, %v2841
        %v2950 = vmul.f32 %v2708, %v2845
        %v2951 = vmul.f32 %v2708, %v2849
        %v2952 = vmul.f32 %v2708, %v2853
        %v2953 = vmul.f32 %v2708, %v2857
        %v2954 = vmul.f32 %v2712, %v2797
        %v2955 = vmul.f32 %v2712, %v2801
        %v2956 = vmul.f32 %v2712, %v2805
        %v2957 = vmul.f32 %v2712, %v2809
        %v2958 = vmul.f32 %v2712, %v2813
        %v2959 = vmul.f32 %v2712, %v2817
        %v2960 = vmul.f32 %v2712, %v2821
        %v2961 = vmul.f32 %v2712, %v2825
        %v2962 = vmul.f32 %v2712, %v2829
        %v2963 = vmul.f32 %v2712, %v2833
        %v2964 = vmul.f32 %v2712, %v2837
        %v2965 = vmul.f32 %v2712, %v2841
        %v2966 = vmul.f32 %v2712, %v2845
        %v2967 = vmul.f32 %v2712, %v2849
        %v2968 = vmul.f32 %v2712, %v2853
        %v2969 = vmul.f32 %v2712, %v2857
        %v2970 = vadd.f32 %v2574, %v2858
        %v2971 = vadd.f32 %v2575, %v2859
        %v2972 = vadd.f32 %v2576, %v2860
        %v2973 = vadd.f32 %v2577, %v2861
        %v2974 = vadd.f32 %v2578, %v2862
        %v2975 = vadd.f32 %v2579, %v2863
        %v2976 = vadd.f32 %v2580, %v2864
        %v2977 = vadd.f32 %v2581, %v2865
        %v2978 = vadd.f32 %v2582, %v2866
        %v2979 = vadd.f32 %v2583, %v2867
        %v2980 = vadd.f32 %v2584, %v2868
        %v2981 = vadd.f32 %v2585, %v2869
        %v2982 = vadd.f32 %v2586, %v2870
        %v2983 = vadd.f32 %v2587, %v2871
        %v2984 = vadd.f32 %v2588, %v2872
        %v2985 = vadd.f32 %v2589, %v2873
        %v2986 = vadd.f32 %v2590, %v2874
        %v2987 = vadd.f32 %v2591, %v2875
        %v2988 = vadd.f32 %v2592, %v2876
        %v2989 = vadd.f32 %v2593, %v2877
        %v2990 = vadd.f32 %v2594, %v2878
        %v2991 = vadd.f32 %v2595, %v2879
        %v2992 = vadd.f32 %v2596, %v2880
        %v2993 = vadd.f32 %v2597, %v2881
        %v2994 = vadd.f32 %v2598, %v2882
        %v2995 = vadd.f32 %v2599, %v2883
        %v2996 = vadd.f32 %v2600, %v2884
        %v2997 = vadd.f32 %v2601, %v2885
        %v2998 = vadd.f32 %v2602, %v2886
        %v2999 = vadd.f32 %v2603, %v2887
        %v3000 = vadd.f32 %v2604, %v2888
        %v3001 = vadd.f32 %v2605, %v2889
        %v3002 = vadd.f32 %v2606, %v2890
        %v3003 = vadd.f32 %v2607, %v2891
        %v3004 = vadd.f32 %v2608, %v2892
        %v3005 = vadd.f32 %v2609, %v2893
        %v3006 = vadd.f32 %v2610, %v2894
        %v3007 = vadd.f32 %v2611, %v2895
        %v3008 = vadd.f32 %v2612, %v2896
        %v3009 = vadd.f32 %v2613, %v2897
        %v3010 = vadd.f32 %v2614, %v2898
        %v3011 = vadd.f32 %v2615, %v2899
        %v3012 = vadd.f32 %v2616, %v2900
        %v3013 = vadd.f32 %v2617, %v2901
        %v3014 = vadd.f32 %v2618, %v2902
        %v3015 = vadd.f32 %v2619, %v2903
        %v3016 = vadd.f32 %v2620, %v2904
        %v3017 = vadd.f32 %v2621, %v2905
        %v3018 = vadd.f32 %v2622, %v2906
        %v3019 = vadd.f32 %v2623, %v2907
        %v3020 = vadd.f32 %v2624, %v2908
        %v3021 = vadd.f32 %v2625, %v2909
        %v3022 = vadd.f32 %v2626, %v2910
        %v3023 = vadd.f32 %v2627, %v2911
        %v3024 = vadd.f32 %v2628, %v2912
        %v3025 = vadd.f32 %v2629, %v2913
        %v3026 = vadd.f32 %v2630, %v2914
        %v3027 = vadd.f32 %v2631, %v2915
        %v3028 = vadd.f32 %v2632, %v2916
        %v3029 = vadd.f32 %v2633, %v2917
        %v3030 = vadd.f32 %v2634, %v2918
        %v3031 = vadd.f32 %v2635, %v2919
        %v3032 = vadd.f32 %v2636, %v2920
        %v3033 = vadd.f32 %v2637, %v2921
        %v3034 = vadd.f32 %v2638, %v2922
        %v3035 = vadd.f32 %v2639, %v2923
        %v3036 = vadd.f32 %v2640, %v2924
        %v3037 = vadd.f32 %v2641, %v2925
        %v3038 = vadd.f32 %v2642, %v2926
        %v3039 = vadd.f32 %v2643, %v2927
        %v3040 = vadd.f32 %v2644, %v2928
        %v3041 = vadd.f32 %v2645, %v2929
        %v3042 = vadd.f32 %v2646, %v2930
        %v3043 = vadd.f32 %v2647, %v2931
        %v3044 = vadd.f32 %v2648, %v2932
        %v3045 = vadd.f32 %v2649, %v2933
        %v3046 = vadd.f32 %v2650, %v2934
        %v3047 = vadd.f32 %v2651, %v2935
        %v3048 = vadd.f32 %v2652, %v2936
        %v3049 = vadd.f32 %v2653, %v2937
        %v3050 = vadd.f32 %v2654, %v2938
        %v3051 = vadd.f32 %v2655, %v2939
        %v3052 = vadd.f32 %v2656, %v2940
        %v3053 = vadd.f32 %v2657, %v2941
        %v3054 = vadd.f32 %v2658, %v2942
        %v3055 = vadd.f32 %v2659, %v2943
        %v3056 = vadd.f32 %v2660, %v2944
        %v3057 = vadd.f32 %v2661, %v2945
        %v3058 = vadd.f32 %v2662, %v2946
        %v3059 = vadd.f32 %v2663, %v2947
        %v3060 = vadd.f32 %v2664, %v2948
        %v3061 = vadd.f32 %v2665, %v2949
        %v3062 = vadd.f32 %v2666, %v2950
        %v3063 = vadd.f32 %v2667, %v2951
        %v3064 = vadd.f32 %v2668, %v2952
        %v3065 = vadd.f32 %v2669, %v2953
        %v3066 = vadd.f32 %v2670, %v2954
        %v3067 = vadd.f32 %v2671, %v2955
        %v3068 = vadd.f32 %v2672, %v2956
        %v3069 = vadd.f32 %v2673, %v2957
        %v3070 = vadd.f32 %v2674, %v2958
        %v3071 = vadd.f32 %v2675, %v2959
        %v3072 = vadd.f32 %v2676, %v2960
        %v3073 = vadd.f32 %v2677, %v2961
        %v3074 = vadd.f32 %v2678, %v2962
        %v3075 = vadd.f32 %v2679, %v2963
        %v3076 = vadd.f32 %v2680, %v2964
        %v3077 = vadd.f32 %v2681, %v2965
        %v3078 = vadd.f32 %v2682, %v2966
        %v3079 = vadd.f32 %v2683, %v2967
        %v3080 = vadd.f32 %v2684, %v2968
        %v3081 = vadd.f32 %v2685, %v2969
        %v3082 = vpack.c.bf16 %v2986, %v2970
        %v3083 = vpack.c.bf16 %v2987, %v2971
        %v3084 = vpack.c.bf16 %v2988, %v2972
        %v3085 = vpack.c.bf16 %v2989, %v2973
        %v3086 = vpack.c.bf16 %v2990, %v2974
        %v3087 = vpack.c.bf16 %v2991, %v2975
        %v3088 = vpack.c.bf16 %v2992, %v2976
        %v3089 = vpack.c.bf16 %v2993, %v2977
        %v3090 = vpack.c.bf16 %v2994, %v2978
        %v3091 = vpack.c.bf16 %v2995, %v2979
        %v3092 = vpack.c.bf16 %v2996, %v2980
        %v3093 = vpack.c.bf16 %v2997, %v2981
        %v3094 = vpack.c.bf16 %v2998, %v2982
        %v3095 = vpack.c.bf16 %v2999, %v2983
        %v3096 = vpack.c.bf16 %v3000, %v2984
        %v3097 = vpack.c.bf16 %v3001, %v2985
        %v3098 = vpack.c.bf16 %v3018, %v3002
        %v3099 = vpack.c.bf16 %v3019, %v3003
        %v3100 = vpack.c.bf16 %v3020, %v3004
        %v3101 = vpack.c.bf16 %v3021, %v3005
        %v3102 = vpack.c.bf16 %v3022, %v3006
        %v3103 = vpack.c.bf16 %v3023, %v3007
        %v3104 = vpack.c.bf16 %v3024, %v3008
        %v3105 = vpack.c.bf16 %v3025, %v3009
        %v3106 = vpack.c.bf16 %v3026, %v3010
        %v3107 = vpack.c.bf16 %v3027, %v3011
        %v3108 = vpack.c.bf16 %v3028, %v3012
        %v3109 = vpack.c.bf16 %v3029, %v3013
        %v3110 = vpack.c.bf16 %v3030, %v3014
        %v3111 = vpack.c.bf16 %v3031, %v3015
        %v3112 = vpack.c.bf16 %v3032, %v3016
        %v3113 = vpack.c.bf16 %v3033, %v3017
        %v3114 = vpack.c.bf16 %v3050, %v3034
        %v3115 = vpack.c.bf16 %v3051, %v3035
        %v3116 = vpack.c.bf16 %v3052, %v3036
        %v3117 = vpack.c.bf16 %v3053, %v3037
        %v3118 = vpack.c.bf16 %v3054, %v3038
        %v3119 = vpack.c.bf16 %v3055, %v3039
        %v3120 = vpack.c.bf16 %v3056, %v3040
        %v3121 = vpack.c.bf16 %v3057, %v3041
        %v3122 = vpack.c.bf16 %v3058, %v3042
        %v3123 = vpack.c.bf16 %v3059, %v3043
        %v3124 = vpack.c.bf16 %v3060, %v3044
        %v3125 = vpack.c.bf16 %v3061, %v3045
        %v3126 = vpack.c.bf16 %v3062, %v3046
        %v3127 = vpack.c.bf16 %v3063, %v3047
        %v3128 = vpack.c.bf16 %v3064, %v3048
        %v3129 = vpack.c.bf16 %v3065, %v3049
        %v3130 = vpack.c.bf16 %v3066, %v3066
        %v3131 = vpack.c.bf16 %v3067, %v3067
        %v3132 = vpack.c.bf16 %v3068, %v3068
        %v3133 = vpack.c.bf16 %v3069, %v3069
        %v3134 = vpack.c.bf16 %v3070, %v3070
        %v3135 = vpack.c.bf16 %v3071, %v3071
        %v3136 = vpack.c.bf16 %v3072, %v3072
        %v3137 = vpack.c.bf16 %v3073, %v3073
        %v3138 = vpack.c.bf16 %v3074, %v3074
        %v3139 = vpack.c.bf16 %v3075, %v3075
        %v3140 = vpack.c.bf16 %v3076, %v3076
        %v3141 = vpack.c.bf16 %v3077, %v3077
        %v3142 = vpack.c.bf16 %v3078, %v3078
        %v3143 = vpack.c.bf16 %v3079, %v3079
        %v3144 = vpack.c.bf16 %v3080, %v3080
        %v3145 = vpack.c.bf16 %v3081, %v3081
        %3147 = vset.pattern.permute.xlu0 0
        %3148 = vperm.xlu0 %3147, %v489
        %v3149 = vpop.permute.xlu0 %3148
        %3152 = vset.pattern.permute.xlu0 0
        %3153 = vperm.xlu0 %3152, %v490
        %v3154 = vpop.permute.xlu0 %3153
        %3157 = vset.pattern.permute.xlu0 0
        %3158 = vperm.xlu0 %3157, %v491
        %v3159 = vpop.permute.xlu0 %3158
        %3162 = vset.pattern.permute.xlu0 0
        %3163 = vperm.xlu0 %3162, %v492
        %v3164 = vpop.permute.xlu0 %3163
        %3167 = vset.pattern.permute.xlu0 0
        %3168 = vperm.xlu0 %3167, %v493
        %v3169 = vpop.permute.xlu0 %3168
        %3172 = vset.pattern.permute.xlu0 0
        %3173 = vperm.xlu0 %3172, %v494
        %v3174 = vpop.permute.xlu0 %3173
        %3177 = vset.pattern.permute.xlu0 0
        %3178 = vperm.xlu0 %3177, %v495
        %v3179 = vpop.permute.xlu0 %3178
        %v3181 = vmul.f32 %v2970, %v3149
        %v3182 = vmul.f32 %v2971, %v3149
        %v3183 = vmul.f32 %v2972, %v3149
        %v3184 = vmul.f32 %v2973, %v3149
        %v3185 = vmul.f32 %v2974, %v3149
        %v3186 = vmul.f32 %v2975, %v3149
        %v3187 = vmul.f32 %v2976, %v3149
        %v3188 = vmul.f32 %v2977, %v3149
        %v3189 = vmul.f32 %v2978, %v3149
        %v3190 = vmul.f32 %v2979, %v3149
        %v3191 = vmul.f32 %v2980, %v3149
        %v3192 = vmul.f32 %v2981, %v3149
        %v3193 = vmul.f32 %v2982, %v3149
        %v3194 = vmul.f32 %v2983, %v3149
        %v3195 = vmul.f32 %v2984, %v3149
        %v3196 = vmul.f32 %v2985, %v3149
        %v3197 = vmul.f32 %v2986, %v3154
        %v3198 = vmul.f32 %v2987, %v3154
        %v3199 = vmul.f32 %v2988, %v3154
        %v3200 = vmul.f32 %v2989, %v3154
        %v3201 = vmul.f32 %v2990, %v3154
        %v3202 = vmul.f32 %v2991, %v3154
        %v3203 = vmul.f32 %v2992, %v3154
        %v3204 = vmul.f32 %v2993, %v3154
        %v3205 = vmul.f32 %v2994, %v3154
        %v3206 = vmul.f32 %v2995, %v3154
        %v3207 = vmul.f32 %v2996, %v3154
        %v3208 = vmul.f32 %v2997, %v3154
        %v3209 = vmul.f32 %v2998, %v3154
        %v3210 = vmul.f32 %v2999, %v3154
        %v3211 = vmul.f32 %v3000, %v3154
        %v3212 = vmul.f32 %v3001, %v3154
        %v3213 = vmul.f32 %v3002, %v3159
        %v3214 = vmul.f32 %v3003, %v3159
        %v3215 = vmul.f32 %v3004, %v3159
        %v3216 = vmul.f32 %v3005, %v3159
        %v3217 = vmul.f32 %v3006, %v3159
        %v3218 = vmul.f32 %v3007, %v3159
        %v3219 = vmul.f32 %v3008, %v3159
        %v3220 = vmul.f32 %v3009, %v3159
        %v3221 = vmul.f32 %v3010, %v3159
        %v3222 = vmul.f32 %v3011, %v3159
        %v3223 = vmul.f32 %v3012, %v3159
        %v3224 = vmul.f32 %v3013, %v3159
        %v3225 = vmul.f32 %v3014, %v3159
        %v3226 = vmul.f32 %v3015, %v3159
        %v3227 = vmul.f32 %v3016, %v3159
        %v3228 = vmul.f32 %v3017, %v3159
        %v3229 = vmul.f32 %v3018, %v3164
        %v3230 = vmul.f32 %v3019, %v3164
        %v3231 = vmul.f32 %v3020, %v3164
        %v3232 = vmul.f32 %v3021, %v3164
        %v3233 = vmul.f32 %v3022, %v3164
        %v3234 = vmul.f32 %v3023, %v3164
        %v3235 = vmul.f32 %v3024, %v3164
        %v3236 = vmul.f32 %v3025, %v3164
        %v3237 = vmul.f32 %v3026, %v3164
        %v3238 = vmul.f32 %v3027, %v3164
        %v3239 = vmul.f32 %v3028, %v3164
        %v3240 = vmul.f32 %v3029, %v3164
        %v3241 = vmul.f32 %v3030, %v3164
        %v3242 = vmul.f32 %v3031, %v3164
        %v3243 = vmul.f32 %v3032, %v3164
        %v3244 = vmul.f32 %v3033, %v3164
        %v3245 = vmul.f32 %v3034, %v3169
        %v3246 = vmul.f32 %v3035, %v3169
        %v3247 = vmul.f32 %v3036, %v3169
        %v3248 = vmul.f32 %v3037, %v3169
        %v3249 = vmul.f32 %v3038, %v3169
        %v3250 = vmul.f32 %v3039, %v3169
        %v3251 = vmul.f32 %v3040, %v3169
        %v3252 = vmul.f32 %v3041, %v3169
        %v3253 = vmul.f32 %v3042, %v3169
        %v3254 = vmul.f32 %v3043, %v3169
        %v3255 = vmul.f32 %v3044, %v3169
        %v3256 = vmul.f32 %v3045, %v3169
        %v3257 = vmul.f32 %v3046, %v3169
        %v3258 = vmul.f32 %v3047, %v3169
        %v3259 = vmul.f32 %v3048, %v3169
        %v3260 = vmul.f32 %v3049, %v3169
        %v3261 = vmul.f32 %v3050, %v3174
        %v3262 = vmul.f32 %v3051, %v3174
        %v3263 = vmul.f32 %v3052, %v3174
        %v3264 = vmul.f32 %v3053, %v3174
        %v3265 = vmul.f32 %v3054, %v3174
        %v3266 = vmul.f32 %v3055, %v3174
        %v3267 = vmul.f32 %v3056, %v3174
        %v3268 = vmul.f32 %v3057, %v3174
        %v3269 = vmul.f32 %v3058, %v3174
        %v3270 = vmul.f32 %v3059, %v3174
        %v3271 = vmul.f32 %v3060, %v3174
        %v3272 = vmul.f32 %v3061, %v3174
        %v3273 = vmul.f32 %v3062, %v3174
        %v3274 = vmul.f32 %v3063, %v3174
        %v3275 = vmul.f32 %v3064, %v3174
        %v3276 = vmul.f32 %v3065, %v3174
        %v3277 = vmul.f32 %v3066, %v3179
        %v3278 = vmul.f32 %v3067, %v3179
        %v3279 = vmul.f32 %v3068, %v3179
        %v3280 = vmul.f32 %v3069, %v3179
        %v3281 = vmul.f32 %v3070, %v3179
        %v3282 = vmul.f32 %v3071, %v3179
        %v3283 = vmul.f32 %v3072, %v3179
        %v3284 = vmul.f32 %v3073, %v3179
        %v3285 = vmul.f32 %v3074, %v3179
        %v3286 = vmul.f32 %v3075, %v3179
        %v3287 = vmul.f32 %v3076, %v3179
        %v3288 = vmul.f32 %v3077, %v3179
        %v3289 = vmul.f32 %v3078, %v3179
        %v3290 = vmul.f32 %v3079, %v3179
        %v3291 = vmul.f32 %v3080, %v3179
        %v3292 = vmul.f32 %v3081, %v3179
        %v3293 = vadd.f32 %v3181, %v3197
        %v3294 = vadd.f32 %v3293, %v3213
        %v3295 = vadd.f32 %v3294, %v3229
        %v3296 = vadd.f32 %v3295, %v3245
        %v3297 = vadd.f32 %v3296, %v3261
        %vm3298 = vcmask 1040384
        %v3299 = vsel %vm3298, %v3277, 0.0
        %v3300 = vadd.f32 %v3297, %v3299
        %v3301 = vrot.slane %v3300, 4
        %v3302 = vadd.f32 %v3300, %v3301
        %v3303 = vrot.slane %v3302, 2
        %v3304 = vadd.f32 %v3302, %v3303
        %v3305 = vrot.slane %v3304, 1
        %v3306 = vadd.f32 %v3304, %v3305
        %v3307 = vadd.f32 %v3182, %v3198
        %v3308 = vadd.f32 %v3307, %v3214
        %v3309 = vadd.f32 %v3308, %v3230
        %v3310 = vadd.f32 %v3309, %v3246
        %v3311 = vadd.f32 %v3310, %v3262
        %v3312 = vsel %vm3298, %v3278, 0.0
        %v3313 = vadd.f32 %v3311, %v3312
        %v3314 = vrot.slane %v3313, 4
        %v3315 = vadd.f32 %v3313, %v3314
        %v3316 = vrot.slane %v3315, 2
        %v3317 = vadd.f32 %v3315, %v3316
        %v3318 = vrot.slane %v3317, 1
        %v3319 = vadd.f32 %v3317, %v3318
        %v3320 = vadd.f32 %v3183, %v3199
        %v3321 = vadd.f32 %v3320, %v3215
        %v3322 = vadd.f32 %v3321, %v3231
        %v3323 = vadd.f32 %v3322, %v3247
        %v3324 = vadd.f32 %v3323, %v3263
        %v3325 = vsel %vm3298, %v3279, 0.0
        %v3326 = vadd.f32 %v3324, %v3325
        %v3327 = vrot.slane %v3326, 4
        %v3328 = vadd.f32 %v3326, %v3327
        %v3329 = vrot.slane %v3328, 2
        %v3330 = vadd.f32 %v3328, %v3329
        %v3331 = vrot.slane %v3330, 1
        %v3332 = vadd.f32 %v3330, %v3331
        %v3333 = vadd.f32 %v3184, %v3200
        %v3334 = vadd.f32 %v3333, %v3216
        %v3335 = vadd.f32 %v3334, %v3232
        %v3336 = vadd.f32 %v3335, %v3248
        %v3337 = vadd.f32 %v3336, %v3264
        %v3338 = vsel %vm3298, %v3280, 0.0
        %v3339 = vadd.f32 %v3337, %v3338
        %v3340 = vrot.slane %v3339, 4
        %v3341 = vadd.f32 %v3339, %v3340
        %v3342 = vrot.slane %v3341, 2
        %v3343 = vadd.f32 %v3341, %v3342
        %v3344 = vrot.slane %v3343, 1
        %v3345 = vadd.f32 %v3343, %v3344
        %v3346 = vadd.f32 %v3185, %v3201
        %v3347 = vadd.f32 %v3346, %v3217
        %v3348 = vadd.f32 %v3347, %v3233
        %v3349 = vadd.f32 %v3348, %v3249
        %v3350 = vadd.f32 %v3349, %v3265
        %v3351 = vsel %vm3298, %v3281, 0.0
        %v3352 = vadd.f32 %v3350, %v3351
        %v3353 = vrot.slane %v3352, 4
        %v3354 = vadd.f32 %v3352, %v3353
        %v3355 = vrot.slane %v3354, 2
        %v3356 = vadd.f32 %v3354, %v3355
        %v3357 = vrot.slane %v3356, 1
        %v3358 = vadd.f32 %v3356, %v3357
        %v3359 = vadd.f32 %v3186, %v3202
        %v3360 = vadd.f32 %v3359, %v3218
        %v3361 = vadd.f32 %v3360, %v3234
        %v3362 = vadd.f32 %v3361, %v3250
        %v3363 = vadd.f32 %v3362, %v3266
        %v3364 = vsel %vm3298, %v3282, 0.0
        %v3365 = vadd.f32 %v3363, %v3364
        %v3366 = vrot.slane %v3365, 4
        %v3367 = vadd.f32 %v3365, %v3366
        %v3368 = vrot.slane %v3367, 2
        %v3369 = vadd.f32 %v3367, %v3368
        %v3370 = vrot.slane %v3369, 1
        %v3371 = vadd.f32 %v3369, %v3370
        %v3372 = vadd.f32 %v3187, %v3203
        %v3373 = vadd.f32 %v3372, %v3219
        %v3374 = vadd.f32 %v3373, %v3235
        %v3375 = vadd.f32 %v3374, %v3251
        %v3376 = vadd.f32 %v3375, %v3267
        %v3377 = vsel %vm3298, %v3283, 0.0
        %v3378 = vadd.f32 %v3376, %v3377
        %v3379 = vrot.slane %v3378, 4
        %v3380 = vadd.f32 %v3378, %v3379
        %v3381 = vrot.slane %v3380, 2
        %v3382 = vadd.f32 %v3380, %v3381
        %v3383 = vrot.slane %v3382, 1
        %v3384 = vadd.f32 %v3382, %v3383
        %v3385 = vadd.f32 %v3188, %v3204
        %v3386 = vadd.f32 %v3385, %v3220
        %v3387 = vadd.f32 %v3386, %v3236
        %v3388 = vadd.f32 %v3387, %v3252
        %v3389 = vadd.f32 %v3388, %v3268
        %v3390 = vsel %vm3298, %v3284, 0.0
        %v3391 = vadd.f32 %v3389, %v3390
        %v3392 = vrot.slane %v3391, 4
        %v3393 = vadd.f32 %v3391, %v3392
        %v3394 = vrot.slane %v3393, 2
        %v3395 = vadd.f32 %v3393, %v3394
        %v3396 = vrot.slane %v3395, 1
        %v3397 = vadd.f32 %v3395, %v3396
        %v3398 = vadd.f32 %v3189, %v3205
        %v3399 = vadd.f32 %v3398, %v3221
        %v3400 = vadd.f32 %v3399, %v3237
        %v3401 = vadd.f32 %v3400, %v3253
        %v3402 = vadd.f32 %v3401, %v3269
        %v3403 = vsel %vm3298, %v3285, 0.0
        %v3404 = vadd.f32 %v3402, %v3403
        %v3405 = vrot.slane %v3404, 4
        %v3406 = vadd.f32 %v3404, %v3405
        %v3407 = vrot.slane %v3406, 2
        %v3408 = vadd.f32 %v3406, %v3407
        %v3409 = vrot.slane %v3408, 1
        %v3410 = vadd.f32 %v3408, %v3409
        %v3411 = vadd.f32 %v3190, %v3206
        %v3412 = vadd.f32 %v3411, %v3222
        %v3413 = vadd.f32 %v3412, %v3238
        %v3414 = vadd.f32 %v3413, %v3254
        %v3415 = vadd.f32 %v3414, %v3270
        %v3416 = vsel %vm3298, %v3286, 0.0
        %v3417 = vadd.f32 %v3415, %v3416
        %v3418 = vrot.slane %v3417, 4
        %v3419 = vadd.f32 %v3417, %v3418
        %v3420 = vrot.slane %v3419, 2
        %v3421 = vadd.f32 %v3419, %v3420
        %v3422 = vrot.slane %v3421, 1
        %v3423 = vadd.f32 %v3421, %v3422
        %v3424 = vadd.f32 %v3191, %v3207
        %v3425 = vadd.f32 %v3424, %v3223
        %v3426 = vadd.f32 %v3425, %v3239
        %v3427 = vadd.f32 %v3426, %v3255
        %v3428 = vadd.f32 %v3427, %v3271
        %v3429 = vsel %vm3298, %v3287, 0.0
        %v3430 = vadd.f32 %v3428, %v3429
        %v3431 = vrot.slane %v3430, 4
        %v3432 = vadd.f32 %v3430, %v3431
        %v3433 = vrot.slane %v3432, 2
        %v3434 = vadd.f32 %v3432, %v3433
        %v3435 = vrot.slane %v3434, 1
        %v3436 = vadd.f32 %v3434, %v3435
        %v3437 = vadd.f32 %v3192, %v3208
        %v3438 = vadd.f32 %v3437, %v3224
        %v3439 = vadd.f32 %v3438, %v3240
        %v3440 = vadd.f32 %v3439, %v3256
        %v3441 = vadd.f32 %v3440, %v3272
        %v3442 = vsel %vm3298, %v3288, 0.0
        %v3443 = vadd.f32 %v3441, %v3442
        %v3444 = vrot.slane %v3443, 4
        %v3445 = vadd.f32 %v3443, %v3444
        %v3446 = vrot.slane %v3445, 2
        %v3447 = vadd.f32 %v3445, %v3446
        %v3448 = vrot.slane %v3447, 1
        %v3449 = vadd.f32 %v3447, %v3448
        %v3450 = vadd.f32 %v3193, %v3209
        %v3451 = vadd.f32 %v3450, %v3225
        %v3452 = vadd.f32 %v3451, %v3241
        %v3453 = vadd.f32 %v3452, %v3257
        %v3454 = vadd.f32 %v3453, %v3273
        %v3455 = vsel %vm3298, %v3289, 0.0
        %v3456 = vadd.f32 %v3454, %v3455
        %v3457 = vrot.slane %v3456, 4
        %v3458 = vadd.f32 %v3456, %v3457
        %v3459 = vrot.slane %v3458, 2
        %v3460 = vadd.f32 %v3458, %v3459
        %v3461 = vrot.slane %v3460, 1
        %v3462 = vadd.f32 %v3460, %v3461
        %v3463 = vadd.f32 %v3194, %v3210
        %v3464 = vadd.f32 %v3463, %v3226
        %v3465 = vadd.f32 %v3464, %v3242
        %v3466 = vadd.f32 %v3465, %v3258
        %v3467 = vadd.f32 %v3466, %v3274
        %v3468 = vsel %vm3298, %v3290, 0.0
        %v3469 = vadd.f32 %v3467, %v3468
        %v3470 = vrot.slane %v3469, 4
        %v3471 = vadd.f32 %v3469, %v3470
        %v3472 = vrot.slane %v3471, 2
        %v3473 = vadd.f32 %v3471, %v3472
        %v3474 = vrot.slane %v3473, 1
        %v3475 = vadd.f32 %v3473, %v3474
        %v3476 = vadd.f32 %v3195, %v3211
        %v3477 = vadd.f32 %v3476, %v3227
        %v3478 = vadd.f32 %v3477, %v3243
        %v3479 = vadd.f32 %v3478, %v3259
        %v3480 = vadd.f32 %v3479, %v3275
        %v3481 = vsel %vm3298, %v3291, 0.0
        %v3482 = vadd.f32 %v3480, %v3481
        %v3483 = vrot.slane %v3482, 4
        %v3484 = vadd.f32 %v3482, %v3483
        %v3485 = vrot.slane %v3484, 2
        %v3486 = vadd.f32 %v3484, %v3485
        %v3487 = vrot.slane %v3486, 1
        %v3488 = vadd.f32 %v3486, %v3487
        %v3489 = vadd.f32 %v3196, %v3212
        %v3490 = vadd.f32 %v3489, %v3228
        %v3491 = vadd.f32 %v3490, %v3244
        %v3492 = vadd.f32 %v3491, %v3260
        %v3493 = vadd.f32 %v3492, %v3276
        %v3494 = vsel %vm3298, %v3292, 0.0
        %v3495 = vadd.f32 %v3493, %v3494
        %v3496 = vrot.slane %v3495, 4
        %v3497 = vadd.f32 %v3495, %v3496
        %v3498 = vrot.slane %v3497, 2
        %v3499 = vadd.f32 %v3497, %v3498
        %v3500 = vrot.slane %v3499, 1
        %v3501 = vadd.f32 %v3499, %v3500
        %v3502 = vpack.c.bf16 %v3306, %v3306
        %v3503 = vpack.c.bf16 %v3319, %v3319
        %v3504 = vpack.c.bf16 %v3332, %v3332
        %v3505 = vpack.c.bf16 %v3345, %v3345
        %v3506 = vpack.c.bf16 %v3358, %v3358
        %v3507 = vpack.c.bf16 %v3371, %v3371
        %v3508 = vpack.c.bf16 %v3384, %v3384
        %v3509 = vpack.c.bf16 %v3397, %v3397
        %v3510 = vpack.c.bf16 %v3410, %v3410
        %v3511 = vpack.c.bf16 %v3423, %v3423
        %v3512 = vpack.c.bf16 %v3436, %v3436
        %v3513 = vpack.c.bf16 %v3449, %v3449
        %v3514 = vpack.c.bf16 %v3462, %v3462
        %v3515 = vpack.c.bf16 %v3475, %v3475
        %v3516 = vpack.c.bf16 %v3488, %v3488
        %v3517 = vpack.c.bf16 %v3501, %v3501
        %v3774 = vunpack.c.l.b16 %v496
        %v3775 = vunpack.c.l.b16 %v497
        %v3776 = vunpack.c.l.b16 %v498
        %v3777 = vunpack.c.l.b16 %v499
        %v3778 = vunpack.c.l.b16 %v500
        %v3779 = vunpack.c.l.b16 %v501
        %v3780 = vunpack.c.l.b16 %v502
        %v3781 = vunpack.c.l.b16 %v503
        %v3782 = vunpack.c.l.b16 %v504
        %v3783 = vunpack.c.l.b16 %v505
        %v3784 = vunpack.c.l.b16 %v506
        %v3785 = vunpack.c.l.b16 %v507
        %v3786 = vunpack.c.l.b16 %v508
        %v3787 = vunpack.c.l.b16 %v509
        %v3788 = vunpack.c.l.b16 %v510
        %v3789 = vunpack.c.l.b16 %v511
        %v3790 = vunpack.c.l.b16 %v512
        %v3791 = vunpack.c.l.b16 %v513
        %v3792 = vunpack.c.l.b16 %v514
        %v3793 = vunpack.c.l.b16 %v515
        %v3794 = vunpack.c.l.b16 %v516
        %v3795 = vunpack.c.l.b16 %v517
        %v3796 = vunpack.c.l.b16 %v518
        %v3797 = vunpack.c.l.b16 %v519
        %v3798 = vunpack.c.l.b16 %v520
        %v3799 = vunpack.c.l.b16 %v521
        %v3800 = vunpack.c.l.b16 %v522
        %v3801 = vunpack.c.l.b16 %v523
        %v3802 = vunpack.c.l.b16 %v524
        %v3803 = vunpack.c.l.b16 %v525
        %v3804 = vunpack.c.l.b16 %v526
        %v3805 = vunpack.c.l.b16 %v527
        %v3806 = vunpack.c.l.b16 %v528
        %v3807 = vunpack.c.l.b16 %v529
        %v3808 = vunpack.c.l.b16 %v530
        %v3809 = vunpack.c.l.b16 %v531
        %v3810 = vunpack.c.l.b16 %v532
        %v3811 = vunpack.c.l.b16 %v533
        %v3812 = vunpack.c.l.b16 %v534
        %v3813 = vunpack.c.l.b16 %v535
        %v3814 = vunpack.c.l.b16 %v536
        %v3815 = vunpack.c.l.b16 %v537
        %v3816 = vunpack.c.l.b16 %v538
        %v3817 = vunpack.c.l.b16 %v539
        %v3818 = vunpack.c.l.b16 %v540
        %v3819 = vunpack.c.l.b16 %v541
        %v3820 = vunpack.c.l.b16 %v542
        %v3821 = vunpack.c.l.b16 %v543
        %v3822 = vunpack.c.l.b16 %v544
        %v3823 = vunpack.c.l.b16 %v545
        %v3824 = vunpack.c.l.b16 %v546
        %v3825 = vunpack.c.l.b16 %v547
        %v3826 = vunpack.c.l.b16 %v548
        %v3827 = vunpack.c.l.b16 %v549
        %v3828 = vunpack.c.l.b16 %v550
        %v3829 = vunpack.c.l.b16 %v551
        %v3830 = vunpack.c.l.b16 %v552
        %v3831 = vunpack.c.l.b16 %v553
        %v3832 = vunpack.c.l.b16 %v554
        %v3833 = vunpack.c.l.b16 %v555
        %v3834 = vunpack.c.l.b16 %v556
        %v3835 = vunpack.c.l.b16 %v557
        %v3836 = vunpack.c.l.b16 %v558
        %v3837 = vunpack.c.l.b16 %v559
        %v3838 = vunpack.c.l.b16 %v560
        %v3839 = vunpack.c.l.b16 %v561
        %v3840 = vunpack.c.l.b16 %v562
        %v3841 = vunpack.c.l.b16 %v563
        %v3842 = vunpack.c.l.b16 %v564
        %v3843 = vunpack.c.l.b16 %v565
        %v3844 = vunpack.c.l.b16 %v566
        %v3845 = vunpack.c.l.b16 %v567
        %v3846 = vunpack.c.l.b16 %v568
        %v3847 = vunpack.c.l.b16 %v569
        %v3848 = vunpack.c.l.b16 %v570
        %v3849 = vunpack.c.l.b16 %v571
        %v3850 = vunpack.c.l.b16 %v572
        %v3851 = vunpack.c.l.b16 %v573
        %v3852 = vunpack.c.l.b16 %v574
        %v3853 = vunpack.c.l.b16 %v575
        %v3854 = vunpack.c.l.b16 %v576
        %v3855 = vunpack.c.l.b16 %v577
        %v3856 = vunpack.c.l.b16 %v578
        %v3857 = vunpack.c.l.b16 %v579
        %v3858 = vunpack.c.l.b16 %v580
        %v3859 = vunpack.c.l.b16 %v581
        %v3860 = vunpack.c.l.b16 %v582
        %v3861 = vunpack.c.l.b16 %v583
        %v3862 = vunpack.c.l.b16 %v584
        %v3863 = vunpack.c.l.b16 %v585
        %v3864 = vunpack.c.l.b16 %v586
        %v3865 = vunpack.c.l.b16 %v587
        %v3866 = vunpack.c.l.b16 %v588
        %v3867 = vunpack.c.l.b16 %v589
        %v3868 = vunpack.c.l.b16 %v590
        %v3869 = vunpack.c.l.b16 %v591
        %v3870 = vunpack.c.l.b16 %v592
        %v3871 = vunpack.c.l.b16 %v593
        %v3872 = vunpack.c.l.b16 %v594
        %v3873 = vunpack.c.l.b16 %v595
        %v3874 = vunpack.c.l.b16 %v596
        %v3875 = vunpack.c.l.b16 %v597
        %v3876 = vunpack.c.l.b16 %v598
        %v3877 = vunpack.c.l.b16 %v599
        %v3878 = vunpack.c.l.b16 %v600
        %v3879 = vunpack.c.l.b16 %v601
        %v3880 = vunpack.c.l.b16 %v602
        %v3881 = vunpack.c.l.b16 %v603
        %v3882 = vunpack.c.l.b16 %v604
        %v3883 = vunpack.c.l.b16 %v605
        %v3884 = vunpack.c.l.b16 %v606
        %v3885 = vunpack.c.l.b16 %v607
        %v3886 = vunpack.c.l.b16 %v608
        %v3887 = vunpack.c.l.b16 %v609
        %v3888 = vunpack.c.l.b16 %v610
        %v3889 = vunpack.c.l.b16 %v611
        %v3890 = vunpack.c.l.b16 %v612
        %v3891 = vunpack.c.l.b16 %v613
        %v3892 = vunpack.c.l.b16 %v614
        %v3893 = vunpack.c.l.b16 %v615
        %v3894 = vunpack.c.l.b16 %v616
        %v3895 = vunpack.c.l.b16 %v617
        %v3896 = vunpack.c.l.b16 %v618
        %v3897 = vunpack.c.l.b16 %v619
        %v3898 = vunpack.c.l.b16 %v620
        %v3899 = vunpack.c.l.b16 %v621
        %v3900 = vunpack.c.l.b16 %v622
        %v3901 = vunpack.c.l.b16 %v623
        %v3902 = vunpack.c.l.b16 %v624
        %v3903 = vunpack.c.l.b16 %v625
        %v3904 = vunpack.c.l.b16 %v626
        %v3905 = vunpack.c.l.b16 %v627
        %v3906 = vunpack.c.l.b16 %v628
        %v3907 = vunpack.c.l.b16 %v629
        %v3908 = vunpack.c.l.b16 %v630
        %v3909 = vunpack.c.l.b16 %v631
        %v3910 = vunpack.c.l.b16 %v632
        %v3911 = vunpack.c.l.b16 %v633
        %v3912 = vunpack.c.l.b16 %v634
        %v3913 = vunpack.c.l.b16 %v635
        %v3914 = vunpack.c.l.b16 %v636
        %v3915 = vunpack.c.l.b16 %v637
        %v3916 = vunpack.c.l.b16 %v638
        %v3917 = vunpack.c.l.b16 %v639
        %v3918 = vunpack.c.l.b16 %v640
        %v3919 = vunpack.c.l.b16 %v641
        %v3920 = vunpack.c.l.b16 %v642
        %v3921 = vunpack.c.l.b16 %v643
        %v3922 = vunpack.c.l.b16 %v644
        %v3923 = vunpack.c.l.b16 %v645
        %v3924 = vunpack.c.l.b16 %v646
        %v3925 = vunpack.c.l.b16 %v647
        %v3926 = vunpack.c.l.b16 %v648
        %v3927 = vunpack.c.l.b16 %v649
        %v3928 = vunpack.c.l.b16 %v650
        %v3929 = vunpack.c.l.b16 %v651
        %v3930 = vunpack.c.l.b16 %v652
        %v3931 = vunpack.c.l.b16 %v653
        %v3932 = vunpack.c.l.b16 %v654
        %v3933 = vunpack.c.l.b16 %v655
        %v3934 = vunpack.c.l.b16 %v656
        %v3935 = vunpack.c.l.b16 %v657
        %v3936 = vunpack.c.l.b16 %v658
        %v3937 = vunpack.c.l.b16 %v659
        %v3938 = vunpack.c.l.b16 %v660
        %v3939 = vunpack.c.l.b16 %v661
        %v3940 = vunpack.c.l.b16 %v662
        %v3941 = vunpack.c.l.b16 %v663
        %v3942 = vunpack.c.l.b16 %v664
        %v3943 = vunpack.c.l.b16 %v665
        %v3944 = vunpack.c.l.b16 %v666
        %v3945 = vunpack.c.l.b16 %v667
        %v3946 = vunpack.c.l.b16 %v668
        %v3947 = vunpack.c.l.b16 %v669
        %v3948 = vunpack.c.l.b16 %v670
        %v3949 = vunpack.c.l.b16 %v671
        %v3950 = vunpack.c.l.b16 %v672
        %v3951 = vunpack.c.l.b16 %v673
        %v3952 = vunpack.c.l.b16 %v674
        %v3953 = vunpack.c.l.b16 %v675
        %v3954 = vunpack.c.l.b16 %v676
        %v3955 = vunpack.c.l.b16 %v677
        %v3956 = vunpack.c.l.b16 %v678
        %v3957 = vunpack.c.l.b16 %v679
        %v3958 = vunpack.c.l.b16 %v680
        %v3959 = vunpack.c.l.b16 %v681
        %v3960 = vunpack.c.l.b16 %v682
        %v3961 = vunpack.c.l.b16 %v683
        %v3962 = vunpack.c.l.b16 %v684
        %v3963 = vunpack.c.l.b16 %v685
        %v3964 = vunpack.c.l.b16 %v686
        %v3965 = vunpack.c.l.b16 %v687
        %v3966 = vunpack.c.l.b16 %v688
        %v3967 = vunpack.c.l.b16 %v689
        %v3968 = vunpack.c.l.b16 %v690
        %v3969 = vunpack.c.l.b16 %v691
        %v3970 = vunpack.c.l.b16 %v692
        %v3971 = vunpack.c.l.b16 %v693
        %v3972 = vunpack.c.l.b16 %v694
        %v3973 = vunpack.c.l.b16 %v695
        %v3974 = vunpack.c.l.b16 %v696
        %v3975 = vunpack.c.l.b16 %v697
        %v3976 = vunpack.c.l.b16 %v698
        %v3977 = vunpack.c.l.b16 %v699
        %v3978 = vunpack.c.l.b16 %v700
        %v3979 = vunpack.c.l.b16 %v701
        %v3980 = vunpack.c.l.b16 %v702
        %v3981 = vunpack.c.l.b16 %v703
        %v3982 = vunpack.c.l.b16 %v704
        %v3983 = vunpack.c.l.b16 %v705
        %v3984 = vunpack.c.l.b16 %v706
        %v3985 = vunpack.c.l.b16 %v707
        %v3986 = vunpack.c.l.b16 %v708
        %v3987 = vunpack.c.l.b16 %v709
        %v3988 = vunpack.c.l.b16 %v710
        %v3989 = vunpack.c.l.b16 %v711
        %v3990 = vunpack.c.l.b16 %v712
        %v3991 = vunpack.c.l.b16 %v713
        %v3992 = vunpack.c.l.b16 %v714
        %v3993 = vunpack.c.l.b16 %v715
        %v3994 = vunpack.c.l.b16 %v716
        %v3995 = vunpack.c.l.b16 %v717
        %v3996 = vunpack.c.l.b16 %v718
        %v3997 = vunpack.c.l.b16 %v719
        %v3998 = vunpack.c.l.b16 %v720
        %v3999 = vunpack.c.l.b16 %v721
        %v4000 = vunpack.c.l.b16 %v722
        %v4001 = vunpack.c.l.b16 %v723
        %v4002 = vunpack.c.l.b16 %v724
        %v4003 = vunpack.c.l.b16 %v725
        %v4004 = vunpack.c.l.b16 %v726
        %v4005 = vunpack.c.l.b16 %v727
        %v4006 = vunpack.c.l.b16 %v728
        %v4007 = vunpack.c.l.b16 %v729
        %v4008 = vunpack.c.l.b16 %v730
        %v4009 = vunpack.c.l.b16 %v731
        %v4010 = vunpack.c.l.b16 %v732
        %v4011 = vunpack.c.l.b16 %v733
        %v4012 = vunpack.c.l.b16 %v734
        %v4013 = vunpack.c.l.b16 %v735
        %v4014 = vunpack.c.l.b16 %v736
        %v4015 = vunpack.c.l.b16 %v737
        %v4016 = vunpack.c.l.b16 %v738
        %v4017 = vunpack.c.l.b16 %v739
        %v4018 = vunpack.c.l.b16 %v740
        %v4019 = vunpack.c.l.b16 %v741
        %v4020 = vunpack.c.l.b16 %v742
        %v4021 = vunpack.c.l.b16 %v743
        %v4022 = vunpack.c.l.b16 %v744
        %v4023 = vunpack.c.l.b16 %v745
        %v4024 = vunpack.c.l.b16 %v746
        %v4025 = vunpack.c.l.b16 %v747
        %v4026 = vunpack.c.l.b16 %v748
        %v4027 = vunpack.c.l.b16 %v749
        %v4028 = vunpack.c.l.b16 %v750
        %v4029 = vunpack.c.l.b16 %v751
        %v4030 = vpack.c.b16 %v3775, %v3774
        %v4031 = vpack.c.b16 %v3777, %v3776
        %v4032 = vpack.c.b16 %v3779, %v3778
        %v4033 = vpack.c.b16 %v3781, %v3780
        %v4034 = vpack.c.b16 %v3783, %v3782
        %v4035 = vpack.c.b16 %v3785, %v3784
        %v4036 = vpack.c.b16 %v3787, %v3786
        %v4037 = vpack.c.b16 %v3789, %v3788
        %v4038 = vpack.c.b16 %v3791, %v3790
        %v4039 = vpack.c.b16 %v3793, %v3792
        %v4040 = vpack.c.b16 %v3795, %v3794
        %v4041 = vpack.c.b16 %v3797, %v3796
        %v4042 = vpack.c.b16 %v3799, %v3798
        %v4043 = vpack.c.b16 %v3801, %v3800
        %v4044 = vpack.c.b16 %v3803, %v3802
        %v4045 = vpack.c.b16 %v3805, %v3804
        %v4046 = vpack.c.b16 %v3807, %v3806
        %v4047 = vpack.c.b16 %v3809, %v3808
        %v4048 = vpack.c.b16 %v3811, %v3810
        %v4049 = vpack.c.b16 %v3813, %v3812
        %v4050 = vpack.c.b16 %v3815, %v3814
        %v4051 = vpack.c.b16 %v3817, %v3816
        %v4052 = vpack.c.b16 %v3819, %v3818
        %v4053 = vpack.c.b16 %v3821, %v3820
        %v4054 = vpack.c.b16 %v3823, %v3822
        %v4055 = vpack.c.b16 %v3825, %v3824
        %v4056 = vpack.c.b16 %v3827, %v3826
        %v4057 = vpack.c.b16 %v3829, %v3828
        %v4058 = vpack.c.b16 %v3831, %v3830
        %v4059 = vpack.c.b16 %v3833, %v3832
        %v4060 = vpack.c.b16 %v3835, %v3834
        %v4061 = vpack.c.b16 %v3837, %v3836
        %v4062 = vpack.c.b16 %v3839, %v3838
        %v4063 = vpack.c.b16 %v3841, %v3840
        %v4064 = vpack.c.b16 %v3843, %v3842
        %v4065 = vpack.c.b16 %v3845, %v3844
        %v4066 = vpack.c.b16 %v3847, %v3846
        %v4067 = vpack.c.b16 %v3849, %v3848
        %v4068 = vpack.c.b16 %v3851, %v3850
        %v4069 = vpack.c.b16 %v3853, %v3852
        %v4070 = vpack.c.b16 %v3855, %v3854
        %v4071 = vpack.c.b16 %v3857, %v3856
        %v4072 = vpack.c.b16 %v3859, %v3858
        %v4073 = vpack.c.b16 %v3861, %v3860
        %v4074 = vpack.c.b16 %v3863, %v3862
        %v4075 = vpack.c.b16 %v3865, %v3864
        %v4076 = vpack.c.b16 %v3867, %v3866
        %v4077 = vpack.c.b16 %v3869, %v3868
        %v4078 = vpack.c.b16 %v3871, %v3870
        %v4079 = vpack.c.b16 %v3873, %v3872
        %v4080 = vpack.c.b16 %v3875, %v3874
        %v4081 = vpack.c.b16 %v3877, %v3876
        %v4082 = vpack.c.b16 %v3879, %v3878
        %v4083 = vpack.c.b16 %v3881, %v3880
        %v4084 = vpack.c.b16 %v3883, %v3882
        %v4085 = vpack.c.b16 %v3885, %v3884
        %v4086 = vpack.c.b16 %v3887, %v3886
        %v4087 = vpack.c.b16 %v3889, %v3888
        %v4088 = vpack.c.b16 %v3891, %v3890
        %v4089 = vpack.c.b16 %v3893, %v3892
        %v4090 = vpack.c.b16 %v3895, %v3894
        %v4091 = vpack.c.b16 %v3897, %v3896
        %v4092 = vpack.c.b16 %v3899, %v3898
        %v4093 = vpack.c.b16 %v3901, %v3900
        %v4094 = vpack.c.b16 %v3903, %v3902
        %v4095 = vpack.c.b16 %v3905, %v3904
        %v4096 = vpack.c.b16 %v3907, %v3906
        %v4097 = vpack.c.b16 %v3909, %v3908
        %v4098 = vpack.c.b16 %v3911, %v3910
        %v4099 = vpack.c.b16 %v3913, %v3912
        %v4100 = vpack.c.b16 %v3915, %v3914
        %v4101 = vpack.c.b16 %v3917, %v3916
        %v4102 = vpack.c.b16 %v3919, %v3918
        %v4103 = vpack.c.b16 %v3921, %v3920
        %v4104 = vpack.c.b16 %v3923, %v3922
        %v4105 = vpack.c.b16 %v3925, %v3924
        %v4106 = vpack.c.b16 %v3927, %v3926
        %v4107 = vpack.c.b16 %v3929, %v3928
        %v4108 = vpack.c.b16 %v3931, %v3930
        %v4109 = vpack.c.b16 %v3933, %v3932
        %v4110 = vpack.c.b16 %v3935, %v3934
        %v4111 = vpack.c.b16 %v3937, %v3936
        %v4112 = vpack.c.b16 %v3939, %v3938
        %v4113 = vpack.c.b16 %v3941, %v3940
        %v4114 = vpack.c.b16 %v3943, %v3942
        %v4115 = vpack.c.b16 %v3945, %v3944
        %v4116 = vpack.c.b16 %v3947, %v3946
        %v4117 = vpack.c.b16 %v3949, %v3948
        %v4118 = vpack.c.b16 %v3951, %v3950
        %v4119 = vpack.c.b16 %v3953, %v3952
        %v4120 = vpack.c.b16 %v3955, %v3954
        %v4121 = vpack.c.b16 %v3957, %v3956
        %v4122 = vpack.c.b16 %v3959, %v3958
        %v4123 = vpack.c.b16 %v3961, %v3960
        %v4124 = vpack.c.b16 %v3963, %v3962
        %v4125 = vpack.c.b16 %v3965, %v3964
        %v4126 = vpack.c.b16 %v3967, %v3966
        %v4127 = vpack.c.b16 %v3969, %v3968
        %v4128 = vpack.c.b16 %v3971, %v3970
        %v4129 = vpack.c.b16 %v3973, %v3972
        %v4130 = vpack.c.b16 %v3975, %v3974
        %v4131 = vpack.c.b16 %v3977, %v3976
        %v4132 = vpack.c.b16 %v3979, %v3978
        %v4133 = vpack.c.b16 %v3981, %v3980
        %v4134 = vpack.c.b16 %v3983, %v3982
        %v4135 = vpack.c.b16 %v3985, %v3984
        %v4136 = vpack.c.b16 %v3987, %v3986
        %v4137 = vpack.c.b16 %v3989, %v3988
        %v4138 = vpack.c.b16 %v3991, %v3990
        %v4139 = vpack.c.b16 %v3993, %v3992
        %v4140 = vpack.c.b16 %v3995, %v3994
        %v4141 = vpack.c.b16 %v3997, %v3996
        %v4142 = vpack.c.b16 %v3999, %v3998
        %v4143 = vpack.c.b16 %v4001, %v4000
        %v4144 = vpack.c.b16 %v4003, %v4002
        %v4145 = vpack.c.b16 %v4005, %v4004
        %v4146 = vpack.c.b16 %v4007, %v4006
        %v4147 = vpack.c.b16 %v4009, %v4008
        %v4148 = vpack.c.b16 %v4011, %v4010
        %v4149 = vpack.c.b16 %v4013, %v4012
        %v4150 = vpack.c.b16 %v4015, %v4014
        %v4151 = vpack.c.b16 %v4017, %v4016
        %v4152 = vpack.c.b16 %v4019, %v4018
        %v4153 = vpack.c.b16 %v4021, %v4020
        %v4154 = vpack.c.b16 %v4023, %v4022
        %v4155 = vpack.c.b16 %v4025, %v4024
        %v4156 = vpack.c.b16 %v4027, %v4026
        %v4157 = vpack.c.b16 %v4029, %v4028
        %4286 = vmatprep.subr.bf16.mxu0 0
        %4287 = vmatpush1.bf16.msra.mxu0 %v4030
        %4288 = vmatprep.subr.bf16.mxu0 0
        %4289 = vmatpush1.bf16.msra.mxu0 %v4031
        %4290 = vmatprep.subr.bf16.mxu0 0
        %4291 = vmatpush1.bf16.msra.mxu0 %v4032
        %4292 = vmatprep.subr.bf16.mxu0 0
        %4293 = vmatpush1.bf16.msra.mxu0 %v4033
        %4294 = vmatprep.subr.bf16.mxu0 0
        %4295 = vmatpush1.bf16.msra.mxu0 %v4034
        %4296 = vmatprep.subr.bf16.mxu0 0
        %4297 = vmatpush1.bf16.msra.mxu0 %v4035
        %4298 = vmatprep.subr.bf16.mxu0 0
        %4299 = vmatpush1.bf16.msra.mxu0 %v4036
        %4300 = vmatprep.subr.bf16.mxu0 0
        %4301 = vmatpush1.bf16.msra.mxu0 %v4037
        %4302 = vmatprep.subr.bf16.mxu0 0
        %4303 = vmatpush1.bf16.msra.mxu0 %v4038
        %4304 = vmatprep.subr.bf16.mxu0 0
        %4305 = vmatpush1.bf16.msra.mxu0 %v4039
        %4306 = vmatprep.subr.bf16.mxu0 0
        %4307 = vmatpush1.bf16.msra.mxu0 %v4040
        %4308 = vmatprep.subr.bf16.mxu0 0
        %4309 = vmatpush1.bf16.msra.mxu0 %v4041
        %4310 = vmatprep.subr.bf16.mxu0 0
        %4311 = vmatpush1.bf16.msra.mxu0 %v4042
        %4312 = vmatprep.subr.bf16.mxu0 0
        %4313 = vmatpush1.bf16.msra.mxu0 %v4043
        %4314 = vmatprep.subr.bf16.mxu0 0
        %4315 = vmatpush1.bf16.msra.mxu0 %v4044
        %4316 = vmatprep.subr.bf16.mxu0 0
        %4317 = vmatpush1.bf16.msra.mxu0 %v4045
        %4318 = vmatprep.mubr.bf16.mxu0 %v3503
        %4319 = vmatmul.mubr.bf16.gmra.mrb[0].mxu0 %v3502
        %v4320 = vpop.f32.mrb[0].mxu0
        %v4321 = vadd.f32 %v752, %v4320
        %v4322 = vpop.f32.mrb[0].mxu0
        %v4323 = vpop.f32.mrb[0].mxu0
        %v4324 = vpop.f32.mrb[0].mxu0
        %4325 = vdwg.mxu0
        %4326 = vmatprep.subr.bf16.mxu0 0
        %4327 = vmatpush1.bf16.msra.mxu0 %v4046
        %4328 = vmatprep.subr.bf16.mxu0 0
        %4329 = vmatpush1.bf16.msra.mxu0 %v4047
        %4330 = vmatprep.subr.bf16.mxu0 0
        %4331 = vmatpush1.bf16.msra.mxu0 %v4048
        %4332 = vmatprep.subr.bf16.mxu0 0
        %4333 = vmatpush1.bf16.msra.mxu0 %v4049
        %4334 = vmatprep.subr.bf16.mxu0 0
        %4335 = vmatpush1.bf16.msra.mxu0 %v4050
        %4336 = vmatprep.subr.bf16.mxu0 0
        %4337 = vmatpush1.bf16.msra.mxu0 %v4051
        %4338 = vmatprep.subr.bf16.mxu0 0
        %4339 = vmatpush1.bf16.msra.mxu0 %v4052
        %4340 = vmatprep.subr.bf16.mxu0 0
        %4341 = vmatpush1.bf16.msra.mxu0 %v4053
        %4342 = vmatprep.subr.bf16.mxu0 0
        %4343 = vmatpush1.bf16.msra.mxu0 %v4054
        %4344 = vmatprep.subr.bf16.mxu0 0
        %4345 = vmatpush1.bf16.msra.mxu0 %v4055
        %4346 = vmatprep.subr.bf16.mxu0 0
        %4347 = vmatpush1.bf16.msra.mxu0 %v4056
        %4348 = vmatprep.subr.bf16.mxu0 0
        %4349 = vmatpush1.bf16.msra.mxu0 %v4057
        %4350 = vmatprep.subr.bf16.mxu0 0
        %4351 = vmatpush1.bf16.msra.mxu0 %v4058
        %4352 = vmatprep.subr.bf16.mxu0 0
        %4353 = vmatpush1.bf16.msra.mxu0 %v4059
        %4354 = vmatprep.subr.bf16.mxu0 0
        %4355 = vmatpush1.bf16.msra.mxu0 %v4060
        %4356 = vmatprep.subr.bf16.mxu0 0
        %4357 = vmatpush1.bf16.msra.mxu0 %v4061
        %4358 = vmatprep.mubr.bf16.mxu0 %v3505
        %4359 = vmatmul.mubr.bf16.gmra.mrb[0].mxu0 %v3504
        %v4360 = vpop.f32.mrb[0].mxu0
        %v4361 = vadd.f32 %v4321, %v4360
        %v4362 = vpop.f32.mrb[0].mxu0
        %v4363 = vpop.f32.mrb[0].mxu0
        %v4364 = vpop.f32.mrb[0].mxu0
        %4365 = vdwg.mxu0
        %4366 = vmatprep.subr.bf16.mxu0 0
        %4367 = vmatpush1.bf16.msra.mxu0 %v4062
        %4368 = vmatprep.subr.bf16.mxu0 0
        %4369 = vmatpush1.bf16.msra.mxu0 %v4063
        %4370 = vmatprep.subr.bf16.mxu0 0
        %4371 = vmatpush1.bf16.msra.mxu0 %v4064
        %4372 = vmatprep.subr.bf16.mxu0 0
        %4373 = vmatpush1.bf16.msra.mxu0 %v4065
        %4374 = vmatprep.subr.bf16.mxu0 0
        %4375 = vmatpush1.bf16.msra.mxu0 %v4066
        %4376 = vmatprep.subr.bf16.mxu0 0
        %4377 = vmatpush1.bf16.msra.mxu0 %v4067
        %4378 = vmatprep.subr.bf16.mxu0 0
        %4379 = vmatpush1.bf16.msra.mxu0 %v4068
        %4380 = vmatprep.subr.bf16.mxu0 0
        %4381 = vmatpush1.bf16.msra.mxu0 %v4069
        %4382 = vmatprep.subr.bf16.mxu0 0
        %4383 = vmatpush1.bf16.msra.mxu0 %v4070
        %4384 = vmatprep.subr.bf16.mxu0 0
        %4385 = vmatpush1.bf16.msra.mxu0 %v4071
        %4386 = vmatprep.subr.bf16.mxu0 0
        %4387 = vmatpush1.bf16.msra.mxu0 %v4072
        %4388 = vmatprep.subr.bf16.mxu0 0
        %4389 = vmatpush1.bf16.msra.mxu0 %v4073
        %4390 = vmatprep.subr.bf16.mxu0 0
        %4391 = vmatpush1.bf16.msra.mxu0 %v4074
        %4392 = vmatprep.subr.bf16.mxu0 0
        %4393 = vmatpush1.bf16.msra.mxu0 %v4075
        %4394 = vmatprep.subr.bf16.mxu0 0
        %4395 = vmatpush1.bf16.msra.mxu0 %v4076
        %4396 = vmatprep.subr.bf16.mxu0 0
        %4397 = vmatpush1.bf16.msra.mxu0 %v4077
        %4398 = vmatprep.mubr.bf16.mxu0 %v3507
        %4399 = vmatmul.mubr.bf16.gmra.mrb[0].mxu0 %v3506
        %v4400 = vpop.f32.mrb[0].mxu0
        %v4401 = vadd.f32 %v4361, %v4400
        %v4402 = vpop.f32.mrb[0].mxu0
        %v4403 = vpop.f32.mrb[0].mxu0
        %v4404 = vpop.f32.mrb[0].mxu0
        %4405 = vdwg.mxu0
        %4406 = vmatprep.subr.bf16.mxu0 0
        %4407 = vmatpush1.bf16.msra.mxu0 %v4078
        %4408 = vmatprep.subr.bf16.mxu0 0
        %4409 = vmatpush1.bf16.msra.mxu0 %v4079
        %4410 = vmatprep.subr.bf16.mxu0 0
        %4411 = vmatpush1.bf16.msra.mxu0 %v4080
        %4412 = vmatprep.subr.bf16.mxu0 0
        %4413 = vmatpush1.bf16.msra.mxu0 %v4081
        %4414 = vmatprep.subr.bf16.mxu0 0
        %4415 = vmatpush1.bf16.msra.mxu0 %v4082
        %4416 = vmatprep.subr.bf16.mxu0 0
        %4417 = vmatpush1.bf16.msra.mxu0 %v4083
        %4418 = vmatprep.subr.bf16.mxu0 0
        %4419 = vmatpush1.bf16.msra.mxu0 %v4084
        %4420 = vmatprep.subr.bf16.mxu0 0
        %4421 = vmatpush1.bf16.msra.mxu0 %v4085
        %4422 = vmatprep.subr.bf16.mxu0 0
        %4423 = vmatpush1.bf16.msra.mxu0 %v4086
        %4424 = vmatprep.subr.bf16.mxu0 0
        %4425 = vmatpush1.bf16.msra.mxu0 %v4087
        %4426 = vmatprep.subr.bf16.mxu0 0
        %4427 = vmatpush1.bf16.msra.mxu0 %v4088
        %4428 = vmatprep.subr.bf16.mxu0 0
        %4429 = vmatpush1.bf16.msra.mxu0 %v4089
        %4430 = vmatprep.subr.bf16.mxu0 0
        %4431 = vmatpush1.bf16.msra.mxu0 %v4090
        %4432 = vmatprep.subr.bf16.mxu0 0
        %4433 = vmatpush1.bf16.msra.mxu0 %v4091
        %4434 = vmatprep.subr.bf16.mxu0 0
        %4435 = vmatpush1.bf16.msra.mxu0 %v4092
        %4436 = vmatprep.subr.bf16.mxu0 0
        %4437 = vmatpush1.bf16.msra.mxu0 %v4093
        %4438 = vmatprep.mubr.bf16.mxu0 %v3509
        %4439 = vmatmul.mubr.bf16.gmra.mrb[0].mxu0 %v3508
        %v4440 = vpop.f32.mrb[0].mxu0
        %v4441 = vadd.f32 %v4401, %v4440
        %v4442 = vpop.f32.mrb[0].mxu0
        %v4443 = vpop.f32.mrb[0].mxu0
        %v4444 = vpop.f32.mrb[0].mxu0
        %4445 = vdwg.mxu0
        %4446 = vmatprep.subr.bf16.mxu0 0
        %4447 = vmatpush1.bf16.msra.mxu0 %v4094
        %4448 = vmatprep.subr.bf16.mxu0 0
        %4449 = vmatpush1.bf16.msra.mxu0 %v4095
        %4450 = vmatprep.subr.bf16.mxu0 0
        %4451 = vmatpush1.bf16.msra.mxu0 %v4096
        %4452 = vmatprep.subr.bf16.mxu0 0
        %4453 = vmatpush1.bf16.msra.mxu0 %v4097
        %4454 = vmatprep.subr.bf16.mxu0 0
        %4455 = vmatpush1.bf16.msra.mxu0 %v4098
        %4456 = vmatprep.subr.bf16.mxu0 0
        %4457 = vmatpush1.bf16.msra.mxu0 %v4099
        %4458 = vmatprep.subr.bf16.mxu0 0
        %4459 = vmatpush1.bf16.msra.mxu0 %v4100
        %4460 = vmatprep.subr.bf16.mxu0 0
        %4461 = vmatpush1.bf16.msra.mxu0 %v4101
        %4462 = vmatprep.subr.bf16.mxu0 0
        %4463 = vmatpush1.bf16.msra.mxu0 %v4102
        %4464 = vmatprep.subr.bf16.mxu0 0
        %4465 = vmatpush1.bf16.msra.mxu0 %v4103
        %4466 = vmatprep.subr.bf16.mxu0 0
        %4467 = vmatpush1.bf16.msra.mxu0 %v4104
        %4468 = vmatprep.subr.bf16.mxu0 0
        %4469 = vmatpush1.bf16.msra.mxu0 %v4105
        %4470 = vmatprep.subr.bf16.mxu0 0
        %4471 = vmatpush1.bf16.msra.mxu0 %v4106
        %4472 = vmatprep.subr.bf16.mxu0 0
        %4473 = vmatpush1.bf16.msra.mxu0 %v4107
        %4474 = vmatprep.subr.bf16.mxu0 0
        %4475 = vmatpush1.bf16.msra.mxu0 %v4108
        %4476 = vmatprep.subr.bf16.mxu0 0
        %4477 = vmatpush1.bf16.msra.mxu0 %v4109
        %4478 = vmatprep.mubr.bf16.mxu0 %v3511
        %4479 = vmatmul.mubr.bf16.gmra.mrb[0].mxu0 %v3510
        %v4480 = vpop.f32.mrb[0].mxu0
        %v4481 = vadd.f32 %v4441, %v4480
        %v4482 = vpop.f32.mrb[0].mxu0
        %v4483 = vpop.f32.mrb[0].mxu0
        %v4484 = vpop.f32.mrb[0].mxu0
        %4485 = vdwg.mxu0
        %4486 = vmatprep.subr.bf16.mxu0 0
        %4487 = vmatpush1.bf16.msra.mxu0 %v4110
        %4488 = vmatprep.subr.bf16.mxu0 0
        %4489 = vmatpush1.bf16.msra.mxu0 %v4111
        %4490 = vmatprep.subr.bf16.mxu0 0
        %4491 = vmatpush1.bf16.msra.mxu0 %v4112
        %4492 = vmatprep.subr.bf16.mxu0 0
        %4493 = vmatpush1.bf16.msra.mxu0 %v4113
        %4494 = vmatprep.subr.bf16.mxu0 0
        %4495 = vmatpush1.bf16.msra.mxu0 %v4114
        %4496 = vmatprep.subr.bf16.mxu0 0
        %4497 = vmatpush1.bf16.msra.mxu0 %v4115
        %4498 = vmatprep.subr.bf16.mxu0 0
        %4499 = vmatpush1.bf16.msra.mxu0 %v4116
        %4500 = vmatprep.subr.bf16.mxu0 0
        %4501 = vmatpush1.bf16.msra.mxu0 %v4117
        %4502 = vmatprep.subr.bf16.mxu0 0
        %4503 = vmatpush1.bf16.msra.mxu0 %v4118
        %4504 = vmatprep.subr.bf16.mxu0 0
        %4505 = vmatpush1.bf16.msra.mxu0 %v4119
        %4506 = vmatprep.subr.bf16.mxu0 0
        %4507 = vmatpush1.bf16.msra.mxu0 %v4120
        %4508 = vmatprep.subr.bf16.mxu0 0
        %4509 = vmatpush1.bf16.msra.mxu0 %v4121
        %4510 = vmatprep.subr.bf16.mxu0 0
        %4511 = vmatpush1.bf16.msra.mxu0 %v4122
        %4512 = vmatprep.subr.bf16.mxu0 0
        %4513 = vmatpush1.bf16.msra.mxu0 %v4123
        %4514 = vmatprep.subr.bf16.mxu0 0
        %4515 = vmatpush1.bf16.msra.mxu0 %v4124
        %4516 = vmatprep.subr.bf16.mxu0 0
        %4517 = vmatpush1.bf16.msra.mxu0 %v4125
        %4518 = vmatprep.mubr.bf16.mxu0 %v3513
        %4519 = vmatmul.mubr.bf16.gmra.mrb[0].mxu0 %v3512
        %v4520 = vpop.f32.mrb[0].mxu0
        %v4521 = vadd.f32 %v4481, %v4520
        %v4522 = vpop.f32.mrb[0].mxu0
        %v4523 = vpop.f32.mrb[0].mxu0
        %v4524 = vpop.f32.mrb[0].mxu0
        %4525 = vdwg.mxu0
        %4526 = vmatprep.subr.bf16.mxu0 0
        %4527 = vmatpush1.bf16.msra.mxu0 %v4126
        %4528 = vmatprep.subr.bf16.mxu0 0
        %4529 = vmatpush1.bf16.msra.mxu0 %v4127
        %4530 = vmatprep.subr.bf16.mxu0 0
        %4531 = vmatpush1.bf16.msra.mxu0 %v4128
        %4532 = vmatprep.subr.bf16.mxu0 0
        %4533 = vmatpush1.bf16.msra.mxu0 %v4129
        %4534 = vmatprep.subr.bf16.mxu0 0
        %4535 = vmatpush1.bf16.msra.mxu0 %v4130
        %4536 = vmatprep.subr.bf16.mxu0 0
        %4537 = vmatpush1.bf16.msra.mxu0 %v4131
        %4538 = vmatprep.subr.bf16.mxu0 0
        %4539 = vmatpush1.bf16.msra.mxu0 %v4132
        %4540 = vmatprep.subr.bf16.mxu0 0
        %4541 = vmatpush1.bf16.msra.mxu0 %v4133
        %4542 = vmatprep.subr.bf16.mxu0 0
        %4543 = vmatpush1.bf16.msra.mxu0 %v4134
        %4544 = vmatprep.subr.bf16.mxu0 0
        %4545 = vmatpush1.bf16.msra.mxu0 %v4135
        %4546 = vmatprep.subr.bf16.mxu0 0
        %4547 = vmatpush1.bf16.msra.mxu0 %v4136
        %4548 = vmatprep.subr.bf16.mxu0 0
        %4549 = vmatpush1.bf16.msra.mxu0 %v4137
        %4550 = vmatprep.subr.bf16.mxu0 0
        %4551 = vmatpush1.bf16.msra.mxu0 %v4138
        %4552 = vmatprep.subr.bf16.mxu0 0
        %4553 = vmatpush1.bf16.msra.mxu0 %v4139
        %4554 = vmatprep.subr.bf16.mxu0 0
        %4555 = vmatpush1.bf16.msra.mxu0 %v4140
        %4556 = vmatprep.subr.bf16.mxu0 0
        %4557 = vmatpush1.bf16.msra.mxu0 %v4141
        %4558 = vmatprep.mubr.bf16.mxu0 %v3515
        %4559 = vmatmul.mubr.bf16.gmra.mrb[0].mxu0 %v3514
        %v4560 = vpop.f32.mrb[0].mxu0
        %v4561 = vadd.f32 %v4521, %v4560
        %v4562 = vpop.f32.mrb[0].mxu0
        %v4563 = vpop.f32.mrb[0].mxu0
        %v4564 = vpop.f32.mrb[0].mxu0
        %4565 = vdwg.mxu0
        %4566 = vmatprep.subr.bf16.mxu0 0
        %4567 = vmatpush1.bf16.msra.mxu0 %v4142
        %4568 = vmatprep.subr.bf16.mxu0 0
        %4569 = vmatpush1.bf16.msra.mxu0 %v4143
        %4570 = vmatprep.subr.bf16.mxu0 0
        %4571 = vmatpush1.bf16.msra.mxu0 %v4144
        %4572 = vmatprep.subr.bf16.mxu0 0
        %4573 = vmatpush1.bf16.msra.mxu0 %v4145
        %4574 = vmatprep.subr.bf16.mxu0 0
        %4575 = vmatpush1.bf16.msra.mxu0 %v4146
        %4576 = vmatprep.subr.bf16.mxu0 0
        %4577 = vmatpush1.bf16.msra.mxu0 %v4147
        %4578 = vmatprep.subr.bf16.mxu0 0
        %4579 = vmatpush1.bf16.msra.mxu0 %v4148
        %4580 = vmatprep.subr.bf16.mxu0 0
        %4581 = vmatpush1.bf16.msra.mxu0 %v4149
        %4582 = vmatprep.subr.bf16.mxu0 0
        %4583 = vmatpush1.bf16.msra.mxu0 %v4150
        %4584 = vmatprep.subr.bf16.mxu0 0
        %4585 = vmatpush1.bf16.msra.mxu0 %v4151
        %4586 = vmatprep.subr.bf16.mxu0 0
        %4587 = vmatpush1.bf16.msra.mxu0 %v4152
        %4588 = vmatprep.subr.bf16.mxu0 0
        %4589 = vmatpush1.bf16.msra.mxu0 %v4153
        %4590 = vmatprep.subr.bf16.mxu0 0
        %4591 = vmatpush1.bf16.msra.mxu0 %v4154
        %4592 = vmatprep.subr.bf16.mxu0 0
        %4593 = vmatpush1.bf16.msra.mxu0 %v4155
        %4594 = vmatprep.subr.bf16.mxu0 0
        %4595 = vmatpush1.bf16.msra.mxu0 %v4156
        %4596 = vmatprep.subr.bf16.mxu0 0
        %4597 = vmatpush1.bf16.msra.mxu0 %v4157
        %4598 = vmatprep.mubr.bf16.mxu0 %v3517
        %4599 = vmatmul.mubr.bf16.gmra.mrb[0].mxu0 %v3516
        %v4600 = vpop.f32.mrb[0].mxu0
        %v4601 = vadd.f32 %v4561, %v4600
        %v4602 = vpop.f32.mrb[0].mxu0
        %v4603 = vpop.f32.mrb[0].mxu0
        %v4604 = vpop.f32.mrb[0].mxu0
        %4605 = vdwg.mxu0
        %v4606 = vmul.f32 %v4601, 0.5
        %v4607 = vmul.f32 %v4601, 0.044715
        %v4608 = vmul.f32 %v4607, %v4601
        %v4609 = vmul.f32 %v4608, %v4601
        %v4610 = vadd.f32 %v4601, %v4609
        %v4611 = vmul.f32 %v4610, 0.7978845
        %v4612 = vtanh.pop %v4611
        %v4613 = vadd.f32 %v4612, 1.0
        %v4614 = vmul.f32 %v4606, %v4613
        %vm4615 = vcmask 523264
        %v4617 = vsel %vm4615, %v4614, 0
        %4619 = vmatprep.subr.mxu0 0.0
        %4620 = vmatpush1.msra.mxu0 %v753
        %4621 = vmatprep.subr.mxu0 0.0
        %4622 = vmatpush1.msra.mxu0 %v754
        %4623 = vmatprep.subr.mxu0 0.0
        %4624 = vmatpush1.msra.mxu0 %v755
        %4625 = vmatprep.subr.mxu0 0.0
        %4626 = vmatpush1.msra.mxu0 %v756
        %4627 = vmatprep.subr.mxu0 0.0
        %4628 = vmatpush1.msra.mxu0 %v757
        %4629 = vmatprep.subr.mxu0 0.0
        %4630 = vmatpush1.msra.mxu0 %v758
        %4631 = vmatprep.subr.mxu0 0.0
        %4632 = vmatpush1.msra.mxu0 %v759
        %4633 = vmatprep.subr.mxu0 0.0
        %4634 = vmatpush1.msra.mxu0 %v760
        %4635 = vmatprep.subr.mxu0 0.0
        %4636 = vmatpush1.msra.mxu0 0.0
        %4637 = vmatprep.subr.mxu0 0.0
        %4638 = vmatpush1.msra.mxu0 0.0
        %4639 = vmatprep.subr.mxu0 0.0
        %4640 = vmatpush1.msra.mxu0 0.0
        %4641 = vmatprep.subr.mxu0 0.0
        %4642 = vmatpush1.msra.mxu0 0.0
        %4643 = vmatprep.subr.mxu0 0.0
        %4644 = vmatpush1.msra.mxu0 0.0
        %4645 = vmatprep.subr.mxu0 0.0
        %4646 = vmatpush1.msra.mxu0 0.0
        %4647 = vmatprep.subr.mxu0 0.0
        %4648 = vmatpush1.msra.mxu0 0.0
        %4649 = vmatprep.subr.mxu0 0.0
        %4650 = vmatpush1.msra.mxu0 0.0
        %4651 = vmatprep.subr.mxu0 0.0
        %4652 = vmatpush1.msra.mxu0 0.0
        %4653 = vmatprep.subr.mxu0 0.0
        %4654 = vmatpush1.msra.mxu0 0.0
        %4655 = vmatprep.subr.mxu0 0.0
        %4656 = vmatpush1.msra.mxu0 0.0
        %4657 = vmatprep.subr.mxu0 0.0
        %4658 = vmatpush1.msra.mxu0 0.0
        %4659 = vmatprep.subr.mxu0 0.0
        %4660 = vmatpush1.msra.mxu0 0.0
        %4661 = vmatprep.subr.mxu0 0.0
        %4662 = vmatpush1.msra.mxu0 0.0
        %4663 = vmatprep.subr.mxu0 0.0
        %4664 = vmatpush1.msra.mxu0 0.0
        %4665 = vmatprep.subr.mxu0 0.0
        %4666 = vmatpush1.msra.mxu0 0.0
        %4667 = vmatprep.subr.mxu0 0.0
        %4668 = vmatpush1.msra.mxu0 0.0
        %4669 = vmatprep.subr.mxu0 0.0
        %4670 = vmatpush1.msra.mxu0 0.0
        %4671 = vmatprep.subr.mxu0 0.0
        %4672 = vmatpush1.msra.mxu0 0.0
        %4673 = vmatprep.subr.mxu0 0.0
        %4674 = vmatpush1.msra.mxu0 0.0
        %4675 = vmatprep.subr.mxu0 0.0
        %4676 = vmatpush1.msra.mxu0 0.0
        %4677 = vmatprep.subr.mxu0 0.0
        %4678 = vmatpush1.msra.mxu0 0.0
        %4679 = vmatprep.subr.mxu0 0.0
        %4680 = vmatpush1.msra.mxu0 0.0
        %4681 = vmatprep.subr.mxu0 0.0
        %4682 = vmatpush1.msra.mxu0 0.0
        %4683 = vmatprep.mubr.f32.mxu0 0.0
        %4684 = vmatmul.mubr.f32.gmra.mrb[0].mxu0 %v4617
        %v4685 = vpop.f32.mrb[0].mxu0
        %v4686 = vadd.f32 %v761, %v4685
        %v4687 = vpop.f32.mrb[0].mxu0
        %4688 = vdwg.mxu0
        %vm4689 = vcmask 16384
        %4690 = vst.msk [vmem:[%s460] sm:$0x1] %vm4689, %v4686
        %v5203 = vunpack.c.l.b16 %v816
        %v5204 = vunpack.c.h.b16 %v816
        %v5205 = vunpack.c.l.b16 %v817
        %v5206 = vunpack.c.h.b16 %v817
        %v5207 = vunpack.c.l.b16 %v818
        %v5208 = vunpack.c.h.b16 %v818
        %v5209 = vunpack.c.l.b16 %v819
        %v5210 = vunpack.c.h.b16 %v819
        %v5211 = vunpack.c.l.b16 %v820
        %v5212 = vunpack.c.h.b16 %v820
        %v5213 = vunpack.c.l.b16 %v821
        %v5214 = vunpack.c.h.b16 %v821
        %v5215 = vunpack.c.l.b16 %v822
        %v5216 = vunpack.c.h.b16 %v822
        %v5217 = vunpack.c.l.b16 %v823
        %v5218 = vunpack.c.h.b16 %v823
        %v5219 = vunpack.c.l.b16 %v824
        %v5220 = vunpack.c.h.b16 %v824
        %v5221 = vunpack.c.l.b16 %v825
        %v5222 = vunpack.c.h.b16 %v825
        %v5223 = vunpack.c.l.b16 %v826
        %v5224 = vunpack.c.h.b16 %v826
        %v5225 = vunpack.c.l.b16 %v827
        %v5226 = vunpack.c.h.b16 %v827
        %v5227 = vunpack.c.l.b16 %v828
        %v5228 = vunpack.c.h.b16 %v828
        %v5229 = vunpack.c.l.b16 %v829
        %v5230 = vunpack.c.h.b16 %v829
        %v5231 = vunpack.c.l.b16 %v830
        %v5232 = vunpack.c.h.b16 %v830
        %v5233 = vunpack.c.l.b16 %v831
        %v5234 = vunpack.c.h.b16 %v831
        %v5235 = vunpack.c.l.b16 %v832
        %v5236 = vunpack.c.h.b16 %v832
        %v5237 = vunpack.c.l.b16 %v833
        %v5238 = vunpack.c.h.b16 %v833
        %v5239 = vunpack.c.l.b16 %v834
        %v5240 = vunpack.c.h.b16 %v834
        %v5241 = vunpack.c.l.b16 %v835
        %v5242 = vunpack.c.h.b16 %v835
        %v5243 = vunpack.c.l.b16 %v836
        %v5244 = vunpack.c.h.b16 %v836
        %v5245 = vunpack.c.l.b16 %v837
        %v5246 = vunpack.c.h.b16 %v837
        %v5247 = vunpack.c.l.b16 %v838
        %v5248 = vunpack.c.h.b16 %v838
        %v5249 = vunpack.c.l.b16 %v839
        %v5250 = vunpack.c.h.b16 %v839
        %v5251 = vunpack.c.l.b16 %v840
        %v5252 = vunpack.c.h.b16 %v840
        %v5253 = vunpack.c.l.b16 %v841
        %v5254 = vunpack.c.h.b16 %v841
        %v5255 = vunpack.c.l.b16 %v842
        %v5256 = vunpack.c.h.b16 %v842
        %v5257 = vunpack.c.l.b16 %v843
        %v5258 = vunpack.c.h.b16 %v843
        %v5259 = vunpack.c.l.b16 %v844
        %v5260 = vunpack.c.h.b16 %v844
        %v5261 = vunpack.c.l.b16 %v845
        %v5262 = vunpack.c.h.b16 %v845
        %v5263 = vunpack.c.l.b16 %v846
        %v5264 = vunpack.c.h.b16 %v846
        %v5265 = vunpack.c.l.b16 %v847
        %v5266 = vunpack.c.h.b16 %v847
        %v5267 = vunpack.c.l.b16 %v848
        %v5268 = vunpack.c.h.b16 %v848
        %v5269 = vunpack.c.l.b16 %v849
        %v5270 = vunpack.c.h.b16 %v849
        %v5271 = vunpack.c.l.b16 %v850
        %v5272 = vunpack.c.h.b16 %v850
        %v5273 = vunpack.c.l.b16 %v851
        %v5274 = vunpack.c.h.b16 %v851
        %v5275 = vunpack.c.l.b16 %v852
        %v5276 = vunpack.c.h.b16 %v852
        %v5277 = vunpack.c.l.b16 %v853
        %v5278 = vunpack.c.h.b16 %v853
        %v5279 = vunpack.c.l.b16 %v854
        %v5280 = vunpack.c.h.b16 %v854
        %v5281 = vunpack.c.l.b16 %v855
        %v5282 = vunpack.c.h.b16 %v855
        %v5283 = vunpack.c.l.b16 %v856
        %v5284 = vunpack.c.h.b16 %v856
        %v5285 = vunpack.c.l.b16 %v857
        %v5286 = vunpack.c.h.b16 %v857
        %v5287 = vunpack.c.l.b16 %v858
        %v5288 = vunpack.c.h.b16 %v858
        %v5289 = vunpack.c.l.b16 %v859
        %v5290 = vunpack.c.h.b16 %v859
        %v5291 = vunpack.c.l.b16 %v860
        %v5292 = vunpack.c.h.b16 %v860
        %v5293 = vunpack.c.l.b16 %v861
        %v5294 = vunpack.c.h.b16 %v861
        %v5295 = vunpack.c.l.b16 %v862
        %v5296 = vunpack.c.h.b16 %v862
        %v5297 = vunpack.c.l.b16 %v863
        %v5298 = vunpack.c.h.b16 %v863
        %v5299 = vunpack.c.l.b16 %v864
        %v5300 = vunpack.c.h.b16 %v864
        %v5301 = vunpack.c.l.b16 %v865
        %v5302 = vunpack.c.h.b16 %v865
        %v5303 = vunpack.c.l.b16 %v866
        %v5304 = vunpack.c.h.b16 %v866
        %v5305 = vunpack.c.l.b16 %v867
        %v5306 = vunpack.c.h.b16 %v867
        %v5307 = vunpack.c.l.b16 %v868
        %v5308 = vunpack.c.h.b16 %v868
        %v5309 = vunpack.c.l.b16 %v869
        %v5310 = vunpack.c.h.b16 %v869
        %v5311 = vunpack.c.l.b16 %v870
        %v5312 = vunpack.c.h.b16 %v870
        %v5313 = vunpack.c.l.b16 %v871
        %v5314 = vunpack.c.h.b16 %v871
        %v5315 = vunpack.c.l.b16 %v872
        %v5316 = vunpack.c.h.b16 %v872
        %v5317 = vunpack.c.l.b16 %v873
        %v5318 = vunpack.c.h.b16 %v873
        %v5319 = vunpack.c.l.b16 %v874
        %v5320 = vunpack.c.h.b16 %v874
        %v5321 = vunpack.c.l.b16 %v875
        %v5322 = vunpack.c.h.b16 %v875
        %v5323 = vunpack.c.l.b16 %v876
        %v5324 = vunpack.c.h.b16 %v876
        %v5325 = vunpack.c.l.b16 %v877
        %v5326 = vunpack.c.h.b16 %v877
        %v5327 = vunpack.c.l.b16 %v878
        %v5328 = vunpack.c.h.b16 %v878
        %v5329 = vunpack.c.l.b16 %v879
        %v5330 = vunpack.c.h.b16 %v879
        %v5331 = vunpack.c.l.b16 %v880
        %v5332 = vunpack.c.h.b16 %v880
        %v5333 = vunpack.c.l.b16 %v881
        %v5334 = vunpack.c.h.b16 %v881
        %v5335 = vunpack.c.l.b16 %v882
        %v5336 = vunpack.c.h.b16 %v882
        %v5337 = vunpack.c.l.b16 %v883
        %v5338 = vunpack.c.h.b16 %v883
        %v5339 = vunpack.c.l.b16 %v884
        %v5340 = vunpack.c.h.b16 %v884
        %v5341 = vunpack.c.l.b16 %v885
        %v5342 = vunpack.c.h.b16 %v885
        %v5343 = vunpack.c.l.b16 %v886
        %v5344 = vunpack.c.h.b16 %v886
        %v5345 = vunpack.c.l.b16 %v887
        %v5346 = vunpack.c.h.b16 %v887
        %v5347 = vunpack.c.l.b16 %v888
        %v5348 = vunpack.c.h.b16 %v888
        %v5349 = vunpack.c.l.b16 %v889
        %v5350 = vunpack.c.h.b16 %v889
        %v5351 = vunpack.c.l.b16 %v890
        %v5352 = vunpack.c.h.b16 %v890
        %v5353 = vunpack.c.l.b16 %v891
        %v5354 = vunpack.c.h.b16 %v891
        %v5355 = vunpack.c.l.b16 %v892
        %v5356 = vunpack.c.h.b16 %v892
        %v5357 = vunpack.c.l.b16 %v893
        %v5358 = vunpack.c.h.b16 %v893
        %v5359 = vunpack.c.l.b16 %v894
        %v5360 = vunpack.c.h.b16 %v894
        %v5361 = vunpack.c.l.b16 %v895
        %v5362 = vunpack.c.h.b16 %v895
        %v5363 = vunpack.c.l.b16 %v896
        %v5364 = vunpack.c.h.b16 %v896
        %v5365 = vunpack.c.l.b16 %v897
        %v5366 = vunpack.c.h.b16 %v897
        %v5367 = vunpack.c.l.b16 %v898
        %v5368 = vunpack.c.h.b16 %v898
        %v5369 = vunpack.c.l.b16 %v899
        %v5370 = vunpack.c.h.b16 %v899
        %v5371 = vunpack.c.l.b16 %v900
        %v5372 = vunpack.c.h.b16 %v900
        %v5373 = vunpack.c.l.b16 %v901
        %v5374 = vunpack.c.h.b16 %v901
        %v5375 = vunpack.c.l.b16 %v902
        %v5376 = vunpack.c.h.b16 %v902
        %v5377 = vunpack.c.l.b16 %v903
        %v5378 = vunpack.c.h.b16 %v903
        %v5379 = vunpack.c.l.b16 %v904
        %v5380 = vunpack.c.h.b16 %v904
        %v5381 = vunpack.c.l.b16 %v905
        %v5382 = vunpack.c.h.b16 %v905
        %v5383 = vunpack.c.l.b16 %v906
        %v5384 = vunpack.c.h.b16 %v906
        %v5385 = vunpack.c.l.b16 %v907
        %v5386 = vunpack.c.h.b16 %v907
        %v5387 = vunpack.c.l.b16 %v908
        %v5388 = vunpack.c.h.b16 %v908
        %v5389 = vunpack.c.l.b16 %v909
        %v5390 = vunpack.c.h.b16 %v909
        %v5391 = vunpack.c.l.b16 %v910
        %v5392 = vunpack.c.h.b16 %v910
        %v5393 = vunpack.c.l.b16 %v911
        %v5394 = vunpack.c.h.b16 %v911
        %v5395 = vunpack.c.l.b16 %v912
        %v5396 = vunpack.c.h.b16 %v912
        %v5397 = vunpack.c.l.b16 %v913
        %v5398 = vunpack.c.h.b16 %v913
        %v5399 = vunpack.c.l.b16 %v914
        %v5400 = vunpack.c.h.b16 %v914
        %v5401 = vunpack.c.l.b16 %v915
        %v5402 = vunpack.c.h.b16 %v915
        %v5403 = vunpack.c.l.b16 %v916
        %v5404 = vunpack.c.h.b16 %v916
        %v5405 = vunpack.c.l.b16 %v917
        %v5406 = vunpack.c.h.b16 %v917
        %v5407 = vunpack.c.l.b16 %v918
        %v5408 = vunpack.c.h.b16 %v918
        %v5409 = vunpack.c.l.b16 %v919
        %v5410 = vunpack.c.h.b16 %v919
        %v5411 = vunpack.c.l.b16 %v920
        %v5412 = vunpack.c.h.b16 %v920
        %v5413 = vunpack.c.l.b16 %v921
        %v5414 = vunpack.c.h.b16 %v921
        %v5415 = vunpack.c.l.b16 %v922
        %v5416 = vunpack.c.h.b16 %v922
        %v5417 = vunpack.c.l.b16 %v923
        %v5418 = vunpack.c.h.b16 %v923
        %v5419 = vunpack.c.l.b16 %v924
        %v5420 = vunpack.c.h.b16 %v924
        %v5421 = vunpack.c.l.b16 %v925
        %v5422 = vunpack.c.h.b16 %v925
        %v5423 = vunpack.c.l.b16 %v926
        %v5424 = vunpack.c.h.b16 %v926
        %v5425 = vunpack.c.l.b16 %v927
        %v5426 = vunpack.c.h.b16 %v927
        %v5427 = vunpack.c.l.b16 %v928
        %v5428 = vunpack.c.h.b16 %v928
        %v5429 = vunpack.c.l.b16 %v929
        %v5430 = vunpack.c.h.b16 %v929
        %v5431 = vunpack.c.l.b16 %v930
        %v5432 = vunpack.c.h.b16 %v930
        %v5433 = vunpack.c.l.b16 %v931
        %v5434 = vunpack.c.h.b16 %v931
        %v5435 = vunpack.c.l.b16 %v932
        %v5436 = vunpack.c.h.b16 %v932
        %v5437 = vunpack.c.l.b16 %v933
        %v5438 = vunpack.c.h.b16 %v933
        %v5439 = vunpack.c.l.b16 %v934
        %v5440 = vunpack.c.h.b16 %v934
        %v5441 = vunpack.c.l.b16 %v935
        %v5442 = vunpack.c.h.b16 %v935
        %v5443 = vunpack.c.l.b16 %v936
        %v5444 = vunpack.c.h.b16 %v936
        %v5445 = vunpack.c.l.b16 %v937
        %v5446 = vunpack.c.h.b16 %v937
        %v5447 = vunpack.c.l.b16 %v938
        %v5448 = vunpack.c.h.b16 %v938
        %v5449 = vunpack.c.l.b16 %v939
        %v5450 = vunpack.c.h.b16 %v939
        %v5451 = vunpack.c.l.b16 %v940
        %v5452 = vunpack.c.h.b16 %v940
        %v5453 = vunpack.c.l.b16 %v941
        %v5454 = vunpack.c.h.b16 %v941
        %v5455 = vunpack.c.l.b16 %v942
        %v5456 = vunpack.c.h.b16 %v942
        %v5457 = vunpack.c.l.b16 %v943
        %v5458 = vunpack.c.h.b16 %v943
        %v5459 = vunpack.c.l.b16 %v944
        %v5460 = vunpack.c.h.b16 %v944
        %v5461 = vunpack.c.l.b16 %v945
        %v5462 = vunpack.c.h.b16 %v945
        %v5463 = vunpack.c.l.b16 %v946
        %v5464 = vunpack.c.h.b16 %v946
        %v5465 = vunpack.c.l.b16 %v947
        %v5466 = vunpack.c.h.b16 %v947
        %v5467 = vunpack.c.l.b16 %v948
        %v5468 = vunpack.c.h.b16 %v948
        %v5469 = vunpack.c.l.b16 %v949
        %v5470 = vunpack.c.h.b16 %v949
        %v5471 = vunpack.c.l.b16 %v950
        %v5472 = vunpack.c.h.b16 %v950
        %v5473 = vunpack.c.l.b16 %v951
        %v5474 = vunpack.c.h.b16 %v951
        %v5475 = vunpack.c.l.b16 %v952
        %v5476 = vunpack.c.h.b16 %v952
        %v5477 = vunpack.c.l.b16 %v953
        %v5478 = vunpack.c.h.b16 %v953
        %v5479 = vunpack.c.l.b16 %v954
        %v5480 = vunpack.c.h.b16 %v954
        %v5481 = vunpack.c.l.b16 %v955
        %v5482 = vunpack.c.h.b16 %v955
        %v5483 = vunpack.c.l.b16 %v956
        %v5484 = vunpack.c.h.b16 %v956
        %v5485 = vunpack.c.l.b16 %v957
        %v5486 = vunpack.c.h.b16 %v957
        %v5487 = vunpack.c.l.b16 %v958
        %v5488 = vunpack.c.h.b16 %v958
        %v5489 = vunpack.c.l.b16 %v959
        %v5490 = vunpack.c.h.b16 %v959
        %v5491 = vunpack.c.l.b16 %v960
        %v5492 = vunpack.c.h.b16 %v960
        %v5493 = vunpack.c.l.b16 %v961
        %v5494 = vunpack.c.h.b16 %v961
        %v5495 = vunpack.c.l.b16 %v962
        %v5496 = vunpack.c.h.b16 %v962
        %v5497 = vunpack.c.l.b16 %v963
        %v5498 = vunpack.c.h.b16 %v963
        %v5499 = vunpack.c.l.b16 %v964
        %v5500 = vunpack.c.h.b16 %v964
        %v5501 = vunpack.c.l.b16 %v965
        %v5502 = vunpack.c.h.b16 %v965
        %v5503 = vunpack.c.l.b16 %v966
        %v5504 = vunpack.c.h.b16 %v966
        %v5505 = vunpack.c.l.b16 %v967
        %v5506 = vunpack.c.h.b16 %v967
        %v5507 = vunpack.c.l.b16 %v968
        %v5508 = vunpack.c.h.b16 %v968
        %v5509 = vunpack.c.l.b16 %v969
        %v5510 = vunpack.c.h.b16 %v969
        %v5511 = vunpack.c.l.b16 %v970
        %v5512 = vunpack.c.h.b16 %v970
        %v5513 = vunpack.c.l.b16 %v971
        %v5514 = vunpack.c.h.b16 %v971
        %v5515 = vunpack.c.l.b16 %v972
        %v5516 = vunpack.c.h.b16 %v972
        %v5517 = vunpack.c.l.b16 %v973
        %v5518 = vunpack.c.h.b16 %v973
        %v5519 = vunpack.c.l.b16 %v974
        %v5520 = vunpack.c.h.b16 %v974
        %v5521 = vunpack.c.l.b16 %v975
        %v5522 = vunpack.c.h.b16 %v975
        %v5523 = vunpack.c.l.b16 %v976
        %v5524 = vunpack.c.h.b16 %v976
        %v5525 = vunpack.c.l.b16 %v977
        %v5526 = vunpack.c.h.b16 %v977
        %v5527 = vunpack.c.l.b16 %v978
        %v5528 = vunpack.c.h.b16 %v978
        %v5529 = vunpack.c.l.b16 %v979
        %v5530 = vunpack.c.h.b16 %v979
        %v5531 = vunpack.c.l.b16 %v980
        %v5532 = vunpack.c.h.b16 %v980
        %v5533 = vunpack.c.l.b16 %v981
        %v5534 = vunpack.c.h.b16 %v981
        %v5535 = vunpack.c.l.b16 %v982
        %v5536 = vunpack.c.h.b16 %v982
        %v5537 = vunpack.c.l.b16 %v983
        %v5538 = vunpack.c.h.b16 %v983
        %v5539 = vunpack.c.l.b16 %v984
        %v5540 = vunpack.c.h.b16 %v984
        %v5541 = vunpack.c.l.b16 %v985
        %v5542 = vunpack.c.h.b16 %v985
        %v5543 = vunpack.c.l.b16 %v986
        %v5544 = vunpack.c.h.b16 %v986
        %v5545 = vunpack.c.l.b16 %v987
        %v5546 = vunpack.c.h.b16 %v987
        %v5547 = vunpack.c.l.b16 %v988
        %v5548 = vunpack.c.h.b16 %v988
        %v5549 = vunpack.c.l.b16 %v989
        %v5550 = vunpack.c.h.b16 %v989
        %v5551 = vunpack.c.l.b16 %v990
        %v5552 = vunpack.c.h.b16 %v990
        %v5553 = vunpack.c.l.b16 %v991
        %v5554 = vunpack.c.h.b16 %v991
        %v5555 = vunpack.c.l.b16 %v992
        %v5556 = vunpack.c.h.b16 %v992
        %v5557 = vunpack.c.l.b16 %v993
        %v5558 = vunpack.c.h.b16 %v993
        %v5559 = vunpack.c.l.b16 %v994
        %v5560 = vunpack.c.h.b16 %v994
        %v5561 = vunpack.c.l.b16 %v995
        %v5562 = vunpack.c.h.b16 %v995
        %v5563 = vunpack.c.l.b16 %v996
        %v5564 = vunpack.c.h.b16 %v996
        %v5565 = vunpack.c.l.b16 %v997
        %v5566 = vunpack.c.h.b16 %v997
        %v5567 = vunpack.c.l.b16 %v998
        %v5568 = vunpack.c.h.b16 %v998
        %v5569 = vunpack.c.l.b16 %v999
        %v5570 = vunpack.c.h.b16 %v999
        %v5571 = vunpack.c.l.b16 %v1000
        %v5572 = vunpack.c.h.b16 %v1000
        %v5573 = vunpack.c.l.b16 %v1001
        %v5574 = vunpack.c.h.b16 %v1001
        %v5575 = vunpack.c.l.b16 %v1002
        %v5576 = vunpack.c.h.b16 %v1002
        %v5577 = vunpack.c.l.b16 %v1003
        %v5578 = vunpack.c.h.b16 %v1003
        %v5579 = vunpack.c.l.b16 %v1004
        %v5580 = vunpack.c.h.b16 %v1004
        %v5581 = vunpack.c.l.b16 %v1005
        %v5582 = vunpack.c.h.b16 %v1005
        %v5583 = vunpack.c.l.b16 %v1006
        %v5584 = vunpack.c.h.b16 %v1006
        %v5585 = vunpack.c.l.b16 %v1007
        %v5586 = vunpack.c.h.b16 %v1007
        %v5587 = vunpack.c.l.b16 %v1008
        %v5588 = vunpack.c.h.b16 %v1008
        %v5589 = vunpack.c.l.b16 %v1009
        %v5590 = vunpack.c.h.b16 %v1009
        %v5591 = vunpack.c.l.b16 %v1010
        %v5592 = vunpack.c.h.b16 %v1010
        %v5593 = vunpack.c.l.b16 %v1011
        %v5594 = vunpack.c.h.b16 %v1011
        %v5595 = vunpack.c.l.b16 %v1012
        %v5596 = vunpack.c.h.b16 %v1012
        %v5597 = vunpack.c.l.b16 %v1013
        %v5598 = vunpack.c.h.b16 %v1013
        %v5599 = vunpack.c.l.b16 %v1014
        %v5600 = vunpack.c.h.b16 %v1014
        %v5601 = vunpack.c.l.b16 %v1015
        %v5602 = vunpack.c.h.b16 %v1015
        %v5603 = vunpack.c.l.b16 %v1016
        %v5604 = vunpack.c.h.b16 %v1016
        %v5605 = vunpack.c.l.b16 %v1017
        %v5606 = vunpack.c.h.b16 %v1017
        %v5607 = vunpack.c.l.b16 %v1018
        %v5608 = vunpack.c.h.b16 %v1018
        %v5609 = vunpack.c.l.b16 %v1019
        %v5610 = vunpack.c.h.b16 %v1019
        %v5611 = vunpack.c.l.b16 %v1020
        %v5612 = vunpack.c.h.b16 %v1020
        %v5613 = vunpack.c.l.b16 %v1021
        %v5614 = vunpack.c.h.b16 %v1021
        %v5615 = vunpack.c.l.b16 %v1022
        %v5616 = vunpack.c.h.b16 %v1022
        %v5617 = vunpack.c.l.b16 %v1023
        %v5618 = vunpack.c.h.b16 %v1023
        %v5619 = vunpack.c.l.b16 %v1024
        %v5620 = vunpack.c.h.b16 %v1024
        %v5621 = vunpack.c.l.b16 %v1025
        %v5622 = vunpack.c.h.b16 %v1025
        %v5623 = vunpack.c.l.b16 %v1026
        %v5624 = vunpack.c.h.b16 %v1026
        %v5625 = vunpack.c.l.b16 %v1027
        %v5626 = vunpack.c.h.b16 %v1027
        %v5627 = vunpack.c.l.b16 %v1028
        %v5628 = vunpack.c.h.b16 %v1028
        %v5629 = vunpack.c.l.b16 %v1029
        %v5630 = vunpack.c.h.b16 %v1029
        %v5631 = vunpack.c.l.b16 %v1030
        %v5632 = vunpack.c.h.b16 %v1030
        %v5633 = vunpack.c.l.b16 %v1031
        %v5634 = vunpack.c.h.b16 %v1031
        %v5635 = vunpack.c.l.b16 %v1032
        %v5636 = vunpack.c.h.b16 %v1032
        %v5637 = vunpack.c.l.b16 %v1033
        %v5638 = vunpack.c.h.b16 %v1033
        %v5639 = vunpack.c.l.b16 %v1034
        %v5640 = vunpack.c.h.b16 %v1034
        %v5641 = vunpack.c.l.b16 %v1035
        %v5642 = vunpack.c.h.b16 %v1035
        %v5643 = vunpack.c.l.b16 %v1036
        %v5644 = vunpack.c.h.b16 %v1036
        %v5645 = vunpack.c.l.b16 %v1037
        %v5646 = vunpack.c.h.b16 %v1037
        %v5647 = vunpack.c.l.b16 %v1038
        %v5648 = vunpack.c.h.b16 %v1038
        %v5649 = vunpack.c.l.b16 %v1039
        %v5650 = vunpack.c.h.b16 %v1039
        %v5651 = vunpack.c.l.b16 %v1040
        %v5652 = vunpack.c.h.b16 %v1040
        %v5653 = vunpack.c.l.b16 %v1041
        %v5654 = vunpack.c.h.b16 %v1041
        %v5655 = vunpack.c.l.b16 %v1042
        %v5656 = vunpack.c.h.b16 %v1042
        %v5657 = vunpack.c.l.b16 %v1043
        %v5658 = vunpack.c.h.b16 %v1043
        %v5659 = vunpack.c.l.b16 %v1044
        %v5660 = vunpack.c.h.b16 %v1044
        %v5661 = vunpack.c.l.b16 %v1045
        %v5662 = vunpack.c.h.b16 %v1045
        %v5663 = vunpack.c.l.b16 %v1046
        %v5664 = vunpack.c.h.b16 %v1046
        %v5665 = vunpack.c.l.b16 %v1047
        %v5666 = vunpack.c.h.b16 %v1047
        %v5667 = vunpack.c.l.b16 %v1048
        %v5668 = vunpack.c.h.b16 %v1048
        %v5669 = vunpack.c.l.b16 %v1049
        %v5670 = vunpack.c.h.b16 %v1049
        %v5671 = vunpack.c.l.b16 %v1050
        %v5672 = vunpack.c.h.b16 %v1050
        %v5673 = vunpack.c.l.b16 %v1051
        %v5674 = vunpack.c.h.b16 %v1051
        %v5675 = vunpack.c.l.b16 %v1052
        %v5676 = vunpack.c.h.b16 %v1052
        %v5677 = vunpack.c.l.b16 %v1053
        %v5678 = vunpack.c.h.b16 %v1053
        %v5679 = vunpack.c.l.b16 %v1054
        %v5680 = vunpack.c.h.b16 %v1054
        %v5681 = vunpack.c.l.b16 %v1055
        %v5682 = vunpack.c.h.b16 %v1055
        %v5683 = vunpack.c.l.b16 %v1056
        %v5684 = vunpack.c.h.b16 %v1056
        %v5685 = vunpack.c.l.b16 %v1057
        %v5686 = vunpack.c.h.b16 %v1057
        %v5687 = vunpack.c.l.b16 %v1058
        %v5688 = vunpack.c.h.b16 %v1058
        %v5689 = vunpack.c.l.b16 %v1059
        %v5690 = vunpack.c.h.b16 %v1059
        %v5691 = vunpack.c.l.b16 %v1060
        %v5692 = vunpack.c.h.b16 %v1060
        %v5693 = vunpack.c.l.b16 %v1061
        %v5694 = vunpack.c.h.b16 %v1061
        %v5695 = vunpack.c.l.b16 %v1062
        %v5696 = vunpack.c.h.b16 %v1062
        %v5697 = vunpack.c.l.b16 %v1063
        %v5698 = vunpack.c.h.b16 %v1063
        %v5699 = vunpack.c.l.b16 %v1064
        %v5700 = vunpack.c.h.b16 %v1064
        %v5701 = vunpack.c.l.b16 %v1065
        %v5702 = vunpack.c.h.b16 %v1065
        %v5703 = vunpack.c.l.b16 %v1066
        %v5704 = vunpack.c.h.b16 %v1066
        %v5705 = vunpack.c.l.b16 %v1067
        %v5706 = vunpack.c.h.b16 %v1067
        %v5707 = vunpack.c.l.b16 %v1068
        %v5708 = vunpack.c.h.b16 %v1068
        %v5709 = vunpack.c.l.b16 %v1069
        %v5710 = vunpack.c.h.b16 %v1069
        %v5711 = vunpack.c.l.b16 %v1070
        %v5712 = vunpack.c.h.b16 %v1070
        %v5713 = vunpack.c.l.b16 %v1071
        %v5714 = vunpack.c.h.b16 %v1071
        %v5715 = vunpack.c.l.b16 %v1072
        %v5716 = vunpack.c.h.b16 %v1072
        %v5717 = vunpack.c.l.b16 %v1073
        %v5718 = vunpack.c.h.b16 %v1073
        %v5719 = vunpack.c.l.b16 %v1074
        %v5720 = vunpack.c.h.b16 %v1074
        %v5721 = vunpack.c.l.b16 %v1075
        %v5722 = vunpack.c.h.b16 %v1075
        %v5723 = vunpack.c.l.b16 %v1076
        %v5724 = vunpack.c.h.b16 %v1076
        %v5725 = vunpack.c.l.b16 %v1077
        %v5726 = vunpack.c.h.b16 %v1077
        %v5727 = vunpack.c.l.b16 %v1078
        %v5728 = vunpack.c.h.b16 %v1078
        %v5729 = vunpack.c.l.b16 %v1079
        %v5730 = vunpack.c.h.b16 %v1079
        %v5731 = vunpack.c.l.b16 %v1080
        %v5732 = vunpack.c.h.b16 %v1080
        %v5733 = vunpack.c.l.b16 %v1081
        %v5734 = vunpack.c.h.b16 %v1081
        %v5735 = vunpack.c.l.b16 %v1082
        %v5736 = vunpack.c.h.b16 %v1082
        %v5737 = vunpack.c.l.b16 %v1083
        %v5738 = vunpack.c.h.b16 %v1083
        %v5739 = vunpack.c.l.b16 %v1084
        %v5740 = vunpack.c.h.b16 %v1084
        %v5741 = vunpack.c.l.b16 %v1085
        %v5742 = vunpack.c.h.b16 %v1085
        %v5743 = vunpack.c.l.b16 %v1086
        %v5744 = vunpack.c.h.b16 %v1086
        %v5745 = vunpack.c.l.b16 %v1087
        %v5746 = vunpack.c.h.b16 %v1087
        %v5747 = vunpack.c.l.b16 %v1088
        %v5748 = vunpack.c.h.b16 %v1088
        %v5749 = vunpack.c.l.b16 %v1089
        %v5750 = vunpack.c.h.b16 %v1089
        %v5751 = vunpack.c.l.b16 %v1090
        %v5752 = vunpack.c.h.b16 %v1090
        %v5753 = vunpack.c.l.b16 %v1091
        %v5754 = vunpack.c.h.b16 %v1091
        %v5755 = vunpack.c.l.b16 %v1092
        %v5756 = vunpack.c.h.b16 %v1092
        %v5757 = vunpack.c.l.b16 %v1093
        %v5758 = vunpack.c.h.b16 %v1093
        %v5759 = vunpack.c.l.b16 %v1094
        %v5760 = vunpack.c.h.b16 %v1094
        %v5761 = vunpack.c.l.b16 %v1095
        %v5762 = vunpack.c.h.b16 %v1095
        %v5763 = vunpack.c.l.b16 %v1096
        %v5764 = vunpack.c.h.b16 %v1096
        %v5765 = vunpack.c.l.b16 %v1097
        %v5766 = vunpack.c.h.b16 %v1097
        %v5767 = vunpack.c.l.b16 %v1098
        %v5768 = vunpack.c.h.b16 %v1098
        %v5769 = vunpack.c.l.b16 %v1099
        %v5770 = vunpack.c.h.b16 %v1099
        %v5771 = vunpack.c.l.b16 %v1100
        %v5772 = vunpack.c.h.b16 %v1100
        %v5773 = vunpack.c.l.b16 %v1101
        %v5774 = vunpack.c.h.b16 %v1101
        %v5775 = vunpack.c.l.b16 %v1102
        %v5776 = vunpack.c.h.b16 %v1102
        %v5777 = vunpack.c.l.b16 %v1103
        %v5778 = vunpack.c.h.b16 %v1103
        %v5779 = vunpack.c.l.b16 %v1104
        %v5780 = vunpack.c.h.b16 %v1104
        %v5781 = vunpack.c.l.b16 %v1105
        %v5782 = vunpack.c.h.b16 %v1105
        %v5783 = vunpack.c.l.b16 %v1106
        %v5784 = vunpack.c.h.b16 %v1106
        %v5785 = vunpack.c.l.b16 %v1107
        %v5786 = vunpack.c.h.b16 %v1107
        %v5787 = vunpack.c.l.b16 %v1108
        %v5788 = vunpack.c.h.b16 %v1108
        %v5789 = vunpack.c.l.b16 %v1109
        %v5790 = vunpack.c.h.b16 %v1109
        %v5791 = vunpack.c.l.b16 %v1110
        %v5792 = vunpack.c.h.b16 %v1110
        %v5793 = vunpack.c.l.b16 %v1111
        %v5794 = vunpack.c.h.b16 %v1111
        %v5795 = vunpack.c.l.b16 %v1112
        %v5796 = vunpack.c.h.b16 %v1112
        %v5797 = vunpack.c.l.b16 %v1113
        %v5798 = vunpack.c.h.b16 %v1113
        %v5799 = vunpack.c.l.b16 %v1114
        %v5800 = vunpack.c.h.b16 %v1114
        %v5801 = vunpack.c.l.b16 %v1115
        %v5802 = vunpack.c.h.b16 %v1115
        %v5803 = vunpack.c.l.b16 %v1116
        %v5804 = vunpack.c.h.b16 %v1116
        %v5805 = vunpack.c.l.b16 %v1117
        %v5806 = vunpack.c.h.b16 %v1117
        %v5807 = vunpack.c.l.b16 %v1118
        %v5808 = vunpack.c.h.b16 %v1118
        %v5809 = vunpack.c.l.b16 %v1119
        %v5810 = vunpack.c.h.b16 %v1119
        %v5811 = vunpack.c.l.b16 %v1120
        %v5812 = vunpack.c.h.b16 %v1120
        %v5813 = vunpack.c.l.b16 %v1121
        %v5814 = vunpack.c.h.b16 %v1121
        %v5815 = vunpack.c.l.b16 %v1122
        %v5816 = vunpack.c.h.b16 %v1122
        %v5817 = vunpack.c.l.b16 %v1123
        %v5818 = vunpack.c.h.b16 %v1123
        %v5819 = vunpack.c.l.b16 %v1124
        %v5820 = vunpack.c.h.b16 %v1124
        %v5821 = vunpack.c.l.b16 %v1125
        %v5822 = vunpack.c.h.b16 %v1125
        %v5823 = vunpack.c.l.b16 %v1126
        %v5824 = vunpack.c.h.b16 %v1126
        %v5825 = vunpack.c.l.b16 %v1127
        %v5826 = vunpack.c.h.b16 %v1127
        %v5827 = vunpack.c.l.b16 %v1128
        %v5828 = vunpack.c.h.b16 %v1128
        %v5829 = vunpack.c.l.b16 %v1129
        %v5830 = vunpack.c.h.b16 %v1129
        %v5831 = vunpack.c.l.b16 %v1130
        %v5832 = vunpack.c.h.b16 %v1130
        %v5833 = vunpack.c.l.b16 %v1131
        %v5834 = vunpack.c.h.b16 %v1131
        %v5835 = vunpack.c.l.b16 %v1132
        %v5836 = vunpack.c.h.b16 %v1132
        %v5837 = vunpack.c.l.b16 %v1133
        %v5838 = vunpack.c.h.b16 %v1133
        %v5839 = vunpack.c.l.b16 %v1134
        %v5840 = vunpack.c.h.b16 %v1134
        %v5841 = vunpack.c.l.b16 %v1135
        %v5842 = vunpack.c.h.b16 %v1135
        %v5843 = vunpack.c.l.b16 %v1136
        %v5844 = vunpack.c.h.b16 %v1136
        %v5845 = vunpack.c.l.b16 %v1137
        %v5846 = vunpack.c.h.b16 %v1137
        %v5847 = vunpack.c.l.b16 %v1138
        %v5848 = vunpack.c.h.b16 %v1138
        %v5849 = vunpack.c.l.b16 %v1139
        %v5850 = vunpack.c.h.b16 %v1139
        %v5851 = vunpack.c.l.b16 %v1140
        %v5852 = vunpack.c.h.b16 %v1140
        %v5853 = vunpack.c.l.b16 %v1141
        %v5854 = vunpack.c.h.b16 %v1141
        %v5855 = vunpack.c.l.b16 %v1142
        %v5856 = vunpack.c.h.b16 %v1142
        %v5857 = vunpack.c.l.b16 %v1143
        %v5858 = vunpack.c.h.b16 %v1143
        %v5859 = vunpack.c.l.b16 %v1144
        %v5860 = vunpack.c.h.b16 %v1144
        %v5861 = vunpack.c.l.b16 %v1145
        %v5862 = vunpack.c.h.b16 %v1145
        %v5863 = vunpack.c.l.b16 %v1146
        %v5864 = vunpack.c.h.b16 %v1146
        %v5865 = vunpack.c.l.b16 %v1147
        %v5866 = vunpack.c.h.b16 %v1147
        %v5867 = vunpack.c.l.b16 %v1148
        %v5868 = vunpack.c.h.b16 %v1148
        %v5869 = vunpack.c.l.b16 %v1149
        %v5870 = vunpack.c.h.b16 %v1149
        %v5871 = vunpack.c.l.b16 %v1150
        %v5872 = vunpack.c.h.b16 %v1150
        %v5873 = vunpack.c.l.b16 %v1151
        %v5874 = vunpack.c.h.b16 %v1151
        %v5875 = vunpack.c.l.b16 %v1152
        %v5876 = vunpack.c.h.b16 %v1152
        %v5877 = vunpack.c.l.b16 %v1153
        %v5878 = vunpack.c.h.b16 %v1153
        %v5879 = vunpack.c.l.b16 %v1154
        %v5880 = vunpack.c.h.b16 %v1154
        %v5881 = vunpack.c.l.b16 %v1155
        %v5882 = vunpack.c.h.b16 %v1155
        %v5883 = vunpack.c.l.b16 %v1156
        %v5884 = vunpack.c.h.b16 %v1156
        %v5885 = vunpack.c.l.b16 %v1157
        %v5886 = vunpack.c.h.b16 %v1157
        %v5887 = vunpack.c.l.b16 %v1158
        %v5888 = vunpack.c.h.b16 %v1158
        %v5889 = vunpack.c.l.b16 %v1159
        %v5890 = vunpack.c.h.b16 %v1159
        %v5891 = vunpack.c.l.b16 %v1160
        %v5892 = vunpack.c.h.b16 %v1160
        %v5893 = vunpack.c.l.b16 %v1161
        %v5894 = vunpack.c.h.b16 %v1161
        %v5895 = vunpack.c.l.b16 %v1162
        %v5896 = vunpack.c.h.b16 %v1162
        %v5897 = vunpack.c.l.b16 %v1163
        %v5898 = vunpack.c.h.b16 %v1163
        %v5899 = vunpack.c.l.b16 %v1164
        %v5900 = vunpack.c.h.b16 %v1164
        %v5901 = vunpack.c.l.b16 %v1165
        %v5902 = vunpack.c.h.b16 %v1165
        %v5903 = vunpack.c.l.b16 %v1166
        %v5904 = vunpack.c.h.b16 %v1166
        %v5905 = vunpack.c.l.b16 %v1167
        %v5906 = vunpack.c.h.b16 %v1167
        %v5907 = vunpack.c.l.b16 %v1168
        %v5908 = vunpack.c.h.b16 %v1168
        %v5909 = vunpack.c.l.b16 %v1169
        %v5910 = vunpack.c.h.b16 %v1169
        %v5911 = vunpack.c.l.b16 %v1170
        %v5912 = vunpack.c.h.b16 %v1170
        %v5913 = vunpack.c.l.b16 %v1171
        %v5914 = vunpack.c.h.b16 %v1171
        %v5915 = vunpack.c.l.b16 %v1172
        %v5916 = vunpack.c.h.b16 %v1172
        %v5917 = vunpack.c.l.b16 %v1173
        %v5918 = vunpack.c.h.b16 %v1173
        %v5919 = vunpack.c.l.b16 %v1174
        %v5920 = vunpack.c.h.b16 %v1174
        %v5921 = vunpack.c.l.b16 %v1175
        %v5922 = vunpack.c.h.b16 %v1175
        %v5923 = vunpack.c.l.b16 %v1176
        %v5924 = vunpack.c.h.b16 %v1176
        %v5925 = vunpack.c.l.b16 %v1177
        %v5926 = vunpack.c.h.b16 %v1177
        %v5927 = vunpack.c.l.b16 %v1178
        %v5928 = vunpack.c.h.b16 %v1178
        %v5929 = vunpack.c.l.b16 %v1179
        %v5930 = vunpack.c.h.b16 %v1179
        %v5931 = vunpack.c.l.b16 %v1180
        %v5932 = vunpack.c.h.b16 %v1180
        %v5933 = vunpack.c.l.b16 %v1181
        %v5934 = vunpack.c.h.b16 %v1181
        %v5935 = vunpack.c.l.b16 %v1182
        %v5936 = vunpack.c.h.b16 %v1182
        %v5937 = vunpack.c.l.b16 %v1183
        %v5938 = vunpack.c.h.b16 %v1183
        %v5939 = vunpack.c.l.b16 %v1184
        %v5940 = vunpack.c.h.b16 %v1184
        %v5941 = vunpack.c.l.b16 %v1185
        %v5942 = vunpack.c.h.b16 %v1185
        %v5943 = vunpack.c.l.b16 %v1186
        %v5944 = vunpack.c.h.b16 %v1186
        %v5945 = vunpack.c.l.b16 %v1187
        %v5946 = vunpack.c.h.b16 %v1187
        %v5947 = vunpack.c.l.b16 %v1188
        %v5948 = vunpack.c.h.b16 %v1188
        %v5949 = vunpack.c.l.b16 %v1189
        %v5950 = vunpack.c.h.b16 %v1189
        %v5951 = vunpack.c.l.b16 %v1190
        %v5952 = vunpack.c.h.b16 %v1190
        %v5953 = vunpack.c.l.b16 %v1191
        %v5954 = vunpack.c.h.b16 %v1191
        %v5955 = vunpack.c.l.b16 %v1192
        %v5956 = vunpack.c.h.b16 %v1192
        %v5957 = vunpack.c.l.b16 %v1193
        %v5958 = vunpack.c.h.b16 %v1193
        %v5959 = vunpack.c.l.b16 %v1194
        %v5960 = vunpack.c.h.b16 %v1194
        %v5961 = vunpack.c.l.b16 %v1195
        %v5962 = vunpack.c.h.b16 %v1195
        %v5963 = vunpack.c.l.b16 %v1196
        %v5964 = vunpack.c.h.b16 %v1196
        %v5965 = vunpack.c.l.b16 %v1197
        %v5966 = vunpack.c.h.b16 %v1197
        %v5967 = vunpack.c.l.b16 %v1198
        %v5968 = vunpack.c.h.b16 %v1198
        %v5969 = vunpack.c.l.b16 %v1199
        %v5970 = vunpack.c.h.b16 %v1199
        %v5971 = vunpack.c.l.b16 %v1200
        %v5972 = vunpack.c.h.b16 %v1200
        %v5973 = vunpack.c.l.b16 %v1201
        %v5974 = vunpack.c.h.b16 %v1201
        %v5975 = vunpack.c.l.b16 %v1202
        %v5976 = vunpack.c.h.b16 %v1202
        %v5977 = vunpack.c.l.b16 %v1203
        %v5978 = vunpack.c.h.b16 %v1203
        %v5979 = vunpack.c.l.b16 %v1204
        %v5980 = vunpack.c.h.b16 %v1204
        %v5981 = vunpack.c.l.b16 %v1205
        %v5982 = vunpack.c.h.b16 %v1205
        %v5983 = vunpack.c.l.b16 %v1206
        %v5984 = vunpack.c.h.b16 %v1206
        %v5985 = vunpack.c.l.b16 %v1207
        %v5986 = vunpack.c.h.b16 %v1207
        %v5987 = vunpack.c.l.b16 %v1208
        %v5988 = vunpack.c.h.b16 %v1208
        %v5989 = vunpack.c.l.b16 %v1209
        %v5990 = vunpack.c.h.b16 %v1209
        %v5991 = vunpack.c.l.b16 %v1210
        %v5992 = vunpack.c.h.b16 %v1210
        %v5993 = vunpack.c.l.b16 %v1211
        %v5994 = vunpack.c.h.b16 %v1211
        %v5995 = vunpack.c.l.b16 %v1212
        %v5996 = vunpack.c.h.b16 %v1212
        %v5997 = vunpack.c.l.b16 %v1213
        %v5998 = vunpack.c.h.b16 %v1213
        %v5999 = vunpack.c.l.b16 %v1214
        %v6000 = vunpack.c.h.b16 %v1214
        %v6001 = vunpack.c.l.b16 %v1215
        %v6002 = vunpack.c.h.b16 %v1215
        %v6003 = vunpack.c.l.b16 %v1216
        %v6004 = vunpack.c.h.b16 %v1216
        %v6005 = vunpack.c.l.b16 %v1217
        %v6006 = vunpack.c.h.b16 %v1217
        %v6007 = vunpack.c.l.b16 %v1218
        %v6008 = vunpack.c.h.b16 %v1218
        %v6009 = vunpack.c.l.b16 %v1219
        %v6010 = vunpack.c.h.b16 %v1219
        %v6011 = vunpack.c.l.b16 %v1220
        %v6012 = vunpack.c.h.b16 %v1220
        %v6013 = vunpack.c.l.b16 %v1221
        %v6014 = vunpack.c.h.b16 %v1221
        %v6015 = vunpack.c.l.b16 %v1222
        %v6016 = vunpack.c.h.b16 %v1222
        %v6017 = vunpack.c.l.b16 %v1223
        %v6018 = vunpack.c.h.b16 %v1223
        %v6019 = vunpack.c.l.b16 %v1224
        %v6020 = vunpack.c.h.b16 %v1224
        %v6021 = vunpack.c.l.b16 %v1225
        %v6022 = vunpack.c.h.b16 %v1225
        %v6023 = vunpack.c.l.b16 %v1226
        %v6024 = vunpack.c.h.b16 %v1226
        %v6025 = vunpack.c.l.b16 %v1227
        %v6026 = vunpack.c.h.b16 %v1227
        %v6027 = vunpack.c.l.b16 %v1228
        %v6028 = vunpack.c.h.b16 %v1228
        %v6029 = vunpack.c.l.b16 %v1229
        %v6030 = vunpack.c.h.b16 %v1229
        %v6031 = vunpack.c.l.b16 %v1230
        %v6032 = vunpack.c.h.b16 %v1230
        %v6033 = vunpack.c.l.b16 %v1231
        %v6034 = vunpack.c.h.b16 %v1231
        %v6035 = vunpack.c.l.b16 %v1232
        %v6036 = vunpack.c.h.b16 %v1232
        %v6037 = vunpack.c.l.b16 %v1233
        %v6038 = vunpack.c.h.b16 %v1233
        %v6039 = vunpack.c.l.b16 %v1234
        %v6040 = vunpack.c.h.b16 %v1234
        %v6041 = vunpack.c.l.b16 %v1235
        %v6042 = vunpack.c.h.b16 %v1235
        %v6043 = vunpack.c.l.b16 %v1236
        %v6044 = vunpack.c.h.b16 %v1236
        %v6045 = vunpack.c.l.b16 %v1237
        %v6046 = vunpack.c.h.b16 %v1237
        %v6047 = vunpack.c.l.b16 %v1238
        %v6048 = vunpack.c.h.b16 %v1238
        %v6049 = vunpack.c.l.b16 %v1239
        %v6050 = vunpack.c.h.b16 %v1239
        %v6051 = vunpack.c.l.b16 %v1240
        %v6052 = vunpack.c.h.b16 %v1240
        %v6053 = vunpack.c.l.b16 %v1241
        %v6054 = vunpack.c.h.b16 %v1241
        %v6055 = vunpack.c.l.b16 %v1242
        %v6056 = vunpack.c.h.b16 %v1242
        %v6057 = vunpack.c.l.b16 %v1243
        %v6058 = vunpack.c.h.b16 %v1243
        %v6059 = vunpack.c.l.b16 %v1244
        %v6060 = vunpack.c.h.b16 %v1244
        %v6061 = vunpack.c.l.b16 %v1245
        %v6062 = vunpack.c.h.b16 %v1245
        %v6063 = vunpack.c.l.b16 %v1246
        %v6064 = vunpack.c.h.b16 %v1246
        %v6065 = vunpack.c.l.b16 %v1247
        %v6066 = vunpack.c.h.b16 %v1247
        %v6067 = vunpack.c.l.b16 %v1248
        %v6068 = vunpack.c.h.b16 %v1248
        %v6069 = vunpack.c.l.b16 %v1249
        %v6070 = vunpack.c.h.b16 %v1249
        %v6071 = vunpack.c.l.b16 %v1250
        %v6072 = vunpack.c.h.b16 %v1250
        %v6073 = vunpack.c.l.b16 %v1251
        %v6074 = vunpack.c.h.b16 %v1251
        %v6075 = vunpack.c.l.b16 %v1252
        %v6076 = vunpack.c.h.b16 %v1252
        %v6077 = vunpack.c.l.b16 %v1253
        %v6078 = vunpack.c.h.b16 %v1253
        %v6079 = vunpack.c.l.b16 %v1254
        %v6080 = vunpack.c.h.b16 %v1254
        %v6081 = vunpack.c.l.b16 %v1255
        %v6082 = vunpack.c.h.b16 %v1255
        %v6083 = vunpack.c.l.b16 %v1256
        %v6084 = vunpack.c.h.b16 %v1256
        %v6085 = vunpack.c.l.b16 %v1257
        %v6086 = vunpack.c.h.b16 %v1257
        %v6087 = vunpack.c.l.b16 %v1258
        %v6088 = vunpack.c.h.b16 %v1258
        %v6089 = vunpack.c.l.b16 %v1259
        %v6090 = vunpack.c.h.b16 %v1259
        %v6091 = vunpack.c.l.b16 %v1260
        %v6092 = vunpack.c.h.b16 %v1260
        %v6093 = vunpack.c.l.b16 %v1261
        %v6094 = vunpack.c.h.b16 %v1261
        %v6095 = vunpack.c.l.b16 %v1262
        %v6096 = vunpack.c.h.b16 %v1262
        %v6097 = vunpack.c.l.b16 %v1263
        %v6098 = vunpack.c.h.b16 %v1263
        %v6099 = vunpack.c.l.b16 %v1264
        %v6100 = vunpack.c.h.b16 %v1264
        %v6101 = vunpack.c.l.b16 %v1265
        %v6102 = vunpack.c.h.b16 %v1265
        %v6103 = vunpack.c.l.b16 %v1266
        %v6104 = vunpack.c.h.b16 %v1266
        %v6105 = vunpack.c.l.b16 %v1267
        %v6106 = vunpack.c.h.b16 %v1267
        %v6107 = vunpack.c.l.b16 %v1268
        %v6108 = vunpack.c.h.b16 %v1268
        %v6109 = vunpack.c.l.b16 %v1269
        %v6110 = vunpack.c.h.b16 %v1269
        %v6111 = vunpack.c.l.b16 %v1270
        %v6112 = vunpack.c.h.b16 %v1270
        %v6113 = vunpack.c.l.b16 %v1271
        %v6114 = vunpack.c.h.b16 %v1271
        %v6115 = vunpack.c.l.b16 %v1272
        %v6116 = vunpack.c.h.b16 %v1272
        %v6117 = vunpack.c.l.b16 %v1273
        %v6118 = vunpack.c.h.b16 %v1273
        %v6119 = vunpack.c.l.b16 %v1274
        %v6120 = vunpack.c.h.b16 %v1274
        %v6121 = vunpack.c.l.b16 %v1275
        %v6122 = vunpack.c.h.b16 %v1275
        %v6123 = vunpack.c.l.b16 %v1276
        %v6124 = vunpack.c.h.b16 %v1276
        %v6125 = vunpack.c.l.b16 %v1277
        %v6126 = vunpack.c.h.b16 %v1277
        %v6127 = vunpack.c.l.b16 %v1278
        %v6128 = vunpack.c.h.b16 %v1278
        %v6129 = vunpack.c.l.b16 %v1279
        %v6130 = vunpack.c.h.b16 %v1279
        %v6131 = vunpack.c.l.b16 %v1280
        %v6132 = vunpack.c.h.b16 %v1280
        %v6133 = vunpack.c.l.b16 %v1281
        %v6134 = vunpack.c.h.b16 %v1281
        %v6135 = vunpack.c.l.b16 %v1282
        %v6136 = vunpack.c.h.b16 %v1282
        %v6137 = vunpack.c.l.b16 %v1283
        %v6138 = vunpack.c.h.b16 %v1283
        %v6139 = vunpack.c.l.b16 %v1284
        %v6140 = vunpack.c.h.b16 %v1284
        %v6141 = vunpack.c.l.b16 %v1285
        %v6142 = vunpack.c.h.b16 %v1285
        %v6143 = vunpack.c.l.b16 %v1286
        %v6144 = vunpack.c.h.b16 %v1286
        %v6145 = vunpack.c.l.b16 %v1287
        %v6146 = vunpack.c.h.b16 %v1287
        %v6147 = vunpack.c.l.b16 %v1288
        %v6148 = vunpack.c.h.b16 %v1288
        %v6149 = vunpack.c.l.b16 %v1289
        %v6150 = vunpack.c.h.b16 %v1289
        %v6151 = vunpack.c.l.b16 %v1290
        %v6152 = vunpack.c.h.b16 %v1290
        %v6153 = vunpack.c.l.b16 %v1291
        %v6154 = vunpack.c.h.b16 %v1291
        %v6155 = vunpack.c.l.b16 %v1292
        %v6156 = vunpack.c.h.b16 %v1292
        %v6157 = vunpack.c.l.b16 %v1293
        %v6158 = vunpack.c.h.b16 %v1293
        %v6159 = vunpack.c.l.b16 %v1294
        %v6160 = vunpack.c.h.b16 %v1294
        %v6161 = vunpack.c.l.b16 %v1295
        %v6162 = vunpack.c.h.b16 %v1295
        %v6163 = vunpack.c.l.b16 %v1296
        %v6164 = vunpack.c.h.b16 %v1296
        %v6165 = vunpack.c.l.b16 %v1297
        %v6166 = vunpack.c.h.b16 %v1297
        %v6167 = vunpack.c.l.b16 %v1298
        %v6168 = vunpack.c.h.b16 %v1298
        %v6169 = vunpack.c.l.b16 %v1299
        %v6170 = vunpack.c.h.b16 %v1299
        %v6171 = vunpack.c.l.b16 %v1300
        %v6172 = vunpack.c.h.b16 %v1300
        %v6173 = vunpack.c.l.b16 %v1301
        %v6174 = vunpack.c.h.b16 %v1301
        %v6175 = vunpack.c.l.b16 %v1302
        %v6176 = vunpack.c.h.b16 %v1302
        %v6177 = vunpack.c.l.b16 %v1303
        %v6178 = vunpack.c.h.b16 %v1303
        %v6179 = vunpack.c.l.b16 %v1304
        %v6180 = vunpack.c.h.b16 %v1304
        %v6181 = vunpack.c.l.b16 %v1305
        %v6182 = vunpack.c.h.b16 %v1305
        %v6183 = vunpack.c.l.b16 %v1306
        %v6184 = vunpack.c.h.b16 %v1306
        %v6185 = vunpack.c.l.b16 %v1307
        %v6186 = vunpack.c.h.b16 %v1307
        %v6187 = vunpack.c.l.b16 %v1308
        %v6188 = vunpack.c.h.b16 %v1308
        %v6189 = vunpack.c.l.b16 %v1309
        %v6190 = vunpack.c.h.b16 %v1309
        %v6191 = vunpack.c.l.b16 %v1310
        %v6192 = vunpack.c.h.b16 %v1310
        %v6193 = vunpack.c.l.b16 %v1311
        %v6194 = vunpack.c.h.b16 %v1311
        %v6195 = vunpack.c.l.b16 %v1312
        %v6196 = vunpack.c.h.b16 %v1312
        %v6197 = vunpack.c.l.b16 %v1313
        %v6198 = vunpack.c.h.b16 %v1313
        %v6199 = vunpack.c.l.b16 %v1314
        %v6200 = vunpack.c.h.b16 %v1314
        %v6201 = vunpack.c.l.b16 %v1315
        %v6202 = vunpack.c.h.b16 %v1315
        %v6203 = vunpack.c.l.b16 %v1316
        %v6204 = vunpack.c.h.b16 %v1316
        %v6205 = vunpack.c.l.b16 %v1317
        %v6206 = vunpack.c.h.b16 %v1317
        %v6207 = vunpack.c.l.b16 %v1318
        %v6208 = vunpack.c.h.b16 %v1318
        %v6209 = vunpack.c.l.b16 %v1319
        %v6210 = vunpack.c.h.b16 %v1319
        %v6211 = vunpack.c.l.b16 %v1320
        %v6212 = vunpack.c.h.b16 %v1320
        %v6213 = vunpack.c.l.b16 %v1321
        %v6214 = vunpack.c.h.b16 %v1321
        %v6215 = vunpack.c.l.b16 %v1322
        %v6216 = vunpack.c.h.b16 %v1322
        %v6217 = vunpack.c.l.b16 %v1323
        %v6218 = vunpack.c.h.b16 %v1323
        %v6219 = vunpack.c.l.b16 %v1324
        %v6220 = vunpack.c.h.b16 %v1324
        %v6221 = vunpack.c.l.b16 %v1325
        %v6222 = vunpack.c.h.b16 %v1325
        %v6223 = vunpack.c.l.b16 %v1326
        %v6224 = vunpack.c.h.b16 %v1326
        %v6225 = vunpack.c.l.b16 %v1327
        %v6226 = vunpack.c.h.b16 %v1327
        %v6227 = vpack.c.b16 %v5207, %v5203
        %v6228 = vpack.c.b16 %v5208, %v5204
        %v6229 = vpack.c.b16 %v5209, %v5205
        %v6230 = vpack.c.b16 %v5210, %v5206
        %v6231 = vpack.c.b16 %v5215, %v5211
        %v6232 = vpack.c.b16 %v5216, %v5212
        %v6233 = vpack.c.b16 %v5217, %v5213
        %v6234 = vpack.c.b16 %v5218, %v5214
        %v6235 = vpack.c.b16 %v5223, %v5219
        %v6236 = vpack.c.b16 %v5224, %v5220
        %v6237 = vpack.c.b16 %v5225, %v5221
        %v6238 = vpack.c.b16 %v5226, %v5222
        %v6239 = vpack.c.b16 %v5231, %v5227
        %v6240 = vpack.c.b16 %v5232, %v5228
        %v6241 = vpack.c.b16 %v5233, %v5229
        %v6242 = vpack.c.b16 %v5234, %v5230
        %v6243 = vpack.c.b16 %v5239, %v5235
        %v6244 = vpack.c.b16 %v5240, %v5236
        %v6245 = vpack.c.b16 %v5241, %v5237
        %v6246 = vpack.c.b16 %v5242, %v5238
        %v6247 = vpack.c.b16 %v5247, %v5243
        %v6248 = vpack.c.b16 %v5248, %v5244
        %v6249 = vpack.c.b16 %v5249, %v5245
        %v6250 = vpack.c.b16 %v5250, %v5246
        %v6251 = vpack.c.b16 %v5255, %v5251
        %v6252 = vpack.c.b16 %v5256, %v5252
        %v6253 = vpack.c.b16 %v5257, %v5253
        %v6254 = vpack.c.b16 %v5258, %v5254
        %v6255 = vpack.c.b16 %v5263, %v5259
        %v6256 = vpack.c.b16 %v5264, %v5260
        %v6257 = vpack.c.b16 %v5265, %v5261
        %v6258 = vpack.c.b16 %v5266, %v5262
        %v6259 = vpack.c.b16 %v5271, %v5267
        %v6260 = vpack.c.b16 %v5272, %v5268
        %v6261 = vpack.c.b16 %v5273, %v5269
        %v6262 = vpack.c.b16 %v5274, %v5270
        %v6263 = vpack.c.b16 %v5279, %v5275
        %v6264 = vpack.c.b16 %v5280, %v5276
        %v6265 = vpack.c.b16 %v5281, %v5277
        %v6266 = vpack.c.b16 %v5282, %v5278
        %v6267 = vpack.c.b16 %v5287, %v5283
        %v6268 = vpack.c.b16 %v5288, %v5284
        %v6269 = vpack.c.b16 %v5289, %v5285
        %v6270 = vpack.c.b16 %v5290, %v5286
        %v6271 = vpack.c.b16 %v5295, %v5291
        %v6272 = vpack.c.b16 %v5296, %v5292
        %v6273 = vpack.c.b16 %v5297, %v5293
        %v6274 = vpack.c.b16 %v5298, %v5294
        %v6275 = vpack.c.b16 %v5303, %v5299
        %v6276 = vpack.c.b16 %v5304, %v5300
        %v6277 = vpack.c.b16 %v5305, %v5301
        %v6278 = vpack.c.b16 %v5306, %v5302
        %v6279 = vpack.c.b16 %v5311, %v5307
        %v6280 = vpack.c.b16 %v5312, %v5308
        %v6281 = vpack.c.b16 %v5313, %v5309
        %v6282 = vpack.c.b16 %v5314, %v5310
        %v6283 = vpack.c.b16 %v5319, %v5315
        %v6284 = vpack.c.b16 %v5320, %v5316
        %v6285 = vpack.c.b16 %v5321, %v5317
        %v6286 = vpack.c.b16 %v5322, %v5318
        %v6287 = vpack.c.b16 %v5327, %v5323
        %v6288 = vpack.c.b16 %v5328, %v5324
        %v6289 = vpack.c.b16 %v5329, %v5325
        %v6290 = vpack.c.b16 %v5330, %v5326
        %v6291 = vpack.c.b16 %v5335, %v5331
        %v6292 = vpack.c.b16 %v5336, %v5332
        %v6293 = vpack.c.b16 %v5337, %v5333
        %v6294 = vpack.c.b16 %v5338, %v5334
        %v6295 = vpack.c.b16 %v5343, %v5339
        %v6296 = vpack.c.b16 %v5344, %v5340
        %v6297 = vpack.c.b16 %v5345, %v5341
        %v6298 = vpack.c.b16 %v5346, %v5342
        %v6299 = vpack.c.b16 %v5351, %v5347
        %v6300 = vpack.c.b16 %v5352, %v5348
        %v6301 = vpack.c.b16 %v5353, %v5349
        %v6302 = vpack.c.b16 %v5354, %v5350
        %v6303 = vpack.c.b16 %v5359, %v5355
        %v6304 = vpack.c.b16 %v5360, %v5356
        %v6305 = vpack.c.b16 %v5361, %v5357
        %v6306 = vpack.c.b16 %v5362, %v5358
        %v6307 = vpack.c.b16 %v5367, %v5363
        %v6308 = vpack.c.b16 %v5368, %v5364
        %v6309 = vpack.c.b16 %v5369, %v5365
        %v6310 = vpack.c.b16 %v5370, %v5366
        %v6311 = vpack.c.b16 %v5375, %v5371
        %v6312 = vpack.c.b16 %v5376, %v5372
        %v6313 = vpack.c.b16 %v5377, %v5373
        %v6314 = vpack.c.b16 %v5378, %v5374
        %v6315 = vpack.c.b16 %v5383, %v5379
        %v6316 = vpack.c.b16 %v5384, %v5380
        %v6317 = vpack.c.b16 %v5385, %v5381
        %v6318 = vpack.c.b16 %v5386, %v5382
        %v6319 = vpack.c.b16 %v5391, %v5387
        %v6320 = vpack.c.b16 %v5392, %v5388
        %v6321 = vpack.c.b16 %v5393, %v5389
        %v6322 = vpack.c.b16 %v5394, %v5390
        %v6323 = vpack.c.b16 %v5399, %v5395
        %v6324 = vpack.c.b16 %v5400, %v5396
        %v6325 = vpack.c.b16 %v5401, %v5397
        %v6326 = vpack.c.b16 %v5402, %v5398
        %v6327 = vpack.c.b16 %v5407, %v5403
        %v6328 = vpack.c.b16 %v5408, %v5404
        %v6329 = vpack.c.b16 %v5409, %v5405
        %v6330 = vpack.c.b16 %v5410, %v5406
        %v6331 = vpack.c.b16 %v5415, %v5411
        %v6332 = vpack.c.b16 %v5416, %v5412
        %v6333 = vpack.c.b16 %v5417, %v5413
        %v6334 = vpack.c.b16 %v5418, %v5414
        %v6335 = vpack.c.b16 %v5423, %v5419
        %v6336 = vpack.c.b16 %v5424, %v5420
        %v6337 = vpack.c.b16 %v5425, %v5421
        %v6338 = vpack.c.b16 %v5426, %v5422
        %v6339 = vpack.c.b16 %v5431, %v5427
        %v6340 = vpack.c.b16 %v5432, %v5428
        %v6341 = vpack.c.b16 %v5433, %v5429
        %v6342 = vpack.c.b16 %v5434, %v5430
        %v6343 = vpack.c.b16 %v5439, %v5435
        %v6344 = vpack.c.b16 %v5440, %v5436
        %v6345 = vpack.c.b16 %v5441, %v5437
        %v6346 = vpack.c.b16 %v5442, %v5438
        %v6347 = vpack.c.b16 %v5447, %v5443
        %v6348 = vpack.c.b16 %v5448, %v5444
        %v6349 = vpack.c.b16 %v5449, %v5445
        %v6350 = vpack.c.b16 %v5450, %v5446
        %v6351 = vpack.c.b16 %v5455, %v5451
        %v6352 = vpack.c.b16 %v5456, %v5452
        %v6353 = vpack.c.b16 %v5457, %v5453
        %v6354 = vpack.c.b16 %v5458, %v5454
        %v6355 = vpack.c.b16 %v5463, %v5459
        %v6356 = vpack.c.b16 %v5464, %v5460
        %v6357 = vpack.c.b16 %v5465, %v5461
        %v6358 = vpack.c.b16 %v5466, %v5462
        %v6359 = vpack.c.b16 %v5471, %v5467
        %v6360 = vpack.c.b16 %v5472, %v5468
        %v6361 = vpack.c.b16 %v5473, %v5469
        %v6362 = vpack.c.b16 %v5474, %v5470
        %v6363 = vpack.c.b16 %v5479, %v5475
        %v6364 = vpack.c.b16 %v5480, %v5476
        %v6365 = vpack.c.b16 %v5481, %v5477
        %v6366 = vpack.c.b16 %v5482, %v5478
        %v6367 = vpack.c.b16 %v5487, %v5483
        %v6368 = vpack.c.b16 %v5488, %v5484
        %v6369 = vpack.c.b16 %v5489, %v5485
        %v6370 = vpack.c.b16 %v5490, %v5486
        %v6371 = vpack.c.b16 %v5495, %v5491
        %v6372 = vpack.c.b16 %v5496, %v5492
        %v6373 = vpack.c.b16 %v5497, %v5493
        %v6374 = vpack.c.b16 %v5498, %v5494
        %v6375 = vpack.c.b16 %v5503, %v5499
        %v6376 = vpack.c.b16 %v5504, %v5500
        %v6377 = vpack.c.b16 %v5505, %v5501
        %v6378 = vpack.c.b16 %v5506, %v5502
        %v6379 = vpack.c.b16 %v5511, %v5507
        %v6380 = vpack.c.b16 %v5512, %v5508
        %v6381 = vpack.c.b16 %v5513, %v5509
        %v6382 = vpack.c.b16 %v5514, %v5510
        %v6383 = vpack.c.b16 %v5519, %v5515
        %v6384 = vpack.c.b16 %v5520, %v5516
        %v6385 = vpack.c.b16 %v5521, %v5517
        %v6386 = vpack.c.b16 %v5522, %v5518
        %v6387 = vpack.c.b16 %v5527, %v5523
        %v6388 = vpack.c.b16 %v5528, %v5524
        %v6389 = vpack.c.b16 %v5529, %v5525
        %v6390 = vpack.c.b16 %v5530, %v5526
        %v6391 = vpack.c.b16 %v5535, %v5531
        %v6392 = vpack.c.b16 %v5536, %v5532
        %v6393 = vpack.c.b16 %v5537, %v5533
        %v6394 = vpack.c.b16 %v5538, %v5534
        %v6395 = vpack.c.b16 %v5543, %v5539
        %v6396 = vpack.c.b16 %v5544, %v5540
        %v6397 = vpack.c.b16 %v5545, %v5541
        %v6398 = vpack.c.b16 %v5546, %v5542
        %v6399 = vpack.c.b16 %v5551, %v5547
        %v6400 = vpack.c.b16 %v5552, %v5548
        %v6401 = vpack.c.b16 %v5553, %v5549
        %v6402 = vpack.c.b16 %v5554, %v5550
        %v6403 = vpack.c.b16 %v5559, %v5555
        %v6404 = vpack.c.b16 %v5560, %v5556
        %v6405 = vpack.c.b16 %v5561, %v5557
        %v6406 = vpack.c.b16 %v5562, %v5558
        %v6407 = vpack.c.b16 %v5567, %v5563
        %v6408 = vpack.c.b16 %v5568, %v5564
        %v6409 = vpack.c.b16 %v5569, %v5565
        %v6410 = vpack.c.b16 %v5570, %v5566
        %v6411 = vpack.c.b16 %v5575, %v5571
        %v6412 = vpack.c.b16 %v5576, %v5572
        %v6413 = vpack.c.b16 %v5577, %v5573
        %v6414 = vpack.c.b16 %v5578, %v5574
        %v6415 = vpack.c.b16 %v5583, %v5579
        %v6416 = vpack.c.b16 %v5584, %v5580
        %v6417 = vpack.c.b16 %v5585, %v5581
        %v6418 = vpack.c.b16 %v5586, %v5582
        %v6419 = vpack.c.b16 %v5591, %v5587
        %v6420 = vpack.c.b16 %v5592, %v5588
        %v6421 = vpack.c.b16 %v5593, %v5589
        %v6422 = vpack.c.b16 %v5594, %v5590
        %v6423 = vpack.c.b16 %v5599, %v5595
        %v6424 = vpack.c.b16 %v5600, %v5596
        %v6425 = vpack.c.b16 %v5601, %v5597
        %v6426 = vpack.c.b16 %v5602, %v5598
        %v6427 = vpack.c.b16 %v5607, %v5603
        %v6428 = vpack.c.b16 %v5608, %v5604
        %v6429 = vpack.c.b16 %v5609, %v5605
        %v6430 = vpack.c.b16 %v5610, %v5606
        %v6431 = vpack.c.b16 %v5615, %v5611
        %v6432 = vpack.c.b16 %v5616, %v5612
        %v6433 = vpack.c.b16 %v5617, %v5613
        %v6434 = vpack.c.b16 %v5618, %v5614
        %v6435 = vpack.c.b16 %v5623, %v5619
        %v6436 = vpack.c.b16 %v5624, %v5620
        %v6437 = vpack.c.b16 %v5625, %v5621
        %v6438 = vpack.c.b16 %v5626, %v5622
        %v6439 = vpack.c.b16 %v5631, %v5627
        %v6440 = vpack.c.b16 %v5632, %v5628
        %v6441 = vpack.c.b16 %v5633, %v5629
        %v6442 = vpack.c.b16 %v5634, %v5630
        %v6443 = vpack.c.b16 %v5639, %v5635
        %v6444 = vpack.c.b16 %v5640, %v5636
        %v6445 = vpack.c.b16 %v5641, %v5637
        %v6446 = vpack.c.b16 %v5642, %v5638
        %v6447 = vpack.c.b16 %v5647, %v5643
        %v6448 = vpack.c.b16 %v5648, %v5644
        %v6449 = vpack.c.b16 %v5649, %v5645
        %v6450 = vpack.c.b16 %v5650, %v5646
        %v6451 = vpack.c.b16 %v5655, %v5651
        %v6452 = vpack.c.b16 %v5656, %v5652
        %v6453 = vpack.c.b16 %v5657, %v5653
        %v6454 = vpack.c.b16 %v5658, %v5654
        %v6455 = vpack.c.b16 %v5663, %v5659
        %v6456 = vpack.c.b16 %v5664, %v5660
        %v6457 = vpack.c.b16 %v5665, %v5661
        %v6458 = vpack.c.b16 %v5666, %v5662
        %v6459 = vpack.c.b16 %v5671, %v5667
        %v6460 = vpack.c.b16 %v5672, %v5668
        %v6461 = vpack.c.b16 %v5673, %v5669
        %v6462 = vpack.c.b16 %v5674, %v5670
        %v6463 = vpack.c.b16 %v5679, %v5675
        %v6464 = vpack.c.b16 %v5680, %v5676
        %v6465 = vpack.c.b16 %v5681, %v5677
        %v6466 = vpack.c.b16 %v5682, %v5678
        %v6467 = vpack.c.b16 %v5687, %v5683
        %v6468 = vpack.c.b16 %v5688, %v5684
        %v6469 = vpack.c.b16 %v5689, %v5685
        %v6470 = vpack.c.b16 %v5690, %v5686
        %v6471 = vpack.c.b16 %v5695, %v5691
        %v6472 = vpack.c.b16 %v5696, %v5692
        %v6473 = vpack.c.b16 %v5697, %v5693
        %v6474 = vpack.c.b16 %v5698, %v5694
        %v6475 = vpack.c.b16 %v5703, %v5699
        %v6476 = vpack.c.b16 %v5704, %v5700
        %v6477 = vpack.c.b16 %v5705, %v5701
        %v6478 = vpack.c.b16 %v5706, %v5702
        %v6479 = vpack.c.b16 %v5711, %v5707
        %v6480 = vpack.c.b16 %v5712, %v5708
        %v6481 = vpack.c.b16 %v5713, %v5709
        %v6482 = vpack.c.b16 %v5714, %v5710
        %v6483 = vpack.c.b16 %v5719, %v5715
        %v6484 = vpack.c.b16 %v5720, %v5716
        %v6485 = vpack.c.b16 %v5721, %v5717
        %v6486 = vpack.c.b16 %v5722, %v5718
        %v6487 = vpack.c.b16 %v5727, %v5723
        %v6488 = vpack.c.b16 %v5728, %v5724
        %v6489 = vpack.c.b16 %v5729, %v5725
        %v6490 = vpack.c.b16 %v5730, %v5726
        %v6491 = vpack.c.b16 %v5735, %v5731
        %v6492 = vpack.c.b16 %v5736, %v5732
        %v6493 = vpack.c.b16 %v5737, %v5733
        %v6494 = vpack.c.b16 %v5738, %v5734
        %v6495 = vpack.c.b16 %v5743, %v5739
        %v6496 = vpack.c.b16 %v5744, %v5740
        %v6497 = vpack.c.b16 %v5745, %v5741
        %v6498 = vpack.c.b16 %v5746, %v5742
        %v6499 = vpack.c.b16 %v5751, %v5747
        %v6500 = vpack.c.b16 %v5752, %v5748
        %v6501 = vpack.c.b16 %v5753, %v5749
        %v6502 = vpack.c.b16 %v5754, %v5750
        %v6503 = vpack.c.b16 %v5759, %v5755
        %v6504 = vpack.c.b16 %v5760, %v5756
        %v6505 = vpack.c.b16 %v5761, %v5757
        %v6506 = vpack.c.b16 %v5762, %v5758
        %v6507 = vpack.c.b16 %v5767, %v5763
        %v6508 = vpack.c.b16 %v5768, %v5764
        %v6509 = vpack.c.b16 %v5769, %v5765
        %v6510 = vpack.c.b16 %v5770, %v5766
        %v6511 = vpack.c.b16 %v5775, %v5771
        %v6512 = vpack.c.b16 %v5776, %v5772
        %v6513 = vpack.c.b16 %v5777, %v5773
        %v6514 = vpack.c.b16 %v5778, %v5774
        %v6515 = vpack.c.b16 %v5783, %v5779
        %v6516 = vpack.c.b16 %v5784, %v5780
        %v6517 = vpack.c.b16 %v5785, %v5781
        %v6518 = vpack.c.b16 %v5786, %v5782
        %v6519 = vpack.c.b16 %v5791, %v5787
        %v6520 = vpack.c.b16 %v5792, %v5788
        %v6521 = vpack.c.b16 %v5793, %v5789
        %v6522 = vpack.c.b16 %v5794, %v5790
        %v6523 = vpack.c.b16 %v5799, %v5795
        %v6524 = vpack.c.b16 %v5800, %v5796
        %v6525 = vpack.c.b16 %v5801, %v5797
        %v6526 = vpack.c.b16 %v5802, %v5798
        %v6527 = vpack.c.b16 %v5807, %v5803
        %v6528 = vpack.c.b16 %v5808, %v5804
        %v6529 = vpack.c.b16 %v5809, %v5805
        %v6530 = vpack.c.b16 %v5810, %v5806
        %v6531 = vpack.c.b16 %v5815, %v5811
        %v6532 = vpack.c.b16 %v5816, %v5812
        %v6533 = vpack.c.b16 %v5817, %v5813
        %v6534 = vpack.c.b16 %v5818, %v5814
        %v6535 = vpack.c.b16 %v5823, %v5819
        %v6536 = vpack.c.b16 %v5824, %v5820
        %v6537 = vpack.c.b16 %v5825, %v5821
        %v6538 = vpack.c.b16 %v5826, %v5822
        %v6539 = vpack.c.b16 %v5831, %v5827
        %v6540 = vpack.c.b16 %v5832, %v5828
        %v6541 = vpack.c.b16 %v5833, %v5829
        %v6542 = vpack.c.b16 %v5834, %v5830
        %v6543 = vpack.c.b16 %v5839, %v5835
        %v6544 = vpack.c.b16 %v5840, %v5836
        %v6545 = vpack.c.b16 %v5841, %v5837
        %v6546 = vpack.c.b16 %v5842, %v5838
        %v6547 = vpack.c.b16 %v5847, %v5843
        %v6548 = vpack.c.b16 %v5848, %v5844
        %v6549 = vpack.c.b16 %v5849, %v5845
        %v6550 = vpack.c.b16 %v5850, %v5846
        %v6551 = vpack.c.b16 %v5855, %v5851
        %v6552 = vpack.c.b16 %v5856, %v5852
        %v6553 = vpack.c.b16 %v5857, %v5853
        %v6554 = vpack.c.b16 %v5858, %v5854
        %v6555 = vpack.c.b16 %v5863, %v5859
        %v6556 = vpack.c.b16 %v5864, %v5860
        %v6557 = vpack.c.b16 %v5865, %v5861
        %v6558 = vpack.c.b16 %v5866, %v5862
        %v6559 = vpack.c.b16 %v5871, %v5867
        %v6560 = vpack.c.b16 %v5872, %v5868
        %v6561 = vpack.c.b16 %v5873, %v5869
        %v6562 = vpack.c.b16 %v5874, %v5870
        %v6563 = vpack.c.b16 %v5879, %v5875
        %v6564 = vpack.c.b16 %v5880, %v5876
        %v6565 = vpack.c.b16 %v5881, %v5877
        %v6566 = vpack.c.b16 %v5882, %v5878
        %v6567 = vpack.c.b16 %v5887, %v5883
        %v6568 = vpack.c.b16 %v5888, %v5884
        %v6569 = vpack.c.b16 %v5889, %v5885
        %v6570 = vpack.c.b16 %v5890, %v5886
        %v6571 = vpack.c.b16 %v5895, %v5891
        %v6572 = vpack.c.b16 %v5896, %v5892
        %v6573 = vpack.c.b16 %v5897, %v5893
        %v6574 = vpack.c.b16 %v5898, %v5894
        %v6575 = vpack.c.b16 %v5903, %v5899
        %v6576 = vpack.c.b16 %v5904, %v5900
        %v6577 = vpack.c.b16 %v5905, %v5901
        %v6578 = vpack.c.b16 %v5906, %v5902
        %v6579 = vpack.c.b16 %v5911, %v5907
        %v6580 = vpack.c.b16 %v5912, %v5908
        %v6581 = vpack.c.b16 %v5913, %v5909
        %v6582 = vpack.c.b16 %v5914, %v5910
        %v6583 = vpack.c.b16 %v5919, %v5915
        %v6584 = vpack.c.b16 %v5920, %v5916
        %v6585 = vpack.c.b16 %v5921, %v5917
        %v6586 = vpack.c.b16 %v5922, %v5918
        %v6587 = vpack.c.b16 %v5927, %v5923
        %v6588 = vpack.c.b16 %v5928, %v5924
        %v6589 = vpack.c.b16 %v5929, %v5925
        %v6590 = vpack.c.b16 %v5930, %v5926
        %v6591 = vpack.c.b16 %v5935, %v5931
        %v6592 = vpack.c.b16 %v5936, %v5932
        %v6593 = vpack.c.b16 %v5937, %v5933
        %v6594 = vpack.c.b16 %v5938, %v5934
        %v6595 = vpack.c.b16 %v5943, %v5939
        %v6596 = vpack.c.b16 %v5944, %v5940
        %v6597 = vpack.c.b16 %v5945, %v5941
        %v6598 = vpack.c.b16 %v5946, %v5942
        %v6599 = vpack.c.b16 %v5951, %v5947
        %v6600 = vpack.c.b16 %v5952, %v5948
        %v6601 = vpack.c.b16 %v5953, %v5949
        %v6602 = vpack.c.b16 %v5954, %v5950
        %v6603 = vpack.c.b16 %v5959, %v5955
        %v6604 = vpack.c.b16 %v5960, %v5956
        %v6605 = vpack.c.b16 %v5961, %v5957
        %v6606 = vpack.c.b16 %v5962, %v5958
        %v6607 = vpack.c.b16 %v5967, %v5963
        %v6608 = vpack.c.b16 %v5968, %v5964
        %v6609 = vpack.c.b16 %v5969, %v5965
        %v6610 = vpack.c.b16 %v5970, %v5966
        %v6611 = vpack.c.b16 %v5975, %v5971
        %v6612 = vpack.c.b16 %v5976, %v5972
        %v6613 = vpack.c.b16 %v5977, %v5973
        %v6614 = vpack.c.b16 %v5978, %v5974
        %v6615 = vpack.c.b16 %v5983, %v5979
        %v6616 = vpack.c.b16 %v5984, %v5980
        %v6617 = vpack.c.b16 %v5985, %v5981
        %v6618 = vpack.c.b16 %v5986, %v5982
        %v6619 = vpack.c.b16 %v5991, %v5987
        %v6620 = vpack.c.b16 %v5992, %v5988
        %v6621 = vpack.c.b16 %v5993, %v5989
        %v6622 = vpack.c.b16 %v5994, %v5990
        %v6623 = vpack.c.b16 %v5999, %v5995
        %v6624 = vpack.c.b16 %v6000, %v5996
        %v6625 = vpack.c.b16 %v6001, %v5997
        %v6626 = vpack.c.b16 %v6002, %v5998
        %v6627 = vpack.c.b16 %v6007, %v6003
        %v6628 = vpack.c.b16 %v6008, %v6004
        %v6629 = vpack.c.b16 %v6009, %v6005
        %v6630 = vpack.c.b16 %v6010, %v6006
        %v6631 = vpack.c.b16 %v6015, %v6011
        %v6632 = vpack.c.b16 %v6016, %v6012
        %v6633 = vpack.c.b16 %v6017, %v6013
        %v6634 = vpack.c.b16 %v6018, %v6014
        %v6635 = vpack.c.b16 %v6023, %v6019
        %v6636 = vpack.c.b16 %v6024, %v6020
        %v6637 = vpack.c.b16 %v6025, %v6021
        %v6638 = vpack.c.b16 %v6026, %v6022
        %v6639 = vpack.c.b16 %v6031, %v6027
        %v6640 = vpack.c.b16 %v6032, %v6028
        %v6641 = vpack.c.b16 %v6033, %v6029
        %v6642 = vpack.c.b16 %v6034, %v6030
        %v6643 = vpack.c.b16 %v6039, %v6035
        %v6644 = vpack.c.b16 %v6040, %v6036
        %v6645 = vpack.c.b16 %v6041, %v6037
        %v6646 = vpack.c.b16 %v6042, %v6038
        %v6647 = vpack.c.b16 %v6047, %v6043
        %v6648 = vpack.c.b16 %v6048, %v6044
        %v6649 = vpack.c.b16 %v6049, %v6045
        %v6650 = vpack.c.b16 %v6050, %v6046
        %v6651 = vpack.c.b16 %v6055, %v6051
        %v6652 = vpack.c.b16 %v6056, %v6052
        %v6653 = vpack.c.b16 %v6057, %v6053
        %v6654 = vpack.c.b16 %v6058, %v6054
        %v6655 = vpack.c.b16 %v6063, %v6059
        %v6656 = vpack.c.b16 %v6064, %v6060
        %v6657 = vpack.c.b16 %v6065, %v6061
        %v6658 = vpack.c.b16 %v6066, %v6062
        %v6659 = vpack.c.b16 %v6071, %v6067
        %v6660 = vpack.c.b16 %v6072, %v6068
        %v6661 = vpack.c.b16 %v6073, %v6069
        %v6662 = vpack.c.b16 %v6074, %v6070
        %v6663 = vpack.c.b16 %v6079, %v6075
        %v6664 = vpack.c.b16 %v6080, %v6076
        %v6665 = vpack.c.b16 %v6081, %v6077
        %v6666 = vpack.c.b16 %v6082, %v6078
        %v6667 = vpack.c.b16 %v6087, %v6083
        %v6668 = vpack.c.b16 %v6088, %v6084
        %v6669 = vpack.c.b16 %v6089, %v6085
        %v6670 = vpack.c.b16 %v6090, %v6086
        %v6671 = vpack.c.b16 %v6095, %v6091
        %v6672 = vpack.c.b16 %v6096, %v6092
        %v6673 = vpack.c.b16 %v6097, %v6093
        %v6674 = vpack.c.b16 %v6098, %v6094
        %v6675 = vpack.c.b16 %v6103, %v6099
        %v6676 = vpack.c.b16 %v6104, %v6100
        %v6677 = vpack.c.b16 %v6105, %v6101
        %v6678 = vpack.c.b16 %v6106, %v6102
        %v6679 = vpack.c.b16 %v6111, %v6107
        %v6680 = vpack.c.b16 %v6112, %v6108
        %v6681 = vpack.c.b16 %v6113, %v6109
        %v6682 = vpack.c.b16 %v6114, %v6110
        %v6683 = vpack.c.b16 %v6119, %v6115
        %v6684 = vpack.c.b16 %v6120, %v6116
        %v6685 = vpack.c.b16 %v6121, %v6117
        %v6686 = vpack.c.b16 %v6122, %v6118
        %v6687 = vpack.c.b16 %v6127, %v6123
        %v6688 = vpack.c.b16 %v6128, %v6124
        %v6689 = vpack.c.b16 %v6129, %v6125
        %v6690 = vpack.c.b16 %v6130, %v6126
        %v6691 = vpack.c.b16 %v6135, %v6131
        %v6692 = vpack.c.b16 %v6136, %v6132
        %v6693 = vpack.c.b16 %v6137, %v6133
        %v6694 = vpack.c.b16 %v6138, %v6134
        %v6695 = vpack.c.b16 %v6143, %v6139
        %v6696 = vpack.c.b16 %v6144, %v6140
        %v6697 = vpack.c.b16 %v6145, %v6141
        %v6698 = vpack.c.b16 %v6146, %v6142
        %v6699 = vpack.c.b16 %v6151, %v6147
        %v6700 = vpack.c.b16 %v6152, %v6148
        %v6701 = vpack.c.b16 %v6153, %v6149
        %v6702 = vpack.c.b16 %v6154, %v6150
        %v6703 = vpack.c.b16 %v6159, %v6155
        %v6704 = vpack.c.b16 %v6160, %v6156
        %v6705 = vpack.c.b16 %v6161, %v6157
        %v6706 = vpack.c.b16 %v6162, %v6158
        %v6707 = vpack.c.b16 %v6167, %v6163
        %v6708 = vpack.c.b16 %v6168, %v6164
        %v6709 = vpack.c.b16 %v6169, %v6165
        %v6710 = vpack.c.b16 %v6170, %v6166
        %v6711 = vpack.c.b16 %v6175, %v6171
        %v6712 = vpack.c.b16 %v6176, %v6172
        %v6713 = vpack.c.b16 %v6177, %v6173
        %v6714 = vpack.c.b16 %v6178, %v6174
        %v6715 = vpack.c.b16 %v6183, %v6179
        %v6716 = vpack.c.b16 %v6184, %v6180
        %v6717 = vpack.c.b16 %v6185, %v6181
        %v6718 = vpack.c.b16 %v6186, %v6182
        %v6719 = vpack.c.b16 %v6191, %v6187
        %v6720 = vpack.c.b16 %v6192, %v6188
        %v6721 = vpack.c.b16 %v6193, %v6189
        %v6722 = vpack.c.b16 %v6194, %v6190
        %v6723 = vpack.c.b16 %v6199, %v6195
        %v6724 = vpack.c.b16 %v6200, %v6196
        %v6725 = vpack.c.b16 %v6201, %v6197
        %v6726 = vpack.c.b16 %v6202, %v6198
        %v6727 = vpack.c.b16 %v6207, %v6203
        %v6728 = vpack.c.b16 %v6208, %v6204
        %v6729 = vpack.c.b16 %v6209, %v6205
        %v6730 = vpack.c.b16 %v6210, %v6206
        %v6731 = vpack.c.b16 %v6215, %v6211
        %v6732 = vpack.c.b16 %v6216, %v6212
        %v6733 = vpack.c.b16 %v6217, %v6213
        %v6734 = vpack.c.b16 %v6218, %v6214
        %v6735 = vpack.c.b16 %v6223, %v6219
        %v6736 = vpack.c.b16 %v6224, %v6220
        %v6737 = vpack.c.b16 %v6225, %v6221
        %v6738 = vpack.c.b16 %v6226, %v6222
        %7251 = vmatprep.subr.bf16.mxu0 %v6228
        %7252 = vmatpush1.bf16.msra.mxu0 %v6227
        %7253 = vmatprep.subr.bf16.mxu0 %v6232
        %7254 = vmatpush1.bf16.msra.mxu0 %v6231
        %7255 = vmatprep.subr.bf16.mxu0 %v6236
        %7256 = vmatpush1.bf16.msra.mxu0 %v6235
        %7257 = vmatprep.subr.bf16.mxu0 %v6240
        %7258 = vmatpush1.bf16.msra.mxu0 %v6239
        %7259 = vmatprep.subr.bf16.mxu0 %v6244
        %7260 = vmatpush1.bf16.msra.mxu0 %v6243
        %7261 = vmatprep.subr.bf16.mxu0 %v6248
        %7262 = vmatpush1.bf16.msra.mxu0 %v6247
        %7263 = vmatprep.subr.bf16.mxu0 %v6252
        %7264 = vmatpush1.bf16.msra.mxu0 %v6251
        %7265 = vmatprep.subr.bf16.mxu0 %v6256
        %7266 = vmatpush1.bf16.msra.mxu0 %v6255
        %7267 = vmatprep.subr.bf16.mxu0 %v6260
        %7268 = vmatpush1.bf16.msra.mxu0 %v6259
        %7269 = vmatprep.subr.bf16.mxu0 %v6264
        %7270 = vmatpush1.bf16.msra.mxu0 %v6263
        %7271 = vmatprep.subr.bf16.mxu0 %v6268
        %7272 = vmatpush1.bf16.msra.mxu0 %v6267
        %7273 = vmatprep.subr.bf16.mxu0 %v6272
        %7274 = vmatpush1.bf16.msra.mxu0 %v6271
        %7275 = vmatprep.subr.bf16.mxu0 %v6276
        %7276 = vmatpush1.bf16.msra.mxu0 %v6275
        %7277 = vmatprep.subr.bf16.mxu0 %v6280
        %7278 = vmatpush1.bf16.msra.mxu0 %v6279
        %7279 = vmatprep.subr.bf16.mxu0 %v6284
        %7280 = vmatpush1.bf16.msra.mxu0 %v6283
        %7281 = vmatprep.subr.bf16.mxu0 %v6288
        %7282 = vmatpush1.bf16.msra.mxu0 %v6287
        %7283 = vmatprep.mubr.bf16.mxu0 %v3083
        %7284 = vmatmul.mubr.bf16.gmra.mrb[0].mxu0 %v3082
        %v7285 = vpop.f32.mrb[0].mxu0
        %v7286 = vadd.f32 0.0, %v7285
        %v7287 = vpop.f32.mrb[0].mxu0
        %v7288 = vadd.f32 0.0, %v7287
        %v7289 = vpop.f32.mrb[0].mxu0
        %v7290 = vadd.f32 0.0, %v7289
        %v7291 = vpop.f32.mrb[0].mxu0
        %v7292 = vadd.f32 0.0, %v7291
        %7293 = vmatprep.mubr.bf16.mxu0 %v3099
        %7294 = vmatmul.mubr.bf16.gmra.mrb[0].mxu0 %v3098
        %v7295 = vpop.f32.mrb[0].mxu0
        %v7296 = vadd.f32 0.0, %v7295
        %v7297 = vpop.f32.mrb[0].mxu0
        %v7298 = vadd.f32 0.0, %v7297
        %v7299 = vpop.f32.mrb[0].mxu0
        %v7300 = vadd.f32 0.0, %v7299
        %v7301 = vpop.f32.mrb[0].mxu0
        %v7302 = vadd.f32 0.0, %v7301
        %7303 = vmatprep.mubr.bf16.mxu0 %v3115
        %7304 = vmatmul.mubr.bf16.gmra.mrb[0].mxu0 %v3114
        %v7305 = vpop.f32.mrb[0].mxu0
        %v7306 = vadd.f32 0.0, %v7305
        %v7307 = vpop.f32.mrb[0].mxu0
        %v7308 = vadd.f32 0.0, %v7307
        %v7309 = vpop.f32.mrb[0].mxu0
        %v7310 = vadd.f32 0.0, %v7309
        %v7311 = vpop.f32.mrb[0].mxu0
        %v7312 = vadd.f32 0.0, %v7311
        %7313 = vmatprep.mubr.bf16.mxu0 %v3131
        %7314 = vmatmul.mubr.bf16.gmra.mrb[0].mxu0 %v3130
        %v7315 = vpop.f32.mrb[0].mxu0
        %v7316 = vadd.f32 0.0, %v7315
        %v7317 = vpop.f32.mrb[0].mxu0
        %v7318 = vadd.f32 0.0, %v7317
        %v7319 = vpop.f32.mrb[0].mxu0
        %v7320 = vpop.f32.mrb[0].mxu0
        %7321 = vdwg.mxu0
        %7322 = vmatprep.subr.bf16.mxu0 %v6292
        %7323 = vmatpush1.bf16.msra.mxu0 %v6291
        %7324 = vmatprep.subr.bf16.mxu0 %v6296
        %7325 = vmatpush1.bf16.msra.mxu0 %v6295
        %7326 = vmatprep.subr.bf16.mxu0 %v6300
        %7327 = vmatpush1.bf16.msra.mxu0 %v6299
        %7328 = vmatprep.subr.bf16.mxu0 %v6304
        %7329 = vmatpush1.bf16.msra.mxu0 %v6303
        %7330 = vmatprep.subr.bf16.mxu0 %v6308
        %7331 = vmatpush1.bf16.msra.mxu0 %v6307
        %7332 = vmatprep.subr.bf16.mxu0 %v6312
        %7333 = vmatpush1.bf16.msra.mxu0 %v6311
        %7334 = vmatprep.subr.bf16.mxu0 %v6316
        %7335 = vmatpush1.bf16.msra.mxu0 %v6315
        %7336 = vmatprep.subr.bf16.mxu0 %v6320
        %7337 = vmatpush1.bf16.msra.mxu0 %v6319
        %7338 = vmatprep.subr.bf16.mxu0 %v6324
        %7339 = vmatpush1.bf16.msra.mxu0 %v6323
        %7340 = vmatprep.subr.bf16.mxu0 %v6328
        %7341 = vmatpush1.bf16.msra.mxu0 %v6327
        %7342 = vmatprep.subr.bf16.mxu0 %v6332
        %7343 = vmatpush1.bf16.msra.mxu0 %v6331
        %7344 = vmatprep.subr.bf16.mxu0 %v6336
        %7345 = vmatpush1.bf16.msra.mxu0 %v6335
        %7346 = vmatprep.subr.bf16.mxu0 %v6340
        %7347 = vmatpush1.bf16.msra.mxu0 %v6339
        %7348 = vmatprep.subr.bf16.mxu0 %v6344
        %7349 = vmatpush1.bf16.msra.mxu0 %v6343
        %7350 = vmatprep.subr.bf16.mxu0 %v6348
        %7351 = vmatpush1.bf16.msra.mxu0 %v6347
        %7352 = vmatprep.subr.bf16.mxu0 %v6352
        %7353 = vmatpush1.bf16.msra.mxu0 %v6351
        %7354 = vmatprep.mubr.bf16.mxu0 %v3085
        %7355 = vmatmul.mubr.bf16.gmra.mrb[0].mxu0 %v3084
        %v7356 = vpop.f32.mrb[0].mxu0
        %v7357 = vadd.f32 %v7286, %v7356
        %v7358 = vpop.f32.mrb[0].mxu0
        %v7359 = vadd.f32 %v7288, %v7358
        %v7360 = vpop.f32.mrb[0].mxu0
        %v7361 = vadd.f32 %v7290, %v7360
        %v7362 = vpop.f32.mrb[0].mxu0
        %v7363 = vadd.f32 %v7292, %v7362
        %7364 = vmatprep.mubr.bf16.mxu0 %v3101
        %7365 = vmatmul.mubr.bf16.gmra.mrb[0].mxu0 %v3100
        %v7366 = vpop.f32.mrb[0].mxu0
        %v7367 = vadd.f32 %v7296, %v7366
        %v7368 = vpop.f32.mrb[0].mxu0
        %v7369 = vadd.f32 %v7298, %v7368
        %v7370 = vpop.f32.mrb[0].mxu0
        %v7371 = vadd.f32 %v7300, %v7370
        %v7372 = vpop.f32.mrb[0].mxu0
        %v7373 = vadd.f32 %v7302, %v7372
        %7374 = vmatprep.mubr.bf16.mxu0 %v3117
        %7375 = vmatmul.mubr.bf16.gmra.mrb[0].mxu0 %v3116
        %v7376 = vpop.f32.mrb[0].mxu0
        %v7377 = vadd.f32 %v7306, %v7376
        %v7378 = vpop.f32.mrb[0].mxu0
        %v7379 = vadd.f32 %v7308, %v7378
        %v7380 = vpop.f32.mrb[0].mxu0
        %v7381 = vadd.f32 %v7310, %v7380
        %v7382 = vpop.f32.mrb[0].mxu0
        %v7383 = vadd.f32 %v7312, %v7382
        %7384 = vmatprep.mubr.bf16.mxu0 %v3133
        %7385 = vmatmul.mubr.bf16.gmra.mrb[0].mxu0 %v3132
        %v7386 = vpop.f32.mrb[0].mxu0
        %v7387 = vadd.f32 %v7316, %v7386
        %v7388 = vpop.f32.mrb[0].mxu0
        %v7389 = vadd.f32 %v7318, %v7388
        %v7390 = vpop.f32.mrb[0].mxu0
        %v7391 = vpop.f32.mrb[0].mxu0
        %7392 = vdwg.mxu0
        %7393 = vmatprep.subr.bf16.mxu0 %v6356
        %7394 = vmatpush1.bf16.msra.mxu0 %v6355
        %7395 = vmatprep.subr.bf16.mxu0 %v6360
        %7396 = vmatpush1.bf16.msra.mxu0 %v6359
        %7397 = vmatprep.subr.bf16.mxu0 %v6364
        %7398 = vmatpush1.bf16.msra.mxu0 %v6363
        %7399 = vmatprep.subr.bf16.mxu0 %v6368
        %7400 = vmatpush1.bf16.msra.mxu0 %v6367
        %7401 = vmatprep.subr.bf16.mxu0 %v6372
        %7402 = vmatpush1.bf16.msra.mxu0 %v6371
        %7403 = vmatprep.subr.bf16.mxu0 %v6376
        %7404 = vmatpush1.bf16.msra.mxu0 %v6375
        %7405 = vmatprep.subr.bf16.mxu0 %v6380
        %7406 = vmatpush1.bf16.msra.mxu0 %v6379
        %7407 = vmatprep.subr.bf16.mxu0 %v6384
        %7408 = vmatpush1.bf16.msra.mxu0 %v6383
        %7409 = vmatprep.subr.bf16.mxu0 %v6388
        %7410 = vmatpush1.bf16.msra.mxu0 %v6387
        %7411 = vmatprep.subr.bf16.mxu0 %v6392
        %7412 = vmatpush1.bf16.msra.mxu0 %v6391
        %7413 = vmatprep.subr.bf16.mxu0 %v6396
        %7414 = vmatpush1.bf16.msra.mxu0 %v6395
        %7415 = vmatprep.subr.bf16.mxu0 %v6400
        %7416 = vmatpush1.bf16.msra.mxu0 %v6399
        %7417 = vmatprep.subr.bf16.mxu0 %v6404
        %7418 = vmatpush1.bf16.msra.mxu0 %v6403
        %7419 = vmatprep.subr.bf16.mxu0 %v6408
        %7420 = vmatpush1.bf16.msra.mxu0 %v6407
        %7421 = vmatprep.subr.bf16.mxu0 %v6412
        %7422 = vmatpush1.bf16.msra.mxu0 %v6411
        %7423 = vmatprep.subr.bf16.mxu0 %v6416
        %7424 = vmatpush1.bf16.msra.mxu0 %v6415
        %7425 = vmatprep.mubr.bf16.mxu0 %v3087
        %7426 = vmatmul.mubr.bf16.gmra.mrb[0].mxu0 %v3086
        %v7427 = vpop.f32.mrb[0].mxu0
        %v7428 = vadd.f32 %v7357, %v7427
        %v7429 = vpop.f32.mrb[0].mxu0
        %v7430 = vadd.f32 %v7359, %v7429
        %v7431 = vpop.f32.mrb[0].mxu0
        %v7432 = vadd.f32 %v7361, %v7431
        %v7433 = vpop.f32.mrb[0].mxu0
        %v7434 = vadd.f32 %v7363, %v7433
        %7435 = vmatprep.mubr.bf16.mxu0 %v3103
        %7436 = vmatmul.mubr.bf16.gmra.mrb[0].mxu0 %v3102
        %v7437 = vpop.f32.mrb[0].mxu0
        %v7438 = vadd.f32 %v7367, %v7437
        %v7439 = vpop.f32.mrb[0].mxu0
        %v7440 = vadd.f32 %v7369, %v7439
        %v7441 = vpop.f32.mrb[0].mxu0
        %v7442 = vadd.f32 %v7371, %v7441
        %v7443 = vpop.f32.mrb[0].mxu0
        %v7444 = vadd.f32 %v7373, %v7443
        %7445 = vmatprep.mubr.bf16.mxu0 %v3119
        %7446 = vmatmul.mubr.bf16.gmra.mrb[0].mxu0 %v3118
        %v7447 = vpop.f32.mrb[0].mxu0
        %v7448 = vadd.f32 %v7377, %v7447
        %v7449 = vpop.f32.mrb[0].mxu0
        %v7450 = vadd.f32 %v7379, %v7449
        %v7451 = vpop.f32.mrb[0].mxu0
        %v7452 = vadd.f32 %v7381, %v7451
        %v7453 = vpop.f32.mrb[0].mxu0
        %v7454 = vadd.f32 %v7383, %v7453
        %7455 = vmatprep.mubr.bf16.mxu0 %v3135
        %7456 = vmatmul.mubr.bf16.gmra.mrb[0].mxu0 %v3134
        %v7457 = vpop.f32.mrb[0].mxu0
        %v7458 = vadd.f32 %v7387, %v7457
        %v7459 = vpop.f32.mrb[0].mxu0
        %v7460 = vadd.f32 %v7389, %v7459
        %v7461 = vpop.f32.mrb[0].mxu0
        %v7462 = vpop.f32.mrb[0].mxu0
        %7463 = vdwg.mxu0
        %7464 = vmatprep.subr.bf16.mxu0 %v6420
        %7465 = vmatpush1.bf16.msra.mxu0 %v6419
        %7466 = vmatprep.subr.bf16.mxu0 %v6424
        %7467 = vmatpush1.bf16.msra.mxu0 %v6423
        %7468 = vmatprep.subr.bf16.mxu0 %v6428
        %7469 = vmatpush1.bf16.msra.mxu0 %v6427
        %7470 = vmatprep.subr.bf16.mxu0 %v6432
        %7471 = vmatpush1.bf16.msra.mxu0 %v6431
        %7472 = vmatprep.subr.bf16.mxu0 %v6436
        %7473 = vmatpush1.bf16.msra.mxu0 %v6435
        %7474 = vmatprep.subr.bf16.mxu0 %v6440
        %7475 = vmatpush1.bf16.msra.mxu0 %v6439
        %7476 = vmatprep.subr.bf16.mxu0 %v6444
        %7477 = vmatpush1.bf16.msra.mxu0 %v6443
        %7478 = vmatprep.subr.bf16.mxu0 %v6448
        %7479 = vmatpush1.bf16.msra.mxu0 %v6447
        %7480 = vmatprep.subr.bf16.mxu0 %v6452
        %7481 = vmatpush1.bf16.msra.mxu0 %v6451
        %7482 = vmatprep.subr.bf16.mxu0 %v6456
        %7483 = vmatpush1.bf16.msra.mxu0 %v6455
        %7484 = vmatprep.subr.bf16.mxu0 %v6460
        %7485 = vmatpush1.bf16.msra.mxu0 %v6459
        %7486 = vmatprep.subr.bf16.mxu0 %v6464
        %7487 = vmatpush1.bf16.msra.mxu0 %v6463
        %7488 = vmatprep.subr.bf16.mxu0 %v6468
        %7489 = vmatpush1.bf16.msra.mxu0 %v6467
        %7490 = vmatprep.subr.bf16.mxu0 %v6472
        %7491 = vmatpush1.bf16.msra.mxu0 %v6471
        %7492 = vmatprep.subr.bf16.mxu0 %v6476
        %7493 = vmatpush1.bf16.msra.mxu0 %v6475
        %7494 = vmatprep.subr.bf16.mxu0 %v6480
        %7495 = vmatpush1.bf16.msra.mxu0 %v6479
        %7496 = vmatprep.mubr.bf16.mxu0 %v3089
        %7497 = vmatmul.mubr.bf16.gmra.mrb[0].mxu0 %v3088
        %v7498 = vpop.f32.mrb[0].mxu0
        %v7499 = vadd.f32 %v7428, %v7498
        %v7500 = vpop.f32.mrb[0].mxu0
        %v7501 = vadd.f32 %v7430, %v7500
        %v7502 = vpop.f32.mrb[0].mxu0
        %v7503 = vadd.f32 %v7432, %v7502
        %v7504 = vpop.f32.mrb[0].mxu0
        %v7505 = vadd.f32 %v7434, %v7504
        %7506 = vmatprep.mubr.bf16.mxu0 %v3105
        %7507 = vmatmul.mubr.bf16.gmra.mrb[0].mxu0 %v3104
        %v7508 = vpop.f32.mrb[0].mxu0
        %v7509 = vadd.f32 %v7438, %v7508
        %v7510 = vpop.f32.mrb[0].mxu0
        %v7511 = vadd.f32 %v7440, %v7510
        %v7512 = vpop.f32.mrb[0].mxu0
        %v7513 = vadd.f32 %v7442, %v7512
        %v7514 = vpop.f32.mrb[0].mxu0
        %v7515 = vadd.f32 %v7444, %v7514
        %7516 = vmatprep.mubr.bf16.mxu0 %v3121
        %7517 = vmatmul.mubr.bf16.gmra.mrb[0].mxu0 %v3120
        %v7518 = vpop.f32.mrb[0].mxu0
        %v7519 = vadd.f32 %v7448, %v7518
        %v7520 = vpop.f32.mrb[0].mxu0
        %v7521 = vadd.f32 %v7450, %v7520
        %v7522 = vpop.f32.mrb[0].mxu0
        %v7523 = vadd.f32 %v7452, %v7522
        %v7524 = vpop.f32.mrb[0].mxu0
        %v7525 = vadd.f32 %v7454, %v7524
        %7526 = vmatprep.mubr.bf16.mxu0 %v3137
        %7527 = vmatmul.mubr.bf16.gmra.mrb[0].mxu0 %v3136
        %v7528 = vpop.f32.mrb[0].mxu0
        %v7529 = vadd.f32 %v7458, %v7528
        %v7530 = vpop.f32.mrb[0].mxu0
        %v7531 = vadd.f32 %v7460, %v7530
        %v7532 = vpop.f32.mrb[0].mxu0
        %v7533 = vpop.f32.mrb[0].mxu0
        %7534 = vdwg.mxu0
        %7535 = vmatprep.subr.bf16.mxu0 %v6484
        %7536 = vmatpush1.bf16.msra.mxu0 %v6483
        %7537 = vmatprep.subr.bf16.mxu0 %v6488
        %7538 = vmatpush1.bf16.msra.mxu0 %v6487
        %7539 = vmatprep.subr.bf16.mxu0 %v6492
        %7540 = vmatpush1.bf16.msra.mxu0 %v6491
        %7541 = vmatprep.subr.bf16.mxu0 %v6496
        %7542 = vmatpush1.bf16.msra.mxu0 %v6495
        %7543 = vmatprep.subr.bf16.mxu0 %v6500
        %7544 = vmatpush1.bf16.msra.mxu0 %v6499
        %7545 = vmatprep.subr.bf16.mxu0 %v6504
        %7546 = vmatpush1.bf16.msra.mxu0 %v6503
        %7547 = vmatprep.subr.bf16.mxu0 %v6508
        %7548 = vmatpush1.bf16.msra.mxu0 %v6507
        %7549 = vmatprep.subr.bf16.mxu0 %v6512
        %7550 = vmatpush1.bf16.msra.mxu0 %v6511
        %7551 = vmatprep.subr.bf16.mxu0 %v6516
        %7552 = vmatpush1.bf16.msra.mxu0 %v6515
        %7553 = vmatprep.subr.bf16.mxu0 %v6520
        %7554 = vmatpush1.bf16.msra.mxu0 %v6519
        %7555 = vmatprep.subr.bf16.mxu0 %v6524
        %7556 = vmatpush1.bf16.msra.mxu0 %v6523
        %7557 = vmatprep.subr.bf16.mxu0 %v6528
        %7558 = vmatpush1.bf16.msra.mxu0 %v6527
        %7559 = vmatprep.subr.bf16.mxu0 %v6532
        %7560 = vmatpush1.bf16.msra.mxu0 %v6531
        %7561 = vmatprep.subr.bf16.mxu0 %v6536
        %7562 = vmatpush1.bf16.msra.mxu0 %v6535
        %7563 = vmatprep.subr.bf16.mxu0 %v6540
        %7564 = vmatpush1.bf16.msra.mxu0 %v6539
        %7565 = vmatprep.subr.bf16.mxu0 %v6544
        %7566 = vmatpush1.bf16.msra.mxu0 %v6543
        %7567 = vmatprep.mubr.bf16.mxu0 %v3091
        %7568 = vmatmul.mubr.bf16.gmra.mrb[0].mxu0 %v3090
        %v7569 = vpop.f32.mrb[0].mxu0
        %v7570 = vadd.f32 %v7499, %v7569
        %v7571 = vpop.f32.mrb[0].mxu0
        %v7572 = vadd.f32 %v7501, %v7571
        %v7573 = vpop.f32.mrb[0].mxu0
        %v7574 = vadd.f32 %v7503, %v7573
        %v7575 = vpop.f32.mrb[0].mxu0
        %v7576 = vadd.f32 %v7505, %v7575
        %7577 = vmatprep.mubr.bf16.mxu0 %v3107
        %7578 = vmatmul.mubr.bf16.gmra.mrb[0].mxu0 %v3106
        %v7579 = vpop.f32.mrb[0].mxu0
        %v7580 = vadd.f32 %v7509, %v7579
        %v7581 = vpop.f32.mrb[0].mxu0
        %v7582 = vadd.f32 %v7511, %v7581
        %v7583 = vpop.f32.mrb[0].mxu0
        %v7584 = vadd.f32 %v7513, %v7583
        %v7585 = vpop.f32.mrb[0].mxu0
        %v7586 = vadd.f32 %v7515, %v7585
        %7587 = vmatprep.mubr.bf16.mxu0 %v3123
        %7588 = vmatmul.mubr.bf16.gmra.mrb[0].mxu0 %v3122
        %v7589 = vpop.f32.mrb[0].mxu0
        %v7590 = vadd.f32 %v7519, %v7589
        %v7591 = vpop.f32.mrb[0].mxu0
        %v7592 = vadd.f32 %v7521, %v7591
        %v7593 = vpop.f32.mrb[0].mxu0
        %v7594 = vadd.f32 %v7523, %v7593
        %v7595 = vpop.f32.mrb[0].mxu0
        %v7596 = vadd.f32 %v7525, %v7595
        %7597 = vmatprep.mubr.bf16.mxu0 %v3139
        %7598 = vmatmul.mubr.bf16.gmra.mrb[0].mxu0 %v3138
        %v7599 = vpop.f32.mrb[0].mxu0
        %v7600 = vadd.f32 %v7529, %v7599
        %v7601 = vpop.f32.mrb[0].mxu0
        %v7602 = vadd.f32 %v7531, %v7601
        %v7603 = vpop.f32.mrb[0].mxu0
        %v7604 = vpop.f32.mrb[0].mxu0
        %7605 = vdwg.mxu0
        %7606 = vmatprep.subr.bf16.mxu0 %v6548
        %7607 = vmatpush1.bf16.msra.mxu0 %v6547
        %7608 = vmatprep.subr.bf16.mxu0 %v6552
        %7609 = vmatpush1.bf16.msra.mxu0 %v6551
        %7610 = vmatprep.subr.bf16.mxu0 %v6556
        %7611 = vmatpush1.bf16.msra.mxu0 %v6555
        %7612 = vmatprep.subr.bf16.mxu0 %v6560
        %7613 = vmatpush1.bf16.msra.mxu0 %v6559
        %7614 = vmatprep.subr.bf16.mxu0 %v6564
        %7615 = vmatpush1.bf16.msra.mxu0 %v6563
        %7616 = vmatprep.subr.bf16.mxu0 %v6568
        %7617 = vmatpush1.bf16.msra.mxu0 %v6567
        %7618 = vmatprep.subr.bf16.mxu0 %v6572
        %7619 = vmatpush1.bf16.msra.mxu0 %v6571
        %7620 = vmatprep.subr.bf16.mxu0 %v6576
        %7621 = vmatpush1.bf16.msra.mxu0 %v6575
        %7622 = vmatprep.subr.bf16.mxu0 %v6580
        %7623 = vmatpush1.bf16.msra.mxu0 %v6579
        %7624 = vmatprep.subr.bf16.mxu0 %v6584
        %7625 = vmatpush1.bf16.msra.mxu0 %v6583
        %7626 = vmatprep.subr.bf16.mxu0 %v6588
        %7627 = vmatpush1.bf16.msra.mxu0 %v6587
        %7628 = vmatprep.subr.bf16.mxu0 %v6592
        %7629 = vmatpush1.bf16.msra.mxu0 %v6591
        %7630 = vmatprep.subr.bf16.mxu0 %v6596
        %7631 = vmatpush1.bf16.msra.mxu0 %v6595
        %7632 = vmatprep.subr.bf16.mxu0 %v6600
        %7633 = vmatpush1.bf16.msra.mxu0 %v6599
        %7634 = vmatprep.subr.bf16.mxu0 %v6604
        %7635 = vmatpush1.bf16.msra.mxu0 %v6603
        %7636 = vmatprep.subr.bf16.mxu0 %v6608
        %7637 = vmatpush1.bf16.msra.mxu0 %v6607
        %7638 = vmatprep.mubr.bf16.mxu0 %v3093
        %7639 = vmatmul.mubr.bf16.gmra.mrb[0].mxu0 %v3092
        %v7640 = vpop.f32.mrb[0].mxu0
        %v7641 = vadd.f32 %v7570, %v7640
        %v7642 = vpop.f32.mrb[0].mxu0
        %v7643 = vadd.f32 %v7572, %v7642
        %v7644 = vpop.f32.mrb[0].mxu0
        %v7645 = vadd.f32 %v7574, %v7644
        %v7646 = vpop.f32.mrb[0].mxu0
        %v7647 = vadd.f32 %v7576, %v7646
        %7648 = vmatprep.mubr.bf16.mxu0 %v3109
        %7649 = vmatmul.mubr.bf16.gmra.mrb[0].mxu0 %v3108
        %v7650 = vpop.f32.mrb[0].mxu0
        %v7651 = vadd.f32 %v7580, %v7650
        %v7652 = vpop.f32.mrb[0].mxu0
        %v7653 = vadd.f32 %v7582, %v7652
        %v7654 = vpop.f32.mrb[0].mxu0
        %v7655 = vadd.f32 %v7584, %v7654
        %v7656 = vpop.f32.mrb[0].mxu0
        %v7657 = vadd.f32 %v7586, %v7656
        %7658 = vmatprep.mubr.bf16.mxu0 %v3125
        %7659 = vmatmul.mubr.bf16.gmra.mrb[0].mxu0 %v3124
        %v7660 = vpop.f32.mrb[0].mxu0
        %v7661 = vadd.f32 %v7590, %v7660
        %v7662 = vpop.f32.mrb[0].mxu0
        %v7663 = vadd.f32 %v7592, %v7662
        %v7664 = vpop.f32.mrb[0].mxu0
        %v7665 = vadd.f32 %v7594, %v7664
        %v7666 = vpop.f32.mrb[0].mxu0
        %v7667 = vadd.f32 %v7596, %v7666
        %7668 = vmatprep.mubr.bf16.mxu0 %v3141
        %7669 = vmatmul.mubr.bf16.gmra.mrb[0].mxu0 %v3140
        %v7670 = vpop.f32.mrb[0].mxu0
        %v7671 = vadd.f32 %v7600, %v7670
        %v7672 = vpop.f32.mrb[0].mxu0
        %v7673 = vadd.f32 %v7602, %v7672
        %v7674 = vpop.f32.mrb[0].mxu0
        %v7675 = vpop.f32.mrb[0].mxu0
        %7676 = vdwg.mxu0
        %7677 = vmatprep.subr.bf16.mxu0 %v6612
        %7678 = vmatpush1.bf16.msra.mxu0 %v6611
        %7679 = vmatprep.subr.bf16.mxu0 %v6616
        %7680 = vmatpush1.bf16.msra.mxu0 %v6615
        %7681 = vmatprep.subr.bf16.mxu0 %v6620
        %7682 = vmatpush1.bf16.msra.mxu0 %v6619
        %7683 = vmatprep.subr.bf16.mxu0 %v6624
        %7684 = vmatpush1.bf16.msra.mxu0 %v6623
        %7685 = vmatprep.subr.bf16.mxu0 %v6628
        %7686 = vmatpush1.bf16.msra.mxu0 %v6627
        %7687 = vmatprep.subr.bf16.mxu0 %v6632
        %7688 = vmatpush1.bf16.msra.mxu0 %v6631
        %7689 = vmatprep.subr.bf16.mxu0 %v6636
        %7690 = vmatpush1.bf16.msra.mxu0 %v6635
        %7691 = vmatprep.subr.bf16.mxu0 %v6640
        %7692 = vmatpush1.bf16.msra.mxu0 %v6639
        %7693 = vmatprep.subr.bf16.mxu0 %v6644
        %7694 = vmatpush1.bf16.msra.mxu0 %v6643
        %7695 = vmatprep.subr.bf16.mxu0 %v6648
        %7696 = vmatpush1.bf16.msra.mxu0 %v6647
        %7697 = vmatprep.subr.bf16.mxu0 %v6652
        %7698 = vmatpush1.bf16.msra.mxu0 %v6651
        %7699 = vmatprep.subr.bf16.mxu0 %v6656
        %7700 = vmatpush1.bf16.msra.mxu0 %v6655
        %7701 = vmatprep.subr.bf16.mxu0 %v6660
        %7702 = vmatpush1.bf16.msra.mxu0 %v6659
        %7703 = vmatprep.subr.bf16.mxu0 %v6664
        %7704 = vmatpush1.bf16.msra.mxu0 %v6663
        %7705 = vmatprep.subr.bf16.mxu0 %v6668
        %7706 = vmatpush1.bf16.msra.mxu0 %v6667
        %7707 = vmatprep.subr.bf16.mxu0 %v6672
        %7708 = vmatpush1.bf16.msra.mxu0 %v6671
        %7709 = vmatprep.mubr.bf16.mxu0 %v3095
        %7710 = vmatmul.mubr.bf16.gmra.mrb[0].mxu0 %v3094
        %v7711 = vpop.f32.mrb[0].mxu0
        %v7712 = vadd.f32 %v7641, %v7711
        %v7713 = vpop.f32.mrb[0].mxu0
        %v7714 = vadd.f32 %v7643, %v7713
        %v7715 = vpop.f32.mrb[0].mxu0
        %v7716 = vadd.f32 %v7645, %v7715
        %v7717 = vpop.f32.mrb[0].mxu0
        %v7718 = vadd.f32 %v7647, %v7717
        %7719 = vmatprep.mubr.bf16.mxu0 %v3111
        %7720 = vmatmul.mubr.bf16.gmra.mrb[0].mxu0 %v3110
        %v7721 = vpop.f32.mrb[0].mxu0
        %v7722 = vadd.f32 %v7651, %v7721
        %v7723 = vpop.f32.mrb[0].mxu0
        %v7724 = vadd.f32 %v7653, %v7723
        %v7725 = vpop.f32.mrb[0].mxu0
        %v7726 = vadd.f32 %v7655, %v7725
        %v7727 = vpop.f32.mrb[0].mxu0
        %v7728 = vadd.f32 %v7657, %v7727
        %7729 = vmatprep.mubr.bf16.mxu0 %v3127
        %7730 = vmatmul.mubr.bf16.gmra.mrb[0].mxu0 %v3126
        %v7731 = vpop.f32.mrb[0].mxu0
        %v7732 = vadd.f32 %v7661, %v7731
        %v7733 = vpop.f32.mrb[0].mxu0
        %v7734 = vadd.f32 %v7663, %v7733
        %v7735 = vpop.f32.mrb[0].mxu0
        %v7736 = vadd.f32 %v7665, %v7735
        %v7737 = vpop.f32.mrb[0].mxu0
        %v7738 = vadd.f32 %v7667, %v7737
        %7739 = vmatprep.mubr.bf16.mxu0 %v3143
        %7740 = vmatmul.mubr.bf16.gmra.mrb[0].mxu0 %v3142
        %v7741 = vpop.f32.mrb[0].mxu0
        %v7742 = vadd.f32 %v7671, %v7741
        %v7743 = vpop.f32.mrb[0].mxu0
        %v7744 = vadd.f32 %v7673, %v7743
        %v7745 = vpop.f32.mrb[0].mxu0
        %v7746 = vpop.f32.mrb[0].mxu0
        %7747 = vdwg.mxu0
        %7748 = vmatprep.subr.bf16.mxu0 %v6676
        %7749 = vmatpush1.bf16.msra.mxu0 %v6675
        %7750 = vmatprep.subr.bf16.mxu0 %v6680
        %7751 = vmatpush1.bf16.msra.mxu0 %v6679
        %7752 = vmatprep.subr.bf16.mxu0 %v6684
        %7753 = vmatpush1.bf16.msra.mxu0 %v6683
        %7754 = vmatprep.subr.bf16.mxu0 %v6688
        %7755 = vmatpush1.bf16.msra.mxu0 %v6687
        %7756 = vmatprep.subr.bf16.mxu0 %v6692
        %7757 = vmatpush1.bf16.msra.mxu0 %v6691
        %7758 = vmatprep.subr.bf16.mxu0 %v6696
        %7759 = vmatpush1.bf16.msra.mxu0 %v6695
        %7760 = vmatprep.subr.bf16.mxu0 %v6700
        %7761 = vmatpush1.bf16.msra.mxu0 %v6699
        %7762 = vmatprep.subr.bf16.mxu0 %v6704
        %7763 = vmatpush1.bf16.msra.mxu0 %v6703
        %7764 = vmatprep.subr.bf16.mxu0 %v6708
        %7765 = vmatpush1.bf16.msra.mxu0 %v6707
        %7766 = vmatprep.subr.bf16.mxu0 %v6712
        %7767 = vmatpush1.bf16.msra.mxu0 %v6711
        %7768 = vmatprep.subr.bf16.mxu0 %v6716
        %7769 = vmatpush1.bf16.msra.mxu0 %v6715
        %7770 = vmatprep.subr.bf16.mxu0 %v6720
        %7771 = vmatpush1.bf16.msra.mxu0 %v6719
        %7772 = vmatprep.subr.bf16.mxu0 %v6724
        %7773 = vmatpush1.bf16.msra.mxu0 %v6723
        %7774 = vmatprep.subr.bf16.mxu0 %v6728
        %7775 = vmatpush1.bf16.msra.mxu0 %v6727
        %7776 = vmatprep.subr.bf16.mxu0 %v6732
        %7777 = vmatpush1.bf16.msra.mxu0 %v6731
        %7778 = vmatprep.subr.bf16.mxu0 %v6736
        %7779 = vmatpush1.bf16.msra.mxu0 %v6735
        %7780 = vmatprep.mubr.bf16.mxu0 %v3097
        %7781 = vmatmul.mubr.bf16.gmra.mrb[0].mxu0 %v3096
        %v7782 = vpop.f32.mrb[0].mxu0
        %v7783 = vadd.f32 %v7712, %v7782
        %v7784 = vpop.f32.mrb[0].mxu0
        %v7785 = vadd.f32 %v7714, %v7784
        %v7786 = vpop.f32.mrb[0].mxu0
        %v7787 = vadd.f32 %v7716, %v7786
        %v7788 = vpop.f32.mrb[0].mxu0
        %v7789 = vadd.f32 %v7718, %v7788
        %7790 = vmatprep.mubr.bf16.mxu0 %v3113
        %7791 = vmatmul.mubr.bf16.gmra.mrb[0].mxu0 %v3112
        %v7792 = vpop.f32.mrb[0].mxu0
        %v7793 = vadd.f32 %v7722, %v7792
        %v7794 = vpop.f32.mrb[0].mxu0
        %v7795 = vadd.f32 %v7724, %v7794
        %v7796 = vpop.f32.mrb[0].mxu0
        %v7797 = vadd.f32 %v7726, %v7796
        %v7798 = vpop.f32.mrb[0].mxu0
        %v7799 = vadd.f32 %v7728, %v7798
        %7800 = vmatprep.mubr.bf16.mxu0 %v3129
        %7801 = vmatmul.mubr.bf16.gmra.mrb[0].mxu0 %v3128
        %v7802 = vpop.f32.mrb[0].mxu0
        %v7803 = vadd.f32 %v7732, %v7802
        %v7804 = vpop.f32.mrb[0].mxu0
        %v7805 = vadd.f32 %v7734, %v7804
        %v7806 = vpop.f32.mrb[0].mxu0
        %v7807 = vadd.f32 %v7736, %v7806
        %v7808 = vpop.f32.mrb[0].mxu0
        %v7809 = vadd.f32 %v7738, %v7808
        %7810 = vmatprep.mubr.bf16.mxu0 %v3145
        %7811 = vmatmul.mubr.bf16.gmra.mrb[0].mxu0 %v3144
        %v7812 = vpop.f32.mrb[0].mxu0
        %v7813 = vadd.f32 %v7742, %v7812
        %v7814 = vpop.f32.mrb[0].mxu0
        %v7815 = vadd.f32 %v7744, %v7814
        %v7816 = vpop.f32.mrb[0].mxu0
        %v7817 = vpop.f32.mrb[0].mxu0
        %7818 = vdwg.mxu0
        %7819 = vmatprep.subr.bf16.mxu0 %v6230
        %7820 = vmatpush1.bf16.msra.mxu0 %v6229
        %7821 = vmatprep.subr.bf16.mxu0 %v6234
        %7822 = vmatpush1.bf16.msra.mxu0 %v6233
        %7823 = vmatprep.subr.bf16.mxu0 %v6238
        %7824 = vmatpush1.bf16.msra.mxu0 %v6237
        %7825 = vmatprep.subr.bf16.mxu0 %v6242
        %7826 = vmatpush1.bf16.msra.mxu0 %v6241
        %7827 = vmatprep.subr.bf16.mxu0 %v6246
        %7828 = vmatpush1.bf16.msra.mxu0 %v6245
        %7829 = vmatprep.subr.bf16.mxu0 %v6250
        %7830 = vmatpush1.bf16.msra.mxu0 %v6249
        %7831 = vmatprep.subr.bf16.mxu0 %v6254
        %7832 = vmatpush1.bf16.msra.mxu0 %v6253
        %7833 = vmatprep.subr.bf16.mxu0 %v6258
        %7834 = vmatpush1.bf16.msra.mxu0 %v6257
        %7835 = vmatprep.subr.bf16.mxu0 %v6262
        %7836 = vmatpush1.bf16.msra.mxu0 %v6261
        %7837 = vmatprep.subr.bf16.mxu0 %v6266
        %7838 = vmatpush1.bf16.msra.mxu0 %v6265
        %7839 = vmatprep.subr.bf16.mxu0 %v6270
        %7840 = vmatpush1.bf16.msra.mxu0 %v6269
        %7841 = vmatprep.subr.bf16.mxu0 %v6274
        %7842 = vmatpush1.bf16.msra.mxu0 %v6273
        %7843 = vmatprep.subr.bf16.mxu0 %v6278
        %7844 = vmatpush1.bf16.msra.mxu0 %v6277
        %7845 = vmatprep.subr.bf16.mxu0 %v6282
        %7846 = vmatpush1.bf16.msra.mxu0 %v6281
        %7847 = vmatprep.subr.bf16.mxu0 %v6286
        %7848 = vmatpush1.bf16.msra.mxu0 %v6285
        %7849 = vmatprep.subr.bf16.mxu0 %v6290
        %7850 = vmatpush1.bf16.msra.mxu0 %v6289
        %7851 = vmatprep.mubr.bf16.mxu0 %v3083
        %7852 = vmatmul.mubr.bf16.gmra.mrb[0].mxu0 %v3082
        %v7853 = vpop.f32.mrb[0].mxu0
        %v7854 = vadd.f32 0.0, %v7853
        %v7855 = vpop.f32.mrb[0].mxu0
        %v7856 = vadd.f32 0.0, %v7855
        %v7857 = vpop.f32.mrb[0].mxu0
        %v7858 = vadd.f32 0.0, %v7857
        %v7859 = vpop.f32.mrb[0].mxu0
        %v7860 = vadd.f32 0.0, %v7859
        %7861 = vmatprep.mubr.bf16.mxu0 %v3099
        %7862 = vmatmul.mubr.bf16.gmra.mrb[0].mxu0 %v3098
        %v7863 = vpop.f32.mrb[0].mxu0
        %v7864 = vadd.f32 0.0, %v7863
        %v7865 = vpop.f32.mrb[0].mxu0
        %v7866 = vadd.f32 0.0, %v7865
        %v7867 = vpop.f32.mrb[0].mxu0
        %v7868 = vadd.f32 0.0, %v7867
        %v7869 = vpop.f32.mrb[0].mxu0
        %v7870 = vadd.f32 0.0, %v7869
        %7871 = vmatprep.mubr.bf16.mxu0 %v3115
        %7872 = vmatmul.mubr.bf16.gmra.mrb[0].mxu0 %v3114
        %v7873 = vpop.f32.mrb[0].mxu0
        %v7874 = vadd.f32 0.0, %v7873
        %v7875 = vpop.f32.mrb[0].mxu0
        %v7876 = vadd.f32 0.0, %v7875
        %v7877 = vpop.f32.mrb[0].mxu0
        %v7878 = vadd.f32 0.0, %v7877
        %v7879 = vpop.f32.mrb[0].mxu0
        %v7880 = vadd.f32 0.0, %v7879
        %7881 = vmatprep.mubr.bf16.mxu0 %v3131
        %7882 = vmatmul.mubr.bf16.gmra.mrb[0].mxu0 %v3130
        %v7883 = vpop.f32.mrb[0].mxu0
        %v7884 = vadd.f32 0.0, %v7883
        %v7885 = vpop.f32.mrb[0].mxu0
        %v7886 = vadd.f32 0.0, %v7885
        %v7887 = vpop.f32.mrb[0].mxu0
        %v7888 = vpop.f32.mrb[0].mxu0
        %7889 = vdwg.mxu0
        %7890 = vmatprep.subr.bf16.mxu0 %v6294
        %7891 = vmatpush1.bf16.msra.mxu0 %v6293
        %7892 = vmatprep.subr.bf16.mxu0 %v6298
        %7893 = vmatpush1.bf16.msra.mxu0 %v6297
        %7894 = vmatprep.subr.bf16.mxu0 %v6302
        %7895 = vmatpush1.bf16.msra.mxu0 %v6301
        %7896 = vmatprep.subr.bf16.mxu0 %v6306
        %7897 = vmatpush1.bf16.msra.mxu0 %v6305
        %7898 = vmatprep.subr.bf16.mxu0 %v6310
        %7899 = vmatpush1.bf16.msra.mxu0 %v6309
        %7900 = vmatprep.subr.bf16.mxu0 %v6314
        %7901 = vmatpush1.bf16.msra.mxu0 %v6313
        %7902 = vmatprep.subr.bf16.mxu0 %v6318
        %7903 = vmatpush1.bf16.msra.mxu0 %v6317
        %7904 = vmatprep.subr.bf16.mxu0 %v6322
        %7905 = vmatpush1.bf16.msra.mxu0 %v6321
        %7906 = vmatprep.subr.bf16.mxu0 %v6326
        %7907 = vmatpush1.bf16.msra.mxu0 %v6325
        %7908 = vmatprep.subr.bf16.mxu0 %v6330
        %7909 = vmatpush1.bf16.msra.mxu0 %v6329
        %7910 = vmatprep.subr.bf16.mxu0 %v6334
        %7911 = vmatpush1.bf16.msra.mxu0 %v6333
        %7912 = vmatprep.subr.bf16.mxu0 %v6338
        %7913 = vmatpush1.bf16.msra.mxu0 %v6337
        %7914 = vmatprep.subr.bf16.mxu0 %v6342
        %7915 = vmatpush1.bf16.msra.mxu0 %v6341
        %7916 = vmatprep.subr.bf16.mxu0 %v6346
        %7917 = vmatpush1.bf16.msra.mxu0 %v6345
        %7918 = vmatprep.subr.bf16.mxu0 %v6350
        %7919 = vmatpush1.bf16.msra.mxu0 %v6349
        %7920 = vmatprep.subr.bf16.mxu0 %v6354
        %7921 = vmatpush1.bf16.msra.mxu0 %v6353
        %7922 = vmatprep.mubr.bf16.mxu0 %v3085
        %7923 = vmatmul.mubr.bf16.gmra.mrb[0].mxu0 %v3084
        %v7924 = vpop.f32.mrb[0].mxu0
        %v7925 = vadd.f32 %v7854, %v7924
        %v7926 = vpop.f32.mrb[0].mxu0
        %v7927 = vadd.f32 %v7856, %v7926
        %v7928 = vpop.f32.mrb[0].mxu0
        %v7929 = vadd.f32 %v7858, %v7928
        %v7930 = vpop.f32.mrb[0].mxu0
        %v7931 = vadd.f32 %v7860, %v7930
        %7932 = vmatprep.mubr.bf16.mxu0 %v3101
        %7933 = vmatmul.mubr.bf16.gmra.mrb[0].mxu0 %v3100
        %v7934 = vpop.f32.mrb[0].mxu0
        %v7935 = vadd.f32 %v7864, %v7934
        %v7936 = vpop.f32.mrb[0].mxu0
        %v7937 = vadd.f32 %v7866, %v7936
        %v7938 = vpop.f32.mrb[0].mxu0
        %v7939 = vadd.f32 %v7868, %v7938
        %v7940 = vpop.f32.mrb[0].mxu0
        %v7941 = vadd.f32 %v7870, %v7940
        %7942 = vmatprep.mubr.bf16.mxu0 %v3117
        %7943 = vmatmul.mubr.bf16.gmra.mrb[0].mxu0 %v3116
        %v7944 = vpop.f32.mrb[0].mxu0
        %v7945 = vadd.f32 %v7874, %v7944
        %v7946 = vpop.f32.mrb[0].mxu0
        %v7947 = vadd.f32 %v7876, %v7946
        %v7948 = vpop.f32.mrb[0].mxu0
        %v7949 = vadd.f32 %v7878, %v7948
        %v7950 = vpop.f32.mrb[0].mxu0
        %v7951 = vadd.f32 %v7880, %v7950
        %7952 = vmatprep.mubr.bf16.mxu0 %v3133
        %7953 = vmatmul.mubr.bf16.gmra.mrb[0].mxu0 %v3132
        %v7954 = vpop.f32.mrb[0].mxu0
        %v7955 = vadd.f32 %v7884, %v7954
        %v7956 = vpop.f32.mrb[0].mxu0
        %v7957 = vadd.f32 %v7886, %v7956
        %v7958 = vpop.f32.mrb[0].mxu0
        %v7959 = vpop.f32.mrb[0].mxu0
        %7960 = vdwg.mxu0
        %7961 = vmatprep.subr.bf16.mxu0 %v6358
        %7962 = vmatpush1.bf16.msra.mxu0 %v6357
        %7963 = vmatprep.subr.bf16.mxu0 %v6362
        %7964 = vmatpush1.bf16.msra.mxu0 %v6361
        %7965 = vmatprep.subr.bf16.mxu0 %v6366
        %7966 = vmatpush1.bf16.msra.mxu0 %v6365
        %7967 = vmatprep.subr.bf16.mxu0 %v6370
        %7968 = vmatpush1.bf16.msra.mxu0 %v6369
        %7969 = vmatprep.subr.bf16.mxu0 %v6374
        %7970 = vmatpush1.bf16.msra.mxu0 %v6373
        %7971 = vmatprep.subr.bf16.mxu0 %v6378
        %7972 = vmatpush1.bf16.msra.mxu0 %v6377
        %7973 = vmatprep.subr.bf16.mxu0 %v6382
        %7974 = vmatpush1.bf16.msra.mxu0 %v6381
        %7975 = vmatprep.subr.bf16.mxu0 %v6386
        %7976 = vmatpush1.bf16.msra.mxu0 %v6385
        %7977 = vmatprep.subr.bf16.mxu0 %v6390
        %7978 = vmatpush1.bf16.msra.mxu0 %v6389
        %7979 = vmatprep.subr.bf16.mxu0 %v6394
        %7980 = vmatpush1.bf16.msra.mxu0 %v6393
        %7981 = vmatprep.subr.bf16.mxu0 %v6398
        %7982 = vmatpush1.bf16.msra.mxu0 %v6397
        %7983 = vmatprep.subr.bf16.mxu0 %v6402
        %7984 = vmatpush1.bf16.msra.mxu0 %v6401
        %7985 = vmatprep.subr.bf16.mxu0 %v6406
        %7986 = vmatpush1.bf16.msra.mxu0 %v6405
        %7987 = vmatprep.subr.bf16.mxu0 %v6410
        %7988 = vmatpush1.bf16.msra.mxu0 %v6409
        %7989 = vmatprep.subr.bf16.mxu0 %v6414
        %7990 = vmatpush1.bf16.msra.mxu0 %v6413
        %7991 = vmatprep.subr.bf16.mxu0 %v6418
        %7992 = vmatpush1.bf16.msra.mxu0 %v6417
        %7993 = vmatprep.mubr.bf16.mxu0 %v3087
        %7994 = vmatmul.mubr.bf16.gmra.mrb[0].mxu0 %v3086
        %v7995 = vpop.f32.mrb[0].mxu0
        %v7996 = vadd.f32 %v7925, %v7995
        %v7997 = vpop.f32.mrb[0].mxu0
        %v7998 = vadd.f32 %v7927, %v7997
        %v7999 = vpop.f32.mrb[0].mxu0
        %v8000 = vadd.f32 %v7929, %v7999
        %v8001 = vpop.f32.mrb[0].mxu0
        %v8002 = vadd.f32 %v7931, %v8001
        %8003 = vmatprep.mubr.bf16.mxu0 %v3103
        %8004 = vmatmul.mubr.bf16.gmra.mrb[0].mxu0 %v3102
        %v8005 = vpop.f32.mrb[0].mxu0
        %v8006 = vadd.f32 %v7935, %v8005
        %v8007 = vpop.f32.mrb[0].mxu0
        %v8008 = vadd.f32 %v7937, %v8007
        %v8009 = vpop.f32.mrb[0].mxu0
        %v8010 = vadd.f32 %v7939, %v8009
        %v8011 = vpop.f32.mrb[0].mxu0
        %v8012 = vadd.f32 %v7941, %v8011
        %8013 = vmatprep.mubr.bf16.mxu0 %v3119
        %8014 = vmatmul.mubr.bf16.gmra.mrb[0].mxu0 %v3118
        %v8015 = vpop.f32.mrb[0].mxu0
        %v8016 = vadd.f32 %v7945, %v8015
        %v8017 = vpop.f32.mrb[0].mxu0
        %v8018 = vadd.f32 %v7947, %v8017
        %v8019 = vpop.f32.mrb[0].mxu0
        %v8020 = vadd.f32 %v7949, %v8019
        %v8021 = vpop.f32.mrb[0].mxu0
        %v8022 = vadd.f32 %v7951, %v8021
        %8023 = vmatprep.mubr.bf16.mxu0 %v3135
        %8024 = vmatmul.mubr.bf16.gmra.mrb[0].mxu0 %v3134
        %v8025 = vpop.f32.mrb[0].mxu0
        %v8026 = vadd.f32 %v7955, %v8025
        %v8027 = vpop.f32.mrb[0].mxu0
        %v8028 = vadd.f32 %v7957, %v8027
        %v8029 = vpop.f32.mrb[0].mxu0
        %v8030 = vpop.f32.mrb[0].mxu0
        %8031 = vdwg.mxu0
        %8032 = vmatprep.subr.bf16.mxu0 %v6422
        %8033 = vmatpush1.bf16.msra.mxu0 %v6421
        %8034 = vmatprep.subr.bf16.mxu0 %v6426
        %8035 = vmatpush1.bf16.msra.mxu0 %v6425
        %8036 = vmatprep.subr.bf16.mxu0 %v6430
        %8037 = vmatpush1.bf16.msra.mxu0 %v6429
        %8038 = vmatprep.subr.bf16.mxu0 %v6434
        %8039 = vmatpush1.bf16.msra.mxu0 %v6433
        %8040 = vmatprep.subr.bf16.mxu0 %v6438
        %8041 = vmatpush1.bf16.msra.mxu0 %v6437
        %8042 = vmatprep.subr.bf16.mxu0 %v6442
        %8043 = vmatpush1.bf16.msra.mxu0 %v6441
        %8044 = vmatprep.subr.bf16.mxu0 %v6446
        %8045 = vmatpush1.bf16.msra.mxu0 %v6445
        %8046 = vmatprep.subr.bf16.mxu0 %v6450
        %8047 = vmatpush1.bf16.msra.mxu0 %v6449
        %8048 = vmatprep.subr.bf16.mxu0 %v6454
        %8049 = vmatpush1.bf16.msra.mxu0 %v6453
        %8050 = vmatprep.subr.bf16.mxu0 %v6458
        %8051 = vmatpush1.bf16.msra.mxu0 %v6457
        %8052 = vmatprep.subr.bf16.mxu0 %v6462
        %8053 = vmatpush1.bf16.msra.mxu0 %v6461
        %8054 = vmatprep.subr.bf16.mxu0 %v6466
        %8055 = vmatpush1.bf16.msra.mxu0 %v6465
        %8056 = vmatprep.subr.bf16.mxu0 %v6470
        %8057 = vmatpush1.bf16.msra.mxu0 %v6469
        %8058 = vmatprep.subr.bf16.mxu0 %v6474
        %8059 = vmatpush1.bf16.msra.mxu0 %v6473
        %8060 = vmatprep.subr.bf16.mxu0 %v6478
        %8061 = vmatpush1.bf16.msra.mxu0 %v6477
        %8062 = vmatprep.subr.bf16.mxu0 %v6482
        %8063 = vmatpush1.bf16.msra.mxu0 %v6481
        %8064 = vmatprep.mubr.bf16.mxu0 %v3089
        %8065 = vmatmul.mubr.bf16.gmra.mrb[0].mxu0 %v3088
        %v8066 = vpop.f32.mrb[0].mxu0
        %v8067 = vadd.f32 %v7996, %v8066
        %v8068 = vpop.f32.mrb[0].mxu0
        %v8069 = vadd.f32 %v7998, %v8068
        %v8070 = vpop.f32.mrb[0].mxu0
        %v8071 = vadd.f32 %v8000, %v8070
        %v8072 = vpop.f32.mrb[0].mxu0
        %v8073 = vadd.f32 %v8002, %v8072
        %8074 = vmatprep.mubr.bf16.mxu0 %v3105
        %8075 = vmatmul.mubr.bf16.gmra.mrb[0].mxu0 %v3104
        %v8076 = vpop.f32.mrb[0].mxu0
        %v8077 = vadd.f32 %v8006, %v8076
        %v8078 = vpop.f32.mrb[0].mxu0
        %v8079 = vadd.f32 %v8008, %v8078
        %v8080 = vpop.f32.mrb[0].mxu0
        %v8081 = vadd.f32 %v8010, %v8080
        %v8082 = vpop.f32.mrb[0].mxu0
        %v8083 = vadd.f32 %v8012, %v8082
        %8084 = vmatprep.mubr.bf16.mxu0 %v3121
        %8085 = vmatmul.mubr.bf16.gmra.mrb[0].mxu0 %v3120
        %v8086 = vpop.f32.mrb[0].mxu0
        %v8087 = vadd.f32 %v8016, %v8086
        %v8088 = vpop.f32.mrb[0].mxu0
        %v8089 = vadd.f32 %v8018, %v8088
        %v8090 = vpop.f32.mrb[0].mxu0
        %v8091 = vadd.f32 %v8020, %v8090
        %v8092 = vpop.f32.mrb[0].mxu0
        %v8093 = vadd.f32 %v8022, %v8092
        %8094 = vmatprep.mubr.bf16.mxu0 %v3137
        %8095 = vmatmul.mubr.bf16.gmra.mrb[0].mxu0 %v3136
        %v8096 = vpop.f32.mrb[0].mxu0
        %v8097 = vadd.f32 %v8026, %v8096
        %v8098 = vpop.f32.mrb[0].mxu0
        %v8099 = vadd.f32 %v8028, %v8098
        %v8100 = vpop.f32.mrb[0].mxu0
        %v8101 = vpop.f32.mrb[0].mxu0
        %8102 = vdwg.mxu0
        %8103 = vmatprep.subr.bf16.mxu0 %v6486
        %8104 = vmatpush1.bf16.msra.mxu0 %v6485
        %8105 = vmatprep.subr.bf16.mxu0 %v6490
        %8106 = vmatpush1.bf16.msra.mxu0 %v6489
        %8107 = vmatprep.subr.bf16.mxu0 %v6494
        %8108 = vmatpush1.bf16.msra.mxu0 %v6493
        %8109 = vmatprep.subr.bf16.mxu0 %v6498
        %8110 = vmatpush1.bf16.msra.mxu0 %v6497
        %8111 = vmatprep.subr.bf16.mxu0 %v6502
        %8112 = vmatpush1.bf16.msra.mxu0 %v6501
        %8113 = vmatprep.subr.bf16.mxu0 %v6506
        %8114 = vmatpush1.bf16.msra.mxu0 %v6505
        %8115 = vmatprep.subr.bf16.mxu0 %v6510
        %8116 = vmatpush1.bf16.msra.mxu0 %v6509
        %8117 = vmatprep.subr.bf16.mxu0 %v6514
        %8118 = vmatpush1.bf16.msra.mxu0 %v6513
        %8119 = vmatprep.subr.bf16.mxu0 %v6518
        %8120 = vmatpush1.bf16.msra.mxu0 %v6517
        %8121 = vmatprep.subr.bf16.mxu0 %v6522
        %8122 = vmatpush1.bf16.msra.mxu0 %v6521
        %8123 = vmatprep.subr.bf16.mxu0 %v6526
        %8124 = vmatpush1.bf16.msra.mxu0 %v6525
        %8125 = vmatprep.subr.bf16.mxu0 %v6530
        %8126 = vmatpush1.bf16.msra.mxu0 %v6529
        %8127 = vmatprep.subr.bf16.mxu0 %v6534
        %8128 = vmatpush1.bf16.msra.mxu0 %v6533
        %8129 = vmatprep.subr.bf16.mxu0 %v6538
        %8130 = vmatpush1.bf16.msra.mxu0 %v6537
        %8131 = vmatprep.subr.bf16.mxu0 %v6542
        %8132 = vmatpush1.bf16.msra.mxu0 %v6541
        %8133 = vmatprep.subr.bf16.mxu0 %v6546
        %8134 = vmatpush1.bf16.msra.mxu0 %v6545
        %8135 = vmatprep.mubr.bf16.mxu0 %v3091
        %8136 = vmatmul.mubr.bf16.gmra.mrb[0].mxu0 %v3090
        %v8137 = vpop.f32.mrb[0].mxu0
        %v8138 = vadd.f32 %v8067, %v8137
        %v8139 = vpop.f32.mrb[0].mxu0
        %v8140 = vadd.f32 %v8069, %v8139
        %v8141 = vpop.f32.mrb[0].mxu0
        %v8142 = vadd.f32 %v8071, %v8141
        %v8143 = vpop.f32.mrb[0].mxu0
        %v8144 = vadd.f32 %v8073, %v8143
        %8145 = vmatprep.mubr.bf16.mxu0 %v3107
        %8146 = vmatmul.mubr.bf16.gmra.mrb[0].mxu0 %v3106
        %v8147 = vpop.f32.mrb[0].mxu0
        %v8148 = vadd.f32 %v8077, %v8147
        %v8149 = vpop.f32.mrb[0].mxu0
        %v8150 = vadd.f32 %v8079, %v8149
        %v8151 = vpop.f32.mrb[0].mxu0
        %v8152 = vadd.f32 %v8081, %v8151
        %v8153 = vpop.f32.mrb[0].mxu0
        %v8154 = vadd.f32 %v8083, %v8153
        %8155 = vmatprep.mubr.bf16.mxu0 %v3123
        %8156 = vmatmul.mubr.bf16.gmra.mrb[0].mxu0 %v3122
        %v8157 = vpop.f32.mrb[0].mxu0
        %v8158 = vadd.f32 %v8087, %v8157
        %v8159 = vpop.f32.mrb[0].mxu0
        %v8160 = vadd.f32 %v8089, %v8159
        %v8161 = vpop.f32.mrb[0].mxu0
        %v8162 = vadd.f32 %v8091, %v8161
        %v8163 = vpop.f32.mrb[0].mxu0
        %v8164 = vadd.f32 %v8093, %v8163
        %8165 = vmatprep.mubr.bf16.mxu0 %v3139
        %8166 = vmatmul.mubr.bf16.gmra.mrb[0].mxu0 %v3138
        %v8167 = vpop.f32.mrb[0].mxu0
        %v8168 = vadd.f32 %v8097, %v8167
        %v8169 = vpop.f32.mrb[0].mxu0
        %v8170 = vadd.f32 %v8099, %v8169
        %v8171 = vpop.f32.mrb[0].mxu0
        %v8172 = vpop.f32.mrb[0].mxu0
        %8173 = vdwg.mxu0
        %8174 = vmatprep.subr.bf16.mxu0 %v6550
        %8175 = vmatpush1.bf16.msra.mxu0 %v6549
        %8176 = vmatprep.subr.bf16.mxu0 %v6554
        %8177 = vmatpush1.bf16.msra.mxu0 %v6553
        %8178 = vmatprep.subr.bf16.mxu0 %v6558
        %8179 = vmatpush1.bf16.msra.mxu0 %v6557
        %8180 = vmatprep.subr.bf16.mxu0 %v6562
        %8181 = vmatpush1.bf16.msra.mxu0 %v6561
        %8182 = vmatprep.subr.bf16.mxu0 %v6566
        %8183 = vmatpush1.bf16.msra.mxu0 %v6565
        %8184 = vmatprep.subr.bf16.mxu0 %v6570
        %8185 = vmatpush1.bf16.msra.mxu0 %v6569
        %8186 = vmatprep.subr.bf16.mxu0 %v6574
        %8187 = vmatpush1.bf16.msra.mxu0 %v6573
        %8188 = vmatprep.subr.bf16.mxu0 %v6578
        %8189 = vmatpush1.bf16.msra.mxu0 %v6577
        %8190 = vmatprep.subr.bf16.mxu0 %v6582
        %8191 = vmatpush1.bf16.msra.mxu0 %v6581
        %8192 = vmatprep.subr.bf16.mxu0 %v6586
        %8193 = vmatpush1.bf16.msra.mxu0 %v6585
        %8194 = vmatprep.subr.bf16.mxu0 %v6590
        %8195 = vmatpush1.bf16.msra.mxu0 %v6589
        %8196 = vmatprep.subr.bf16.mxu0 %v6594
        %8197 = vmatpush1.bf16.msra.mxu0 %v6593
        %8198 = vmatprep.subr.bf16.mxu0 %v6598
        %8199 = vmatpush1.bf16.msra.mxu0 %v6597
        %8200 = vmatprep.subr.bf16.mxu0 %v6602
        %8201 = vmatpush1.bf16.msra.mxu0 %v6601
        %8202 = vmatprep.subr.bf16.mxu0 %v6606
        %8203 = vmatpush1.bf16.msra.mxu0 %v6605
        %8204 = vmatprep.subr.bf16.mxu0 %v6610
        %8205 = vmatpush1.bf16.msra.mxu0 %v6609
        %8206 = vmatprep.mubr.bf16.mxu0 %v3093
        %8207 = vmatmul.mubr.bf16.gmra.mrb[0].mxu0 %v3092
        %v8208 = vpop.f32.mrb[0].mxu0
        %v8209 = vadd.f32 %v8138, %v8208
        %v8210 = vpop.f32.mrb[0].mxu0
        %v8211 = vadd.f32 %v8140, %v8210
        %v8212 = vpop.f32.mrb[0].mxu0
        %v8213 = vadd.f32 %v8142, %v8212
        %v8214 = vpop.f32.mrb[0].mxu0
        %v8215 = vadd.f32 %v8144, %v8214
        %8216 = vmatprep.mubr.bf16.mxu0 %v3109
        %8217 = vmatmul.mubr.bf16.gmra.mrb[0].mxu0 %v3108
        %v8218 = vpop.f32.mrb[0].mxu0
        %v8219 = vadd.f32 %v8148, %v8218
        %v8220 = vpop.f32.mrb[0].mxu0
        %v8221 = vadd.f32 %v8150, %v8220
        %v8222 = vpop.f32.mrb[0].mxu0
        %v8223 = vadd.f32 %v8152, %v8222
        %v8224 = vpop.f32.mrb[0].mxu0
        %v8225 = vadd.f32 %v8154, %v8224
        %8226 = vmatprep.mubr.bf16.mxu0 %v3125
        %8227 = vmatmul.mubr.bf16.gmra.mrb[0].mxu0 %v3124
        %v8228 = vpop.f32.mrb[0].mxu0
        %v8229 = vadd.f32 %v8158, %v8228
        %v8230 = vpop.f32.mrb[0].mxu0
        %v8231 = vadd.f32 %v8160, %v8230
        %v8232 = vpop.f32.mrb[0].mxu0
        %v8233 = vadd.f32 %v8162, %v8232
        %v8234 = vpop.f32.mrb[0].mxu0
        %v8235 = vadd.f32 %v8164, %v8234
        %8236 = vmatprep.mubr.bf16.mxu0 %v3141
        %8237 = vmatmul.mubr.bf16.gmra.mrb[0].mxu0 %v3140
        %v8238 = vpop.f32.mrb[0].mxu0
        %v8239 = vadd.f32 %v8168, %v8238
        %v8240 = vpop.f32.mrb[0].mxu0
        %v8241 = vadd.f32 %v8170, %v8240
        %v8242 = vpop.f32.mrb[0].mxu0
        %v8243 = vpop.f32.mrb[0].mxu0
        %8244 = vdwg.mxu0
        %8245 = vmatprep.subr.bf16.mxu0 %v6614
        %8246 = vmatpush1.bf16.msra.mxu0 %v6613
        %8247 = vmatprep.subr.bf16.mxu0 %v6618
        %8248 = vmatpush1.bf16.msra.mxu0 %v6617
        %8249 = vmatprep.subr.bf16.mxu0 %v6622
        %8250 = vmatpush1.bf16.msra.mxu0 %v6621
        %8251 = vmatprep.subr.bf16.mxu0 %v6626
        %8252 = vmatpush1.bf16.msra.mxu0 %v6625
        %8253 = vmatprep.subr.bf16.mxu0 %v6630
        %8254 = vmatpush1.bf16.msra.mxu0 %v6629
        %8255 = vmatprep.subr.bf16.mxu0 %v6634
        %8256 = vmatpush1.bf16.msra.mxu0 %v6633
        %8257 = vmatprep.subr.bf16.mxu0 %v6638
        %8258 = vmatpush1.bf16.msra.mxu0 %v6637
        %8259 = vmatprep.subr.bf16.mxu0 %v6642
        %8260 = vmatpush1.bf16.msra.mxu0 %v6641
        %8261 = vmatprep.subr.bf16.mxu0 %v6646
        %8262 = vmatpush1.bf16.msra.mxu0 %v6645
        %8263 = vmatprep.subr.bf16.mxu0 %v6650
        %8264 = vmatpush1.bf16.msra.mxu0 %v6649
        %8265 = vmatprep.subr.bf16.mxu0 %v6654
        %8266 = vmatpush1.bf16.msra.mxu0 %v6653
        %8267 = vmatprep.subr.bf16.mxu0 %v6658
        %8268 = vmatpush1.bf16.msra.mxu0 %v6657
        %8269 = vmatprep.subr.bf16.mxu0 %v6662
        %8270 = vmatpush1.bf16.msra.mxu0 %v6661
        %8271 = vmatprep.subr.bf16.mxu0 %v6666
        %8272 = vmatpush1.bf16.msra.mxu0 %v6665
        %8273 = vmatprep.subr.bf16.mxu0 %v6670
        %8274 = vmatpush1.bf16.msra.mxu0 %v6669
        %8275 = vmatprep.subr.bf16.mxu0 %v6674
        %8276 = vmatpush1.bf16.msra.mxu0 %v6673
        %8277 = vmatprep.mubr.bf16.mxu0 %v3095
        %8278 = vmatmul.mubr.bf16.gmra.mrb[0].mxu0 %v3094
        %v8279 = vpop.f32.mrb[0].mxu0
        %v8280 = vadd.f32 %v8209, %v8279
        %v8281 = vpop.f32.mrb[0].mxu0
        %v8282 = vadd.f32 %v8211, %v8281
        %v8283 = vpop.f32.mrb[0].mxu0
        %v8284 = vadd.f32 %v8213, %v8283
        %v8285 = vpop.f32.mrb[0].mxu0
        %v8286 = vadd.f32 %v8215, %v8285
        %8287 = vmatprep.mubr.bf16.mxu0 %v3111
        %8288 = vmatmul.mubr.bf16.gmra.mrb[0].mxu0 %v3110
        %v8289 = vpop.f32.mrb[0].mxu0
        %v8290 = vadd.f32 %v8219, %v8289
        %v8291 = vpop.f32.mrb[0].mxu0
        %v8292 = vadd.f32 %v8221, %v8291
        %v8293 = vpop.f32.mrb[0].mxu0
        %v8294 = vadd.f32 %v8223, %v8293
        %v8295 = vpop.f32.mrb[0].mxu0
        %v8296 = vadd.f32 %v8225, %v8295
        %8297 = vmatprep.mubr.bf16.mxu0 %v3127
        %8298 = vmatmul.mubr.bf16.gmra.mrb[0].mxu0 %v3126
        %v8299 = vpop.f32.mrb[0].mxu0
        %v8300 = vadd.f32 %v8229, %v8299
        %v8301 = vpop.f32.mrb[0].mxu0
        %v8302 = vadd.f32 %v8231, %v8301
        %v8303 = vpop.f32.mrb[0].mxu0
        %v8304 = vadd.f32 %v8233, %v8303
        %v8305 = vpop.f32.mrb[0].mxu0
        %v8306 = vadd.f32 %v8235, %v8305
        %8307 = vmatprep.mubr.bf16.mxu0 %v3143
        %8308 = vmatmul.mubr.bf16.gmra.mrb[0].mxu0 %v3142
        %v8309 = vpop.f32.mrb[0].mxu0
        %v8310 = vadd.f32 %v8239, %v8309
        %v8311 = vpop.f32.mrb[0].mxu0
        %v8312 = vadd.f32 %v8241, %v8311
        %v8313 = vpop.f32.mrb[0].mxu0
        %v8314 = vpop.f32.mrb[0].mxu0
        %8315 = vdwg.mxu0
        %8316 = vmatprep.subr.bf16.mxu0 %v6678
        %8317 = vmatpush1.bf16.msra.mxu0 %v6677
        %8318 = vmatprep.subr.bf16.mxu0 %v6682
        %8319 = vmatpush1.bf16.msra.mxu0 %v6681
        %8320 = vmatprep.subr.bf16.mxu0 %v6686
        %8321 = vmatpush1.bf16.msra.mxu0 %v6685
        %8322 = vmatprep.subr.bf16.mxu0 %v6690
        %8323 = vmatpush1.bf16.msra.mxu0 %v6689
        %8324 = vmatprep.subr.bf16.mxu0 %v6694
        %8325 = vmatpush1.bf16.msra.mxu0 %v6693
        %8326 = vmatprep.subr.bf16.mxu0 %v6698
        %8327 = vmatpush1.bf16.msra.mxu0 %v6697
        %8328 = vmatprep.subr.bf16.mxu0 %v6702
        %8329 = vmatpush1.bf16.msra.mxu0 %v6701
        %8330 = vmatprep.subr.bf16.mxu0 %v6706
        %8331 = vmatpush1.bf16.msra.mxu0 %v6705
        %8332 = vmatprep.subr.bf16.mxu0 %v6710
        %8333 = vmatpush1.bf16.msra.mxu0 %v6709
        %8334 = vmatprep.subr.bf16.mxu0 %v6714
        %8335 = vmatpush1.bf16.msra.mxu0 %v6713
        %8336 = vmatprep.subr.bf16.mxu0 %v6718
        %8337 = vmatpush1.bf16.msra.mxu0 %v6717
        %8338 = vmatprep.subr.bf16.mxu0 %v6722
        %8339 = vmatpush1.bf16.msra.mxu0 %v6721
        %8340 = vmatprep.subr.bf16.mxu0 %v6726
        %8341 = vmatpush1.bf16.msra.mxu0 %v6725
        %8342 = vmatprep.subr.bf16.mxu0 %v6730
        %8343 = vmatpush1.bf16.msra.mxu0 %v6729
        %8344 = vmatprep.subr.bf16.mxu0 %v6734
        %8345 = vmatpush1.bf16.msra.mxu0 %v6733
        %8346 = vmatprep.subr.bf16.mxu0 %v6738
        %8347 = vmatpush1.bf16.msra.mxu0 %v6737
        %8348 = vmatprep.mubr.bf16.mxu0 %v3097
        %8349 = vmatmul.mubr.bf16.gmra.mrb[0].mxu0 %v3096
        %v8350 = vpop.f32.mrb[0].mxu0
        %v8351 = vadd.f32 %v8280, %v8350
        %v8352 = vpop.f32.mrb[0].mxu0
        %v8353 = vadd.f32 %v8282, %v8352
        %v8354 = vpop.f32.mrb[0].mxu0
        %v8355 = vadd.f32 %v8284, %v8354
        %v8356 = vpop.f32.mrb[0].mxu0
        %v8357 = vadd.f32 %v8286, %v8356
        %8358 = vmatprep.mubr.bf16.mxu0 %v3113
        %8359 = vmatmul.mubr.bf16.gmra.mrb[0].mxu0 %v3112
        %v8360 = vpop.f32.mrb[0].mxu0
        %v8361 = vadd.f32 %v8290, %v8360
        %v8362 = vpop.f32.mrb[0].mxu0
        %v8363 = vadd.f32 %v8292, %v8362
        %v8364 = vpop.f32.mrb[0].mxu0
        %v8365 = vadd.f32 %v8294, %v8364
        %v8366 = vpop.f32.mrb[0].mxu0
        %v8367 = vadd.f32 %v8296, %v8366
        %8368 = vmatprep.mubr.bf16.mxu0 %v3129
        %8369 = vmatmul.mubr.bf16.gmra.mrb[0].mxu0 %v3128
        %v8370 = vpop.f32.mrb[0].mxu0
        %v8371 = vadd.f32 %v8300, %v8370
        %v8372 = vpop.f32.mrb[0].mxu0
        %v8373 = vadd.f32 %v8302, %v8372
        %v8374 = vpop.f32.mrb[0].mxu0
        %v8375 = vadd.f32 %v8304, %v8374
        %v8376 = vpop.f32.mrb[0].mxu0
        %v8377 = vadd.f32 %v8306, %v8376
        %8378 = vmatprep.mubr.bf16.mxu0 %v3145
        %8379 = vmatmul.mubr.bf16.gmra.mrb[0].mxu0 %v3144
        %v8380 = vpop.f32.mrb[0].mxu0
        %v8381 = vadd.f32 %v8310, %v8380
        %v8382 = vpop.f32.mrb[0].mxu0
        %v8383 = vadd.f32 %v8312, %v8382
        %v8384 = vpop.f32.mrb[0].mxu0
        %v8385 = vpop.f32.mrb[0].mxu0
        %8386 = vdwg.mxu0
        %v8387 = vpack.c.bf16 %v7787, %v7783
        %v8388 = vpack.c.bf16 %v7789, %v7785
        %v8389 = vpack.c.bf16 %v8355, %v8351
        %v8390 = vpack.c.bf16 %v8357, %v8353
        %v8391 = vpack.c.bf16 %v7797, %v7793
        %v8392 = vpack.c.bf16 %v7799, %v7795
        %v8393 = vpack.c.bf16 %v8365, %v8361
        %v8394 = vpack.c.bf16 %v8367, %v8363
        %v8395 = vpack.c.bf16 %v7807, %v7803
        %v8396 = vpack.c.bf16 %v7809, %v7805
        %v8397 = vpack.c.bf16 %v8375, %v8371
        %v8398 = vpack.c.bf16 %v8377, %v8373
        %v8399 = vpack.c.bf16 %v7813, %v7813
        %v8400 = vpack.c.bf16 %v7815, %v7815
        %v8401 = vpack.c.bf16 %v8381, %v8381
        %v8402 = vpack.c.bf16 %v8383, %v8383
        %v8404 = vlaneseq
        %v8405 = vshrl.u32 %v8404, 7
        %v8406 = vsub.s32 0, %v8405
        %v8407 = vrot.slane %v1328, %v8406
        %v8408 = vlaneseq
        %v8409 = vshrl.u32 %v8408, 7
        %v8410 = vsub.s32 1, %v8409
        %v8411 = vrot.slane %v1328, %v8410
        %v8412 = vlaneseq
        %v8413 = vshrl.u32 %v8412, 7
        %v8414 = vsub.s32 2, %v8413
        %v8415 = vrot.slane %v1328, %v8414
        %v8416 = vlaneseq
        %v8417 = vshrl.u32 %v8416, 7
        %v8418 = vsub.s32 3, %v8417
        %v8419 = vrot.slane %v1328, %v8418
        %v8478 = vunpack.c.l.b16 %v762
        %v8479 = vunpack.c.l.b16 %v763
        %v8480 = vunpack.c.l.b16 %v764
        %v8481 = vunpack.c.l.b16 %v765
        %v8482 = vunpack.c.l.b16 %v766
        %v8483 = vunpack.c.l.b16 %v767
        %v8484 = vunpack.c.l.b16 %v768
        %v8485 = vunpack.c.l.b16 %v769
        %v8486 = vunpack.c.l.b16 %v770
        %v8487 = vunpack.c.l.b16 %v771
        %v8488 = vunpack.c.l.b16 %v772
        %v8489 = vunpack.c.l.b16 %v773
        %v8490 = vunpack.c.l.b16 %v774
        %v8491 = vunpack.c.l.b16 %v775
        %v8492 = vunpack.c.l.b16 %v776
        %v8493 = vunpack.c.l.b16 %v777
        %v8494 = vunpack.c.l.b16 %v778
        %v8495 = vunpack.c.l.b16 %v779
        %v8496 = vunpack.c.l.b16 %v780
        %v8497 = vunpack.c.l.b16 %v781
        %v8498 = vunpack.c.l.b16 %v782
        %v8499 = vunpack.c.l.b16 %v783
        %v8500 = vunpack.c.l.b16 %v784
        %v8501 = vunpack.c.l.b16 %v785
        %v8502 = vunpack.c.l.b16 %v786
        %v8503 = vunpack.c.l.b16 %v787
        %v8504 = vunpack.c.l.b16 %v788
        %v8505 = vunpack.c.l.b16 %v789
        %v8506 = vunpack.c.l.b16 %v790
        %v8507 = vunpack.c.l.b16 %v791
        %v8508 = vunpack.c.l.b16 %v792
        %v8509 = vunpack.c.l.b16 %v793
        %v8510 = vunpack.c.l.b16 %v794
        %v8511 = vunpack.c.l.b16 %v795
        %v8512 = vunpack.c.l.b16 %v796
        %v8513 = vunpack.c.l.b16 %v797
        %v8514 = vunpack.c.l.b16 %v798
        %v8515 = vunpack.c.l.b16 %v799
        %v8516 = vunpack.c.l.b16 %v800
        %v8517 = vunpack.c.l.b16 %v801
        %v8518 = vunpack.c.l.b16 %v802
        %v8519 = vunpack.c.l.b16 %v803
        %v8520 = vunpack.c.l.b16 %v804
        %v8521 = vunpack.c.l.b16 %v805
        %v8522 = vunpack.c.l.b16 %v806
        %v8523 = vunpack.c.l.b16 %v807
        %v8524 = vunpack.c.l.b16 %v808
        %v8525 = vunpack.c.l.b16 %v809
        %v8526 = vunpack.c.l.b16 %v810
        %v8527 = vunpack.c.l.b16 %v811
        %v8528 = vunpack.c.l.b16 %v812
        %v8529 = vunpack.c.l.b16 %v813
        %v8530 = vunpack.c.l.b16 %v814
        %v8531 = vunpack.c.l.b16 %v815
        %v8532 = vpack.c.b16 %v8479, %v8478
        %v8533 = vpack.c.b16 %v8481, %v8480
        %v8534 = vpack.c.b16 %v8483, %v8482
        %v8535 = vpack.c.b16 %v8485, %v8484
        %v8536 = vpack.c.b16 %v8487, %v8486
        %v8537 = vpack.c.b16 %v8489, %v8488
        %v8538 = vpack.c.b16 %v8491, %v8490
        %v8539 = vpack.c.b16 %v8493, %v8492
        %v8540 = vpack.c.b16 %v8495, %v8494
        %v8541 = vpack.c.b16 %v8497, %v8496
        %v8542 = vpack.c.b16 %v8499, %v8498
        %v8543 = vpack.c.b16 %v8501, %v8500
        %v8544 = vpack.c.b16 %v8503, %v8502
        %v8545 = vpack.c.b16 %v8505, %v8504
        %v8546 = vpack.c.b16 %v8507, %v8506
        %v8547 = vpack.c.b16 %v8509, %v8508
        %v8548 = vpack.c.b16 %v8511, %v8510
        %v8549 = vpack.c.b16 %v8513, %v8512
        %v8550 = vpack.c.b16 %v8515, %v8514
        %v8551 = vpack.c.b16 %v8517, %v8516
        %v8552 = vpack.c.b16 %v8519, %v8518
        %v8553 = vpack.c.b16 %v8521, %v8520
        %v8554 = vpack.c.b16 %v8523, %v8522
        %v8555 = vpack.c.b16 %v8525, %v8524
        %v8556 = vpack.c.b16 %v8527, %v8526
        %v8557 = vpack.c.b16 %v8529, %v8528
        %v8558 = vpack.c.b16 %v8531, %v8530
        %vm8559 = vcmask 400384
        %v8561 = vsel %vm8559, %v8532, 0
        %v8564 = vsel %vm8559, %v8533, 0
        %v8567 = vsel %vm8559, %v8534, 0
        %v8570 = vsel %vm8559, %v8535, 0
        %v8573 = vsel %vm8559, %v8536, 0
        %v8576 = vsel %vm8559, %v8537, 0
        %v8579 = vsel %vm8559, %v8538, 0
        %v8582 = vsel %vm8559, %v8539, 0
        %v8585 = vsel %vm8559, %v8540, 0
        %v8588 = vsel %vm8559, %v8541, 0
        %v8591 = vsel %vm8559, %v8542, 0
        %v8594 = vsel %vm8559, %v8543, 0
        %v8597 = vsel %vm8559, %v8544, 0
        %v8600 = vsel %vm8559, %v8545, 0
        %v8603 = vsel %vm8559, %v8546, 0
        %v8606 = vsel %vm8559, %v8547, 0
        %v8609 = vsel %vm8559, %v8548, 0
        %v8612 = vsel %vm8559, %v8549, 0
        %v8615 = vsel %vm8559, %v8550, 0
        %v8618 = vsel %vm8559, %v8551, 0
        %v8621 = vsel %vm8559, %v8552, 0
        %v8624 = vsel %vm8559, %v8553, 0
        %v8627 = vsel %vm8559, %v8554, 0
        %v8630 = vsel %vm8559, %v8555, 0
        %v8633 = vsel %vm8559, %v8556, 0
        %v8636 = vsel %vm8559, %v8557, 0
        %v8639 = vsel %vm8559, %v8558, 0
        %v8641 = vsel 0, 4294967295, 65535
        %v8642 = vsel %vm3298, %v8641, 0
        %v8644 = vand.u32 %v8399, %v8642
        %v8647 = vand.u32 %v8400, %v8642
        %v8650 = vand.u32 %v8401, %v8642
        %v8653 = vand.u32 %v8402, %v8642
        %8655 = vmatprep.subr.bf16.mxu0 %v8388
        %8656 = vmatpush1.bf16.msra.mxu0 %v8387
        %8657 = vmatprep.subr.bf16.mxu0 %v8392
        %8658 = vmatpush1.bf16.msra.mxu0 %v8391
        %8659 = vmatprep.subr.bf16.mxu0 %v8396
        %8660 = vmatpush1.bf16.msra.mxu0 %v8395
        %8661 = vmatprep.subr.bf16.mxu0 %v8647
        %8662 = vmatpush1.bf16.msra.mxu0 %v8644
        %8663 = vmatprep.subr.bf16.mxu0 0
        %8664 = vmatpush1.bf16.msra.mxu0 0
        %8665 = vmatprep.subr.bf16.mxu0 0
        %8666 = vmatpush1.bf16.msra.mxu0 0
        %8667 = vmatprep.subr.bf16.mxu0 0
        %8668 = vmatpush1.bf16.msra.mxu0 0
        %8669 = vmatprep.subr.bf16.mxu0 0
        %8670 = vmatpush1.bf16.msra.mxu0 0
        %8671 = vmatprep.subr.bf16.mxu0 0
        %8672 = vmatpush1.bf16.msra.mxu0 0
        %8673 = vmatprep.subr.bf16.mxu0 0
        %8674 = vmatpush1.bf16.msra.mxu0 0
        %8675 = vmatprep.subr.bf16.mxu0 0
        %8676 = vmatpush1.bf16.msra.mxu0 0
        %8677 = vmatprep.subr.bf16.mxu0 0
        %8678 = vmatpush1.bf16.msra.mxu0 0
        %8679 = vmatprep.subr.bf16.mxu0 0
        %8680 = vmatpush1.bf16.msra.mxu0 0
        %8681 = vmatprep.subr.bf16.mxu0 0
        %8682 = vmatpush1.bf16.msra.mxu0 0
        %8683 = vmatprep.subr.bf16.mxu0 0
        %8684 = vmatpush1.bf16.msra.mxu0 0
        %8685 = vmatprep.subr.bf16.mxu0 0
        %8686 = vmatpush1.bf16.msra.mxu0 0
        %8687 = vmatprep.mubr.bf16.mxu0 0
        %8688 = vmatmul.mubr.bf16.gmra.mrb[0].mxu0 %v8561
        %v8689 = vpop.f32.mrb[0].mxu0
        %v8690 = vadd.f32 %v8407, %v8689
        %v8691 = vpop.f32.mrb[0].mxu0
        %v8692 = vadd.f32 %v8411, %v8691
        %v8693 = vpop.f32.mrb[0].mxu0
        %v8694 = vadd.f32 %v8407, %v8693
        %v8695 = vpop.f32.mrb[0].mxu0
        %v8696 = vadd.f32 %v8411, %v8695
        %8697 = vmatprep.mubr.bf16.mxu0 0
        %8698 = vmatmul.mubr.bf16.gmra.mrb[0].mxu0 %v8564
        %v8699 = vpop.f32.mrb[0].mxu0
        %v8700 = vadd.f32 %v8407, %v8699
        %v8701 = vpop.f32.mrb[0].mxu0
        %v8702 = vadd.f32 %v8411, %v8701
        %v8703 = vpop.f32.mrb[0].mxu0
        %v8704 = vadd.f32 %v8407, %v8703
        %v8705 = vpop.f32.mrb[0].mxu0
        %v8706 = vadd.f32 %v8411, %v8705
        %8707 = vmatprep.mubr.bf16.mxu0 0
        %8708 = vmatmul.mubr.bf16.gmra.mrb[0].mxu0 %v8567
        %v8709 = vpop.f32.mrb[0].mxu0
        %v8710 = vadd.f32 %v8407, %v8709
        %v8711 = vpop.f32.mrb[0].mxu0
        %v8712 = vadd.f32 %v8411, %v8711
        %v8713 = vpop.f32.mrb[0].mxu0
        %v8714 = vadd.f32 %v8407, %v8713
        %v8715 = vpop.f32.mrb[0].mxu0
        %v8716 = vadd.f32 %v8411, %v8715
        %8717 = vmatprep.mubr.bf16.mxu0 0
        %8718 = vmatmul.mubr.bf16.gmra.mrb[0].mxu0 %v8570
        %v8719 = vpop.f32.mrb[0].mxu0
        %v8720 = vadd.f32 %v8407, %v8719
        %v8721 = vpop.f32.mrb[0].mxu0
        %v8722 = vadd.f32 %v8411, %v8721
        %v8723 = vpop.f32.mrb[0].mxu0
        %v8724 = vadd.f32 %v8407, %v8723
        %v8725 = vpop.f32.mrb[0].mxu0
        %v8726 = vadd.f32 %v8411, %v8725
        %8727 = vmatprep.mubr.bf16.mxu0 0
        %8728 = vmatmul.mubr.bf16.gmra.mrb[0].mxu0 %v8573
        %v8729 = vpop.f32.mrb[0].mxu0
        %v8730 = vadd.f32 %v8407, %v8729
        %v8731 = vpop.f32.mrb[0].mxu0
        %v8732 = vadd.f32 %v8411, %v8731
        %v8733 = vpop.f32.mrb[0].mxu0
        %v8734 = vadd.f32 %v8407, %v8733
        %v8735 = vpop.f32.mrb[0].mxu0
        %v8736 = vadd.f32 %v8411, %v8735
        %8737 = vmatprep.mubr.bf16.mxu0 0
        %8738 = vmatmul.mubr.bf16.gmra.mrb[0].mxu0 %v8576
        %v8739 = vpop.f32.mrb[0].mxu0
        %v8740 = vadd.f32 %v8407, %v8739
        %v8741 = vpop.f32.mrb[0].mxu0
        %v8742 = vadd.f32 %v8411, %v8741
        %v8743 = vpop.f32.mrb[0].mxu0
        %v8744 = vadd.f32 %v8407, %v8743
        %v8745 = vpop.f32.mrb[0].mxu0
        %v8746 = vadd.f32 %v8411, %v8745
        %8747 = vmatprep.mubr.bf16.mxu0 0
        %8748 = vmatmul.mubr.bf16.gmra.mrb[0].mxu0 %v8579
        %v8749 = vpop.f32.mrb[0].mxu0
        %v8750 = vadd.f32 %v8407, %v8749
        %v8751 = vpop.f32.mrb[0].mxu0
        %v8752 = vadd.f32 %v8411, %v8751
        %v8753 = vpop.f32.mrb[0].mxu0
        %v8754 = vadd.f32 %v8407, %v8753
        %v8755 = vpop.f32.mrb[0].mxu0
        %v8756 = vadd.f32 %v8411, %v8755
        %8757 = vmatprep.mubr.bf16.mxu0 0
        %8758 = vmatmul.mubr.bf16.gmra.mrb[0].mxu0 %v8582
        %v8759 = vpop.f32.mrb[0].mxu0
        %v8760 = vadd.f32 %v8407, %v8759
        %v8761 = vpop.f32.mrb[0].mxu0
        %v8762 = vadd.f32 %v8411, %v8761
        %v8763 = vpop.f32.mrb[0].mxu0
        %v8764 = vadd.f32 %v8407, %v8763
        %v8765 = vpop.f32.mrb[0].mxu0
        %v8766 = vadd.f32 %v8411, %v8765
        %8767 = vmatprep.mubr.bf16.mxu0 0
        %8768 = vmatmul.mubr.bf16.gmra.mrb[0].mxu0 %v8585
        %v8769 = vpop.f32.mrb[0].mxu0
        %v8770 = vadd.f32 %v8407, %v8769
        %v8771 = vpop.f32.mrb[0].mxu0
        %v8772 = vadd.f32 %v8411, %v8771
        %v8773 = vpop.f32.mrb[0].mxu0
        %v8774 = vadd.f32 %v8407, %v8773
        %v8775 = vpop.f32.mrb[0].mxu0
        %v8776 = vadd.f32 %v8411, %v8775
        %8777 = vmatprep.mubr.bf16.mxu0 0
        %8778 = vmatmul.mubr.bf16.gmra.mrb[0].mxu0 %v8588
        %v8779 = vpop.f32.mrb[0].mxu0
        %v8780 = vadd.f32 %v8407, %v8779
        %v8781 = vpop.f32.mrb[0].mxu0
        %v8782 = vadd.f32 %v8411, %v8781
        %v8783 = vpop.f32.mrb[0].mxu0
        %v8784 = vadd.f32 %v8407, %v8783
        %v8785 = vpop.f32.mrb[0].mxu0
        %v8786 = vadd.f32 %v8411, %v8785
        %8787 = vmatprep.mubr.bf16.mxu0 0
        %8788 = vmatmul.mubr.bf16.gmra.mrb[0].mxu0 %v8591
        %v8789 = vpop.f32.mrb[0].mxu0
        %v8790 = vadd.f32 %v8407, %v8789
        %v8791 = vpop.f32.mrb[0].mxu0
        %v8792 = vadd.f32 %v8411, %v8791
        %v8793 = vpop.f32.mrb[0].mxu0
        %v8794 = vadd.f32 %v8407, %v8793
        %v8795 = vpop.f32.mrb[0].mxu0
        %v8796 = vadd.f32 %v8411, %v8795
        %8797 = vmatprep.mubr.bf16.mxu0 0
        %8798 = vmatmul.mubr.bf16.gmra.mrb[0].mxu0 %v8594
        %v8799 = vpop.f32.mrb[0].mxu0
        %v8800 = vadd.f32 %v8407, %v8799
        %v8801 = vpop.f32.mrb[0].mxu0
        %v8802 = vadd.f32 %v8411, %v8801
        %v8803 = vpop.f32.mrb[0].mxu0
        %v8804 = vadd.f32 %v8407, %v8803
        %v8805 = vpop.f32.mrb[0].mxu0
        %v8806 = vadd.f32 %v8411, %v8805
        %8807 = vmatprep.mubr.bf16.mxu0 0
        %8808 = vmatmul.mubr.bf16.gmra.mrb[0].mxu0 %v8597
        %v8809 = vpop.f32.mrb[0].mxu0
        %v8810 = vadd.f32 %v8407, %v8809
        %v8811 = vpop.f32.mrb[0].mxu0
        %v8812 = vadd.f32 %v8411, %v8811
        %v8813 = vpop.f32.mrb[0].mxu0
        %v8814 = vadd.f32 %v8407, %v8813
        %v8815 = vpop.f32.mrb[0].mxu0
        %v8816 = vadd.f32 %v8411, %v8815
        %8817 = vmatprep.mubr.bf16.mxu0 0
        %8818 = vmatmul.mubr.bf16.gmra.mrb[0].mxu0 %v8600
        %v8819 = vpop.f32.mrb[0].mxu0
        %v8820 = vadd.f32 %v8407, %v8819
        %v8821 = vpop.f32.mrb[0].mxu0
        %v8822 = vadd.f32 %v8411, %v8821
        %v8823 = vpop.f32.mrb[0].mxu0
        %v8824 = vadd.f32 %v8407, %v8823
        %v8825 = vpop.f32.mrb[0].mxu0
        %v8826 = vadd.f32 %v8411, %v8825
        %8827 = vmatprep.mubr.bf16.mxu0 0
        %8828 = vmatmul.mubr.bf16.gmra.mrb[0].mxu0 %v8603
        %v8829 = vpop.f32.mrb[0].mxu0
        %v8830 = vadd.f32 %v8407, %v8829
        %v8831 = vpop.f32.mrb[0].mxu0
        %v8832 = vadd.f32 %v8411, %v8831
        %v8833 = vpop.f32.mrb[0].mxu0
        %v8834 = vadd.f32 %v8407, %v8833
        %v8835 = vpop.f32.mrb[0].mxu0
        %v8836 = vadd.f32 %v8411, %v8835
        %8837 = vmatprep.mubr.bf16.mxu0 0
        %8838 = vmatmul.mubr.bf16.gmra.mrb[0].mxu0 %v8606
        %v8839 = vpop.f32.mrb[0].mxu0
        %v8840 = vadd.f32 %v8407, %v8839
        %v8841 = vpop.f32.mrb[0].mxu0
        %v8842 = vadd.f32 %v8411, %v8841
        %v8843 = vpop.f32.mrb[0].mxu0
        %v8844 = vadd.f32 %v8407, %v8843
        %v8845 = vpop.f32.mrb[0].mxu0
        %v8846 = vadd.f32 %v8411, %v8845
        %8847 = vmatprep.mubr.bf16.mxu0 0
        %8848 = vmatmul.mubr.bf16.gmra.mrb[0].mxu0 %v8609
        %v8849 = vpop.f32.mrb[0].mxu0
        %v8850 = vadd.f32 %v8407, %v8849
        %v8851 = vpop.f32.mrb[0].mxu0
        %v8852 = vadd.f32 %v8411, %v8851
        %v8853 = vpop.f32.mrb[0].mxu0
        %v8854 = vadd.f32 %v8407, %v8853
        %v8855 = vpop.f32.mrb[0].mxu0
        %v8856 = vadd.f32 %v8411, %v8855
        %8857 = vmatprep.mubr.bf16.mxu0 0
        %8858 = vmatmul.mubr.bf16.gmra.mrb[0].mxu0 %v8612
        %v8859 = vpop.f32.mrb[0].mxu0
        %v8860 = vadd.f32 %v8407, %v8859
        %v8861 = vpop.f32.mrb[0].mxu0
        %v8862 = vadd.f32 %v8411, %v8861
        %v8863 = vpop.f32.mrb[0].mxu0
        %v8864 = vadd.f32 %v8407, %v8863
        %v8865 = vpop.f32.mrb[0].mxu0
        %v8866 = vadd.f32 %v8411, %v8865
        %8867 = vmatprep.mubr.bf16.mxu0 0
        %8868 = vmatmul.mubr.bf16.gmra.mrb[0].mxu0 %v8615
        %v8869 = vpop.f32.mrb[0].mxu0
        %v8870 = vadd.f32 %v8407, %v8869
        %v8871 = vpop.f32.mrb[0].mxu0
        %v8872 = vadd.f32 %v8411, %v8871
        %v8873 = vpop.f32.mrb[0].mxu0
        %v8874 = vadd.f32 %v8407, %v8873
        %v8875 = vpop.f32.mrb[0].mxu0
        %v8876 = vadd.f32 %v8411, %v8875
        %8877 = vmatprep.mubr.bf16.mxu0 0
        %8878 = vmatmul.mubr.bf16.gmra.mrb[0].mxu0 %v8618
        %v8879 = vpop.f32.mrb[0].mxu0
        %v8880 = vadd.f32 %v8407, %v8879
        %v8881 = vpop.f32.mrb[0].mxu0
        %v8882 = vadd.f32 %v8411, %v8881
        %v8883 = vpop.f32.mrb[0].mxu0
        %v8884 = vadd.f32 %v8407, %v8883
        %v8885 = vpop.f32.mrb[0].mxu0
        %v8886 = vadd.f32 %v8411, %v8885
        %8887 = vmatprep.mubr.bf16.mxu0 0
        %8888 = vmatmul.mubr.bf16.gmra.mrb[0].mxu0 %v8621
        %v8889 = vpop.f32.mrb[0].mxu0
        %v8890 = vadd.f32 %v8407, %v8889
        %v8891 = vpop.f32.mrb[0].mxu0
        %v8892 = vadd.f32 %v8411, %v8891
        %v8893 = vpop.f32.mrb[0].mxu0
        %v8894 = vadd.f32 %v8407, %v8893
        %v8895 = vpop.f32.mrb[0].mxu0
        %v8896 = vadd.f32 %v8411, %v8895
        %8897 = vmatprep.mubr.bf16.mxu0 0
        %8898 = vmatmul.mubr.bf16.gmra.mrb[0].mxu0 %v8624
        %v8899 = vpop.f32.mrb[0].mxu0
        %v8900 = vadd.f32 %v8407, %v8899
        %v8901 = vpop.f32.mrb[0].mxu0
        %v8902 = vadd.f32 %v8411, %v8901
        %v8903 = vpop.f32.mrb[0].mxu0
        %v8904 = vadd.f32 %v8407, %v8903
        %v8905 = vpop.f32.mrb[0].mxu0
        %v8906 = vadd.f32 %v8411, %v8905
        %8907 = vmatprep.mubr.bf16.mxu0 0
        %8908 = vmatmul.mubr.bf16.gmra.mrb[0].mxu0 %v8627
        %v8909 = vpop.f32.mrb[0].mxu0
        %v8910 = vadd.f32 %v8407, %v8909
        %v8911 = vpop.f32.mrb[0].mxu0
        %v8912 = vadd.f32 %v8411, %v8911
        %v8913 = vpop.f32.mrb[0].mxu0
        %v8914 = vadd.f32 %v8407, %v8913
        %v8915 = vpop.f32.mrb[0].mxu0
        %v8916 = vadd.f32 %v8411, %v8915
        %8917 = vmatprep.mubr.bf16.mxu0 0
        %8918 = vmatmul.mubr.bf16.gmra.mrb[0].mxu0 %v8630
        %v8919 = vpop.f32.mrb[0].mxu0
        %v8920 = vadd.f32 %v8407, %v8919
        %v8921 = vpop.f32.mrb[0].mxu0
        %v8922 = vadd.f32 %v8411, %v8921
        %v8923 = vpop.f32.mrb[0].mxu0
        %v8924 = vadd.f32 %v8407, %v8923
        %v8925 = vpop.f32.mrb[0].mxu0
        %v8926 = vadd.f32 %v8411, %v8925
        %8927 = vmatprep.mubr.bf16.mxu0 0
        %8928 = vmatmul.mubr.bf16.gmra.mrb[0].mxu0 %v8633
        %v8929 = vpop.f32.mrb[0].mxu0
        %v8930 = vadd.f32 %v8407, %v8929
        %v8931 = vpop.f32.mrb[0].mxu0
        %v8932 = vadd.f32 %v8411, %v8931
        %v8933 = vpop.f32.mrb[0].mxu0
        %v8934 = vadd.f32 %v8407, %v8933
        %v8935 = vpop.f32.mrb[0].mxu0
        %v8936 = vadd.f32 %v8411, %v8935
        %8937 = vmatprep.mubr.bf16.mxu0 0
        %8938 = vmatmul.mubr.bf16.gmra.mrb[0].mxu0 %v8636
        %v8939 = vpop.f32.mrb[0].mxu0
        %v8940 = vadd.f32 %v8407, %v8939
        %v8941 = vpop.f32.mrb[0].mxu0
        %v8942 = vadd.f32 %v8411, %v8941
        %v8943 = vpop.f32.mrb[0].mxu0
        %v8944 = vadd.f32 %v8407, %v8943
        %v8945 = vpop.f32.mrb[0].mxu0
        %v8946 = vadd.f32 %v8411, %v8945
        %8947 = vmatprep.mubr.bf16.mxu0 0
        %8948 = vmatmul.mubr.bf16.gmra.mrb[0].mxu0 %v8639
        %v8949 = vpop.f32.mrb[0].mxu0
        %v8950 = vadd.f32 %v8407, %v8949
        %v8951 = vpop.f32.mrb[0].mxu0
        %v8952 = vadd.f32 %v8411, %v8951
        %v8953 = vpop.f32.mrb[0].mxu0
        %v8954 = vadd.f32 %v8407, %v8953
        %v8955 = vpop.f32.mrb[0].mxu0
        %v8956 = vadd.f32 %v8411, %v8955
        %8957 = vdwg.mxu0
        %8958 = vmatprep.subr.bf16.mxu0 %v8390
        %8959 = vmatpush1.bf16.msra.mxu0 %v8389
        %8960 = vmatprep.subr.bf16.mxu0 %v8394
        %8961 = vmatpush1.bf16.msra.mxu0 %v8393
        %8962 = vmatprep.subr.bf16.mxu0 %v8398
        %8963 = vmatpush1.bf16.msra.mxu0 %v8397
        %8964 = vmatprep.subr.bf16.mxu0 %v8653
        %8965 = vmatpush1.bf16.msra.mxu0 %v8650
        %8966 = vmatprep.subr.bf16.mxu0 0
        %8967 = vmatpush1.bf16.msra.mxu0 0
        %8968 = vmatprep.subr.bf16.mxu0 0
        %8969 = vmatpush1.bf16.msra.mxu0 0
        %8970 = vmatprep.subr.bf16.mxu0 0
        %8971 = vmatpush1.bf16.msra.mxu0 0
        %8972 = vmatprep.subr.bf16.mxu0 0
        %8973 = vmatpush1.bf16.msra.mxu0 0
        %8974 = vmatprep.subr.bf16.mxu0 0
        %8975 = vmatpush1.bf16.msra.mxu0 0
        %8976 = vmatprep.subr.bf16.mxu0 0
        %8977 = vmatpush1.bf16.msra.mxu0 0
        %8978 = vmatprep.subr.bf16.mxu0 0
        %8979 = vmatpush1.bf16.msra.mxu0 0
        %8980 = vmatprep.subr.bf16.mxu0 0
        %8981 = vmatpush1.bf16.msra.mxu0 0
        %8982 = vmatprep.subr.bf16.mxu0 0
        %8983 = vmatpush1.bf16.msra.mxu0 0
        %8984 = vmatprep.subr.bf16.mxu0 0
        %8985 = vmatpush1.bf16.msra.mxu0 0
        %8986 = vmatprep.subr.bf16.mxu0 0
        %8987 = vmatpush1.bf16.msra.mxu0 0
        %8988 = vmatprep.subr.bf16.mxu0 0
        %8989 = vmatpush1.bf16.msra.mxu0 0
        %8990 = vmatprep.mubr.bf16.mxu0 0
        %8991 = vmatmul.mubr.bf16.gmra.mrb[0].mxu0 %v8561
        %v8992 = vpop.f32.mrb[0].mxu0
        %v8993 = vadd.f32 %v8415, %v8992
        %v8994 = vpop.f32.mrb[0].mxu0
        %v8995 = vadd.f32 %v8419, %v8994
        %v8996 = vpop.f32.mrb[0].mxu0
        %v8997 = vadd.f32 %v8415, %v8996
        %v8998 = vpop.f32.mrb[0].mxu0
        %v8999 = vadd.f32 %v8419, %v8998
        %9000 = vmatprep.mubr.bf16.mxu0 0
        %9001 = vmatmul.mubr.bf16.gmra.mrb[0].mxu0 %v8564
        %v9002 = vpop.f32.mrb[0].mxu0
        %v9003 = vadd.f32 %v8415, %v9002
        %v9004 = vpop.f32.mrb[0].mxu0
        %v9005 = vadd.f32 %v8419, %v9004
        %v9006 = vpop.f32.mrb[0].mxu0
        %v9007 = vadd.f32 %v8415, %v9006
        %v9008 = vpop.f32.mrb[0].mxu0
        %v9009 = vadd.f32 %v8419, %v9008
        %9010 = vmatprep.mubr.bf16.mxu0 0
        %9011 = vmatmul.mubr.bf16.gmra.mrb[0].mxu0 %v8567
        %v9012 = vpop.f32.mrb[0].mxu0
        %v9013 = vadd.f32 %v8415, %v9012
        %v9014 = vpop.f32.mrb[0].mxu0
        %v9015 = vadd.f32 %v8419, %v9014
        %v9016 = vpop.f32.mrb[0].mxu0
        %v9017 = vadd.f32 %v8415, %v9016
        %v9018 = vpop.f32.mrb[0].mxu0
        %v9019 = vadd.f32 %v8419, %v9018
        %9020 = vmatprep.mubr.bf16.mxu0 0
        %9021 = vmatmul.mubr.bf16.gmra.mrb[0].mxu0 %v8570
        %v9022 = vpop.f32.mrb[0].mxu0
        %v9023 = vadd.f32 %v8415, %v9022
        %v9024 = vpop.f32.mrb[0].mxu0
        %v9025 = vadd.f32 %v8419, %v9024
        %v9026 = vpop.f32.mrb[0].mxu0
        %v9027 = vadd.f32 %v8415, %v9026
        %v9028 = vpop.f32.mrb[0].mxu0
        %v9029 = vadd.f32 %v8419, %v9028
        %9030 = vmatprep.mubr.bf16.mxu0 0
        %9031 = vmatmul.mubr.bf16.gmra.mrb[0].mxu0 %v8573
        %v9032 = vpop.f32.mrb[0].mxu0
        %v9033 = vadd.f32 %v8415, %v9032
        %v9034 = vpop.f32.mrb[0].mxu0
        %v9035 = vadd.f32 %v8419, %v9034
        %v9036 = vpop.f32.mrb[0].mxu0
        %v9037 = vadd.f32 %v8415, %v9036
        %v9038 = vpop.f32.mrb[0].mxu0
        %v9039 = vadd.f32 %v8419, %v9038
        %9040 = vmatprep.mubr.bf16.mxu0 0
        %9041 = vmatmul.mubr.bf16.gmra.mrb[0].mxu0 %v8576
        %v9042 = vpop.f32.mrb[0].mxu0
        %v9043 = vadd.f32 %v8415, %v9042
        %v9044 = vpop.f32.mrb[0].mxu0
        %v9045 = vadd.f32 %v8419, %v9044
        %v9046 = vpop.f32.mrb[0].mxu0
        %v9047 = vadd.f32 %v8415, %v9046
        %v9048 = vpop.f32.mrb[0].mxu0
        %v9049 = vadd.f32 %v8419, %v9048
        %9050 = vmatprep.mubr.bf16.mxu0 0
        %9051 = vmatmul.mubr.bf16.gmra.mrb[0].mxu0 %v8579
        %v9052 = vpop.f32.mrb[0].mxu0
        %v9053 = vadd.f32 %v8415, %v9052
        %v9054 = vpop.f32.mrb[0].mxu0
        %v9055 = vadd.f32 %v8419, %v9054
        %v9056 = vpop.f32.mrb[0].mxu0
        %v9057 = vadd.f32 %v8415, %v9056
        %v9058 = vpop.f32.mrb[0].mxu0
        %v9059 = vadd.f32 %v8419, %v9058
        %9060 = vmatprep.mubr.bf16.mxu0 0
        %9061 = vmatmul.mubr.bf16.gmra.mrb[0].mxu0 %v8582
        %v9062 = vpop.f32.mrb[0].mxu0
        %v9063 = vadd.f32 %v8415, %v9062
        %v9064 = vpop.f32.mrb[0].mxu0
        %v9065 = vadd.f32 %v8419, %v9064
        %v9066 = vpop.f32.mrb[0].mxu0
        %v9067 = vadd.f32 %v8415, %v9066
        %v9068 = vpop.f32.mrb[0].mxu0
        %v9069 = vadd.f32 %v8419, %v9068
        %9070 = vmatprep.mubr.bf16.mxu0 0
        %9071 = vmatmul.mubr.bf16.gmra.mrb[0].mxu0 %v8585
        %v9072 = vpop.f32.mrb[0].mxu0
        %v9073 = vadd.f32 %v8415, %v9072
        %v9074 = vpop.f32.mrb[0].mxu0
        %v9075 = vadd.f32 %v8419, %v9074
        %v9076 = vpop.f32.mrb[0].mxu0
        %v9077 = vadd.f32 %v8415, %v9076
        %v9078 = vpop.f32.mrb[0].mxu0
        %v9079 = vadd.f32 %v8419, %v9078
        %9080 = vmatprep.mubr.bf16.mxu0 0
        %9081 = vmatmul.mubr.bf16.gmra.mrb[0].mxu0 %v8588
        %v9082 = vpop.f32.mrb[0].mxu0
        %v9083 = vadd.f32 %v8415, %v9082
        %v9084 = vpop.f32.mrb[0].mxu0
        %v9085 = vadd.f32 %v8419, %v9084
        %v9086 = vpop.f32.mrb[0].mxu0
        %v9087 = vadd.f32 %v8415, %v9086
        %v9088 = vpop.f32.mrb[0].mxu0
        %v9089 = vadd.f32 %v8419, %v9088
        %9090 = vmatprep.mubr.bf16.mxu0 0
        %9091 = vmatmul.mubr.bf16.gmra.mrb[0].mxu0 %v8591
        %v9092 = vpop.f32.mrb[0].mxu0
        %v9093 = vadd.f32 %v8415, %v9092
        %v9094 = vpop.f32.mrb[0].mxu0
        %v9095 = vadd.f32 %v8419, %v9094
        %v9096 = vpop.f32.mrb[0].mxu0
        %v9097 = vadd.f32 %v8415, %v9096
        %v9098 = vpop.f32.mrb[0].mxu0
        %v9099 = vadd.f32 %v8419, %v9098
        %9100 = vmatprep.mubr.bf16.mxu0 0
        %9101 = vmatmul.mubr.bf16.gmra.mrb[0].mxu0 %v8594
        %v9102 = vpop.f32.mrb[0].mxu0
        %v9103 = vadd.f32 %v8415, %v9102
        %v9104 = vpop.f32.mrb[0].mxu0
        %v9105 = vadd.f32 %v8419, %v9104
        %v9106 = vpop.f32.mrb[0].mxu0
        %v9107 = vadd.f32 %v8415, %v9106
        %v9108 = vpop.f32.mrb[0].mxu0
        %v9109 = vadd.f32 %v8419, %v9108
        %9110 = vmatprep.mubr.bf16.mxu0 0
        %9111 = vmatmul.mubr.bf16.gmra.mrb[0].mxu0 %v8597
        %v9112 = vpop.f32.mrb[0].mxu0
        %v9113 = vadd.f32 %v8415, %v9112
        %v9114 = vpop.f32.mrb[0].mxu0
        %v9115 = vadd.f32 %v8419, %v9114
        %v9116 = vpop.f32.mrb[0].mxu0
        %v9117 = vadd.f32 %v8415, %v9116
        %v9118 = vpop.f32.mrb[0].mxu0
        %v9119 = vadd.f32 %v8419, %v9118
        %9120 = vmatprep.mubr.bf16.mxu0 0
        %9121 = vmatmul.mubr.bf16.gmra.mrb[0].mxu0 %v8600
        %v9122 = vpop.f32.mrb[0].mxu0
        %v9123 = vadd.f32 %v8415, %v9122
        %v9124 = vpop.f32.mrb[0].mxu0
        %v9125 = vadd.f32 %v8419, %v9124
        %v9126 = vpop.f32.mrb[0].mxu0
        %v9127 = vadd.f32 %v8415, %v9126
        %v9128 = vpop.f32.mrb[0].mxu0
        %v9129 = vadd.f32 %v8419, %v9128
        %9130 = vmatprep.mubr.bf16.mxu0 0
        %9131 = vmatmul.mubr.bf16.gmra.mrb[0].mxu0 %v8603
        %v9132 = vpop.f32.mrb[0].mxu0
        %v9133 = vadd.f32 %v8415, %v9132
        %v9134 = vpop.f32.mrb[0].mxu0
        %v9135 = vadd.f32 %v8419, %v9134
        %v9136 = vpop.f32.mrb[0].mxu0
        %v9137 = vadd.f32 %v8415, %v9136
        %v9138 = vpop.f32.mrb[0].mxu0
        %v9139 = vadd.f32 %v8419, %v9138
        %9140 = vmatprep.mubr.bf16.mxu0 0
        %9141 = vmatmul.mubr.bf16.gmra.mrb[0].mxu0 %v8606
        %v9142 = vpop.f32.mrb[0].mxu0
        %v9143 = vadd.f32 %v8415, %v9142
        %v9144 = vpop.f32.mrb[0].mxu0
        %v9145 = vadd.f32 %v8419, %v9144
        %v9146 = vpop.f32.mrb[0].mxu0
        %v9147 = vadd.f32 %v8415, %v9146
        %v9148 = vpop.f32.mrb[0].mxu0
        %v9149 = vadd.f32 %v8419, %v9148
        %9150 = vmatprep.mubr.bf16.mxu0 0
        %9151 = vmatmul.mubr.bf16.gmra.mrb[0].mxu0 %v8609
        %v9152 = vpop.f32.mrb[0].mxu0
        %v9153 = vadd.f32 %v8415, %v9152
        %v9154 = vpop.f32.mrb[0].mxu0
        %v9155 = vadd.f32 %v8419, %v9154
        %v9156 = vpop.f32.mrb[0].mxu0
        %v9157 = vadd.f32 %v8415, %v9156
        %v9158 = vpop.f32.mrb[0].mxu0
        %v9159 = vadd.f32 %v8419, %v9158
        %9160 = vmatprep.mubr.bf16.mxu0 0
        %9161 = vmatmul.mubr.bf16.gmra.mrb[0].mxu0 %v8612
        %v9162 = vpop.f32.mrb[0].mxu0
        %v9163 = vadd.f32 %v8415, %v9162
        %v9164 = vpop.f32.mrb[0].mxu0
        %v9165 = vadd.f32 %v8419, %v9164
        %v9166 = vpop.f32.mrb[0].mxu0
        %v9167 = vadd.f32 %v8415, %v9166
        %v9168 = vpop.f32.mrb[0].mxu0
        %v9169 = vadd.f32 %v8419, %v9168
        %9170 = vmatprep.mubr.bf16.mxu0 0
        %9171 = vmatmul.mubr.bf16.gmra.mrb[0].mxu0 %v8615
        %v9172 = vpop.f32.mrb[0].mxu0
        %v9173 = vadd.f32 %v8415, %v9172
        %v9174 = vpop.f32.mrb[0].mxu0
        %v9175 = vadd.f32 %v8419, %v9174
        %v9176 = vpop.f32.mrb[0].mxu0
        %v9177 = vadd.f32 %v8415, %v9176
        %v9178 = vpop.f32.mrb[0].mxu0
        %v9179 = vadd.f32 %v8419, %v9178
        %9180 = vmatprep.mubr.bf16.mxu0 0
        %9181 = vmatmul.mubr.bf16.gmra.mrb[0].mxu0 %v8618
        %v9182 = vpop.f32.mrb[0].mxu0
        %v9183 = vadd.f32 %v8415, %v9182
        %v9184 = vpop.f32.mrb[0].mxu0
        %v9185 = vadd.f32 %v8419, %v9184
        %v9186 = vpop.f32.mrb[0].mxu0
        %v9187 = vadd.f32 %v8415, %v9186
        %v9188 = vpop.f32.mrb[0].mxu0
        %v9189 = vadd.f32 %v8419, %v9188
        %9190 = vmatprep.mubr.bf16.mxu0 0
        %9191 = vmatmul.mubr.bf16.gmra.mrb[0].mxu0 %v8621
        %v9192 = vpop.f32.mrb[0].mxu0
        %v9193 = vadd.f32 %v8415, %v9192
        %v9194 = vpop.f32.mrb[0].mxu0
        %v9195 = vadd.f32 %v8419, %v9194
        %v9196 = vpop.f32.mrb[0].mxu0
        %v9197 = vadd.f32 %v8415, %v9196
        %v9198 = vpop.f32.mrb[0].mxu0
        %v9199 = vadd.f32 %v8419, %v9198
        %9200 = vmatprep.mubr.bf16.mxu0 0
        %9201 = vmatmul.mubr.bf16.gmra.mrb[0].mxu0 %v8624
        %v9202 = vpop.f32.mrb[0].mxu0
        %v9203 = vadd.f32 %v8415, %v9202
        %v9204 = vpop.f32.mrb[0].mxu0
        %v9205 = vadd.f32 %v8419, %v9204
        %v9206 = vpop.f32.mrb[0].mxu0
        %v9207 = vadd.f32 %v8415, %v9206
        %v9208 = vpop.f32.mrb[0].mxu0
        %v9209 = vadd.f32 %v8419, %v9208
        %9210 = vmatprep.mubr.bf16.mxu0 0
        %9211 = vmatmul.mubr.bf16.gmra.mrb[0].mxu0 %v8627
        %v9212 = vpop.f32.mrb[0].mxu0
        %v9213 = vadd.f32 %v8415, %v9212
        %v9214 = vpop.f32.mrb[0].mxu0
        %v9215 = vadd.f32 %v8419, %v9214
        %v9216 = vpop.f32.mrb[0].mxu0
        %v9217 = vadd.f32 %v8415, %v9216
        %v9218 = vpop.f32.mrb[0].mxu0
        %v9219 = vadd.f32 %v8419, %v9218
        %9220 = vmatprep.mubr.bf16.mxu0 0
        %9221 = vmatmul.mubr.bf16.gmra.mrb[0].mxu0 %v8630
        %v9222 = vpop.f32.mrb[0].mxu0
        %v9223 = vadd.f32 %v8415, %v9222
        %v9224 = vpop.f32.mrb[0].mxu0
        %v9225 = vadd.f32 %v8419, %v9224
        %v9226 = vpop.f32.mrb[0].mxu0
        %v9227 = vadd.f32 %v8415, %v9226
        %v9228 = vpop.f32.mrb[0].mxu0
        %v9229 = vadd.f32 %v8419, %v9228
        %9230 = vmatprep.mubr.bf16.mxu0 0
        %9231 = vmatmul.mubr.bf16.gmra.mrb[0].mxu0 %v8633
        %v9232 = vpop.f32.mrb[0].mxu0
        %v9233 = vadd.f32 %v8415, %v9232
        %v9234 = vpop.f32.mrb[0].mxu0
        %v9235 = vadd.f32 %v8419, %v9234
        %v9236 = vpop.f32.mrb[0].mxu0
        %v9237 = vadd.f32 %v8415, %v9236
        %v9238 = vpop.f32.mrb[0].mxu0
        %v9239 = vadd.f32 %v8419, %v9238
        %9240 = vmatprep.mubr.bf16.mxu0 0
        %9241 = vmatmul.mubr.bf16.gmra.mrb[0].mxu0 %v8636
        %v9242 = vpop.f32.mrb[0].mxu0
        %v9243 = vadd.f32 %v8415, %v9242
        %v9244 = vpop.f32.mrb[0].mxu0
        %v9245 = vadd.f32 %v8419, %v9244
        %v9246 = vpop.f32.mrb[0].mxu0
        %v9247 = vadd.f32 %v8415, %v9246
        %v9248 = vpop.f32.mrb[0].mxu0
        %v9249 = vadd.f32 %v8419, %v9248
        %9250 = vmatprep.mubr.bf16.mxu0 0
        %9251 = vmatmul.mubr.bf16.gmra.mrb[0].mxu0 %v8639
        %v9252 = vpop.f32.mrb[0].mxu0
        %v9253 = vadd.f32 %v8415, %v9252
        %v9254 = vpop.f32.mrb[0].mxu0
        %v9255 = vadd.f32 %v8419, %v9254
        %v9256 = vpop.f32.mrb[0].mxu0
        %v9257 = vadd.f32 %v8415, %v9256
        %v9258 = vpop.f32.mrb[0].mxu0
        %v9259 = vadd.f32 %v8419, %v9258
        %9260 = vdwg.mxu0
        %v9261 = vpack.c.bf16 %v8694, %v8690
        %v9262 = vpack.c.bf16 %v8696, %v8692
        %v9263 = vpack.c.bf16 %v8997, %v8993
        %v9264 = vpack.c.bf16 %v8999, %v8995
        %v9265 = vpack.c.bf16 %v8704, %v8700
        %v9266 = vpack.c.bf16 %v8706, %v8702
        %v9267 = vpack.c.bf16 %v9007, %v9003
        %v9268 = vpack.c.bf16 %v9009, %v9005
        %v9269 = vpack.c.bf16 %v8714, %v8710
        %v9270 = vpack.c.bf16 %v8716, %v8712
        %v9271 = vpack.c.bf16 %v9017, %v9013
        %v9272 = vpack.c.bf16 %v9019, %v9015
        %v9273 = vpack.c.bf16 %v8724, %v8720
        %v9274 = vpack.c.bf16 %v8726, %v8722
        %v9275 = vpack.c.bf16 %v9027, %v9023
        %v9276 = vpack.c.bf16 %v9029, %v9025
        %v9277 = vpack.c.bf16 %v8734, %v8730
        %v9278 = vpack.c.bf16 %v8736, %v8732
        %v9279 = vpack.c.bf16 %v9037, %v9033
        %v9280 = vpack.c.bf16 %v9039, %v9035
        %v9281 = vpack.c.bf16 %v8744, %v8740
        %v9282 = vpack.c.bf16 %v8746, %v8742
        %v9283 = vpack.c.bf16 %v9047, %v9043
        %v9284 = vpack.c.bf16 %v9049, %v9045
        %v9285 = vpack.c.bf16 %v8754, %v8750
        %v9286 = vpack.c.bf16 %v8756, %v8752
        %v9287 = vpack.c.bf16 %v9057, %v9053
        %v9288 = vpack.c.bf16 %v9059, %v9055
        %v9289 = vpack.c.bf16 %v8764, %v8760
        %v9290 = vpack.c.bf16 %v8766, %v8762
        %v9291 = vpack.c.bf16 %v9067, %v9063
        %v9292 = vpack.c.bf16 %v9069, %v9065
        %v9293 = vpack.c.bf16 %v8774, %v8770
        %v9294 = vpack.c.bf16 %v8776, %v8772
        %v9295 = vpack.c.bf16 %v9077, %v9073
        %v9296 = vpack.c.bf16 %v9079, %v9075
        %v9297 = vpack.c.bf16 %v8784, %v8780
        %v9298 = vpack.c.bf16 %v8786, %v8782
        %v9299 = vpack.c.bf16 %v9087, %v9083
        %v9300 = vpack.c.bf16 %v9089, %v9085
        %v9301 = vpack.c.bf16 %v8794, %v8790
        %v9302 = vpack.c.bf16 %v8796, %v8792
        %v9303 = vpack.c.bf16 %v9097, %v9093
        %v9304 = vpack.c.bf16 %v9099, %v9095
        %v9305 = vpack.c.bf16 %v8804, %v8800
        %v9306 = vpack.c.bf16 %v8806, %v8802
        %v9307 = vpack.c.bf16 %v9107, %v9103
        %v9308 = vpack.c.bf16 %v9109, %v9105
        %v9309 = vpack.c.bf16 %v8814, %v8810
        %v9310 = vpack.c.bf16 %v8816, %v8812
        %v9311 = vpack.c.bf16 %v9117, %v9113
        %v9312 = vpack.c.bf16 %v9119, %v9115
        %v9313 = vpack.c.bf16 %v8824, %v8820
        %v9314 = vpack.c.bf16 %v8826, %v8822
        %v9315 = vpack.c.bf16 %v9127, %v9123
        %v9316 = vpack.c.bf16 %v9129, %v9125
        %v9317 = vpack.c.bf16 %v8834, %v8830
        %v9318 = vpack.c.bf16 %v8836, %v8832
        %v9319 = vpack.c.bf16 %v9137, %v9133
        %v9320 = vpack.c.bf16 %v9139, %v9135
        %v9321 = vpack.c.bf16 %v8844, %v8840
        %v9322 = vpack.c.bf16 %v8846, %v8842
        %v9323 = vpack.c.bf16 %v9147, %v9143
        %v9324 = vpack.c.bf16 %v9149, %v9145
        %v9325 = vpack.c.bf16 %v8854, %v8850
        %v9326 = vpack.c.bf16 %v8856, %v8852
        %v9327 = vpack.c.bf16 %v9157, %v9153
        %v9328 = vpack.c.bf16 %v9159, %v9155
        %v9329 = vpack.c.bf16 %v8864, %v8860
        %v9330 = vpack.c.bf16 %v8866, %v8862
        %v9331 = vpack.c.bf16 %v9167, %v9163
        %v9332 = vpack.c.bf16 %v9169, %v9165
        %v9333 = vpack.c.bf16 %v8874, %v8870
        %v9334 = vpack.c.bf16 %v8876, %v8872
        %v9335 = vpack.c.bf16 %v9177, %v9173
        %v9336 = vpack.c.bf16 %v9179, %v9175
        %v9337 = vpack.c.bf16 %v8884, %v8880
        %v9338 = vpack.c.bf16 %v8886, %v8882
        %v9339 = vpack.c.bf16 %v9187, %v9183
        %v9340 = vpack.c.bf16 %v9189, %v9185
        %v9341 = vpack.c.bf16 %v8894, %v8890
        %v9342 = vpack.c.bf16 %v8896, %v8892
        %v9343 = vpack.c.bf16 %v9197, %v9193
        %v9344 = vpack.c.bf16 %v9199, %v9195
        %v9345 = vpack.c.bf16 %v8904, %v8900
        %v9346 = vpack.c.bf16 %v8906, %v8902
        %v9347 = vpack.c.bf16 %v9207, %v9203
        %v9348 = vpack.c.bf16 %v9209, %v9205
        %v9349 = vpack.c.bf16 %v8914, %v8910
        %v9350 = vpack.c.bf16 %v8916, %v8912
        %v9351 = vpack.c.bf16 %v9217, %v9213
        %v9352 = vpack.c.bf16 %v9219, %v9215
        %v9353 = vpack.c.bf16 %v8924, %v8920
        %v9354 = vpack.c.bf16 %v8926, %v8922
        %v9355 = vpack.c.bf16 %v9227, %v9223
        %v9356 = vpack.c.bf16 %v9229, %v9225
        %v9357 = vpack.c.bf16 %v8934, %v8930
        %v9358 = vpack.c.bf16 %v8936, %v8932
        %v9359 = vpack.c.bf16 %v9237, %v9233
        %v9360 = vpack.c.bf16 %v9239, %v9235
        %v9361 = vpack.c.bf16 %v8944, %v8940
        %v9362 = vpack.c.bf16 %v8946, %v8942
        %v9363 = vpack.c.bf16 %v9247, %v9243
        %v9364 = vpack.c.bf16 %v9249, %v9245
        %v9365 = vpack.c.bf16 %v8954, %v8950
        %v9366 = vpack.c.bf16 %v8956, %v8952
        %v9367 = vpack.c.bf16 %v9257, %v9253
        %v9368 = vpack.c.bf16 %v9259, %v9255
        %v9370 = vlaneseq
        %v9371 = vshrl.u32 %v9370, 7
        %v9372 = vsub.s32 0, %v9371
        %v9373 = vrot.slane %v1393, %v9372
        %v9439 = vunpack.c.l.b16 %v1329
        %v9440 = vunpack.c.l.b16 %v1330
        %v9441 = vunpack.c.l.b16 %v1331
        %v9442 = vunpack.c.l.b16 %v1332
        %v9443 = vunpack.c.l.b16 %v1333
        %v9444 = vunpack.c.l.b16 %v1334
        %v9445 = vunpack.c.l.b16 %v1335
        %v9446 = vunpack.c.l.b16 %v1336
        %v9447 = vunpack.c.l.b16 %v1337
        %v9448 = vunpack.c.l.b16 %v1338
        %v9449 = vunpack.c.l.b16 %v1339
        %v9450 = vunpack.c.l.b16 %v1340
        %v9451 = vunpack.c.l.b16 %v1341
        %v9452 = vunpack.c.l.b16 %v1342
        %v9453 = vunpack.c.l.b16 %v1343
        %v9454 = vunpack.c.l.b16 %v1344
        %v9455 = vunpack.c.l.b16 %v1345
        %v9456 = vunpack.c.l.b16 %v1346
        %v9457 = vunpack.c.l.b16 %v1347
        %v9458 = vunpack.c.l.b16 %v1348
        %v9459 = vunpack.c.l.b16 %v1349
        %v9460 = vunpack.c.l.b16 %v1350
        %v9461 = vunpack.c.l.b16 %v1351
        %v9462 = vunpack.c.l.b16 %v1352
        %v9463 = vunpack.c.l.b16 %v1353
        %v9464 = vunpack.c.l.b16 %v1354
        %v9465 = vunpack.c.l.b16 %v1355
        %v9466 = vunpack.c.l.b16 %v1356
        %v9467 = vunpack.c.l.b16 %v1357
        %v9468 = vunpack.c.l.b16 %v1358
        %v9469 = vunpack.c.l.b16 %v1359
        %v9470 = vunpack.c.l.b16 %v1360
        %v9471 = vunpack.c.l.b16 %v1361
        %v9472 = vunpack.c.l.b16 %v1362
        %v9473 = vunpack.c.l.b16 %v1363
        %v9474 = vunpack.c.l.b16 %v1364
        %v9475 = vunpack.c.l.b16 %v1365
        %v9476 = vunpack.c.l.b16 %v1366
        %v9477 = vunpack.c.l.b16 %v1367
        %v9478 = vunpack.c.l.b16 %v1368
        %v9479 = vunpack.c.l.b16 %v1369
        %v9480 = vunpack.c.l.b16 %v1370
        %v9481 = vunpack.c.l.b16 %v1371
        %v9482 = vunpack.c.l.b16 %v1372
        %v9483 = vunpack.c.l.b16 %v1373
        %v9484 = vunpack.c.l.b16 %v1374
        %v9485 = vunpack.c.l.b16 %v1375
        %v9486 = vunpack.c.l.b16 %v1376
        %v9487 = vunpack.c.l.b16 %v1377
        %v9488 = vunpack.c.l.b16 %v1378
        %v9489 = vunpack.c.l.b16 %v1379
        %v9490 = vunpack.c.l.b16 %v1380
        %v9491 = vunpack.c.l.b16 %v1381
        %v9492 = vunpack.c.l.b16 %v1382
        %v9493 = vunpack.c.l.b16 %v1383
        %v9494 = vunpack.c.l.b16 %v1384
        %v9495 = vunpack.c.l.b16 %v1385
        %v9496 = vunpack.c.l.b16 %v1386
        %v9497 = vunpack.c.l.b16 %v1387
        %v9498 = vunpack.c.l.b16 %v1388
        %v9499 = vunpack.c.l.b16 %v1389
        %v9500 = vunpack.c.l.b16 %v1390
        %v9501 = vunpack.c.l.b16 %v1391
        %v9502 = vunpack.c.l.b16 %v1392
        %v9503 = vpack.c.b16 %v9440, %v9439
        %v9504 = vpack.c.b16 %v9442, %v9441
        %v9505 = vpack.c.b16 %v9444, %v9443
        %v9506 = vpack.c.b16 %v9446, %v9445
        %v9507 = vpack.c.b16 %v9448, %v9447
        %v9508 = vpack.c.b16 %v9450, %v9449
        %v9509 = vpack.c.b16 %v9452, %v9451
        %v9510 = vpack.c.b16 %v9454, %v9453
        %v9511 = vpack.c.b16 %v9456, %v9455
        %v9512 = vpack.c.b16 %v9458, %v9457
        %v9513 = vpack.c.b16 %v9460, %v9459
        %v9514 = vpack.c.b16 %v9462, %v9461
        %v9515 = vpack.c.b16 %v9464, %v9463
        %v9516 = vpack.c.b16 %v9466, %v9465
        %v9517 = vpack.c.b16 %v9468, %v9467
        %v9518 = vpack.c.b16 %v9470, %v9469
        %v9519 = vpack.c.b16 %v9472, %v9471
        %v9520 = vpack.c.b16 %v9474, %v9473
        %v9521 = vpack.c.b16 %v9476, %v9475
        %v9522 = vpack.c.b16 %v9478, %v9477
        %v9523 = vpack.c.b16 %v9480, %v9479
        %v9524 = vpack.c.b16 %v9482, %v9481
        %v9525 = vpack.c.b16 %v9484, %v9483
        %v9526 = vpack.c.b16 %v9486, %v9485
        %v9527 = vpack.c.b16 %v9488, %v9487
        %v9528 = vpack.c.b16 %v9490, %v9489
        %v9529 = vpack.c.b16 %v9492, %v9491
        %v9530 = vpack.c.b16 %v9494, %v9493
        %v9531 = vpack.c.b16 %v9496, %v9495
        %v9532 = vpack.c.b16 %v9498, %v9497
        %v9533 = vpack.c.b16 %v9500, %v9499
        %v9534 = vpack.c.b16 %v9502, %v9501
        %9567 = vmatprep.subr.bf16.mxu0 0
        %9568 = vmatpush1.bf16.msra.mxu0 %v9503
        %9569 = vmatprep.subr.bf16.mxu0 0
        %9570 = vmatpush1.bf16.msra.mxu0 %v9504
        %9571 = vmatprep.subr.bf16.mxu0 0
        %9572 = vmatpush1.bf16.msra.mxu0 %v9505
        %9573 = vmatprep.subr.bf16.mxu0 0
        %9574 = vmatpush1.bf16.msra.mxu0 %v9506
        %9575 = vmatprep.subr.bf16.mxu0 0
        %9576 = vmatpush1.bf16.msra.mxu0 %v9507
        %9577 = vmatprep.subr.bf16.mxu0 0
        %9578 = vmatpush1.bf16.msra.mxu0 %v9508
        %9579 = vmatprep.subr.bf16.mxu0 0
        %9580 = vmatpush1.bf16.msra.mxu0 %v9509
        %9581 = vmatprep.subr.bf16.mxu0 0
        %9582 = vmatpush1.bf16.msra.mxu0 %v9510
        %9583 = vmatprep.subr.bf16.mxu0 0
        %9584 = vmatpush1.bf16.msra.mxu0 %v9511
        %9585 = vmatprep.subr.bf16.mxu0 0
        %9586 = vmatpush1.bf16.msra.mxu0 %v9512
        %9587 = vmatprep.subr.bf16.mxu0 0
        %9588 = vmatpush1.bf16.msra.mxu0 %v9513
        %9589 = vmatprep.subr.bf16.mxu0 0
        %9590 = vmatpush1.bf16.msra.mxu0 %v9514
        %9591 = vmatprep.subr.bf16.mxu0 0
        %9592 = vmatpush1.bf16.msra.mxu0 %v9515
        %9593 = vmatprep.subr.bf16.mxu0 0
        %9594 = vmatpush1.bf16.msra.mxu0 %v9516
        %9595 = vmatprep.subr.bf16.mxu0 0
        %9596 = vmatpush1.bf16.msra.mxu0 %v9517
        %9597 = vmatprep.subr.bf16.mxu0 0
        %9598 = vmatpush1.bf16.msra.mxu0 %v9518
        %9599 = vmatprep.mubr.bf16.mxu0 %v9262
        %9600 = vmatmul.mubr.bf16.gmra.mrb[0].mxu0 %v9261
        %v9601 = vpop.f32.mrb[0].mxu0
        %v9602 = vadd.f32 %v9373, %v9601
        %v9603 = vpop.f32.mrb[0].mxu0
        %v9604 = vpop.f32.mrb[0].mxu0
        %v9605 = vadd.f32 %v9373, %v9604
        %v9606 = vpop.f32.mrb[0].mxu0
        %9607 = vmatprep.mubr.bf16.mxu0 %v9266
        %9608 = vmatmul.mubr.bf16.gmra.mrb[0].mxu0 %v9265
        %v9609 = vpop.f32.mrb[0].mxu0
        %v9610 = vadd.f32 %v9373, %v9609
        %v9611 = vpop.f32.mrb[0].mxu0
        %v9612 = vpop.f32.mrb[0].mxu0
        %v9613 = vadd.f32 %v9373, %v9612
        %v9614 = vpop.f32.mrb[0].mxu0
        %9615 = vmatprep.mubr.bf16.mxu0 %v9270
        %9616 = vmatmul.mubr.bf16.gmra.mrb[0].mxu0 %v9269
        %v9617 = vpop.f32.mrb[0].mxu0
        %v9618 = vadd.f32 %v9373, %v9617
        %v9619 = vpop.f32.mrb[0].mxu0
        %v9620 = vpop.f32.mrb[0].mxu0
        %v9621 = vadd.f32 %v9373, %v9620
        %v9622 = vpop.f32.mrb[0].mxu0
        %9623 = vmatprep.mubr.bf16.mxu0 %v9274
        %9624 = vmatmul.mubr.bf16.gmra.mrb[0].mxu0 %v9273
        %v9625 = vpop.f32.mrb[0].mxu0
        %v9626 = vadd.f32 %v9373, %v9625
        %v9627 = vpop.f32.mrb[0].mxu0
        %v9628 = vpop.f32.mrb[0].mxu0
        %v9629 = vadd.f32 %v9373, %v9628
        %v9630 = vpop.f32.mrb[0].mxu0
        %9631 = vmatprep.mubr.bf16.mxu0 %v9278
        %9632 = vmatmul.mubr.bf16.gmra.mrb[0].mxu0 %v9277
        %v9633 = vpop.f32.mrb[0].mxu0
        %v9634 = vadd.f32 %v9373, %v9633
        %v9635 = vpop.f32.mrb[0].mxu0
        %v9636 = vpop.f32.mrb[0].mxu0
        %v9637 = vadd.f32 %v9373, %v9636
        %v9638 = vpop.f32.mrb[0].mxu0
        %9639 = vmatprep.mubr.bf16.mxu0 %v9282
        %9640 = vmatmul.mubr.bf16.gmra.mrb[0].mxu0 %v9281
        %v9641 = vpop.f32.mrb[0].mxu0
        %v9642 = vadd.f32 %v9373, %v9641
        %v9643 = vpop.f32.mrb[0].mxu0
        %v9644 = vpop.f32.mrb[0].mxu0
        %v9645 = vadd.f32 %v9373, %v9644
        %v9646 = vpop.f32.mrb[0].mxu0
        %9647 = vmatprep.mubr.bf16.mxu0 %v9286
        %9648 = vmatmul.mubr.bf16.gmra.mrb[0].mxu0 %v9285
        %v9649 = vpop.f32.mrb[0].mxu0
        %v9650 = vadd.f32 %v9373, %v9649
        %v9651 = vpop.f32.mrb[0].mxu0
        %v9652 = vpop.f32.mrb[0].mxu0
        %v9653 = vadd.f32 %v9373, %v9652
        %v9654 = vpop.f32.mrb[0].mxu0
        %9655 = vmatprep.mubr.bf16.mxu0 %v9290
        %9656 = vmatmul.mubr.bf16.gmra.mrb[0].mxu0 %v9289
        %v9657 = vpop.f32.mrb[0].mxu0
        %v9658 = vadd.f32 %v9373, %v9657
        %v9659 = vpop.f32.mrb[0].mxu0
        %v9660 = vpop.f32.mrb[0].mxu0
        %v9661 = vadd.f32 %v9373, %v9660
        %v9662 = vpop.f32.mrb[0].mxu0
        %9663 = vmatprep.mubr.bf16.mxu0 %v9294
        %9664 = vmatmul.mubr.bf16.gmra.mrb[0].mxu0 %v9293
        %v9665 = vpop.f32.mrb[0].mxu0
        %v9666 = vadd.f32 %v9373, %v9665
        %v9667 = vpop.f32.mrb[0].mxu0
        %v9668 = vpop.f32.mrb[0].mxu0
        %v9669 = vadd.f32 %v9373, %v9668
        %v9670 = vpop.f32.mrb[0].mxu0
        %9671 = vmatprep.mubr.bf16.mxu0 %v9298
        %9672 = vmatmul.mubr.bf16.gmra.mrb[0].mxu0 %v9297
        %v9673 = vpop.f32.mrb[0].mxu0
        %v9674 = vadd.f32 %v9373, %v9673
        %v9675 = vpop.f32.mrb[0].mxu0
        %v9676 = vpop.f32.mrb[0].mxu0
        %v9677 = vadd.f32 %v9373, %v9676
        %v9678 = vpop.f32.mrb[0].mxu0
        %9679 = vmatprep.mubr.bf16.mxu0 %v9302
        %9680 = vmatmul.mubr.bf16.gmra.mrb[0].mxu0 %v9301
        %v9681 = vpop.f32.mrb[0].mxu0
        %v9682 = vadd.f32 %v9373, %v9681
        %v9683 = vpop.f32.mrb[0].mxu0
        %v9684 = vpop.f32.mrb[0].mxu0
        %v9685 = vadd.f32 %v9373, %v9684
        %v9686 = vpop.f32.mrb[0].mxu0
        %9687 = vmatprep.mubr.bf16.mxu0 %v9306
        %9688 = vmatmul.mubr.bf16.gmra.mrb[0].mxu0 %v9305
        %v9689 = vpop.f32.mrb[0].mxu0
        %v9690 = vadd.f32 %v9373, %v9689
        %v9691 = vpop.f32.mrb[0].mxu0
        %v9692 = vpop.f32.mrb[0].mxu0
        %v9693 = vadd.f32 %v9373, %v9692
        %v9694 = vpop.f32.mrb[0].mxu0
        %9695 = vmatprep.mubr.bf16.mxu0 %v9310
        %9696 = vmatmul.mubr.bf16.gmra.mrb[0].mxu0 %v9309
        %v9697 = vpop.f32.mrb[0].mxu0
        %v9698 = vadd.f32 %v9373, %v9697
        %v9699 = vpop.f32.mrb[0].mxu0
        %v9700 = vpop.f32.mrb[0].mxu0
        %v9701 = vadd.f32 %v9373, %v9700
        %v9702 = vpop.f32.mrb[0].mxu0
        %9703 = vmatprep.mubr.bf16.mxu0 %v9314
        %9704 = vmatmul.mubr.bf16.gmra.mrb[0].mxu0 %v9313
        %v9705 = vpop.f32.mrb[0].mxu0
        %v9706 = vadd.f32 %v9373, %v9705
        %v9707 = vpop.f32.mrb[0].mxu0
        %v9708 = vpop.f32.mrb[0].mxu0
        %v9709 = vadd.f32 %v9373, %v9708
        %v9710 = vpop.f32.mrb[0].mxu0
        %9711 = vmatprep.mubr.bf16.mxu0 %v9318
        %9712 = vmatmul.mubr.bf16.gmra.mrb[0].mxu0 %v9317
        %v9713 = vpop.f32.mrb[0].mxu0
        %v9714 = vadd.f32 %v9373, %v9713
        %v9715 = vpop.f32.mrb[0].mxu0
        %v9716 = vpop.f32.mrb[0].mxu0
        %v9717 = vadd.f32 %v9373, %v9716
        %v9718 = vpop.f32.mrb[0].mxu0
        %9719 = vmatprep.mubr.bf16.mxu0 %v9322
        %9720 = vmatmul.mubr.bf16.gmra.mrb[0].mxu0 %v9321
        %v9721 = vpop.f32.mrb[0].mxu0
        %v9722 = vadd.f32 %v9373, %v9721
        %v9723 = vpop.f32.mrb[0].mxu0
        %v9724 = vpop.f32.mrb[0].mxu0
        %v9725 = vadd.f32 %v9373, %v9724
        %v9726 = vpop.f32.mrb[0].mxu0
        %9727 = vmatprep.mubr.bf16.mxu0 %v9326
        %9728 = vmatmul.mubr.bf16.gmra.mrb[0].mxu0 %v9325
        %v9729 = vpop.f32.mrb[0].mxu0
        %v9730 = vadd.f32 %v9373, %v9729
        %v9731 = vpop.f32.mrb[0].mxu0
        %v9732 = vpop.f32.mrb[0].mxu0
        %v9733 = vadd.f32 %v9373, %v9732
        %v9734 = vpop.f32.mrb[0].mxu0
        %9735 = vmatprep.mubr.bf16.mxu0 %v9330
        %9736 = vmatmul.mubr.bf16.gmra.mrb[0].mxu0 %v9329
        %v9737 = vpop.f32.mrb[0].mxu0
        %v9738 = vadd.f32 %v9373, %v9737
        %v9739 = vpop.f32.mrb[0].mxu0
        %v9740 = vpop.f32.mrb[0].mxu0
        %v9741 = vadd.f32 %v9373, %v9740
        %v9742 = vpop.f32.mrb[0].mxu0
        %9743 = vmatprep.mubr.bf16.mxu0 %v9334
        %9744 = vmatmul.mubr.bf16.gmra.mrb[0].mxu0 %v9333
        %v9745 = vpop.f32.mrb[0].mxu0
        %v9746 = vadd.f32 %v9373, %v9745
        %v9747 = vpop.f32.mrb[0].mxu0
        %v9748 = vpop.f32.mrb[0].mxu0
        %v9749 = vadd.f32 %v9373, %v9748
        %v9750 = vpop.f32.mrb[0].mxu0
        %9751 = vmatprep.mubr.bf16.mxu0 %v9338
        %9752 = vmatmul.mubr.bf16.gmra.mrb[0].mxu0 %v9337
        %v9753 = vpop.f32.mrb[0].mxu0
        %v9754 = vadd.f32 %v9373, %v9753
        %v9755 = vpop.f32.mrb[0].mxu0
        %v9756 = vpop.f32.mrb[0].mxu0
        %v9757 = vadd.f32 %v9373, %v9756
        %v9758 = vpop.f32.mrb[0].mxu0
        %9759 = vmatprep.mubr.bf16.mxu0 %v9342
        %9760 = vmatmul.mubr.bf16.gmra.mrb[0].mxu0 %v9341
        %v9761 = vpop.f32.mrb[0].mxu0
        %v9762 = vadd.f32 %v9373, %v9761
        %v9763 = vpop.f32.mrb[0].mxu0
        %v9764 = vpop.f32.mrb[0].mxu0
        %v9765 = vadd.f32 %v9373, %v9764
        %v9766 = vpop.f32.mrb[0].mxu0
        %9767 = vmatprep.mubr.bf16.mxu0 %v9346
        %9768 = vmatmul.mubr.bf16.gmra.mrb[0].mxu0 %v9345
        %v9769 = vpop.f32.mrb[0].mxu0
        %v9770 = vadd.f32 %v9373, %v9769
        %v9771 = vpop.f32.mrb[0].mxu0
        %v9772 = vpop.f32.mrb[0].mxu0
        %v9773 = vadd.f32 %v9373, %v9772
        %v9774 = vpop.f32.mrb[0].mxu0
        %9775 = vmatprep.mubr.bf16.mxu0 %v9350
        %9776 = vmatmul.mubr.bf16.gmra.mrb[0].mxu0 %v9349
        %v9777 = vpop.f32.mrb[0].mxu0
        %v9778 = vadd.f32 %v9373, %v9777
        %v9779 = vpop.f32.mrb[0].mxu0
        %v9780 = vpop.f32.mrb[0].mxu0
        %v9781 = vadd.f32 %v9373, %v9780
        %v9782 = vpop.f32.mrb[0].mxu0
        %9783 = vmatprep.mubr.bf16.mxu0 %v9354
        %9784 = vmatmul.mubr.bf16.gmra.mrb[0].mxu0 %v9353
        %v9785 = vpop.f32.mrb[0].mxu0
        %v9786 = vadd.f32 %v9373, %v9785
        %v9787 = vpop.f32.mrb[0].mxu0
        %v9788 = vpop.f32.mrb[0].mxu0
        %v9789 = vadd.f32 %v9373, %v9788
        %v9790 = vpop.f32.mrb[0].mxu0
        %9791 = vmatprep.mubr.bf16.mxu0 %v9358
        %9792 = vmatmul.mubr.bf16.gmra.mrb[0].mxu0 %v9357
        %v9793 = vpop.f32.mrb[0].mxu0
        %v9794 = vadd.f32 %v9373, %v9793
        %v9795 = vpop.f32.mrb[0].mxu0
        %v9796 = vpop.f32.mrb[0].mxu0
        %v9797 = vadd.f32 %v9373, %v9796
        %v9798 = vpop.f32.mrb[0].mxu0
        %9799 = vmatprep.mubr.bf16.mxu0 %v9362
        %9800 = vmatmul.mubr.bf16.gmra.mrb[0].mxu0 %v9361
        %v9801 = vpop.f32.mrb[0].mxu0
        %v9802 = vadd.f32 %v9373, %v9801
        %v9803 = vpop.f32.mrb[0].mxu0
        %v9804 = vpop.f32.mrb[0].mxu0
        %v9805 = vadd.f32 %v9373, %v9804
        %v9806 = vpop.f32.mrb[0].mxu0
        %9807 = vmatprep.mubr.bf16.mxu0 %v9366
        %9808 = vmatmul.mubr.bf16.gmra.mrb[0].mxu0 %v9365
        %v9809 = vpop.f32.mrb[0].mxu0
        %v9810 = vadd.f32 %v9373, %v9809
        %v9811 = vpop.f32.mrb[0].mxu0
        %v9812 = vpop.f32.mrb[0].mxu0
        %v9813 = vadd.f32 %v9373, %v9812
        %v9814 = vpop.f32.mrb[0].mxu0
        %9815 = vdwg.mxu0
        %9816 = vmatprep.subr.bf16.mxu0 0
        %9817 = vmatpush1.bf16.msra.mxu0 %v9519
        %9818 = vmatprep.subr.bf16.mxu0 0
        %9819 = vmatpush1.bf16.msra.mxu0 %v9520
        %9820 = vmatprep.subr.bf16.mxu0 0
        %9821 = vmatpush1.bf16.msra.mxu0 %v9521
        %9822 = vmatprep.subr.bf16.mxu0 0
        %9823 = vmatpush1.bf16.msra.mxu0 %v9522
        %9824 = vmatprep.subr.bf16.mxu0 0
        %9825 = vmatpush1.bf16.msra.mxu0 %v9523
        %9826 = vmatprep.subr.bf16.mxu0 0
        %9827 = vmatpush1.bf16.msra.mxu0 %v9524
        %9828 = vmatprep.subr.bf16.mxu0 0
        %9829 = vmatpush1.bf16.msra.mxu0 %v9525
        %9830 = vmatprep.subr.bf16.mxu0 0
        %9831 = vmatpush1.bf16.msra.mxu0 %v9526
        %9832 = vmatprep.subr.bf16.mxu0 0
        %9833 = vmatpush1.bf16.msra.mxu0 %v9527
        %9834 = vmatprep.subr.bf16.mxu0 0
        %9835 = vmatpush1.bf16.msra.mxu0 %v9528
        %9836 = vmatprep.subr.bf16.mxu0 0
        %9837 = vmatpush1.bf16.msra.mxu0 %v9529
        %9838 = vmatprep.subr.bf16.mxu0 0
        %9839 = vmatpush1.bf16.msra.mxu0 %v9530
        %9840 = vmatprep.subr.bf16.mxu0 0
        %9841 = vmatpush1.bf16.msra.mxu0 %v9531
        %9842 = vmatprep.subr.bf16.mxu0 0
        %9843 = vmatpush1.bf16.msra.mxu0 %v9532
        %9844 = vmatprep.subr.bf16.mxu0 0
        %9845 = vmatpush1.bf16.msra.mxu0 %v9533
        %9846 = vmatprep.subr.bf16.mxu0 0
        %9847 = vmatpush1.bf16.msra.mxu0 %v9534
        %9848 = vmatprep.mubr.bf16.mxu0 %v9264
        %9849 = vmatmul.mubr.bf16.gmra.mrb[0].mxu0 %v9263
        %v9850 = vpop.f32.mrb[0].mxu0
        %v9851 = vadd.f32 %v9602, %v9850
        %v9852 = vpop.f32.mrb[0].mxu0
        %v9853 = vpop.f32.mrb[0].mxu0
        %v9854 = vadd.f32 %v9605, %v9853
        %v9855 = vpop.f32.mrb[0].mxu0
        %9856 = vmatprep.mubr.bf16.mxu0 %v9268
        %9857 = vmatmul.mubr.bf16.gmra.mrb[0].mxu0 %v9267
        %v9858 = vpop.f32.mrb[0].mxu0
        %v9859 = vadd.f32 %v9610, %v9858
        %v9860 = vpop.f32.mrb[0].mxu0
        %v9861 = vpop.f32.mrb[0].mxu0
        %v9862 = vadd.f32 %v9613, %v9861
        %v9863 = vpop.f32.mrb[0].mxu0
        %9864 = vmatprep.mubr.bf16.mxu0 %v9272
        %9865 = vmatmul.mubr.bf16.gmra.mrb[0].mxu0 %v9271
        %v9866 = vpop.f32.mrb[0].mxu0
        %v9867 = vadd.f32 %v9618, %v9866
        %v9868 = vpop.f32.mrb[0].mxu0
        %v9869 = vpop.f32.mrb[0].mxu0
        %v9870 = vadd.f32 %v9621, %v9869
        %v9871 = vpop.f32.mrb[0].mxu0
        %9872 = vmatprep.mubr.bf16.mxu0 %v9276
        %9873 = vmatmul.mubr.bf16.gmra.mrb[0].mxu0 %v9275
        %v9874 = vpop.f32.mrb[0].mxu0
        %v9875 = vadd.f32 %v9626, %v9874
        %v9876 = vpop.f32.mrb[0].mxu0
        %v9877 = vpop.f32.mrb[0].mxu0
        %v9878 = vadd.f32 %v9629, %v9877
        %v9879 = vpop.f32.mrb[0].mxu0
        %9880 = vmatprep.mubr.bf16.mxu0 %v9280
        %9881 = vmatmul.mubr.bf16.gmra.mrb[0].mxu0 %v9279
        %v9882 = vpop.f32.mrb[0].mxu0
        %v9883 = vadd.f32 %v9634, %v9882
        %v9884 = vpop.f32.mrb[0].mxu0
        %v9885 = vpop.f32.mrb[0].mxu0
        %v9886 = vadd.f32 %v9637, %v9885
        %v9887 = vpop.f32.mrb[0].mxu0
        %9888 = vmatprep.mubr.bf16.mxu0 %v9284
        %9889 = vmatmul.mubr.bf16.gmra.mrb[0].mxu0 %v9283
        %v9890 = vpop.f32.mrb[0].mxu0
        %v9891 = vadd.f32 %v9642, %v9890
        %v9892 = vpop.f32.mrb[0].mxu0
        %v9893 = vpop.f32.mrb[0].mxu0
        %v9894 = vadd.f32 %v9645, %v9893
        %v9895 = vpop.f32.mrb[0].mxu0
        %9896 = vmatprep.mubr.bf16.mxu0 %v9288
        %9897 = vmatmul.mubr.bf16.gmra.mrb[0].mxu0 %v9287
        %v9898 = vpop.f32.mrb[0].mxu0
        %v9899 = vadd.f32 %v9650, %v9898
        %v9900 = vpop.f32.mrb[0].mxu0
        %v9901 = vpop.f32.mrb[0].mxu0
        %v9902 = vadd.f32 %v9653, %v9901
        %v9903 = vpop.f32.mrb[0].mxu0
        %9904 = vmatprep.mubr.bf16.mxu0 %v9292
        %9905 = vmatmul.mubr.bf16.gmra.mrb[0].mxu0 %v9291
        %v9906 = vpop.f32.mrb[0].mxu0
        %v9907 = vadd.f32 %v9658, %v9906
        %v9908 = vpop.f32.mrb[0].mxu0
        %v9909 = vpop.f32.mrb[0].mxu0
        %v9910 = vadd.f32 %v9661, %v9909
        %v9911 = vpop.f32.mrb[0].mxu0
        %9912 = vmatprep.mubr.bf16.mxu0 %v9296
        %9913 = vmatmul.mubr.bf16.gmra.mrb[0].mxu0 %v9295
        %v9914 = vpop.f32.mrb[0].mxu0
        %v9915 = vadd.f32 %v9666, %v9914
        %v9916 = vpop.f32.mrb[0].mxu0
        %v9917 = vpop.f32.mrb[0].mxu0
        %v9918 = vadd.f32 %v9669, %v9917
        %v9919 = vpop.f32.mrb[0].mxu0
        %9920 = vmatprep.mubr.bf16.mxu0 %v9300
        %9921 = vmatmul.mubr.bf16.gmra.mrb[0].mxu0 %v9299
        %v9922 = vpop.f32.mrb[0].mxu0
        %v9923 = vadd.f32 %v9674, %v9922
        %v9924 = vpop.f32.mrb[0].mxu0
        %v9925 = vpop.f32.mrb[0].mxu0
        %v9926 = vadd.f32 %v9677, %v9925
        %v9927 = vpop.f32.mrb[0].mxu0
        %9928 = vmatprep.mubr.bf16.mxu0 %v9304
        %9929 = vmatmul.mubr.bf16.gmra.mrb[0].mxu0 %v9303
        %v9930 = vpop.f32.mrb[0].mxu0
        %v9931 = vadd.f32 %v9682, %v9930
        %v9932 = vpop.f32.mrb[0].mxu0
        %v9933 = vpop.f32.mrb[0].mxu0
        %v9934 = vadd.f32 %v9685, %v9933
        %v9935 = vpop.f32.mrb[0].mxu0
        %9936 = vmatprep.mubr.bf16.mxu0 %v9308
        %9937 = vmatmul.mubr.bf16.gmra.mrb[0].mxu0 %v9307
        %v9938 = vpop.f32.mrb[0].mxu0
        %v9939 = vadd.f32 %v9690, %v9938
        %v9940 = vpop.f32.mrb[0].mxu0
        %v9941 = vpop.f32.mrb[0].mxu0
        %v9942 = vadd.f32 %v9693, %v9941
        %v9943 = vpop.f32.mrb[0].mxu0
        %9944 = vmatprep.mubr.bf16.mxu0 %v9312
        %9945 = vmatmul.mubr.bf16.gmra.mrb[0].mxu0 %v9311
        %v9946 = vpop.f32.mrb[0].mxu0
        %v9947 = vadd.f32 %v9698, %v9946
        %v9948 = vpop.f32.mrb[0].mxu0
        %v9949 = vpop.f32.mrb[0].mxu0
        %v9950 = vadd.f32 %v9701, %v9949
        %v9951 = vpop.f32.mrb[0].mxu0
        %9952 = vmatprep.mubr.bf16.mxu0 %v9316
        %9953 = vmatmul.mubr.bf16.gmra.mrb[0].mxu0 %v9315
        %v9954 = vpop.f32.mrb[0].mxu0
        %v9955 = vadd.f32 %v9706, %v9954
        %v9956 = vpop.f32.mrb[0].mxu0
        %v9957 = vpop.f32.mrb[0].mxu0
        %v9958 = vadd.f32 %v9709, %v9957
        %v9959 = vpop.f32.mrb[0].mxu0
        %9960 = vmatprep.mubr.bf16.mxu0 %v9320
        %9961 = vmatmul.mubr.bf16.gmra.mrb[0].mxu0 %v9319
        %v9962 = vpop.f32.mrb[0].mxu0
        %v9963 = vadd.f32 %v9714, %v9962
        %v9964 = vpop.f32.mrb[0].mxu0
        %v9965 = vpop.f32.mrb[0].mxu0
        %v9966 = vadd.f32 %v9717, %v9965
        %v9967 = vpop.f32.mrb[0].mxu0
        %9968 = vmatprep.mubr.bf16.mxu0 %v9324
        %9969 = vmatmul.mubr.bf16.gmra.mrb[0].mxu0 %v9323
        %v9970 = vpop.f32.mrb[0].mxu0
        %v9971 = vadd.f32 %v9722, %v9970
        %v9972 = vpop.f32.mrb[0].mxu0
        %v9973 = vpop.f32.mrb[0].mxu0
        %v9974 = vadd.f32 %v9725, %v9973
        %v9975 = vpop.f32.mrb[0].mxu0
        %9976 = vmatprep.mubr.bf16.mxu0 %v9328
        %9977 = vmatmul.mubr.bf16.gmra.mrb[0].mxu0 %v9327
        %v9978 = vpop.f32.mrb[0].mxu0
        %v9979 = vadd.f32 %v9730, %v9978
        %v9980 = vpop.f32.mrb[0].mxu0
        %v9981 = vpop.f32.mrb[0].mxu0
        %v9982 = vadd.f32 %v9733, %v9981
        %v9983 = vpop.f32.mrb[0].mxu0
        %9984 = vmatprep.mubr.bf16.mxu0 %v9332
        %9985 = vmatmul.mubr.bf16.gmra.mrb[0].mxu0 %v9331
        %v9986 = vpop.f32.mrb[0].mxu0
        %v9987 = vadd.f32 %v9738, %v9986
        %v9988 = vpop.f32.mrb[0].mxu0
        %v9989 = vpop.f32.mrb[0].mxu0
        %v9990 = vadd.f32 %v9741, %v9989
        %v9991 = vpop.f32.mrb[0].mxu0
        %9992 = vmatprep.mubr.bf16.mxu0 %v9336
        %9993 = vmatmul.mubr.bf16.gmra.mrb[0].mxu0 %v9335
        %v9994 = vpop.f32.mrb[0].mxu0
        %v9995 = vadd.f32 %v9746, %v9994
        %v9996 = vpop.f32.mrb[0].mxu0
        %v9997 = vpop.f32.mrb[0].mxu0
        %v9998 = vadd.f32 %v9749, %v9997
        %v9999 = vpop.f32.mrb[0].mxu0
        %10000 = vmatprep.mubr.bf16.mxu0 %v9340
        %10001 = vmatmul.mubr.bf16.gmra.mrb[0].mxu0 %v9339
        %v10002 = vpop.f32.mrb[0].mxu0
        %v10003 = vadd.f32 %v9754, %v10002
        %v10004 = vpop.f32.mrb[0].mxu0
        %v10005 = vpop.f32.mrb[0].mxu0
        %v10006 = vadd.f32 %v9757, %v10005
        %v10007 = vpop.f32.mrb[0].mxu0
        %10008 = vmatprep.mubr.bf16.mxu0 %v9344
        %10009 = vmatmul.mubr.bf16.gmra.mrb[0].mxu0 %v9343
        %v10010 = vpop.f32.mrb[0].mxu0
        %v10011 = vadd.f32 %v9762, %v10010
        %v10012 = vpop.f32.mrb[0].mxu0
        %v10013 = vpop.f32.mrb[0].mxu0
        %v10014 = vadd.f32 %v9765, %v10013
        %v10015 = vpop.f32.mrb[0].mxu0
        %10016 = vmatprep.mubr.bf16.mxu0 %v9348
        %10017 = vmatmul.mubr.bf16.gmra.mrb[0].mxu0 %v9347
        %v10018 = vpop.f32.mrb[0].mxu0
        %v10019 = vadd.f32 %v9770, %v10018
        %v10020 = vpop.f32.mrb[0].mxu0
        %v10021 = vpop.f32.mrb[0].mxu0
        %v10022 = vadd.f32 %v9773, %v10021
        %v10023 = vpop.f32.mrb[0].mxu0
        %10024 = vmatprep.mubr.bf16.mxu0 %v9352
        %10025 = vmatmul.mubr.bf16.gmra.mrb[0].mxu0 %v9351
        %v10026 = vpop.f32.mrb[0].mxu0
        %v10027 = vadd.f32 %v9778, %v10026
        %v10028 = vpop.f32.mrb[0].mxu0
        %v10029 = vpop.f32.mrb[0].mxu0
        %v10030 = vadd.f32 %v9781, %v10029
        %v10031 = vpop.f32.mrb[0].mxu0
        %10032 = vmatprep.mubr.bf16.mxu0 %v9356
        %10033 = vmatmul.mubr.bf16.gmra.mrb[0].mxu0 %v9355
        %v10034 = vpop.f32.mrb[0].mxu0
        %v10035 = vadd.f32 %v9786, %v10034
        %v10036 = vpop.f32.mrb[0].mxu0
        %v10037 = vpop.f32.mrb[0].mxu0
        %v10038 = vadd.f32 %v9789, %v10037
        %v10039 = vpop.f32.mrb[0].mxu0
        %10040 = vmatprep.mubr.bf16.mxu0 %v9360
        %10041 = vmatmul.mubr.bf16.gmra.mrb[0].mxu0 %v9359
        %v10042 = vpop.f32.mrb[0].mxu0
        %v10043 = vadd.f32 %v9794, %v10042
        %v10044 = vpop.f32.mrb[0].mxu0
        %v10045 = vpop.f32.mrb[0].mxu0
        %v10046 = vadd.f32 %v9797, %v10045
        %v10047 = vpop.f32.mrb[0].mxu0
        %10048 = vmatprep.mubr.bf16.mxu0 %v9364
        %10049 = vmatmul.mubr.bf16.gmra.mrb[0].mxu0 %v9363
        %v10050 = vpop.f32.mrb[0].mxu0
        %v10051 = vadd.f32 %v9802, %v10050
        %v10052 = vpop.f32.mrb[0].mxu0
        %v10053 = vpop.f32.mrb[0].mxu0
        %v10054 = vadd.f32 %v9805, %v10053
        %v10055 = vpop.f32.mrb[0].mxu0
        %10056 = vmatprep.mubr.bf16.mxu0 %v9368
        %10057 = vmatmul.mubr.bf16.gmra.mrb[0].mxu0 %v9367
        %v10058 = vpop.f32.mrb[0].mxu0
        %v10059 = vadd.f32 %v9810, %v10058
        %v10060 = vpop.f32.mrb[0].mxu0
        %v10061 = vpop.f32.mrb[0].mxu0
        %v10062 = vadd.f32 %v9813, %v10061
        %v10063 = vpop.f32.mrb[0].mxu0
        %10064 = vdwg.mxu0
        %vm10065 = vcmask 23552
        %10066 = vst.msk [vmem:[%s477] sm:$0xff] %vm10065, %v9851
        %10067 = vst.msk [vmem:[%s477 + $0x8] sm:$0xff] %vm10065, %v9854
        %10068 = vst.msk [vmem:[%s477 + $0x10] sm:$0xff] %vm10065, %v9859
        %10069 = vst.msk [vmem:[%s477 + $0x18] sm:$0xff] %vm10065, %v9862
        %10070 = vst.msk [vmem:[%s477 + $0x20] sm:$0xff] %vm10065, %v9867
        %10071 = vst.msk [vmem:[%s477 + $0x28] sm:$0xff] %vm10065, %v9870
        %10072 = vst.msk [vmem:[%s477 + $0x30] sm:$0xff] %vm10065, %v9875
        %10073 = vst.msk [vmem:[%s477 + $0x38] sm:$0xff] %vm10065, %v9878
        %10074 = vst.msk [vmem:[%s477 + $0x40] sm:$0xff] %vm10065, %v9883
        %10075 = vst.msk [vmem:[%s477 + $0x48] sm:$0xff] %vm10065, %v9886
        %10076 = vst.msk [vmem:[%s477 + $0x50] sm:$0xff] %vm10065, %v9891
        %10077 = vst.msk [vmem:[%s477 + $0x58] sm:$0xff] %vm10065, %v9894
        %10078 = vst.msk [vmem:[%s477 + $0x60] sm:$0xff] %vm10065, %v9899
        %10079 = vst.msk [vmem:[%s477 + $0x68] sm:$0xff] %vm10065, %v9902
        %10080 = vst.msk [vmem:[%s477 + $0x70] sm:$0xff] %vm10065, %v9907
        %10081 = vst.msk [vmem:[%s477 + $0x78] sm:$0xff] %vm10065, %v9910
        %10082 = vst.msk [vmem:[%s477 + $0x80] sm:$0xff] %vm10065, %v9915
        %10083 = vst.msk [vmem:[%s477 + $0x88] sm:$0xff] %vm10065, %v9918
        %10084 = vst.msk [vmem:[%s477 + $0x90] sm:$0xff] %vm10065, %v9923
        %10085 = vst.msk [vmem:[%s477 + $0x98] sm:$0xff] %vm10065, %v9926
        %10086 = vst.msk [vmem:[%s477 + $0xa0] sm:$0xff] %vm10065, %v9931
        %10087 = vst.msk [vmem:[%s477 + $0xa8] sm:$0xff] %vm10065, %v9934
        %10088 = vst.msk [vmem:[%s477 + $0xb0] sm:$0xff] %vm10065, %v9939
        %10089 = vst.msk [vmem:[%s477 + $0xb8] sm:$0xff] %vm10065, %v9942
        %10090 = vst.msk [vmem:[%s477 + $0xc0] sm:$0xff] %vm10065, %v9947
        %10091 = vst.msk [vmem:[%s477 + $0xc8] sm:$0xff] %vm10065, %v9950
        %10092 = vst.msk [vmem:[%s477 + $0xd0] sm:$0xff] %vm10065, %v9955
        %10093 = vst.msk [vmem:[%s477 + $0xd8] sm:$0xff] %vm10065, %v9958
        %10094 = vst.msk [vmem:[%s477 + $0xe0] sm:$0xff] %vm10065, %v9963
        %10095 = vst.msk [vmem:[%s477 + $0xe8] sm:$0xff] %vm10065, %v9966
        %10096 = vst.msk [vmem:[%s477 + $0xf0] sm:$0xff] %vm10065, %v9971
        %10097 = vst.msk [vmem:[%s477 + $0xf8] sm:$0xff] %vm10065, %v9974
        %10098 = vst.msk [vmem:[%s477 + $0x100] sm:$0xff] %vm10065, %v9979
        %10099 = vst.msk [vmem:[%s477 + $0x108] sm:$0xff] %vm10065, %v9982
        %10100 = vst.msk [vmem:[%s477 + $0x110] sm:$0xff] %vm10065, %v9987
        %10101 = vst.msk [vmem:[%s477 + $0x118] sm:$0xff] %vm10065, %v9990
        %10102 = vst.msk [vmem:[%s477 + $0x120] sm:$0xff] %vm10065, %v9995
        %10103 = vst.msk [vmem:[%s477 + $0x128] sm:$0xff] %vm10065, %v9998
        %10104 = vst.msk [vmem:[%s477 + $0x130] sm:$0xff] %vm10065, %v10003
        %10105 = vst.msk [vmem:[%s477 + $0x138] sm:$0xff] %vm10065, %v10006
        %10106 = vst.msk [vmem:[%s477 + $0x140] sm:$0xff] %vm10065, %v10011
        %10107 = vst.msk [vmem:[%s477 + $0x148] sm:$0xff] %vm10065, %v10014
        %10108 = vst.msk [vmem:[%s477 + $0x150] sm:$0xff] %vm10065, %v10019
        %10109 = vst.msk [vmem:[%s477 + $0x158] sm:$0xff] %vm10065, %v10022
        %10110 = vst.msk [vmem:[%s477 + $0x160] sm:$0xff] %vm10065, %v10027
        %10111 = vst.msk [vmem:[%s477 + $0x168] sm:$0xff] %vm10065, %v10030
        %10112 = vst.msk [vmem:[%s477 + $0x170] sm:$0xff] %vm10065, %v10035
        %10113 = vst.msk [vmem:[%s477 + $0x178] sm:$0xff] %vm10065, %v10038
        %10114 = vst.msk [vmem:[%s477 + $0x180] sm:$0xff] %vm10065, %v10043
        %10115 = vst.msk [vmem:[%s477 + $0x188] sm:$0xff] %vm10065, %v10046
        %10116 = vst.msk [vmem:[%s477 + $0x190] sm:$0xff] %vm10065, %v10051
        %10117 = vst.msk [vmem:[%s477 + $0x198] sm:$0xff] %vm10065, %v10054
        %10118 = vst.msk [vmem:[%s477 + $0x1a0] sm:$0xff] %vm10065, %v10059
        %vm10119 = vcmask 22528
        %10120 = vst.msk [vmem:[%s477 + $0x1a8] sm:$0x7f] %vm10119, %v10062
        %s10121 = sand.u32 %s315, 1
        %s10122 = scalar_lea.sflag [#allocation3], %s10121
        %s10123 = sand.u32 %s315, 1
        %s10124 = scalar_lea.vmem [#allocation2], %s10123
        %p10125 = scmp.lt.s32.totalorder %s29, 1
        %s10126 = scalar_select %p10125, %s29, 1
        %s10127 = smul.addr %s10126, 54
        %s10128 = smul.addr %s10127, 8
        %s10129 = scalar_lea.vmem %s14, %s10128
        // Predicated region
        $region73: #{hmd_former_forward.1} parent=71 // pred_check
          %p10130 = pneg %p325
        $region74: #{hmd_former_forward.1} parent=71 // pred_check_branch
          %10132 = sbr.rel (%p10130) target = $region76
        $region75: #{hmd_former_forward.1} parent=71 // pred_region
          %s10134 = ssub.s32 16, 16
          %10135 = vsyncadd %s10122, %s10134
          %s10136 = smul.addr %s29, 16
          %s10137 = scalar_lea.hbm %s13, %s10136
          %s10139 = sshll.u32 %s10124, 4
          %s10140 = int_to_ptr.vmem [resolvable:$true] %s10139
          %10142 = dma.vmem_to_hbm [thread:$0]  %s10140, 16, %s10137, %s10122
        $region76: #{hmd_former_forward.1} parent=71 // pred_fallthru
          _
        // Predicated region
        $region77: #{hmd_former_forward.1} parent=71 // pred_check
          %p10143 = pneg %p351
        $region78: #{hmd_former_forward.1} parent=71 // pred_check_branch
          %10145 = sbr.rel (%p10143) target = $region80
        $region79: #{hmd_former_forward.1} parent=71 // pred_region
          _
        $region80: #{hmd_former_forward.1} parent=71 // pred_fallthru
          _
      $region72: #{hmd_former_forward.1} parent=5 // pred_fallthru
        _
      %p10146 = scmp.le.s32.totalorder 2, %s24
      // Predicated region
      $region81: #{hmd_former_forward.1} parent=5 // pred_check
        %p10147 = pneg %p10146
      $region82: #{hmd_former_forward.1} parent=5 // pred_check_branch
        %10149 = sbr.rel (%p10147) target = $region84
      $region83: #{hmd_former_forward.1} parent=5 // pred_region
        %s10150 = ssub.s32 %s24, 2
        // Predicated region
        $region85: #{hmd_former_forward.1} parent=83 // pred_check
          %p10151 = pneg %p331
        $region86: #{hmd_former_forward.1} parent=83 // pred_check_branch
          %10153 = sbr.rel (%p10151) target = $region88
        $region87: #{hmd_former_forward.1} parent=83 // pred_region
          %s10154 = sand.u32 %s316, 1
          %s10155 = scalar_lea.sflag [#allocation3], %s10154
          %s10156 = sand.u32 %s316, 1
          %s10157 = scalar_lea.vmem [#allocation2], %s10156
          %10158 = dma.done %s10155, 16
        $region88: #{hmd_former_forward.1} parent=83 // pred_fallthru
          _
        // Predicated region
        $region89: #{hmd_former_forward.1} parent=83 // pred_check
          %p10159 = pneg %p357
        $region90: #{hmd_former_forward.1} parent=83 // pred_check_branch
          %10161 = sbr.rel (%p10159) target = $region92
        $region91: #{hmd_former_forward.1} parent=83 // pred_region
          %p10162 = scmp.lt.s32.totalorder %s30, 1
          %s10163 = scalar_select %p10162, %s30, 1
          %s10164 = smul.addr %s10163, 54
          %s10165 = smul.addr %s10164, 8
          %s10166 = scalar_lea.vmem %s14, %s10165
        $region92: #{hmd_former_forward.1} parent=83 // pred_fallthru
          _
      $region84: #{hmd_former_forward.1} parent=5 // pred_fallthru
        _
    $region6: #{hmd_former_forward.1} parent=1 // loop_footer
      %s28 = sadd.s32 1, %s24
    $region7: #{hmd_former_forward.1} parent=1 // loop_footer_branch
      %23 = sbr.rel target = $region3
    $region8: #{hmd_former_forward.1} parent=1 // loop_exit
      _
    %10167 = vsyncpa [#allocation3], 1
    %s10168 = scalar_lea.sflag [#allocation3], 1
    %10169 = vsyncpa %s10168, 1

</llo_original>
